<compile_context>
chip_gen: v7x
topology: tpu7x:2x2x1
jax: 0.10.0
libtpu: 0.0.40
codegen_flags: <defaults>
</compile_context>

<pallas_src>
import jax
import jax.numpy as jnp
from jax.experimental import pallas as pl
from jax.experimental.pallas import tpu as pltpu

EPS = 1e-6


# ---------------- hyperparameters (stand-in for `hyp`) ----------------
class hyp:
    do_feat2D = False
    do_emb2D = False
    do_feat3D = True
    do_emb3D = False
    do_view = False
    do_occ = False
    feat3D_dim = 8
    Z, Y, X = 16, 16, 16
    XMIN, XMAX = -8.0, 8.0
    YMIN, YMAX = -8.0, 8.0
    ZMIN, ZMAX = -8.0, 8.0


def _pick_vb(V, cap=2048):
    """Largest lane-tile <= cap that divides V (multiple of 128 when possible).
    Cap 2048 keeps the (8, VB) f32 accumulators at 16 vregs (no spills); blocks are
    vreg-pressure bound here, not VMEM bound."""
    if V <= cap:
        return V
    if V % 128 != 0:
        return V
    vb = cap - (cap % 128)
    while vb >= 128 and V % vb != 0:
        vb -= 128
    return vb if vb >= 128 else V


# ---------------- Pallas kernels ----------------
def transform_voxelize_pallas(T_stack, xyz, Z, Y, X, mins, vox_size, n_groups):
    """Fused rigid transform + Ref2Mem + occupancy voxelization.

    T_stack: [M*G, 4, 4]  transforms (cloud-major, group-minor ordering)
    xyz:     [M, 3, N]    camX point clouds
    mins / vox_size: python float 3-tuples (baked into the kernel as constants)
    Returns (xyz_out [M*G, 3, N], occ [M*G, 1, Z*Y*X]).
    """
    M, _, N = xyz.shape
    G = n_groups
    K = M * G
    V = Z * Y * X
    VB = _pick_vb(V, cap=2048)
    nvt = V // VB
    MB = 2 if (M % 2 == 0) else 1          # clouds per grid step
    KB = MB * G                            # output rows (transforms) per grid step
    assert KB % 8 == 0 or KB == K, "batch*seq must be even (or 1) for 8-sublane occ tiles"
    NC = M // MB

    xyz_f = xyz.astype(jnp.float32)
    T_flat = T_stack.reshape(K, 16).astype(jnp.float32)

    mnx, mny, mnz = (float(mins[0]), float(mins[1]), float(mins[2]))
    ivx = 1.0 / float(vox_size[0])
    ivy = 1.0 / float(vox_size[1])
    ivz = 1.0 / float(vox_size[2])

    def kernel(t_ref, p_ref, xyz_o_ref, occ_ref, flat_sc):
        c = pl.program_id(0)       # cloud-pair index
        vt = pl.program_id(1)      # voxel tile index

        # ---- once per cloud pair: transform all KB groups, cache flat voxel ids ----
        @pl.when(vt == 0)
        def _():
            for mb in range(MB):
                px = p_ref[mb, 0:1, :]          # (1, N)  lane-dense
                py = p_ref[mb, 1:2, :]
                pz = p_ref[mb, 2:3, :]
                for g in range(G):
                    r = mb * G + g
                    k = (c * MB + mb) * G + g   # row into the SMEM transform table
                    tx = (t_ref[k, 0] * px + t_ref[k, 1] * py +
                          t_ref[k, 2] * pz + t_ref[k, 3])
                    ty = (t_ref[k, 4] * px + t_ref[k, 5] * py +
                          t_ref[k, 6] * pz + t_ref[k, 7])
                    tz = (t_ref[k, 8] * px + t_ref[k, 9] * py +
                          t_ref[k, 10] * pz + t_ref[k, 11])
                    xyz_o_ref[r, 0:1, :] = tx
                    xyz_o_ref[r, 1:2, :] = ty
                    xyz_o_ref[r, 2:3, :] = tz
                    # Ref2Mem (continuous voxel coords) + round-to-nearest binning
                    mx = (tx - mnx) * ivx - 0.5
                    my = (ty - mny) * ivy - 0.5
                    mz = (tz - mnz) * ivz - 0.5
                    xi = jnp.floor(mx + 0.5)
                    yi = jnp.floor(my + 0.5)
                    zi = jnp.floor(mz + 0.5)
                    valid = ((xi >= 0.0) & (xi <= X - 1.0) &
                             (yi >= 0.0) & (yi <= Y - 1.0) &
                             (zi >= 0.0) & (zi <= Z - 1.0))
                    # TODO(synk): zero/padded points are not filtered (matches the
                    # simple reference voxelizer); add a nonzero mask here if needed.
                    flat = zi * float(Y * X) + yi * float(X) + xi        # (1, N)
                    flat_sc[r:r + 1, :] = jnp.where(valid, flat, -1.0)   # -1 never matches

        # ---- every voxel tile: compare cached ids against this tile's voxel ids ----
        base = (vt * VB).astype(jnp.float32)
        vox_row = (jax.lax.broadcasted_iota(jnp.int32, (1, VB), 1)
                   .astype(jnp.float32) + base)                 # (1, VB), hoisted
        ids_all = flat_sc[...]                                  # (KB, N): row = transform
        acc = jnp.zeros((KB, VB), jnp.float32)
        # TODO(synk): at production N this static loop should become a fori_loop /
        # two-level pipeline; kept unrolled because dynamic minor-dim (lane) slicing
        # is not guaranteed to lower and N is small in this config.
        for n in range(N):
            ids = ids_all[:, n:n + 1]                           # (KB, 1)
            acc = jnp.where(ids == vox_row, 1.0, acc)           # (KB, VB)
        occ_ref[...] = acc                                      # full 8-sublane store

    xyz_out, occ = pl.pallas_call(
        kernel,
        out_shape=(jax.ShapeDtypeStruct((K, 3, N), jnp.float32),
                   jax.ShapeDtypeStruct((K, V), jnp.float32)),
        grid=(NC, nvt),
        in_specs=[pl.BlockSpec(memory_space=pltpu.MemorySpace.SMEM),   # 4x4s as scalars
                  pl.BlockSpec((MB, 3, N), lambda c, v: (c, 0, 0))],
        out_specs=(pl.BlockSpec((KB, 3, N), lambda c, v: (c, 0, 0)),
                   pl.BlockSpec((KB, VB), lambda c, v: (c, v))),
        scratch_shapes=[pltpu.VMEM((KB, N), jnp.float32)],
        compiler_params=pltpu.CompilerParams(
            dimension_semantics=("parallel", "arbitrary")),
    )(T_flat, xyz_f)
    return xyz_out, occ.reshape(K, 1, V)


def featnet3d_pallas(occ, unp, w, b):
    """Fused FeatNet3D stand-in.

    occ: [M,1,V], unp: [M,3,V], w: [C,4], b: [C,1] -> feat [M,C,V].
    Builds input = cat([occ, unp*occ]) and applies a 1x1x1 conv + channel L2-norm.
    Channel dims (4 -> C) are tiny, so the conv stays on the VPU as broadcast-MACs
    (an MXU rewrite would be <2% utilization).  2-D parallel grid over (M, V tiles);
    weight/bias broadcasts happen once per grid step.
    """
    M, _, V = occ.shape
    C = w.shape[0]
    VBF = _pick_vb(V, cap=2048)

    def kernel(occ_ref, unp_ref, w_ref, b_ref, o_ref):
        occ_v = occ_ref[0, 0:1, :]                  # (1, VBF)
        r = unp_ref[0, 0:1, :] * occ_v
        g = unp_ref[0, 1:2, :] * occ_v
        bl = unp_ref[0, 2:3, :] * occ_v
        out = (w_ref[:, 0:1] * occ_v + w_ref[:, 1:2] * r +
               w_ref[:, 2:3] * g + w_ref[:, 3:4] * bl + b_ref[...])   # (C, VBF)
        inv = jax.lax.rsqrt(jnp.sum(out * out, axis=0, keepdims=True) + EPS)
        o_ref[0] = out * inv

    return pl.pallas_call(
        kernel,
        out_shape=jax.ShapeDtypeStruct((M, C, V), jnp.float32),
        grid=(M, V // VBF),
        in_specs=[pl.BlockSpec((1, 1, VBF), lambda m, v: (m, 0, v)),
                  pl.BlockSpec((1, 3, VBF), lambda m, v: (m, 0, v)),
                  pl.BlockSpec((C, 4), lambda m, v: (0, 0)),
                  pl.BlockSpec((C, 1), lambda m, v: (0, 0))],
        out_specs=pl.BlockSpec((1, C, VBF), lambda m, v: (m, 0, v)),
        compiler_params=pltpu.CompilerParams(
            dimension_semantics=("parallel", "parallel")),
    )(occ.astype(jnp.float32), unp.astype(jnp.float32),
      w.astype(jnp.float32), b.astype(jnp.float32))


def masked_mean_pallas(feat, valid):
    """feat: [B,S1,C,V], valid: [B,S1,1,V] ->
       (sum(f*m)/(sum(m)+eps) [B,C,V], clamp(sum(m),0,1) [B,1,V]).
    reduce_masked_mean over the sequence dim; 2-D parallel grid over (B, V tiles),
    division done once per lane on the EUP via approximate reciprocal."""
    B, S1, C, V = feat.shape
    VBR = _pick_vb(V, cap=2048)

    def kernel(f_ref, v_ref, fo_ref, vo_ref):
        f = f_ref[0]                                # (S1, C, VBR)
        m = v_ref[0]                                # (S1, 1, VBR)
        num = jnp.sum(f * m, axis=0)                # (C, VBR)
        den = jnp.sum(m, axis=0)                    # (1, VBR)
        inv = pl.reciprocal(den + EPS, approx=True)
        fo_ref[0] = num * inv
        vo_ref[0] = jnp.clip(den, 0.0, 1.0)

    return pl.pallas_call(
        kernel,
        out_shape=(jax.ShapeDtypeStruct((B, C, V), jnp.float32),
                   jax.ShapeDtypeStruct((B, 1, V), jnp.float32)),
        grid=(B, V // VBR),
        in_specs=[pl.BlockSpec((1, S1, C, VBR), lambda b, v: (b, 0, 0, v)),
                  pl.BlockSpec((1, S1, 1, VBR), lambda b, v: (b, 0, 0, v))],
        out_specs=(pl.BlockSpec((1, C, VBR), lambda b, v: (b, 0, v)),
                   pl.BlockSpec((1, 1, VBR), lambda b, v: (b, 0, v))),
        compiler_params=pltpu.CompilerParams(
            dimension_semantics=("parallel", "parallel")),
    )(feat.astype(jnp.float32), valid.astype(jnp.float32))


# ---------------- JAX glue (geometry helpers) ----------------
def safe_inverse(T):
    R = T[..., :3, :3]
    t = T[..., :3, 3:4]
    Rt = jnp.swapaxes(R, -1, -2)
    top = jnp.concatenate([Rt, -(Rt @ t)], axis=-1)
    bot = jnp.broadcast_to(jnp.array([0.0, 0.0, 0.0, 1.0], jnp.float32),
                           top.shape[:-2] + (1, 4))
    return jnp.concatenate([top, bot], axis=-2)


def get_camM_T_camXs(origin_T_camXs, ind=0):
    inv0 = safe_inverse(origin_T_camXs[:, ind])
    return jnp.einsum('bij,bsjk->bsik', inv0, origin_T_camXs)


class VoxUtil:
    def __init__(self, scene_centroid, Z, Y, X):
        self.Z, self.Y, self.X = Z, Y, X
        self.V = Z * Y * X
        cx, cy, cz = [float(scene_centroid[i]) for i in range(3)]
        self.mins_f = (hyp.XMIN + cx, hyp.YMIN + cy, hyp.ZMIN + cz)
        self.vox_size_f = ((hyp.XMAX - hyp.XMIN) / X,
                           (hyp.YMAX - hyp.YMIN) / Y,
                           (hyp.ZMAX - hyp.ZMIN) / Z)
        self.mins = jnp.array(self.mins_f, jnp.float32)
        self.vox_size = jnp.array(self.vox_size_f, jnp.float32)
        iz, iy, ix = jnp.meshgrid(jnp.arange(Z), jnp.arange(Y), jnp.arange(X), indexing='ij')
        xc = self.mins[0] + (ix.astype(jnp.float32) + 0.5) * self.vox_size[0]
        yc = self.mins[1] + (iy.astype(jnp.float32) + 0.5) * self.vox_size[1]
        zc = self.mins[2] + (iz.astype(jnp.float32) + 0.5) * self.vox_size[2]
        self.xyz_grid_ref = jnp.stack([xc, yc, zc], axis=-1).reshape(self.V, 3)

    def ref_to_mem(self, xyz_ref):
        return (xyz_ref - self.mins) / self.vox_size - 0.5

    def transform_and_voxelize(self, T_stack, xyz, n_groups):
        """T_stack: [M*G,4,4], xyz: [M,3,N] -> (xyz_out [M*G,3,N], occ [M*G,1,V])."""
        return transform_voxelize_pallas(T_stack, xyz, self.Z, self.Y, self.X,
                                         self.mins_f, self.vox_size_f, n_groups)

    def unproject_rgb_to_mem(self, rgb, pix_T_cams):
        # glue: nearest-neighbour unprojection.
        # TODO(synk): original uses bilinear grid_sample; nearest-neighbour used here.
        # TODO(synk): at production Z/Y/X this gather should move into a Pallas kernel
        # (scalar-prefetched index tables + manual DMA) — it dominates wall-clock there.
        M, C, H, W = rgb.shape
        x, y, z = (self.xyz_grid_ref[:, 0], self.xyz_grid_ref[:, 1], self.xyz_grid_ref[:, 2])
        fx, fy = pix_T_cams[:, 0, 0], pix_T_cams[:, 1, 1]
        cx, cy = pix_T_cams[:, 0, 2], pix_T_cams[:, 1, 2]
        zc = jnp.maximum(z, EPS)
        u = fx[:, None] * (x / zc)[None, :] + cx[:, None]
        v = fy[:, None] * (y / zc)[None, :] + cy[:, None]
        ui = jnp.floor(u + 0.5)
        vi = jnp.floor(v + 0.5)
        valid = ((ui >= 0) & (ui <= W - 1) & (vi >= 0) & (vi <= H - 1) &
                 (z[None, :] > 0)).astype(jnp.float32)
        ui = jnp.clip(ui, 0, W - 1).astype(jnp.int32)
        vi = jnp.clip(vi, 0, H - 1).astype(jnp.int32)
        pix_idx = vi * W + ui
        rgb_flat = rgb.reshape(M, C, H * W)
        idx = jnp.broadcast_to(pix_idx[:, None, :], (M, C, self.V))
        unp = jnp.take_along_axis(rgb_flat, idx, axis=2)
        return unp * valid[:, None, :]

    def apply_4x4s_to_voxs(self, B_T_A, feat_A):
        # glue: nearest-neighbour voxel resampling.
        # TODO(synk): original uses trilinear grid_sample; nearest-neighbour used here.
        M, C, V = feat_A.shape
        A_T_B = safe_inverse(B_T_A)
        xyz_A = (jnp.einsum('mij,vj->mvi', A_T_B[:, :3, :3], self.xyz_grid_ref) +
                 A_T_B[:, :3, 3][:, None, :])
        mem = self.ref_to_mem(xyz_A)
        idx = jnp.floor(mem + 0.5)
        dims = jnp.array([self.X, self.Y, self.Z], jnp.float32)
        valid = jnp.all((idx >= 0) & (idx <= dims - 1), axis=-1).astype(jnp.float32)
        idx = jnp.clip(idx, 0, dims - 1).astype(jnp.int32)
        flat = idx[..., 2] * (self.Y * self.X) + idx[..., 1] * self.X + idx[..., 0]
        gidx = jnp.broadcast_to(flat[:, None, :], (M, C, V))
        return jnp.take_along_axis(feat_A, gidx, axis=2) * valid[:, None, :]


# ---------------- the model ----------------
class CarlaBenchModel:
    def __init__(self, key):
        kw, kb = jax.random.split(key)
        # deterministic synthetic FeatNet3D parameters (1x1x1 conv: in=4 -> feat3D_dim)
        self.feat3d_w = jax.random.normal(kw, (hyp.feat3D_dim, 4), jnp.float32) * 0.5
        self.feat3d_b = jax.random.normal(kb, (hyp.feat3D_dim, 1), jnp.float32) * 0.1

    def prepare_common_tensors(self, feed):
        self.B = feed['set_batch_size']
        self.S = feed['set_seqlen']
        B, S = self.B, self.S
        __p = lambda x: x.reshape((B * S,) + x.shape[2:])
        __u = lambda x: x.reshape((B, S) + x.shape[1:])

        self.rgb_camXs = feed['rgb_camXs']
        self.pix_T_cams = feed['pix_T_cams']
        origin_T_camRs = feed['origin_T_camRs']
        origin_T_camXs = feed['origin_T_camXs']

        self.camX0s_T_camXs = get_camM_T_camXs(origin_T_camXs, 0)
        self.camR0s_T_camRs = get_camM_T_camXs(origin_T_camRs, 0)
        self.camRs_T_camXs = __u(safe_inverse(__p(origin_T_camRs)) @ __p(origin_T_camXs))
        self.camXs_T_camRs = __u(safe_inverse(__p(self.camRs_T_camXs)))
        self.camXs_T_camX0s = __u(safe_inverse(__p(self.camX0s_T_camXs)))
        self.camX0_T_camR0 = self.camX0s_T_camXs[:, 0] @ self.camXs_T_camRs[:, 0]
        self.camR0s_T_camXs = self.camR0s_T_camRs @ self.camRs_T_camXs

        self.Z, self.Y, self.X = hyp.Z, hyp.Y, hyp.X
        # deterministic stand-in for the np.random.uniform scene-centroid draw
        self.vox_util = VoxUtil(feed['scene_centroid'], self.Z, self.Y, self.X)

        xyz_camXs = feed['xyz_camXs']                       # [B,S,N,3]
        self.xyz_camXs = xyz_camXs
        M = B * S
        N = xyz_camXs.shape[2]

        # ONE fused Pallas call: apply_4x4 + Ref2Mem + voxelize for 4 transform
        # groups per (b,s) cloud: identity (camXs), camRs, camX0s, camR0s.
        eye = jnp.broadcast_to(jnp.eye(4, dtype=jnp.float32), (M, 4, 4))
        T_groups = jnp.stack([eye,
                              __p(self.camRs_T_camXs),
                              __p(self.camX0s_T_camXs),
                              __p(self.camR0s_T_camXs)], axis=1)   # [M,4,4,4]
        xyz_p = jnp.transpose(__p(xyz_camXs), (0, 2, 1))            # [M,3,N]
        xyz_all, occ_all = self.vox_util.transform_and_voxelize(
            T_groups.reshape(M * 4, 4, 4), xyz_p, n_groups=4)
        xyz_all = xyz_all.reshape(M, 4, 3, N)
        occ_all = occ_all.reshape(M, 4, 1, self.vox_util.V)
        to_pts = lambda a: __u(jnp.transpose(a, (0, 2, 1)))         # [M,3,N] -> [B,S,N,3]
        self.xyz_camRs = to_pts(xyz_all[:, 1])
        self.xyz_camX0s = to_pts(xyz_all[:, 2])
        self.xyz_camR0s = to_pts(xyz_all[:, 3])
        self.occ_memXs = __u(occ_all[:, 0])
        self.occ_memRs = __u(occ_all[:, 1])
        self.occ_memX0s = __u(occ_all[:, 2])
        self.occ_memR0s = __u(occ_all[:, 3])
        # TODO(synk): half/quarter-resolution occ grids only feed OccNet/summaries; omitted.
        self.unp_memXs = __u(self.vox_util.unproject_rgb_to_mem(__p(self.rgb_camXs),
                                                                __p(self.pix_T_cams)))
        self.unp_memRs = __u(self.vox_util.apply_4x4s_to_voxs(__p(self.camRs_T_camXs),
                                                              __p(self.unp_memXs)))
        # TODO(synk): summ_writer / tensorboard visualisation has no kernel equivalent; omitted.

    def run_train(self, feed):
        B, S = self.B, self.S
        total_loss = jnp.float32(0.0)
        results = {}
        if hyp.do_feat3D:
            Sm = S - 1
            M1 = B * Sm
            __pm = lambda x: x.reshape((B * Sm,) + x.shape[2:])
            __um = lambda x: x.reshape((B, Sm) + x.shape[1:])
            # ONE batched featnet3D call: frames 1..S-1 (camX view) + frame 0 (camR view)
            occ_cat = jnp.concatenate([__pm(self.occ_memXs[:, 1:]),
                                       self.occ_memRs[:, 0]], axis=0)
            unp_cat = jnp.concatenate([__pm(self.unp_memXs[:, 1:]),
                                       self.unp_memRs[:, 0]], axis=0)
            feat_cat = featnet3d_pallas(occ_cat, unp_cat, self.feat3d_w, self.feat3d_b)
            feat_memXs_ = feat_cat[:M1]
            altfeat_memR = feat_cat[M1:]
            feat_memXs = __um(feat_memXs_)
            valid_memXs = jnp.ones_like(feat_memXs[:, :, 0:1])
            feat3D_loss = jnp.float32(0.0)  # TODO(synk): FeatNet3D smoothness loss not reproduced.
            total_loss = total_loss + feat3D_loss
            feat_memRs = __um(self.vox_util.apply_4x4s_to_voxs(
                __pm(self.camRs_T_camXs[:, 1:]), feat_memXs_))
            valid_memRs = __um(self.vox_util.apply_4x4s_to_voxs(
                __pm(self.camRs_T_camXs[:, 1:]), __pm(valid_memXs)))
            # masked temporal aggregation (Pallas reduction kernel)
            feat_memR, valid_memR = masked_mean_pallas(feat_memRs, valid_memRs)
            results.update(feat_memR=feat_memR, altfeat_memR=altfeat_memR,
                           valid_memR=valid_memR)
        # hyp.do_occ / do_view / do_emb2D / do_emb3D disabled in this config.
        # TODO(synk): OccNet/ViewNet/EmbNet heads not defined in the reference snippet.
        return total_loss, results, False

    def forward(self, feed):
        set_name = feed['set_name']
        if set_name in ('train', 'val'):
            self.prepare_common_tensors(feed)
            return self.run_train(feed)
        # TODO(synk): test-path tracking (utils_track / lrt box logic) not reproduced.
        raise NotImplementedError('only train/val path implemented')


# ---------------- main ----------------
if __name__ == "__main__":
    B, S, H, W, N = 2, 2, 16, 16, 128
    key = jax.random.PRNGKey(0)
    k = jax.random.split(key, 8)

    rgb_camXs = jax.random.uniform(k[0], (B, S, 3, H, W), jnp.float32, -0.5, 0.5)

    fx = fy = float(W)
    cxp, cyp = W / 2.0, H / 2.0
    pix = jnp.array([[fx, 0, cxp, 0], [0, fy, cyp, 0],
                     [0, 0, 1, 0], [0, 0, 0, 1]], jnp.float32)
    pix_T_cams = jnp.broadcast_to(pix, (B, S, 4, 4))

    def make_rigid(kk, n):
        ka, kt = jax.random.split(kk)
        th = jax.random.uniform(ka, (n,), jnp.float32, -0.1, 0.1)
        t = jax.random.uniform(kt, (n, 3), jnp.float32, -0.5, 0.5)
        c, s = jnp.cos(th), jnp.sin(th)
        z = jnp.zeros_like(th)
        o = jnp.ones_like(th)
        R = jnp.stack([jnp.stack([c, z, s], -1),
                       jnp.stack([z, o, z], -1),
                       jnp.stack([-s, z, c], -1)], -2)
        T = jnp.concatenate(
            [jnp.concatenate([R, t[:, :, None]], -1),
             jnp.broadcast_to(jnp.array([0.0, 0.0, 0.0, 1.0], jnp.float32), (n, 1, 4))],
            axis=-2)
        return T

    origin_T_camXs = make_rigid(k[1], B * S).reshape(B, S, 4, 4)
    origin_T_camRs = make_rigid(k[2], B * S).reshape(B, S, 4, 4)

    xs = jax.random.uniform(k[3], (B, S, N, 1), jnp.float32, -6.0, 6.0)
    ys = jax.random.uniform(k[4], (B, S, N, 1), jnp.float32, -3.0, 3.0)
    zs = jax.random.uniform(k[5], (B, S, N, 1), jnp.float32, 12.0, 24.0)
    xyz_camXs = jnp.concatenate([xs, ys, zs], axis=-1)

    feed = dict(set_name='train', set_batch_size=B, set_seqlen=S,
                rgb_camXs=rgb_camXs, pix_T_cams=pix_T_cams,
                origin_T_camRs=origin_T_camRs, origin_T_camXs=origin_T_camXs,
                xyz_camXs=xyz_camXs,
                scene_centroid=(0.0, 0.0, 18.0))

    model = CarlaBenchModel(k[6])
    total_loss, results, early_return = model.forward(feed)
    jax.block_until_ready((total_loss, results))
    print("KERNEL_OK")
</pallas_src>

<mosaic_0001>
module attributes {stable_mosaic.version = 11 : i64} {
  func.func @kernel(%arg0: i32, %arg1: i32, %arg2: memref<16x16xf32, #tpu.memory_space<smem>>, %arg3: memref<2x3x128xf32, #tpu.memory_space<vmem>>, %arg4: memref<8x3x128xf32, #tpu.memory_space<vmem>>, %arg5: memref<8x2048xf32, #tpu.memory_space<vmem>>, %arg6: memref<8x128xf32, #tpu.memory_space<vmem>>) attributes {dimension_semantics = [#tpu.dimension_semantics<parallel>, #tpu.dimension_semantics<arbitrary>], iteration_bounds = array<i64: 2, 2>, scalar_prefetch = 0 : i64, scratch_operands = 1 : i64, tpu.core_type = #tpu.core_type<tc>, window_params = [{transform_indices = @transform_0, window_bounds = array<i64: 16, 16>}, {transform_indices = @transform_1, window_bounds = array<i64: 2, 3, 128>}, {transform_indices = @transform_2, window_bounds = array<i64: 8, 3, 128>}, {transform_indices = @transform_3, window_bounds = array<i64: 8, 2048>}]} {
    %c0_i32 = arith.constant 0 : i32
    %0 = arith.cmpi eq, %arg1, %c0_i32 : i32
    %1 = arith.extui %0 : i1 to i32
    %c0_i32_0 = arith.constant 0 : i32
    %2 = arith.cmpi ne, %1, %c0_i32_0 : i32
    scf.if %2 {
      %c0_132 = arith.constant 0 : index
      %c0_133 = arith.constant 0 : index
      %c0_134 = arith.constant 0 : index
      %780 = vector.load %arg3[%c0_132, %c0_133, %c0_134] : memref<2x3x128xf32, #tpu.memory_space<vmem>>, vector<1x1x128xf32>
      %781 = vector.shape_cast %780 : vector<1x1x128xf32> to vector<1x128xf32>
      %c0_135 = arith.constant 0 : index
      %c1 = arith.constant 1 : index
      %c0_136 = arith.constant 0 : index
      %782 = vector.load %arg3[%c0_135, %c1, %c0_136] : memref<2x3x128xf32, #tpu.memory_space<vmem>>, vector<1x1x128xf32>
      %783 = vector.shape_cast %782 : vector<1x1x128xf32> to vector<1x128xf32>
      %c0_137 = arith.constant 0 : index
      %c2 = arith.constant 2 : index
      %c0_138 = arith.constant 0 : index
      %784 = vector.load %arg3[%c0_137, %c2, %c0_138] : memref<2x3x128xf32, #tpu.memory_space<vmem>>, vector<1x1x128xf32>
      %785 = vector.shape_cast %784 : vector<1x1x128xf32> to vector<1x128xf32>
      %c2_i32 = arith.constant 2 : i32
      %786 = arith.muli %arg0, %c2_i32 : i32
      %c0_i32_139 = arith.constant 0 : i32
      %787 = arith.addi %786, %c0_i32_139 : i32
      %c4_i32 = arith.constant 4 : i32
      %788 = arith.muli %787, %c4_i32 : i32
      %c0_i32_140 = arith.constant 0 : i32
      %789 = arith.addi %788, %c0_i32_140 : i32
      %790 = arith.index_cast %789 : i32 to index
      %c0_141 = arith.constant 0 : index
      %791 = memref.load %arg2[%790, %c0_141] : memref<16x16xf32, #tpu.memory_space<smem>>
      %792 = vector.broadcast %791 : f32 to vector<1x128xf32>
      %793 = arith.mulf %792, %781 : vector<1x128xf32>
      %794 = arith.index_cast %789 : i32 to index
      %c1_142 = arith.constant 1 : index
      %795 = memref.load %arg2[%794, %c1_142] : memref<16x16xf32, #tpu.memory_space<smem>>
      %796 = vector.broadcast %795 : f32 to vector<1x128xf32>
      %797 = arith.mulf %796, %783 : vector<1x128xf32>
      %798 = arith.addf %793, %797 : vector<1x128xf32>
      %799 = arith.index_cast %789 : i32 to index
      %c2_143 = arith.constant 2 : index
      %800 = memref.load %arg2[%799, %c2_143] : memref<16x16xf32, #tpu.memory_space<smem>>
      %801 = vector.broadcast %800 : f32 to vector<1x128xf32>
      %802 = arith.mulf %801, %785 : vector<1x128xf32>
      %803 = arith.addf %798, %802 : vector<1x128xf32>
      %804 = arith.index_cast %789 : i32 to index
      %c3 = arith.constant 3 : index
      %805 = memref.load %arg2[%804, %c3] : memref<16x16xf32, #tpu.memory_space<smem>>
      %806 = vector.broadcast %805 : f32 to vector<1x128xf32>
      %807 = arith.addf %803, %806 : vector<1x128xf32>
      %808 = arith.index_cast %789 : i32 to index
      %c4 = arith.constant 4 : index
      %809 = memref.load %arg2[%808, %c4] : memref<16x16xf32, #tpu.memory_space<smem>>
      %810 = vector.broadcast %809 : f32 to vector<1x128xf32>
      %811 = arith.mulf %810, %781 : vector<1x128xf32>
      %812 = arith.index_cast %789 : i32 to index
      %c5 = arith.constant 5 : index
      %813 = memref.load %arg2[%812, %c5] : memref<16x16xf32, #tpu.memory_space<smem>>
      %814 = vector.broadcast %813 : f32 to vector<1x128xf32>
      %815 = arith.mulf %814, %783 : vector<1x128xf32>
      %816 = arith.addf %811, %815 : vector<1x128xf32>
      %817 = arith.index_cast %789 : i32 to index
      %c6 = arith.constant 6 : index
      %818 = memref.load %arg2[%817, %c6] : memref<16x16xf32, #tpu.memory_space<smem>>
      %819 = vector.broadcast %818 : f32 to vector<1x128xf32>
      %820 = arith.mulf %819, %785 : vector<1x128xf32>
      %821 = arith.addf %816, %820 : vector<1x128xf32>
      %822 = arith.index_cast %789 : i32 to index
      %c7 = arith.constant 7 : index
      %823 = memref.load %arg2[%822, %c7] : memref<16x16xf32, #tpu.memory_space<smem>>
      %824 = vector.broadcast %823 : f32 to vector<1x128xf32>
      %825 = arith.addf %821, %824 : vector<1x128xf32>
      %826 = arith.index_cast %789 : i32 to index
      %c8 = arith.constant 8 : index
      %827 = memref.load %arg2[%826, %c8] : memref<16x16xf32, #tpu.memory_space<smem>>
      %828 = vector.broadcast %827 : f32 to vector<1x128xf32>
      %829 = arith.mulf %828, %781 : vector<1x128xf32>
      %830 = arith.index_cast %789 : i32 to index
      %c9 = arith.constant 9 : index
      %831 = memref.load %arg2[%830, %c9] : memref<16x16xf32, #tpu.memory_space<smem>>
      %832 = vector.broadcast %831 : f32 to vector<1x128xf32>
      %833 = arith.mulf %832, %783 : vector<1x128xf32>
      %834 = arith.addf %829, %833 : vector<1x128xf32>
      %835 = arith.index_cast %789 : i32 to index
      %c10 = arith.constant 10 : index
      %836 = memref.load %arg2[%835, %c10] : memref<16x16xf32, #tpu.memory_space<smem>>
      %837 = vector.broadcast %836 : f32 to vector<1x128xf32>
      %838 = arith.mulf %837, %785 : vector<1x128xf32>
      %839 = arith.addf %834, %838 : vector<1x128xf32>
      %840 = arith.index_cast %789 : i32 to index
      %c11 = arith.constant 11 : index
      %841 = memref.load %arg2[%840, %c11] : memref<16x16xf32, #tpu.memory_space<smem>>
      %842 = vector.broadcast %841 : f32 to vector<1x128xf32>
      %843 = arith.addf %839, %842 : vector<1x128xf32>
      %c0_144 = arith.constant 0 : index
      %c0_145 = arith.constant 0 : index
      %c0_146 = arith.constant 0 : index
      %844 = vector.load %arg4[%c0_144, %c0_145, %c0_146] : memref<8x3x128xf32, #tpu.memory_space<vmem>>, vector<1x1x128xf32>
      %845 = vector.shape_cast %844 : vector<1x1x128xf32> to vector<1x128xf32>
      %846 = vector.shape_cast %807 : vector<1x128xf32> to vector<1x1x128xf32>
      tpu.vector_store %arg4[%c0_144, %c0_145, %c0_146], %846 {strides = array<i32>} : memref<8x3x128xf32, #tpu.memory_space<vmem>>, vector<1x1x128xf32>,
      %c0_147 = arith.constant 0 : index
      %c1_148 = arith.constant 1 : index
      %c0_149 = arith.constant 0 : index
      %847 = vector.load %arg4[%c0_147, %c1_148, %c0_149] : memref<8x3x128xf32, #tpu.memory_space<vmem>>, vector<1x1x128xf32>
      %848 = vector.shape_cast %847 : vector<1x1x128xf32> to vector<1x128xf32>
      %849 = vector.shape_cast %825 : vector<1x128xf32> to vector<1x1x128xf32>
      tpu.vector_store %arg4[%c0_147, %c1_148, %c0_149], %849 {strides = array<i32>} : memref<8x3x128xf32, #tpu.memory_space<vmem>>, vector<1x1x128xf32>,
      %c0_150 = arith.constant 0 : index
      %c2_151 = arith.constant 2 : index
      %c0_152 = arith.constant 0 : index
      %850 = vector.load %arg4[%c0_150, %c2_151, %c0_152] : memref<8x3x128xf32, #tpu.memory_space<vmem>>, vector<1x1x128xf32>
      %851 = vector.shape_cast %850 : vector<1x1x128xf32> to vector<1x128xf32>
      %852 = vector.shape_cast %843 : vector<1x128xf32> to vector<1x1x128xf32>
      tpu.vector_store %arg4[%c0_150, %c2_151, %c0_152], %852 {strides = array<i32>} : memref<8x3x128xf32, #tpu.memory_space<vmem>>, vector<1x1x128xf32>,
      %cst_153 = arith.constant -8.000000e+00 : f32
      %853 = vector.broadcast %cst_153 : f32 to vector<1x128xf32>
      %854 = arith.subf %807, %853 : vector<1x128xf32>
      %cst_154 = arith.constant 1.000000e+00 : f32
      %855 = vector.broadcast %cst_154 : f32 to vector<1x128xf32>
      %856 = arith.mulf %854, %855 : vector<1x128xf32>
      %cst_155 = arith.constant 5.000000e-01 : f32
      %857 = vector.broadcast %cst_155 : f32 to vector<1x128xf32>
      %858 = arith.subf %856, %857 : vector<1x128xf32>
      %cst_156 = arith.constant -8.000000e+00 : f32
      %859 = vector.broadcast %cst_156 : f32 to vector<1x128xf32>
      %860 = arith.subf %825, %859 : vector<1x128xf32>
      %cst_157 = arith.constant 1.000000e+00 : f32
      %861 = vector.broadcast %cst_157 : f32 to vector<1x128xf32>
      %862 = arith.mulf %860, %861 : vector<1x128xf32>
      %cst_158 = arith.constant 5.000000e-01 : f32
      %863 = vector.broadcast %cst_158 : f32 to vector<1x128xf32>
      %864 = arith.subf %862, %863 : vector<1x128xf32>
      %cst_159 = arith.constant 1.000000e+01 : f32
      %865 = vector.broadcast %cst_159 : f32 to vector<1x128xf32>
      %866 = arith.subf %843, %865 : vector<1x128xf32>
      %cst_160 = arith.constant 1.000000e+00 : f32
      %867 = vector.broadcast %cst_160 : f32 to vector<1x128xf32>
      %868 = arith.mulf %866, %867 : vector<1x128xf32>
      %cst_161 = arith.constant 5.000000e-01 : f32
      %869 = vector.broadcast %cst_161 : f32 to vector<1x128xf32>
      %870 = arith.subf %868, %869 : vector<1x128xf32>
      %cst_162 = arith.constant 5.000000e-01 : f32
      %871 = vector.broadcast %cst_162 : f32 to vector<1x128xf32>
      %872 = arith.addf %858, %871 : vector<1x128xf32>
      %873 = math.floor %872 : vector<1x128xf32>
      %cst_163 = arith.constant 5.000000e-01 : f32
      %874 = vector.broadcast %cst_163 : f32 to vector<1x128xf32>
      %875 = arith.addf %864, %874 : vector<1x128xf32>
      %876 = math.floor %875 : vector<1x128xf32>
      %cst_164 = arith.constant 5.000000e-01 : f32
      %877 = vector.broadcast %cst_164 : f32 to vector<1x128xf32>
      %878 = arith.addf %870, %877 : vector<1x128xf32>
      %879 = math.floor %878 : vector<1x128xf32>
      %cst_165 = arith.constant 0.000000e+00 : f32
      %880 = vector.broadcast %cst_165 : f32 to vector<1x128xf32>
      %881 = arith.cmpf oge, %873, %880 : vector<1x128xf32>
      %cst_166 = arith.constant 1.500000e+01 : f32
      %882 = vector.broadcast %cst_166 : f32 to vector<1x128xf32>
      %883 = arith.cmpf ole, %873, %882 : vector<1x128xf32>
      %884 = arith.andi %881, %883 : vector<1x128xi1>
      %cst_167 = arith.constant 0.000000e+00 : f32
      %885 = vector.broadcast %cst_167 : f32 to vector<1x128xf32>
      %886 = arith.cmpf oge, %876, %885 : vector<1x128xf32>
      %887 = arith.andi %884, %886 : vector<1x128xi1>
      %cst_168 = arith.constant 1.500000e+01 : f32
      %888 = vector.broadcast %cst_168 : f32 to vector<1x128xf32>
      %889 = arith.cmpf ole, %876, %888 : vector<1x128xf32>
      %890 = arith.andi %887, %889 : vector<1x128xi1>
      %cst_169 = arith.constant 0.000000e+00 : f32
      %891 = vector.broadcast %cst_169 : f32 to vector<1x128xf32>
      %892 = arith.cmpf oge, %879, %891 : vector<1x128xf32>
      %893 = arith.andi %890, %892 : vector<1x128xi1>
      %cst_170 = arith.constant 1.500000e+01 : f32
      %894 = vector.broadcast %cst_170 : f32 to vector<1x128xf32>
      %895 = arith.cmpf ole, %879, %894 : vector<1x128xf32>
      %896 = arith.andi %893, %895 : vector<1x128xi1>
      %cst_171 = arith.constant 2.560000e+02 : f32
      %897 = vector.broadcast %cst_171 : f32 to vector<1x128xf32>
      %898 = arith.mulf %879, %897 : vector<1x128xf32>
      %cst_172 = arith.constant 1.600000e+01 : f32
      %899 = vector.broadcast %cst_172 : f32 to vector<1x128xf32>
      %900 = arith.mulf %876, %899 : vector<1x128xf32>
      %901 = arith.addf %898, %900 : vector<1x128xf32>
      %902 = arith.addf %901, %873 : vector<1x128xf32>
      %cst_173 = arith.constant -1.000000e+00 : f32
      %903 = vector.broadcast %cst_173 : f32 to vector<1x128xf32>
      %904 = arith.select %896, %902, %903 : vector<1x128xi1>, vector<1x128xf32>
      %c0_174 = arith.constant 0 : index
      %c0_175 = arith.constant 0 : index
      %905 = vector.load %arg6[%c0_174, %c0_175] : memref<8x128xf32, #tpu.memory_space<vmem>>, vector<1x128xf32>
      tpu.vector_store %arg6[%c0_174, %c0_175], %904 {strides = array<i32>} : memref<8x128xf32, #tpu.memory_space<vmem>>, vector<1x128xf32>,
      %c2_i32_176 = arith.constant 2 : i32
      %906 = arith.muli %arg0, %c2_i32_176 : i32
      %c0_i32_177 = arith.constant 0 : i32
      %907 = arith.addi %906, %c0_i32_177 : i32
      %c4_i32_178 = arith.constant 4 : i32
      %908 = arith.muli %907, %c4_i32_178 : i32
      %c1_i32 = arith.constant 1 : i32
      %909 = arith.addi %908, %c1_i32 : i32
      %910 = arith.index_cast %909 : i32 to index
      %c0_179 = arith.constant 0 : index
      %911 = memref.load %arg2[%910, %c0_179] : memref<16x16xf32, #tpu.memory_space<smem>>
      %912 = vector.broadcast %911 : f32 to vector<1x128xf32>
      %913 = arith.mulf %912, %781 : vector<1x128xf32>
      %914 = arith.index_cast %909 : i32 to index
      %c1_180 = arith.constant 1 : index
      %915 = memref.load %arg2[%914, %c1_180] : memref<16x16xf32, #tpu.memory_space<smem>>
      %916 = vector.broadcast %915 : f32 to vector<1x128xf32>
      %917 = arith.mulf %916, %783 : vector<1x128xf32>
      %918 = arith.addf %913, %917 : vector<1x128xf32>
      %919 = arith.index_cast %909 : i32 to index
      %c2_181 = arith.constant 2 : index
      %920 = memref.load %arg2[%919, %c2_181] : memref<16x16xf32, #tpu.memory_space<smem>>
      %921 = vector.broadcast %920 : f32 to vector<1x128xf32>
      %922 = arith.mulf %921, %785 : vector<1x128xf32>
      %923 = arith.addf %918, %922 : vector<1x128xf32>
      %924 = arith.index_cast %909 : i32 to index
      %c3_182 = arith.constant 3 : index
      %925 = memref.load %arg2[%924, %c3_182] : memref<16x16xf32, #tpu.memory_space<smem>>
      %926 = vector.broadcast %925 : f32 to vector<1x128xf32>
      %927 = arith.addf %923, %926 : vector<1x128xf32>
      %928 = arith.index_cast %909 : i32 to index
      %c4_183 = arith.constant 4 : index
      %929 = memref.load %arg2[%928, %c4_183] : memref<16x16xf32, #tpu.memory_space<smem>>
      %930 = vector.broadcast %929 : f32 to vector<1x128xf32>
      %931 = arith.mulf %930, %781 : vector<1x128xf32>
      %932 = arith.index_cast %909 : i32 to index
      %c5_184 = arith.constant 5 : index
      %933 = memref.load %arg2[%932, %c5_184] : memref<16x16xf32, #tpu.memory_space<smem>>
      %934 = vector.broadcast %933 : f32 to vector<1x128xf32>
      %935 = arith.mulf %934, %783 : vector<1x128xf32>
      %936 = arith.addf %931, %935 : vector<1x128xf32>
      %937 = arith.index_cast %909 : i32 to index
      %c6_185 = arith.constant 6 : index
      %938 = memref.load %arg2[%937, %c6_185] : memref<16x16xf32, #tpu.memory_space<smem>>
      %939 = vector.broadcast %938 : f32 to vector<1x128xf32>
      %940 = arith.mulf %939, %785 : vector<1x128xf32>
      %941 = arith.addf %936, %940 : vector<1x128xf32>
      %942 = arith.index_cast %909 : i32 to index
      %c7_186 = arith.constant 7 : index
      %943 = memref.load %arg2[%942, %c7_186] : memref<16x16xf32, #tpu.memory_space<smem>>
      %944 = vector.broadcast %943 : f32 to vector<1x128xf32>
      %945 = arith.addf %941, %944 : vector<1x128xf32>
      %946 = arith.index_cast %909 : i32 to index
      %c8_187 = arith.constant 8 : index
      %947 = memref.load %arg2[%946, %c8_187] : memref<16x16xf32, #tpu.memory_space<smem>>
      %948 = vector.broadcast %947 : f32 to vector<1x128xf32>
      %949 = arith.mulf %948, %781 : vector<1x128xf32>
      %950 = arith.index_cast %909 : i32 to index
      %c9_188 = arith.constant 9 : index
      %951 = memref.load %arg2[%950, %c9_188] : memref<16x16xf32, #tpu.memory_space<smem>>
      %952 = vector.broadcast %951 : f32 to vector<1x128xf32>
      %953 = arith.mulf %952, %783 : vector<1x128xf32>
      %954 = arith.addf %949, %953 : vector<1x128xf32>
      %955 = arith.index_cast %909 : i32 to index
      %c10_189 = arith.constant 10 : index
      %956 = memref.load %arg2[%955, %c10_189] : memref<16x16xf32, #tpu.memory_space<smem>>
      %957 = vector.broadcast %956 : f32 to vector<1x128xf32>
      %958 = arith.mulf %957, %785 : vector<1x128xf32>
      %959 = arith.addf %954, %958 : vector<1x128xf32>
      %960 = arith.index_cast %909 : i32 to index
      %c11_190 = arith.constant 11 : index
      %961 = memref.load %arg2[%960, %c11_190] : memref<16x16xf32, #tpu.memory_space<smem>>
      %962 = vector.broadcast %961 : f32 to vector<1x128xf32>
      %963 = arith.addf %959, %962 : vector<1x128xf32>
      %c1_191 = arith.constant 1 : index
      %c0_192 = arith.constant 0 : index
      %c0_193 = arith.constant 0 : index
      %964 = vector.load %arg4[%c1_191, %c0_192, %c0_193] : memref<8x3x128xf32, #tpu.memory_space<vmem>>, vector<1x1x128xf32>
      %965 = vector.shape_cast %964 : vector<1x1x128xf32> to vector<1x128xf32>
      %966 = vector.shape_cast %927 : vector<1x128xf32> to vector<1x1x128xf32>
      tpu.vector_store %arg4[%c1_191, %c0_192, %c0_193], %966 {strides = array<i32>} : memref<8x3x128xf32, #tpu.memory_space<vmem>>, vector<1x1x128xf32>,
      %c1_194 = arith.constant 1 : index
      %c1_195 = arith.constant 1 : index
      %c0_196 = arith.constant 0 : index
      %967 = vector.load %arg4[%c1_194, %c1_195, %c0_196] : memref<8x3x128xf32, #tpu.memory_space<vmem>>, vector<1x1x128xf32>
      %968 = vector.shape_cast %967 : vector<1x1x128xf32> to vector<1x128xf32>
      %969 = vector.shape_cast %945 : vector<1x128xf32> to vector<1x1x128xf32>
      tpu.vector_store %arg4[%c1_194, %c1_195, %c0_196], %969 {strides = array<i32>} : memref<8x3x128xf32, #tpu.memory_space<vmem>>, vector<1x1x128xf32>,
      %c1_197 = arith.constant 1 : index
      %c2_198 = arith.constant 2 : index
      %c0_199 = arith.constant 0 : index
      %970 = vector.load %arg4[%c1_197, %c2_198, %c0_199] : memref<8x3x128xf32, #tpu.memory_space<vmem>>, vector<1x1x128xf32>
      %971 = vector.shape_cast %970 : vector<1x1x128xf32> to vector<1x128xf32>
      %972 = vector.shape_cast %963 : vector<1x128xf32> to vector<1x1x128xf32>
      tpu.vector_store %arg4[%c1_197, %c2_198, %c0_199], %972 {strides = array<i32>} : memref<8x3x128xf32, #tpu.memory_space<vmem>>, vector<1x1x128xf32>,
      %cst_200 = arith.constant -8.000000e+00 : f32
      %973 = vector.broadcast %cst_200 : f32 to vector<1x128xf32>
      %974 = arith.subf %927, %973 : vector<1x128xf32>
      %cst_201 = arith.constant 1.000000e+00 : f32
      %975 = vector.broadcast %cst_201 : f32 to vector<1x128xf32>
      %976 = arith.mulf %974, %975 : vector<1x128xf32>
      %cst_202 = arith.constant 5.000000e-01 : f32
      %977 = vector.broadcast %cst_202 : f32 to vector<1x128xf32>
      %978 = arith.subf %976, %977 : vector<1x128xf32>
      %cst_203 = arith.constant -8.000000e+00 : f32
      %979 = vector.broadcast %cst_203 : f32 to vector<1x128xf32>
      %980 = arith.subf %945, %979 : vector<1x128xf32>
      %cst_204 = arith.constant 1.000000e+00 : f32
      %981 = vector.broadcast %cst_204 : f32 to vector<1x128xf32>
      %982 = arith.mulf %980, %981 : vector<1x128xf32>
      %cst_205 = arith.constant 5.000000e-01 : f32
      %983 = vector.broadcast %cst_205 : f32 to vector<1x128xf32>
      %984 = arith.subf %982, %983 : vector<1x128xf32>
      %cst_206 = arith.constant 1.000000e+01 : f32
      %985 = vector.broadcast %cst_206 : f32 to vector<1x128xf32>
      %986 = arith.subf %963, %985 : vector<1x128xf32>
      %cst_207 = arith.constant 1.000000e+00 : f32
      %987 = vector.broadcast %cst_207 : f32 to vector<1x128xf32>
      %988 = arith.mulf %986, %987 : vector<1x128xf32>
      %cst_208 = arith.constant 5.000000e-01 : f32
      %989 = vector.broadcast %cst_208 : f32 to vector<1x128xf32>
      %990 = arith.subf %988, %989 : vector<1x128xf32>
      %cst_209 = arith.constant 5.000000e-01 : f32
      %991 = vector.broadcast %cst_209 : f32 to vector<1x128xf32>
      %992 = arith.addf %978, %991 : vector<1x128xf32>
      %993 = math.floor %992 : vector<1x128xf32>
      %cst_210 = arith.constant 5.000000e-01 : f32
      %994 = vector.broadcast %cst_210 : f32 to vector<1x128xf32>
      %995 = arith.addf %984, %994 : vector<1x128xf32>
      %996 = math.floor %995 : vector<1x128xf32>
      %cst_211 = arith.constant 5.000000e-01 : f32
      %997 = vector.broadcast %cst_211 : f32 to vector<1x128xf32>
      %998 = arith.addf %990, %997 : vector<1x128xf32>
      %999 = math.floor %998 : vector<1x128xf32>
      %cst_212 = arith.constant 0.000000e+00 : f32
      %1000 = vector.broadcast %cst_212 : f32 to vector<1x128xf32>
      %1001 = arith.cmpf oge, %993, %1000 : vector<1x128xf32>
      %cst_213 = arith.constant 1.500000e+01 : f32
      %1002 = vector.broadcast %cst_213 : f32 to vector<1x128xf32>
      %1003 = arith.cmpf ole, %993, %1002 : vector<1x128xf32>
      %1004 = arith.andi %1001, %1003 : vector<1x128xi1>
      %cst_214 = arith.constant 0.000000e+00 : f32
      %1005 = vector.broadcast %cst_214 : f32 to vector<1x128xf32>
      %1006 = arith.cmpf oge, %996, %1005 : vector<1x128xf32>
      %1007 = arith.andi %1004, %1006 : vector<1x128xi1>
      %cst_215 = arith.constant 1.500000e+01 : f32
      %1008 = vector.broadcast %cst_215 : f32 to vector<1x128xf32>
      %1009 = arith.cmpf ole, %996, %1008 : vector<1x128xf32>
      %1010 = arith.andi %1007, %1009 : vector<1x128xi1>
      %cst_216 = arith.constant 0.000000e+00 : f32
      %1011 = vector.broadcast %cst_216 : f32 to vector<1x128xf32>
      %1012 = arith.cmpf oge, %999, %1011 : vector<1x128xf32>
      %1013 = arith.andi %1010, %1012 : vector<1x128xi1>
      %cst_217 = arith.constant 1.500000e+01 : f32
      %1014 = vector.broadcast %cst_217 : f32 to vector<1x128xf32>
      %1015 = arith.cmpf ole, %999, %1014 : vector<1x128xf32>
      %1016 = arith.andi %1013, %1015 : vector<1x128xi1>
      %cst_218 = arith.constant 2.560000e+02 : f32
      %1017 = vector.broadcast %cst_218 : f32 to vector<1x128xf32>
      %1018 = arith.mulf %999, %1017 : vector<1x128xf32>
      %cst_219 = arith.constant 1.600000e+01 : f32
      %1019 = vector.broadcast %cst_219 : f32 to vector<1x128xf32>
      %1020 = arith.mulf %996, %1019 : vector<1x128xf32>
      %1021 = arith.addf %1018, %1020 : vector<1x128xf32>
      %1022 = arith.addf %1021, %993 : vector<1x128xf32>
      %cst_220 = arith.constant -1.000000e+00 : f32
      %1023 = vector.broadcast %cst_220 : f32 to vector<1x128xf32>
      %1024 = arith.select %1016, %1022, %1023 : vector<1x128xi1>, vector<1x128xf32>
      %c1_221 = arith.constant 1 : index
      %c0_222 = arith.constant 0 : index
      %1025 = vector.load %arg6[%c1_221, %c0_222] : memref<8x128xf32, #tpu.memory_space<vmem>>, vector<1x128xf32>
      tpu.vector_store %arg6[%c1_221, %c0_222], %1024 {strides = array<i32>} : memref<8x128xf32, #tpu.memory_space<vmem>>, vector<1x128xf32>,
      %c2_i32_223 = arith.constant 2 : i32
      %1026 = arith.muli %arg0, %c2_i32_223 : i32
      %c0_i32_224 = arith.constant 0 : i32
      %1027 = arith.addi %1026, %c0_i32_224 : i32
      %c4_i32_225 = arith.constant 4 : i32
      %1028 = arith.muli %1027, %c4_i32_225 : i32
      %c2_i32_226 = arith.constant 2 : i32
      %1029 = arith.addi %1028, %c2_i32_226 : i32
      %1030 = arith.index_cast %1029 : i32 to index
      %c0_227 = arith.constant 0 : index
      %1031 = memref.load %arg2[%1030, %c0_227] : memref<16x16xf32, #tpu.memory_space<smem>>
      %1032 = vector.broadcast %1031 : f32 to vector<1x128xf32>
      %1033 = arith.mulf %1032, %781 : vector<1x128xf32>
      %1034 = arith.index_cast %1029 : i32 to index
      %c1_228 = arith.constant 1 : index
      %1035 = memref.load %arg2[%1034, %c1_228] : memref<16x16xf32, #tpu.memory_space<smem>>
      %1036 = vector.broadcast %1035 : f32 to vector<1x128xf32>
      %1037 = arith.mulf %1036, %783 : vector<1x128xf32>
      %1038 = arith.addf %1033, %1037 : vector<1x128xf32>
      %1039 = arith.index_cast %1029 : i32 to index
      %c2_229 = arith.constant 2 : index
      %1040 = memref.load %arg2[%1039, %c2_229] : memref<16x16xf32, #tpu.memory_space<smem>>
      %1041 = vector.broadcast %1040 : f32 to vector<1x128xf32>
      %1042 = arith.mulf %1041, %785 : vector<1x128xf32>
      %1043 = arith.addf %1038, %1042 : vector<1x128xf32>
      %1044 = arith.index_cast %1029 : i32 to index
      %c3_230 = arith.constant 3 : index
      %1045 = memref.load %arg2[%1044, %c3_230] : memref<16x16xf32, #tpu.memory_space<smem>>
      %1046 = vector.broadcast %1045 : f32 to vector<1x128xf32>
      %1047 = arith.addf %1043, %1046 : vector<1x128xf32>
      %1048 = arith.index_cast %1029 : i32 to index
      %c4_231 = arith.constant 4 : index
      %1049 = memref.load %arg2[%1048, %c4_231] : memref<16x16xf32, #tpu.memory_space<smem>>
      %1050 = vector.broadcast %1049 : f32 to vector<1x128xf32>
      %1051 = arith.mulf %1050, %781 : vector<1x128xf32>
      %1052 = arith.index_cast %1029 : i32 to index
      %c5_232 = arith.constant 5 : index
      %1053 = memref.load %arg2[%1052, %c5_232] : memref<16x16xf32, #tpu.memory_space<smem>>
      %1054 = vector.broadcast %1053 : f32 to vector<1x128xf32>
      %1055 = arith.mulf %1054, %783 : vector<1x128xf32>
      %1056 = arith.addf %1051, %1055 : vector<1x128xf32>
      %1057 = arith.index_cast %1029 : i32 to index
      %c6_233 = arith.constant 6 : index
      %1058 = memref.load %arg2[%1057, %c6_233] : memref<16x16xf32, #tpu.memory_space<smem>>
      %1059 = vector.broadcast %1058 : f32 to vector<1x128xf32>
      %1060 = arith.mulf %1059, %785 : vector<1x128xf32>
      %1061 = arith.addf %1056, %1060 : vector<1x128xf32>
      %1062 = arith.index_cast %1029 : i32 to index
      %c7_234 = arith.constant 7 : index
      %1063 = memref.load %arg2[%1062, %c7_234] : memref<16x16xf32, #tpu.memory_space<smem>>
      %1064 = vector.broadcast %1063 : f32 to vector<1x128xf32>
      %1065 = arith.addf %1061, %1064 : vector<1x128xf32>
      %1066 = arith.index_cast %1029 : i32 to index
      %c8_235 = arith.constant 8 : index
      %1067 = memref.load %arg2[%1066, %c8_235] : memref<16x16xf32, #tpu.memory_space<smem>>
      %1068 = vector.broadcast %1067 : f32 to vector<1x128xf32>
      %1069 = arith.mulf %1068, %781 : vector<1x128xf32>
      %1070 = arith.index_cast %1029 : i32 to index
      %c9_236 = arith.constant 9 : index
      %1071 = memref.load %arg2[%1070, %c9_236] : memref<16x16xf32, #tpu.memory_space<smem>>
      %1072 = vector.broadcast %1071 : f32 to vector<1x128xf32>
      %1073 = arith.mulf %1072, %783 : vector<1x128xf32>
      %1074 = arith.addf %1069, %1073 : vector<1x128xf32>
      %1075 = arith.index_cast %1029 : i32 to index
      %c10_237 = arith.constant 10 : index
      %1076 = memref.load %arg2[%1075, %c10_237] : memref<16x16xf32, #tpu.memory_space<smem>>
      %1077 = vector.broadcast %1076 : f32 to vector<1x128xf32>
      %1078 = arith.mulf %1077, %785 : vector<1x128xf32>
      %1079 = arith.addf %1074, %1078 : vector<1x128xf32>
      %1080 = arith.index_cast %1029 : i32 to index
      %c11_238 = arith.constant 11 : index
      %1081 = memref.load %arg2[%1080, %c11_238] : memref<16x16xf32, #tpu.memory_space<smem>>
      %1082 = vector.broadcast %1081 : f32 to vector<1x128xf32>
      %1083 = arith.addf %1079, %1082 : vector<1x128xf32>
      %c2_239 = arith.constant 2 : index
      %c0_240 = arith.constant 0 : index
      %c0_241 = arith.constant 0 : index
      %1084 = vector.load %arg4[%c2_239, %c0_240, %c0_241] : memref<8x3x128xf32, #tpu.memory_space<vmem>>, vector<1x1x128xf32>
      %1085 = vector.shape_cast %1084 : vector<1x1x128xf32> to vector<1x128xf32>
      %1086 = vector.shape_cast %1047 : vector<1x128xf32> to vector<1x1x128xf32>
      tpu.vector_store %arg4[%c2_239, %c0_240, %c0_241], %1086 {strides = array<i32>} : memref<8x3x128xf32, #tpu.memory_space<vmem>>, vector<1x1x128xf32>,
      %c2_242 = arith.constant 2 : index
      %c1_243 = arith.constant 1 : index
      %c0_244 = arith.constant 0 : index
      %1087 = vector.load %arg4[%c2_242, %c1_243, %c0_244] : memref<8x3x128xf32, #tpu.memory_space<vmem>>, vector<1x1x128xf32>
      %1088 = vector.shape_cast %1087 : vector<1x1x128xf32> to vector<1x128xf32>
      %1089 = vector.shape_cast %1065 : vector<1x128xf32> to vector<1x1x128xf32>
      tpu.vector_store %arg4[%c2_242, %c1_243, %c0_244], %1089 {strides = array<i32>} : memref<8x3x128xf32, #tpu.memory_space<vmem>>, vector<1x1x128xf32>,
      %c2_245 = arith.constant 2 : index
      %c2_246 = arith.constant 2 : index
      %c0_247 = arith.constant 0 : index
      %1090 = vector.load %arg4[%c2_245, %c2_246, %c0_247] : memref<8x3x128xf32, #tpu.memory_space<vmem>>, vector<1x1x128xf32>
      %1091 = vector.shape_cast %1090 : vector<1x1x128xf32> to vector<1x128xf32>
      %1092 = vector.shape_cast %1083 : vector<1x128xf32> to vector<1x1x128xf32>
      tpu.vector_store %arg4[%c2_245, %c2_246, %c0_247], %1092 {strides = array<i32>} : memref<8x3x128xf32, #tpu.memory_space<vmem>>, vector<1x1x128xf32>,
      %cst_248 = arith.constant -8.000000e+00 : f32
      %1093 = vector.broadcast %cst_248 : f32 to vector<1x128xf32>
      %1094 = arith.subf %1047, %1093 : vector<1x128xf32>
      %cst_249 = arith.constant 1.000000e+00 : f32
      %1095 = vector.broadcast %cst_249 : f32 to vector<1x128xf32>
      %1096 = arith.mulf %1094, %1095 : vector<1x128xf32>
      %cst_250 = arith.constant 5.000000e-01 : f32
      %1097 = vector.broadcast %cst_250 : f32 to vector<1x128xf32>
      %1098 = arith.subf %1096, %1097 : vector<1x128xf32>
      %cst_251 = arith.constant -8.000000e+00 : f32
      %1099 = vector.broadcast %cst_251 : f32 to vector<1x128xf32>
      %1100 = arith.subf %1065, %1099 : vector<1x128xf32>
      %cst_252 = arith.constant 1.000000e+00 : f32
      %1101 = vector.broadcast %cst_252 : f32 to vector<1x128xf32>
      %1102 = arith.mulf %1100, %1101 : vector<1x128xf32>
      %cst_253 = arith.constant 5.000000e-01 : f32
      %1103 = vector.broadcast %cst_253 : f32 to vector<1x128xf32>
      %1104 = arith.subf %1102, %1103 : vector<1x128xf32>
      %cst_254 = arith.constant 1.000000e+01 : f32
      %1105 = vector.broadcast %cst_254 : f32 to vector<1x128xf32>
      %1106 = arith.subf %1083, %1105 : vector<1x128xf32>
      %cst_255 = arith.constant 1.000000e+00 : f32
      %1107 = vector.broadcast %cst_255 : f32 to vector<1x128xf32>
      %1108 = arith.mulf %1106, %1107 : vector<1x128xf32>
      %cst_256 = arith.constant 5.000000e-01 : f32
      %1109 = vector.broadcast %cst_256 : f32 to vector<1x128xf32>
      %1110 = arith.subf %1108, %1109 : vector<1x128xf32>
      %cst_257 = arith.constant 5.000000e-01 : f32
      %1111 = vector.broadcast %cst_257 : f32 to vector<1x128xf32>
      %1112 = arith.addf %1098, %1111 : vector<1x128xf32>
      %1113 = math.floor %1112 : vector<1x128xf32>
      %cst_258 = arith.constant 5.000000e-01 : f32
      %1114 = vector.broadcast %cst_258 : f32 to vector<1x128xf32>
      %1115 = arith.addf %1104, %1114 : vector<1x128xf32>
      %1116 = math.floor %1115 : vector<1x128xf32>
      %cst_259 = arith.constant 5.000000e-01 : f32
      %1117 = vector.broadcast %cst_259 : f32 to vector<1x128xf32>
      %1118 = arith.addf %1110, %1117 : vector<1x128xf32>
      %1119 = math.floor %1118 : vector<1x128xf32>
      %cst_260 = arith.constant 0.000000e+00 : f32
      %1120 = vector.broadcast %cst_260 : f32 to vector<1x128xf32>
      %1121 = arith.cmpf oge, %1113, %1120 : vector<1x128xf32>
      %cst_261 = arith.constant 1.500000e+01 : f32
      %1122 = vector.broadcast %cst_261 : f32 to vector<1x128xf32>
      %1123 = arith.cmpf ole, %1113, %1122 : vector<1x128xf32>
      %1124 = arith.andi %1121, %1123 : vector<1x128xi1>
      %cst_262 = arith.constant 0.000000e+00 : f32
      %1125 = vector.broadcast %cst_262 : f32 to vector<1x128xf32>
      %1126 = arith.cmpf oge, %1116, %1125 : vector<1x128xf32>
      %1127 = arith.andi %1124, %1126 : vector<1x128xi1>
      %cst_263 = arith.constant 1.500000e+01 : f32
      %1128 = vector.broadcast %cst_263 : f32 to vector<1x128xf32>
      %1129 = arith.cmpf ole, %1116, %1128 : vector<1x128xf32>
      %1130 = arith.andi %1127, %1129 : vector<1x128xi1>
      %cst_264 = arith.constant 0.000000e+00 : f32
      %1131 = vector.broadcast %cst_264 : f32 to vector<1x128xf32>
      %1132 = arith.cmpf oge, %1119, %1131 : vector<1x128xf32>
      %1133 = arith.andi %1130, %1132 : vector<1x128xi1>
      %cst_265 = arith.constant 1.500000e+01 : f32
      %1134 = vector.broadcast %cst_265 : f32 to vector<1x128xf32>
      %1135 = arith.cmpf ole, %1119, %1134 : vector<1x128xf32>
      %1136 = arith.andi %1133, %1135 : vector<1x128xi1>
      %cst_266 = arith.constant 2.560000e+02 : f32
      %1137 = vector.broadcast %cst_266 : f32 to vector<1x128xf32>
      %1138 = arith.mulf %1119, %1137 : vector<1x128xf32>
      %cst_267 = arith.constant 1.600000e+01 : f32
      %1139 = vector.broadcast %cst_267 : f32 to vector<1x128xf32>
      %1140 = arith.mulf %1116, %1139 : vector<1x128xf32>
      %1141 = arith.addf %1138, %1140 : vector<1x128xf32>
      %1142 = arith.addf %1141, %1113 : vector<1x128xf32>
      %cst_268 = arith.constant -1.000000e+00 : f32
      %1143 = vector.broadcast %cst_268 : f32 to vector<1x128xf32>
      %1144 = arith.select %1136, %1142, %1143 : vector<1x128xi1>, vector<1x128xf32>
      %c2_269 = arith.constant 2 : index
      %c0_270 = arith.constant 0 : index
      %1145 = vector.load %arg6[%c2_269, %c0_270] : memref<8x128xf32, #tpu.memory_space<vmem>>, vector<1x128xf32>
      tpu.vector_store %arg6[%c2_269, %c0_270], %1144 {strides = array<i32>} : memref<8x128xf32, #tpu.memory_space<vmem>>, vector<1x128xf32>,
      %c2_i32_271 = arith.constant 2 : i32
      %1146 = arith.muli %arg0, %c2_i32_271 : i32
      %c0_i32_272 = arith.constant 0 : i32
      %1147 = arith.addi %1146, %c0_i32_272 : i32
      %c4_i32_273 = arith.constant 4 : i32
      %1148 = arith.muli %1147, %c4_i32_273 : i32
      %c3_i32 = arith.constant 3 : i32
      %1149 = arith.addi %1148, %c3_i32 : i32
      %1150 = arith.index_cast %1149 : i32 to index
      %c0_274 = arith.constant 0 : index
      %1151 = memref.load %arg2[%1150, %c0_274] : memref<16x16xf32, #tpu.memory_space<smem>>
      %1152 = vector.broadcast %1151 : f32 to vector<1x128xf32>
      %1153 = arith.mulf %1152, %781 : vector<1x128xf32>
      %1154 = arith.index_cast %1149 : i32 to index
      %c1_275 = arith.constant 1 : index
      %1155 = memref.load %arg2[%1154, %c1_275] : memref<16x16xf32, #tpu.memory_space<smem>>
      %1156 = vector.broadcast %1155 : f32 to vector<1x128xf32>
      %1157 = arith.mulf %1156, %783 : vector<1x128xf32>
      %1158 = arith.addf %1153, %1157 : vector<1x128xf32>
      %1159 = arith.index_cast %1149 : i32 to index
      %c2_276 = arith.constant 2 : index
      %1160 = memref.load %arg2[%1159, %c2_276] : memref<16x16xf32, #tpu.memory_space<smem>>
      %1161 = vector.broadcast %1160 : f32 to vector<1x128xf32>
      %1162 = arith.mulf %1161, %785 : vector<1x128xf32>
      %1163 = arith.addf %1158, %1162 : vector<1x128xf32>
      %1164 = arith.index_cast %1149 : i32 to index
      %c3_277 = arith.constant 3 : index
      %1165 = memref.load %arg2[%1164, %c3_277] : memref<16x16xf32, #tpu.memory_space<smem>>
      %1166 = vector.broadcast %1165 : f32 to vector<1x128xf32>
      %1167 = arith.addf %1163, %1166 : vector<1x128xf32>
      %1168 = arith.index_cast %1149 : i32 to index
      %c4_278 = arith.constant 4 : index
      %1169 = memref.load %arg2[%1168, %c4_278] : memref<16x16xf32, #tpu.memory_space<smem>>
      %1170 = vector.broadcast %1169 : f32 to vector<1x128xf32>
      %1171 = arith.mulf %1170, %781 : vector<1x128xf32>
      %1172 = arith.index_cast %1149 : i32 to index
      %c5_279 = arith.constant 5 : index
      %1173 = memref.load %arg2[%1172, %c5_279] : memref<16x16xf32, #tpu.memory_space<smem>>
      %1174 = vector.broadcast %1173 : f32 to vector<1x128xf32>
      %1175 = arith.mulf %1174, %783 : vector<1x128xf32>
      %1176 = arith.addf %1171, %1175 : vector<1x128xf32>
      %1177 = arith.index_cast %1149 : i32 to index
      %c6_280 = arith.constant 6 : index
      %1178 = memref.load %arg2[%1177, %c6_280] : memref<16x16xf32, #tpu.memory_space<smem>>
      %1179 = vector.broadcast %1178 : f32 to vector<1x128xf32>
      %1180 = arith.mulf %1179, %785 : vector<1x128xf32>
      %1181 = arith.addf %1176, %1180 : vector<1x128xf32>
      %1182 = arith.index_cast %1149 : i32 to index
      %c7_281 = arith.constant 7 : index
      %1183 = memref.load %arg2[%1182, %c7_281] : memref<16x16xf32, #tpu.memory_space<smem>>
      %1184 = vector.broadcast %1183 : f32 to vector<1x128xf32>
      %1185 = arith.addf %1181, %1184 : vector<1x128xf32>
      %1186 = arith.index_cast %1149 : i32 to index
      %c8_282 = arith.constant 8 : index
      %1187 = memref.load %arg2[%1186, %c8_282] : memref<16x16xf32, #tpu.memory_space<smem>>
      %1188 = vector.broadcast %1187 : f32 to vector<1x128xf32>
      %1189 = arith.mulf %1188, %781 : vector<1x128xf32>
      %1190 = arith.index_cast %1149 : i32 to index
      %c9_283 = arith.constant 9 : index
      %1191 = memref.load %arg2[%1190, %c9_283] : memref<16x16xf32, #tpu.memory_space<smem>>
      %1192 = vector.broadcast %1191 : f32 to vector<1x128xf32>
      %1193 = arith.mulf %1192, %783 : vector<1x128xf32>
      %1194 = arith.addf %1189, %1193 : vector<1x128xf32>
      %1195 = arith.index_cast %1149 : i32 to index
      %c10_284 = arith.constant 10 : index
      %1196 = memref.load %arg2[%1195, %c10_284] : memref<16x16xf32, #tpu.memory_space<smem>>
      %1197 = vector.broadcast %1196 : f32 to vector<1x128xf32>
      %1198 = arith.mulf %1197, %785 : vector<1x128xf32>
      %1199 = arith.addf %1194, %1198 : vector<1x128xf32>
      %1200 = arith.index_cast %1149 : i32 to index
      %c11_285 = arith.constant 11 : index
      %1201 = memref.load %arg2[%1200, %c11_285] : memref<16x16xf32, #tpu.memory_space<smem>>
      %1202 = vector.broadcast %1201 : f32 to vector<1x128xf32>
      %1203 = arith.addf %1199, %1202 : vector<1x128xf32>
      %c3_286 = arith.constant 3 : index
      %c0_287 = arith.constant 0 : index
      %c0_288 = arith.constant 0 : index
      %1204 = vector.load %arg4[%c3_286, %c0_287, %c0_288] : memref<8x3x128xf32, #tpu.memory_space<vmem>>, vector<1x1x128xf32>
      %1205 = vector.shape_cast %1204 : vector<1x1x128xf32> to vector<1x128xf32>
      %1206 = vector.shape_cast %1167 : vector<1x128xf32> to vector<1x1x128xf32>
      tpu.vector_store %arg4[%c3_286, %c0_287, %c0_288], %1206 {strides = array<i32>} : memref<8x3x128xf32, #tpu.memory_space<vmem>>, vector<1x1x128xf32>,
      %c3_289 = arith.constant 3 : index
      %c1_290 = arith.constant 1 : index
      %c0_291 = arith.constant 0 : index
      %1207 = vector.load %arg4[%c3_289, %c1_290, %c0_291] : memref<8x3x128xf32, #tpu.memory_space<vmem>>, vector<1x1x128xf32>
      %1208 = vector.shape_cast %1207 : vector<1x1x128xf32> to vector<1x128xf32>
      %1209 = vector.shape_cast %1185 : vector<1x128xf32> to vector<1x1x128xf32>
      tpu.vector_store %arg4[%c3_289, %c1_290, %c0_291], %1209 {strides = array<i32>} : memref<8x3x128xf32, #tpu.memory_space<vmem>>, vector<1x1x128xf32>,
      %c3_292 = arith.constant 3 : index
      %c2_293 = arith.constant 2 : index
      %c0_294 = arith.constant 0 : index
      %1210 = vector.load %arg4[%c3_292, %c2_293, %c0_294] : memref<8x3x128xf32, #tpu.memory_space<vmem>>, vector<1x1x128xf32>
      %1211 = vector.shape_cast %1210 : vector<1x1x128xf32> to vector<1x128xf32>
      %1212 = vector.shape_cast %1203 : vector<1x128xf32> to vector<1x1x128xf32>
      tpu.vector_store %arg4[%c3_292, %c2_293, %c0_294], %1212 {strides = array<i32>} : memref<8x3x128xf32, #tpu.memory_space<vmem>>, vector<1x1x128xf32>,
      %cst_295 = arith.constant -8.000000e+00 : f32
      %1213 = vector.broadcast %cst_295 : f32 to vector<1x128xf32>
      %1214 = arith.subf %1167, %1213 : vector<1x128xf32>
      %cst_296 = arith.constant 1.000000e+00 : f32
      %1215 = vector.broadcast %cst_296 : f32 to vector<1x128xf32>
      %1216 = arith.mulf %1214, %1215 : vector<1x128xf32>
      %cst_297 = arith.constant 5.000000e-01 : f32
      %1217 = vector.broadcast %cst_297 : f32 to vector<1x128xf32>
      %1218 = arith.subf %1216, %1217 : vector<1x128xf32>
      %cst_298 = arith.constant -8.000000e+00 : f32
      %1219 = vector.broadcast %cst_298 : f32 to vector<1x128xf32>
      %1220 = arith.subf %1185, %1219 : vector<1x128xf32>
      %cst_299 = arith.constant 1.000000e+00 : f32
      %1221 = vector.broadcast %cst_299 : f32 to vector<1x128xf32>
      %1222 = arith.mulf %1220, %1221 : vector<1x128xf32>
      %cst_300 = arith.constant 5.000000e-01 : f32
      %1223 = vector.broadcast %cst_300 : f32 to vector<1x128xf32>
      %1224 = arith.subf %1222, %1223 : vector<1x128xf32>
      %cst_301 = arith.constant 1.000000e+01 : f32
      %1225 = vector.broadcast %cst_301 : f32 to vector<1x128xf32>
      %1226 = arith.subf %1203, %1225 : vector<1x128xf32>
      %cst_302 = arith.constant 1.000000e+00 : f32
      %1227 = vector.broadcast %cst_302 : f32 to vector<1x128xf32>
      %1228 = arith.mulf %1226, %1227 : vector<1x128xf32>
      %cst_303 = arith.constant 5.000000e-01 : f32
      %1229 = vector.broadcast %cst_303 : f32 to vector<1x128xf32>
      %1230 = arith.subf %1228, %1229 : vector<1x128xf32>
      %cst_304 = arith.constant 5.000000e-01 : f32
      %1231 = vector.broadcast %cst_304 : f32 to vector<1x128xf32>
      %1232 = arith.addf %1218, %1231 : vector<1x128xf32>
      %1233 = math.floor %1232 : vector<1x128xf32>
      %cst_305 = arith.constant 5.000000e-01 : f32
      %1234 = vector.broadcast %cst_305 : f32 to vector<1x128xf32>
      %1235 = arith.addf %1224, %1234 : vector<1x128xf32>
      %1236 = math.floor %1235 : vector<1x128xf32>
      %cst_306 = arith.constant 5.000000e-01 : f32
      %1237 = vector.broadcast %cst_306 : f32 to vector<1x128xf32>
      %1238 = arith.addf %1230, %1237 : vector<1x128xf32>
      %1239 = math.floor %1238 : vector<1x128xf32>
      %cst_307 = arith.constant 0.000000e+00 : f32
      %1240 = vector.broadcast %cst_307 : f32 to vector<1x128xf32>
      %1241 = arith.cmpf oge, %1233, %1240 : vector<1x128xf32>
      %cst_308 = arith.constant 1.500000e+01 : f32
      %1242 = vector.broadcast %cst_308 : f32 to vector<1x128xf32>
      %1243 = arith.cmpf ole, %1233, %1242 : vector<1x128xf32>
      %1244 = arith.andi %1241, %1243 : vector<1x128xi1>
      %cst_309 = arith.constant 0.000000e+00 : f32
      %1245 = vector.broadcast %cst_309 : f32 to vector<1x128xf32>
      %1246 = arith.cmpf oge, %1236, %1245 : vector<1x128xf32>
      %1247 = arith.andi %1244, %1246 : vector<1x128xi1>
      %cst_310 = arith.constant 1.500000e+01 : f32
      %1248 = vector.broadcast %cst_310 : f32 to vector<1x128xf32>
      %1249 = arith.cmpf ole, %1236, %1248 : vector<1x128xf32>
      %1250 = arith.andi %1247, %1249 : vector<1x128xi1>
      %cst_311 = arith.constant 0.000000e+00 : f32
      %1251 = vector.broadcast %cst_311 : f32 to vector<1x128xf32>
      %1252 = arith.cmpf oge, %1239, %1251 : vector<1x128xf32>
      %1253 = arith.andi %1250, %1252 : vector<1x128xi1>
      %cst_312 = arith.constant 1.500000e+01 : f32
      %1254 = vector.broadcast %cst_312 : f32 to vector<1x128xf32>
      %1255 = arith.cmpf ole, %1239, %1254 : vector<1x128xf32>
      %1256 = arith.andi %1253, %1255 : vector<1x128xi1>
      %cst_313 = arith.constant 2.560000e+02 : f32
      %1257 = vector.broadcast %cst_313 : f32 to vector<1x128xf32>
      %1258 = arith.mulf %1239, %1257 : vector<1x128xf32>
      %cst_314 = arith.constant 1.600000e+01 : f32
      %1259 = vector.broadcast %cst_314 : f32 to vector<1x128xf32>
      %1260 = arith.mulf %1236, %1259 : vector<1x128xf32>
      %1261 = arith.addf %1258, %1260 : vector<1x128xf32>
      %1262 = arith.addf %1261, %1233 : vector<1x128xf32>
      %cst_315 = arith.constant -1.000000e+00 : f32
      %1263 = vector.broadcast %cst_315 : f32 to vector<1x128xf32>
      %1264 = arith.select %1256, %1262, %1263 : vector<1x128xi1>, vector<1x128xf32>
      %c3_316 = arith.constant 3 : index
      %c0_317 = arith.constant 0 : index
      %1265 = vector.load %arg6[%c3_316, %c0_317] : memref<8x128xf32, #tpu.memory_space<vmem>>, vector<1x128xf32>
      tpu.vector_store %arg6[%c3_316, %c0_317], %1264 {strides = array<i32>} : memref<8x128xf32, #tpu.memory_space<vmem>>, vector<1x128xf32>,
      %c1_318 = arith.constant 1 : index
      %c0_319 = arith.constant 0 : index
      %c0_320 = arith.constant 0 : index
      %1266 = vector.load %arg3[%c1_318, %c0_319, %c0_320] : memref<2x3x128xf32, #tpu.memory_space<vmem>>, vector<1x1x128xf32>
      %1267 = vector.shape_cast %1266 : vector<1x1x128xf32> to vector<1x128xf32>
      %c1_321 = arith.constant 1 : index
      %c1_322 = arith.constant 1 : index
      %c0_323 = arith.constant 0 : index
      %1268 = vector.load %arg3[%c1_321, %c1_322, %c0_323] : memref<2x3x128xf32, #tpu.memory_space<vmem>>, vector<1x1x128xf32>
      %1269 = vector.shape_cast %1268 : vector<1x1x128xf32> to vector<1x128xf32>
      %c1_324 = arith.constant 1 : index
      %c2_325 = arith.constant 2 : index
      %c0_326 = arith.constant 0 : index
      %1270 = vector.load %arg3[%c1_324, %c2_325, %c0_326] : memref<2x3x128xf32, #tpu.memory_space<vmem>>, vector<1x1x128xf32>
      %1271 = vector.shape_cast %1270 : vector<1x1x128xf32> to vector<1x128xf32>
      %c2_i32_327 = arith.constant 2 : i32
      %1272 = arith.muli %arg0, %c2_i32_327 : i32
      %c1_i32_328 = arith.constant 1 : i32
      %1273 = arith.addi %1272, %c1_i32_328 : i32
      %c4_i32_329 = arith.constant 4 : i32
      %1274 = arith.muli %1273, %c4_i32_329 : i32
      %c0_i32_330 = arith.constant 0 : i32
      %1275 = arith.addi %1274, %c0_i32_330 : i32
      %1276 = arith.index_cast %1275 : i32 to index
      %c0_331 = arith.constant 0 : index
      %1277 = memref.load %arg2[%1276, %c0_331] : memref<16x16xf32, #tpu.memory_space<smem>>
      %1278 = vector.broadcast %1277 : f32 to vector<1x128xf32>
      %1279 = arith.mulf %1278, %1267 : vector<1x128xf32>
      %1280 = arith.index_cast %1275 : i32 to index
      %c1_332 = arith.constant 1 : index
      %1281 = memref.load %arg2[%1280, %c1_332] : memref<16x16xf32, #tpu.memory_space<smem>>
      %1282 = vector.broadcast %1281 : f32 to vector<1x128xf32>
      %1283 = arith.mulf %1282, %1269 : vector<1x128xf32>
      %1284 = arith.addf %1279, %1283 : vector<1x128xf32>
      %1285 = arith.index_cast %1275 : i32 to index
      %c2_333 = arith.constant 2 : index
      %1286 = memref.load %arg2[%1285, %c2_333] : memref<16x16xf32, #tpu.memory_space<smem>>
      %1287 = vector.broadcast %1286 : f32 to vector<1x128xf32>
      %1288 = arith.mulf %1287, %1271 : vector<1x128xf32>
      %1289 = arith.addf %1284, %1288 : vector<1x128xf32>
      %1290 = arith.index_cast %1275 : i32 to index
      %c3_334 = arith.constant 3 : index
      %1291 = memref.load %arg2[%1290, %c3_334] : memref<16x16xf32, #tpu.memory_space<smem>>
      %1292 = vector.broadcast %1291 : f32 to vector<1x128xf32>
      %1293 = arith.addf %1289, %1292 : vector<1x128xf32>
      %1294 = arith.index_cast %1275 : i32 to index
      %c4_335 = arith.constant 4 : index
      %1295 = memref.load %arg2[%1294, %c4_335] : memref<16x16xf32, #tpu.memory_space<smem>>
      %1296 = vector.broadcast %1295 : f32 to vector<1x128xf32>
      %1297 = arith.mulf %1296, %1267 : vector<1x128xf32>
      %1298 = arith.index_cast %1275 : i32 to index
      %c5_336 = arith.constant 5 : index
      %1299 = memref.load %arg2[%1298, %c5_336] : memref<16x16xf32, #tpu.memory_space<smem>>
      %1300 = vector.broadcast %1299 : f32 to vector<1x128xf32>
      %1301 = arith.mulf %1300, %1269 : vector<1x128xf32>
      %1302 = arith.addf %1297, %1301 : vector<1x128xf32>
      %1303 = arith.index_cast %1275 : i32 to index
      %c6_337 = arith.constant 6 : index
      %1304 = memref.load %arg2[%1303, %c6_337] : memref<16x16xf32, #tpu.memory_space<smem>>
      %1305 = vector.broadcast %1304 : f32 to vector<1x128xf32>
      %1306 = arith.mulf %1305, %1271 : vector<1x128xf32>
      %1307 = arith.addf %1302, %1306 : vector<1x128xf32>
      %1308 = arith.index_cast %1275 : i32 to index
      %c7_338 = arith.constant 7 : index
      %1309 = memref.load %arg2[%1308, %c7_338] : memref<16x16xf32, #tpu.memory_space<smem>>
      %1310 = vector.broadcast %1309 : f32 to vector<1x128xf32>
      %1311 = arith.addf %1307, %1310 : vector<1x128xf32>
      %1312 = arith.index_cast %1275 : i32 to index
      %c8_339 = arith.constant 8 : index
      %1313 = memref.load %arg2[%1312, %c8_339] : memref<16x16xf32, #tpu.memory_space<smem>>
      %1314 = vector.broadcast %1313 : f32 to vector<1x128xf32>
      %1315 = arith.mulf %1314, %1267 : vector<1x128xf32>
      %1316 = arith.index_cast %1275 : i32 to index
      %c9_340 = arith.constant 9 : index
      %1317 = memref.load %arg2[%1316, %c9_340] : memref<16x16xf32, #tpu.memory_space<smem>>
      %1318 = vector.broadcast %1317 : f32 to vector<1x128xf32>
      %1319 = arith.mulf %1318, %1269 : vector<1x128xf32>
      %1320 = arith.addf %1315, %1319 : vector<1x128xf32>
      %1321 = arith.index_cast %1275 : i32 to index
      %c10_341 = arith.constant 10 : index
      %1322 = memref.load %arg2[%1321, %c10_341] : memref<16x16xf32, #tpu.memory_space<smem>>
      %1323 = vector.broadcast %1322 : f32 to vector<1x128xf32>
      %1324 = arith.mulf %1323, %1271 : vector<1x128xf32>
      %1325 = arith.addf %1320, %1324 : vector<1x128xf32>
      %1326 = arith.index_cast %1275 : i32 to index
      %c11_342 = arith.constant 11 : index
      %1327 = memref.load %arg2[%1326, %c11_342] : memref<16x16xf32, #tpu.memory_space<smem>>
      %1328 = vector.broadcast %1327 : f32 to vector<1x128xf32>
      %1329 = arith.addf %1325, %1328 : vector<1x128xf32>
      %c4_343 = arith.constant 4 : index
      %c0_344 = arith.constant 0 : index
      %c0_345 = arith.constant 0 : index
      %1330 = vector.load %arg4[%c4_343, %c0_344, %c0_345] : memref<8x3x128xf32, #tpu.memory_space<vmem>>, vector<1x1x128xf32>
      %1331 = vector.shape_cast %1330 : vector<1x1x128xf32> to vector<1x128xf32>
      %1332 = vector.shape_cast %1293 : vector<1x128xf32> to vector<1x1x128xf32>
      tpu.vector_store %arg4[%c4_343, %c0_344, %c0_345], %1332 {strides = array<i32>} : memref<8x3x128xf32, #tpu.memory_space<vmem>>, vector<1x1x128xf32>,
      %c4_346 = arith.constant 4 : index
      %c1_347 = arith.constant 1 : index
      %c0_348 = arith.constant 0 : index
      %1333 = vector.load %arg4[%c4_346, %c1_347, %c0_348] : memref<8x3x128xf32, #tpu.memory_space<vmem>>, vector<1x1x128xf32>
      %1334 = vector.shape_cast %1333 : vector<1x1x128xf32> to vector<1x128xf32>
      %1335 = vector.shape_cast %1311 : vector<1x128xf32> to vector<1x1x128xf32>
      tpu.vector_store %arg4[%c4_346, %c1_347, %c0_348], %1335 {strides = array<i32>} : memref<8x3x128xf32, #tpu.memory_space<vmem>>, vector<1x1x128xf32>,
      %c4_349 = arith.constant 4 : index
      %c2_350 = arith.constant 2 : index
      %c0_351 = arith.constant 0 : index
      %1336 = vector.load %arg4[%c4_349, %c2_350, %c0_351] : memref<8x3x128xf32, #tpu.memory_space<vmem>>, vector<1x1x128xf32>
      %1337 = vector.shape_cast %1336 : vector<1x1x128xf32> to vector<1x128xf32>
      %1338 = vector.shape_cast %1329 : vector<1x128xf32> to vector<1x1x128xf32>
      tpu.vector_store %arg4[%c4_349, %c2_350, %c0_351], %1338 {strides = array<i32>} : memref<8x3x128xf32, #tpu.memory_space<vmem>>, vector<1x1x128xf32>,
      %cst_352 = arith.constant -8.000000e+00 : f32
      %1339 = vector.broadcast %cst_352 : f32 to vector<1x128xf32>
      %1340 = arith.subf %1293, %1339 : vector<1x128xf32>
      %cst_353 = arith.constant 1.000000e+00 : f32
      %1341 = vector.broadcast %cst_353 : f32 to vector<1x128xf32>
      %1342 = arith.mulf %1340, %1341 : vector<1x128xf32>
      %cst_354 = arith.constant 5.000000e-01 : f32
      %1343 = vector.broadcast %cst_354 : f32 to vector<1x128xf32>
      %1344 = arith.subf %1342, %1343 : vector<1x128xf32>
      %cst_355 = arith.constant -8.000000e+00 : f32
      %1345 = vector.broadcast %cst_355 : f32 to vector<1x128xf32>
      %1346 = arith.subf %1311, %1345 : vector<1x128xf32>
      %cst_356 = arith.constant 1.000000e+00 : f32
      %1347 = vector.broadcast %cst_356 : f32 to vector<1x128xf32>
      %1348 = arith.mulf %1346, %1347 : vector<1x128xf32>
      %cst_357 = arith.constant 5.000000e-01 : f32
      %1349 = vector.broadcast %cst_357 : f32 to vector<1x128xf32>
      %1350 = arith.subf %1348, %1349 : vector<1x128xf32>
      %cst_358 = arith.constant 1.000000e+01 : f32
      %1351 = vector.broadcast %cst_358 : f32 to vector<1x128xf32>
      %1352 = arith.subf %1329, %1351 : vector<1x128xf32>
      %cst_359 = arith.constant 1.000000e+00 : f32
      %1353 = vector.broadcast %cst_359 : f32 to vector<1x128xf32>
      %1354 = arith.mulf %1352, %1353 : vector<1x128xf32>
      %cst_360 = arith.constant 5.000000e-01 : f32
      %1355 = vector.broadcast %cst_360 : f32 to vector<1x128xf32>
      %1356 = arith.subf %1354, %1355 : vector<1x128xf32>
      %cst_361 = arith.constant 5.000000e-01 : f32
      %1357 = vector.broadcast %cst_361 : f32 to vector<1x128xf32>
      %1358 = arith.addf %1344, %1357 : vector<1x128xf32>
      %1359 = math.floor %1358 : vector<1x128xf32>
      %cst_362 = arith.constant 5.000000e-01 : f32
      %1360 = vector.broadcast %cst_362 : f32 to vector<1x128xf32>
      %1361 = arith.addf %1350, %1360 : vector<1x128xf32>
      %1362 = math.floor %1361 : vector<1x128xf32>
      %cst_363 = arith.constant 5.000000e-01 : f32
      %1363 = vector.broadcast %cst_363 : f32 to vector<1x128xf32>
      %1364 = arith.addf %1356, %1363 : vector<1x128xf32>
      %1365 = math.floor %1364 : vector<1x128xf32>
      %cst_364 = arith.constant 0.000000e+00 : f32
      %1366 = vector.broadcast %cst_364 : f32 to vector<1x128xf32>
      %1367 = arith.cmpf oge, %1359, %1366 : vector<1x128xf32>
      %cst_365 = arith.constant 1.500000e+01 : f32
      %1368 = vector.broadcast %cst_365 : f32 to vector<1x128xf32>
      %1369 = arith.cmpf ole, %1359, %1368 : vector<1x128xf32>
      %1370 = arith.andi %1367, %1369 : vector<1x128xi1>
      %cst_366 = arith.constant 0.000000e+00 : f32
      %1371 = vector.broadcast %cst_366 : f32 to vector<1x128xf32>
      %1372 = arith.cmpf oge, %1362, %1371 : vector<1x128xf32>
      %1373 = arith.andi %1370, %1372 : vector<1x128xi1>
      %cst_367 = arith.constant 1.500000e+01 : f32
      %1374 = vector.broadcast %cst_367 : f32 to vector<1x128xf32>
      %1375 = arith.cmpf ole, %1362, %1374 : vector<1x128xf32>
      %1376 = arith.andi %1373, %1375 : vector<1x128xi1>
      %cst_368 = arith.constant 0.000000e+00 : f32
      %1377 = vector.broadcast %cst_368 : f32 to vector<1x128xf32>
      %1378 = arith.cmpf oge, %1365, %1377 : vector<1x128xf32>
      %1379 = arith.andi %1376, %1378 : vector<1x128xi1>
      %cst_369 = arith.constant 1.500000e+01 : f32
      %1380 = vector.broadcast %cst_369 : f32 to vector<1x128xf32>
      %1381 = arith.cmpf ole, %1365, %1380 : vector<1x128xf32>
      %1382 = arith.andi %1379, %1381 : vector<1x128xi1>
      %cst_370 = arith.constant 2.560000e+02 : f32
      %1383 = vector.broadcast %cst_370 : f32 to vector<1x128xf32>
      %1384 = arith.mulf %1365, %1383 : vector<1x128xf32>
      %cst_371 = arith.constant 1.600000e+01 : f32
      %1385 = vector.broadcast %cst_371 : f32 to vector<1x128xf32>
      %1386 = arith.mulf %1362, %1385 : vector<1x128xf32>
      %1387 = arith.addf %1384, %1386 : vector<1x128xf32>
      %1388 = arith.addf %1387, %1359 : vector<1x128xf32>
      %cst_372 = arith.constant -1.000000e+00 : f32
      %1389 = vector.broadcast %cst_372 : f32 to vector<1x128xf32>
      %1390 = arith.select %1382, %1388, %1389 : vector<1x128xi1>, vector<1x128xf32>
      %c4_373 = arith.constant 4 : index
      %c0_374 = arith.constant 0 : index
      %1391 = vector.load %arg6[%c4_373, %c0_374] : memref<8x128xf32, #tpu.memory_space<vmem>>, vector<1x128xf32>
      tpu.vector_store %arg6[%c4_373, %c0_374], %1390 {strides = array<i32>} : memref<8x128xf32, #tpu.memory_space<vmem>>, vector<1x128xf32>,
      %c2_i32_375 = arith.constant 2 : i32
      %1392 = arith.muli %arg0, %c2_i32_375 : i32
      %c1_i32_376 = arith.constant 1 : i32
      %1393 = arith.addi %1392, %c1_i32_376 : i32
      %c4_i32_377 = arith.constant 4 : i32
      %1394 = arith.muli %1393, %c4_i32_377 : i32
      %c1_i32_378 = arith.constant 1 : i32
      %1395 = arith.addi %1394, %c1_i32_378 : i32
      %1396 = arith.index_cast %1395 : i32 to index
      %c0_379 = arith.constant 0 : index
      %1397 = memref.load %arg2[%1396, %c0_379] : memref<16x16xf32, #tpu.memory_space<smem>>
      %1398 = vector.broadcast %1397 : f32 to vector<1x128xf32>
      %1399 = arith.mulf %1398, %1267 : vector<1x128xf32>
      %1400 = arith.index_cast %1395 : i32 to index
      %c1_380 = arith.constant 1 : index
      %1401 = memref.load %arg2[%1400, %c1_380] : memref<16x16xf32, #tpu.memory_space<smem>>
      %1402 = vector.broadcast %1401 : f32 to vector<1x128xf32>
      %1403 = arith.mulf %1402, %1269 : vector<1x128xf32>
      %1404 = arith.addf %1399, %1403 : vector<1x128xf32>
      %1405 = arith.index_cast %1395 : i32 to index
      %c2_381 = arith.constant 2 : index
      %1406 = memref.load %arg2[%1405, %c2_381] : memref<16x16xf32, #tpu.memory_space<smem>>
      %1407 = vector.broadcast %1406 : f32 to vector<1x128xf32>
      %1408 = arith.mulf %1407, %1271 : vector<1x128xf32>
      %1409 = arith.addf %1404, %1408 : vector<1x128xf32>
      %1410 = arith.index_cast %1395 : i32 to index
      %c3_382 = arith.constant 3 : index
      %1411 = memref.load %arg2[%1410, %c3_382] : memref<16x16xf32, #tpu.memory_space<smem>>
      %1412 = vector.broadcast %1411 : f32 to vector<1x128xf32>
      %1413 = arith.addf %1409, %1412 : vector<1x128xf32>
      %1414 = arith.index_cast %1395 : i32 to index
      %c4_383 = arith.constant 4 : index
      %1415 = memref.load %arg2[%1414, %c4_383] : memref<16x16xf32, #tpu.memory_space<smem>>
      %1416 = vector.broadcast %1415 : f32 to vector<1x128xf32>
      %1417 = arith.mulf %1416, %1267 : vector<1x128xf32>
      %1418 = arith.index_cast %1395 : i32 to index
      %c5_384 = arith.constant 5 : index
      %1419 = memref.load %arg2[%1418, %c5_384] : memref<16x16xf32, #tpu.memory_space<smem>>
      %1420 = vector.broadcast %1419 : f32 to vector<1x128xf32>
      %1421 = arith.mulf %1420, %1269 : vector<1x128xf32>
      %1422 = arith.addf %1417, %1421 : vector<1x128xf32>
      %1423 = arith.index_cast %1395 : i32 to index
      %c6_385 = arith.constant 6 : index
      %1424 = memref.load %arg2[%1423, %c6_385] : memref<16x16xf32, #tpu.memory_space<smem>>
      %1425 = vector.broadcast %1424 : f32 to vector<1x128xf32>
      %1426 = arith.mulf %1425, %1271 : vector<1x128xf32>
      %1427 = arith.addf %1422, %1426 : vector<1x128xf32>
      %1428 = arith.index_cast %1395 : i32 to index
      %c7_386 = arith.constant 7 : index
      %1429 = memref.load %arg2[%1428, %c7_386] : memref<16x16xf32, #tpu.memory_space<smem>>
      %1430 = vector.broadcast %1429 : f32 to vector<1x128xf32>
      %1431 = arith.addf %1427, %1430 : vector<1x128xf32>
      %1432 = arith.index_cast %1395 : i32 to index
      %c8_387 = arith.constant 8 : index
      %1433 = memref.load %arg2[%1432, %c8_387] : memref<16x16xf32, #tpu.memory_space<smem>>
      %1434 = vector.broadcast %1433 : f32 to vector<1x128xf32>
      %1435 = arith.mulf %1434, %1267 : vector<1x128xf32>
      %1436 = arith.index_cast %1395 : i32 to index
      %c9_388 = arith.constant 9 : index
      %1437 = memref.load %arg2[%1436, %c9_388] : memref<16x16xf32, #tpu.memory_space<smem>>
      %1438 = vector.broadcast %1437 : f32 to vector<1x128xf32>
      %1439 = arith.mulf %1438, %1269 : vector<1x128xf32>
      %1440 = arith.addf %1435, %1439 : vector<1x128xf32>
      %1441 = arith.index_cast %1395 : i32 to index
      %c10_389 = arith.constant 10 : index
      %1442 = memref.load %arg2[%1441, %c10_389] : memref<16x16xf32, #tpu.memory_space<smem>>
      %1443 = vector.broadcast %1442 : f32 to vector<1x128xf32>
      %1444 = arith.mulf %1443, %1271 : vector<1x128xf32>
      %1445 = arith.addf %1440, %1444 : vector<1x128xf32>
      %1446 = arith.index_cast %1395 : i32 to index
      %c11_390 = arith.constant 11 : index
      %1447 = memref.load %arg2[%1446, %c11_390] : memref<16x16xf32, #tpu.memory_space<smem>>
      %1448 = vector.broadcast %1447 : f32 to vector<1x128xf32>
      %1449 = arith.addf %1445, %1448 : vector<1x128xf32>
      %c5_391 = arith.constant 5 : index
      %c0_392 = arith.constant 0 : index
      %c0_393 = arith.constant 0 : index
      %1450 = vector.load %arg4[%c5_391, %c0_392, %c0_393] : memref<8x3x128xf32, #tpu.memory_space<vmem>>, vector<1x1x128xf32>
      %1451 = vector.shape_cast %1450 : vector<1x1x128xf32> to vector<1x128xf32>
      %1452 = vector.shape_cast %1413 : vector<1x128xf32> to vector<1x1x128xf32>
      tpu.vector_store %arg4[%c5_391, %c0_392, %c0_393], %1452 {strides = array<i32>} : memref<8x3x128xf32, #tpu.memory_space<vmem>>, vector<1x1x128xf32>,
      %c5_394 = arith.constant 5 : index
      %c1_395 = arith.constant 1 : index
      %c0_396 = arith.constant 0 : index
      %1453 = vector.load %arg4[%c5_394, %c1_395, %c0_396] : memref<8x3x128xf32, #tpu.memory_space<vmem>>, vector<1x1x128xf32>
      %1454 = vector.shape_cast %1453 : vector<1x1x128xf32> to vector<1x128xf32>
      %1455 = vector.shape_cast %1431 : vector<1x128xf32> to vector<1x1x128xf32>
      tpu.vector_store %arg4[%c5_394, %c1_395, %c0_396], %1455 {strides = array<i32>} : memref<8x3x128xf32, #tpu.memory_space<vmem>>, vector<1x1x128xf32>,
      %c5_397 = arith.constant 5 : index
      %c2_398 = arith.constant 2 : index
      %c0_399 = arith.constant 0 : index
      %1456 = vector.load %arg4[%c5_397, %c2_398, %c0_399] : memref<8x3x128xf32, #tpu.memory_space<vmem>>, vector<1x1x128xf32>
      %1457 = vector.shape_cast %1456 : vector<1x1x128xf32> to vector<1x128xf32>
      %1458 = vector.shape_cast %1449 : vector<1x128xf32> to vector<1x1x128xf32>
      tpu.vector_store %arg4[%c5_397, %c2_398, %c0_399], %1458 {strides = array<i32>} : memref<8x3x128xf32, #tpu.memory_space<vmem>>, vector<1x1x128xf32>,
      %cst_400 = arith.constant -8.000000e+00 : f32
      %1459 = vector.broadcast %cst_400 : f32 to vector<1x128xf32>
      %1460 = arith.subf %1413, %1459 : vector<1x128xf32>
      %cst_401 = arith.constant 1.000000e+00 : f32
      %1461 = vector.broadcast %cst_401 : f32 to vector<1x128xf32>
      %1462 = arith.mulf %1460, %1461 : vector<1x128xf32>
      %cst_402 = arith.constant 5.000000e-01 : f32
      %1463 = vector.broadcast %cst_402 : f32 to vector<1x128xf32>
      %1464 = arith.subf %1462, %1463 : vector<1x128xf32>
      %cst_403 = arith.constant -8.000000e+00 : f32
      %1465 = vector.broadcast %cst_403 : f32 to vector<1x128xf32>
      %1466 = arith.subf %1431, %1465 : vector<1x128xf32>
      %cst_404 = arith.constant 1.000000e+00 : f32
      %1467 = vector.broadcast %cst_404 : f32 to vector<1x128xf32>
      %1468 = arith.mulf %1466, %1467 : vector<1x128xf32>
      %cst_405 = arith.constant 5.000000e-01 : f32
      %1469 = vector.broadcast %cst_405 : f32 to vector<1x128xf32>
      %1470 = arith.subf %1468, %1469 : vector<1x128xf32>
      %cst_406 = arith.constant 1.000000e+01 : f32
      %1471 = vector.broadcast %cst_406 : f32 to vector<1x128xf32>
      %1472 = arith.subf %1449, %1471 : vector<1x128xf32>
      %cst_407 = arith.constant 1.000000e+00 : f32
      %1473 = vector.broadcast %cst_407 : f32 to vector<1x128xf32>
      %1474 = arith.mulf %1472, %1473 : vector<1x128xf32>
      %cst_408 = arith.constant 5.000000e-01 : f32
      %1475 = vector.broadcast %cst_408 : f32 to vector<1x128xf32>
      %1476 = arith.subf %1474, %1475 : vector<1x128xf32>
      %cst_409 = arith.constant 5.000000e-01 : f32
      %1477 = vector.broadcast %cst_409 : f32 to vector<1x128xf32>
      %1478 = arith.addf %1464, %1477 : vector<1x128xf32>
      %1479 = math.floor %1478 : vector<1x128xf32>
      %cst_410 = arith.constant 5.000000e-01 : f32
      %1480 = vector.broadcast %cst_410 : f32 to vector<1x128xf32>
      %1481 = arith.addf %1470, %1480 : vector<1x128xf32>
      %1482 = math.floor %1481 : vector<1x128xf32>
      %cst_411 = arith.constant 5.000000e-01 : f32
      %1483 = vector.broadcast %cst_411 : f32 to vector<1x128xf32>
      %1484 = arith.addf %1476, %1483 : vector<1x128xf32>
      %1485 = math.floor %1484 : vector<1x128xf32>
      %cst_412 = arith.constant 0.000000e+00 : f32
      %1486 = vector.broadcast %cst_412 : f32 to vector<1x128xf32>
      %1487 = arith.cmpf oge, %1479, %1486 : vector<1x128xf32>
      %cst_413 = arith.constant 1.500000e+01 : f32
      %1488 = vector.broadcast %cst_413 : f32 to vector<1x128xf32>
      %1489 = arith.cmpf ole, %1479, %1488 : vector<1x128xf32>
      %1490 = arith.andi %1487, %1489 : vector<1x128xi1>
      %cst_414 = arith.constant 0.000000e+00 : f32
      %1491 = vector.broadcast %cst_414 : f32 to vector<1x128xf32>
      %1492 = arith.cmpf oge, %1482, %1491 : vector<1x128xf32>
      %1493 = arith.andi %1490, %1492 : vector<1x128xi1>
      %cst_415 = arith.constant 1.500000e+01 : f32
      %1494 = vector.broadcast %cst_415 : f32 to vector<1x128xf32>
      %1495 = arith.cmpf ole, %1482, %1494 : vector<1x128xf32>
      %1496 = arith.andi %1493, %1495 : vector<1x128xi1>
      %cst_416 = arith.constant 0.000000e+00 : f32
      %1497 = vector.broadcast %cst_416 : f32 to vector<1x128xf32>
      %1498 = arith.cmpf oge, %1485, %1497 : vector<1x128xf32>
      %1499 = arith.andi %1496, %1498 : vector<1x128xi1>
      %cst_417 = arith.constant 1.500000e+01 : f32
      %1500 = vector.broadcast %cst_417 : f32 to vector<1x128xf32>
      %1501 = arith.cmpf ole, %1485, %1500 : vector<1x128xf32>
      %1502 = arith.andi %1499, %1501 : vector<1x128xi1>
      %cst_418 = arith.constant 2.560000e+02 : f32
      %1503 = vector.broadcast %cst_418 : f32 to vector<1x128xf32>
      %1504 = arith.mulf %1485, %1503 : vector<1x128xf32>
      %cst_419 = arith.constant 1.600000e+01 : f32
      %1505 = vector.broadcast %cst_419 : f32 to vector<1x128xf32>
      %1506 = arith.mulf %1482, %1505 : vector<1x128xf32>
      %1507 = arith.addf %1504, %1506 : vector<1x128xf32>
      %1508 = arith.addf %1507, %1479 : vector<1x128xf32>
      %cst_420 = arith.constant -1.000000e+00 : f32
      %1509 = vector.broadcast %cst_420 : f32 to vector<1x128xf32>
      %1510 = arith.select %1502, %1508, %1509 : vector<1x128xi1>, vector<1x128xf32>
      %c5_421 = arith.constant 5 : index
      %c0_422 = arith.constant 0 : index
      %1511 = vector.load %arg6[%c5_421, %c0_422] : memref<8x128xf32, #tpu.memory_space<vmem>>, vector<1x128xf32>
      tpu.vector_store %arg6[%c5_421, %c0_422], %1510 {strides = array<i32>} : memref<8x128xf32, #tpu.memory_space<vmem>>, vector<1x128xf32>,
      %c2_i32_423 = arith.constant 2 : i32
      %1512 = arith.muli %arg0, %c2_i32_423 : i32
      %c1_i32_424 = arith.constant 1 : i32
      %1513 = arith.addi %1512, %c1_i32_424 : i32
      %c4_i32_425 = arith.constant 4 : i32
      %1514 = arith.muli %1513, %c4_i32_425 : i32
      %c2_i32_426 = arith.constant 2 : i32
      %1515 = arith.addi %1514, %c2_i32_426 : i32
      %1516 = arith.index_cast %1515 : i32 to index
      %c0_427 = arith.constant 0 : index
      %1517 = memref.load %arg2[%1516, %c0_427] : memref<16x16xf32, #tpu.memory_space<smem>>
      %1518 = vector.broadcast %1517 : f32 to vector<1x128xf32>
      %1519 = arith.mulf %1518, %1267 : vector<1x128xf32>
      %1520 = arith.index_cast %1515 : i32 to index
      %c1_428 = arith.constant 1 : index
      %1521 = memref.load %arg2[%1520, %c1_428] : memref<16x16xf32, #tpu.memory_space<smem>>
      %1522 = vector.broadcast %1521 : f32 to vector<1x128xf32>
      %1523 = arith.mulf %1522, %1269 : vector<1x128xf32>
      %1524 = arith.addf %1519, %1523 : vector<1x128xf32>
      %1525 = arith.index_cast %1515 : i32 to index
      %c2_429 = arith.constant 2 : index
      %1526 = memref.load %arg2[%1525, %c2_429] : memref<16x16xf32, #tpu.memory_space<smem>>
      %1527 = vector.broadcast %1526 : f32 to vector<1x128xf32>
      %1528 = arith.mulf %1527, %1271 : vector<1x128xf32>
      %1529 = arith.addf %1524, %1528 : vector<1x128xf32>
      %1530 = arith.index_cast %1515 : i32 to index
      %c3_430 = arith.constant 3 : index
      %1531 = memref.load %arg2[%1530, %c3_430] : memref<16x16xf32, #tpu.memory_space<smem>>
      %1532 = vector.broadcast %1531 : f32 to vector<1x128xf32>
      %1533 = arith.addf %1529, %1532 : vector<1x128xf32>
      %1534 = arith.index_cast %1515 : i32 to index
      %c4_431 = arith.constant 4 : index
      %1535 = memref.load %arg2[%1534, %c4_431] : memref<16x16xf32, #tpu.memory_space<smem>>
      %1536 = vector.broadcast %1535 : f32 to vector<1x128xf32>
      %1537 = arith.mulf %1536, %1267 : vector<1x128xf32>
      %1538 = arith.index_cast %1515 : i32 to index
      %c5_432 = arith.constant 5 : index
      %1539 = memref.load %arg2[%1538, %c5_432] : memref<16x16xf32, #tpu.memory_space<smem>>
      %1540 = vector.broadcast %1539 : f32 to vector<1x128xf32>
      %1541 = arith.mulf %1540, %1269 : vector<1x128xf32>
      %1542 = arith.addf %1537, %1541 : vector<1x128xf32>
      %1543 = arith.index_cast %1515 : i32 to index
      %c6_433 = arith.constant 6 : index
      %1544 = memref.load %arg2[%1543, %c6_433] : memref<16x16xf32, #tpu.memory_space<smem>>
      %1545 = vector.broadcast %1544 : f32 to vector<1x128xf32>
      %1546 = arith.mulf %1545, %1271 : vector<1x128xf32>
      %1547 = arith.addf %1542, %1546 : vector<1x128xf32>
      %1548 = arith.index_cast %1515 : i32 to index
      %c7_434 = arith.constant 7 : index
      %1549 = memref.load %arg2[%1548, %c7_434] : memref<16x16xf32, #tpu.memory_space<smem>>
      %1550 = vector.broadcast %1549 : f32 to vector<1x128xf32>
      %1551 = arith.addf %1547, %1550 : vector<1x128xf32>
      %1552 = arith.index_cast %1515 : i32 to index
      %c8_435 = arith.constant 8 : index
      %1553 = memref.load %arg2[%1552, %c8_435] : memref<16x16xf32, #tpu.memory_space<smem>>
      %1554 = vector.broadcast %1553 : f32 to vector<1x128xf32>
      %1555 = arith.mulf %1554, %1267 : vector<1x128xf32>
      %1556 = arith.index_cast %1515 : i32 to index
      %c9_436 = arith.constant 9 : index
      %1557 = memref.load %arg2[%1556, %c9_436] : memref<16x16xf32, #tpu.memory_space<smem>>
      %1558 = vector.broadcast %1557 : f32 to vector<1x128xf32>
      %1559 = arith.mulf %1558, %1269 : vector<1x128xf32>
      %1560 = arith.addf %1555, %1559 : vector<1x128xf32>
      %1561 = arith.index_cast %1515 : i32 to index
      %c10_437 = arith.constant 10 : index
      %1562 = memref.load %arg2[%1561, %c10_437] : memref<16x16xf32, #tpu.memory_space<smem>>
      %1563 = vector.broadcast %1562 : f32 to vector<1x128xf32>
      %1564 = arith.mulf %1563, %1271 : vector<1x128xf32>
      %1565 = arith.addf %1560, %1564 : vector<1x128xf32>
      %1566 = arith.index_cast %1515 : i32 to index
      %c11_438 = arith.constant 11 : index
      %1567 = memref.load %arg2[%1566, %c11_438] : memref<16x16xf32, #tpu.memory_space<smem>>
      %1568 = vector.broadcast %1567 : f32 to vector<1x128xf32>
      %1569 = arith.addf %1565, %1568 : vector<1x128xf32>
      %c6_439 = arith.constant 6 : index
      %c0_440 = arith.constant 0 : index
      %c0_441 = arith.constant 0 : index
      %1570 = vector.load %arg4[%c6_439, %c0_440, %c0_441] : memref<8x3x128xf32, #tpu.memory_space<vmem>>, vector<1x1x128xf32>
      %1571 = vector.shape_cast %1570 : vector<1x1x128xf32> to vector<1x128xf32>
      %1572 = vector.shape_cast %1533 : vector<1x128xf32> to vector<1x1x128xf32>
      tpu.vector_store %arg4[%c6_439, %c0_440, %c0_441], %1572 {strides = array<i32>} : memref<8x3x128xf32, #tpu.memory_space<vmem>>, vector<1x1x128xf32>,
      %c6_442 = arith.constant 6 : index
      %c1_443 = arith.constant 1 : index
      %c0_444 = arith.constant 0 : index
      %1573 = vector.load %arg4[%c6_442, %c1_443, %c0_444] : memref<8x3x128xf32, #tpu.memory_space<vmem>>, vector<1x1x128xf32>
      %1574 = vector.shape_cast %1573 : vector<1x1x128xf32> to vector<1x128xf32>
      %1575 = vector.shape_cast %1551 : vector<1x128xf32> to vector<1x1x128xf32>
      tpu.vector_store %arg4[%c6_442, %c1_443, %c0_444], %1575 {strides = array<i32>} : memref<8x3x128xf32, #tpu.memory_space<vmem>>, vector<1x1x128xf32>,
      %c6_445 = arith.constant 6 : index
      %c2_446 = arith.constant 2 : index
      %c0_447 = arith.constant 0 : index
      %1576 = vector.load %arg4[%c6_445, %c2_446, %c0_447] : memref<8x3x128xf32, #tpu.memory_space<vmem>>, vector<1x1x128xf32>
      %1577 = vector.shape_cast %1576 : vector<1x1x128xf32> to vector<1x128xf32>
      %1578 = vector.shape_cast %1569 : vector<1x128xf32> to vector<1x1x128xf32>
      tpu.vector_store %arg4[%c6_445, %c2_446, %c0_447], %1578 {strides = array<i32>} : memref<8x3x128xf32, #tpu.memory_space<vmem>>, vector<1x1x128xf32>,
      %cst_448 = arith.constant -8.000000e+00 : f32
      %1579 = vector.broadcast %cst_448 : f32 to vector<1x128xf32>
      %1580 = arith.subf %1533, %1579 : vector<1x128xf32>
      %cst_449 = arith.constant 1.000000e+00 : f32
      %1581 = vector.broadcast %cst_449 : f32 to vector<1x128xf32>
      %1582 = arith.mulf %1580, %1581 : vector<1x128xf32>
      %cst_450 = arith.constant 5.000000e-01 : f32
      %1583 = vector.broadcast %cst_450 : f32 to vector<1x128xf32>
      %1584 = arith.subf %1582, %1583 : vector<1x128xf32>
      %cst_451 = arith.constant -8.000000e+00 : f32
      %1585 = vector.broadcast %cst_451 : f32 to vector<1x128xf32>
      %1586 = arith.subf %1551, %1585 : vector<1x128xf32>
      %cst_452 = arith.constant 1.000000e+00 : f32
      %1587 = vector.broadcast %cst_452 : f32 to vector<1x128xf32>
      %1588 = arith.mulf %1586, %1587 : vector<1x128xf32>
      %cst_453 = arith.constant 5.000000e-01 : f32
      %1589 = vector.broadcast %cst_453 : f32 to vector<1x128xf32>
      %1590 = arith.subf %1588, %1589 : vector<1x128xf32>
      %cst_454 = arith.constant 1.000000e+01 : f32
      %1591 = vector.broadcast %cst_454 : f32 to vector<1x128xf32>
      %1592 = arith.subf %1569, %1591 : vector<1x128xf32>
      %cst_455 = arith.constant 1.000000e+00 : f32
      %1593 = vector.broadcast %cst_455 : f32 to vector<1x128xf32>
      %1594 = arith.mulf %1592, %1593 : vector<1x128xf32>
      %cst_456 = arith.constant 5.000000e-01 : f32
      %1595 = vector.broadcast %cst_456 : f32 to vector<1x128xf32>
      %1596 = arith.subf %1594, %1595 : vector<1x128xf32>
      %cst_457 = arith.constant 5.000000e-01 : f32
      %1597 = vector.broadcast %cst_457 : f32 to vector<1x128xf32>
      %1598 = arith.addf %1584, %1597 : vector<1x128xf32>
      %1599 = math.floor %1598 : vector<1x128xf32>
      %cst_458 = arith.constant 5.000000e-01 : f32
      %1600 = vector.broadcast %cst_458 : f32 to vector<1x128xf32>
      %1601 = arith.addf %1590, %1600 : vector<1x128xf32>
      %1602 = math.floor %1601 : vector<1x128xf32>
      %cst_459 = arith.constant 5.000000e-01 : f32
      %1603 = vector.broadcast %cst_459 : f32 to vector<1x128xf32>
      %1604 = arith.addf %1596, %1603 : vector<1x128xf32>
      %1605 = math.floor %1604 : vector<1x128xf32>
      %cst_460 = arith.constant 0.000000e+00 : f32
      %1606 = vector.broadcast %cst_460 : f32 to vector<1x128xf32>
      %1607 = arith.cmpf oge, %1599, %1606 : vector<1x128xf32>
      %cst_461 = arith.constant 1.500000e+01 : f32
      %1608 = vector.broadcast %cst_461 : f32 to vector<1x128xf32>
      %1609 = arith.cmpf ole, %1599, %1608 : vector<1x128xf32>
      %1610 = arith.andi %1607, %1609 : vector<1x128xi1>
      %cst_462 = arith.constant 0.000000e+00 : f32
      %1611 = vector.broadcast %cst_462 : f32 to vector<1x128xf32>
      %1612 = arith.cmpf oge, %1602, %1611 : vector<1x128xf32>
      %1613 = arith.andi %1610, %1612 : vector<1x128xi1>
      %cst_463 = arith.constant 1.500000e+01 : f32
      %1614 = vector.broadcast %cst_463 : f32 to vector<1x128xf32>
      %1615 = arith.cmpf ole, %1602, %1614 : vector<1x128xf32>
      %1616 = arith.andi %1613, %1615 : vector<1x128xi1>
      %cst_464 = arith.constant 0.000000e+00 : f32
      %1617 = vector.broadcast %cst_464 : f32 to vector<1x128xf32>
      %1618 = arith.cmpf oge, %1605, %1617 : vector<1x128xf32>
      %1619 = arith.andi %1616, %1618 : vector<1x128xi1>
      %cst_465 = arith.constant 1.500000e+01 : f32
      %1620 = vector.broadcast %cst_465 : f32 to vector<1x128xf32>
      %1621 = arith.cmpf ole, %1605, %1620 : vector<1x128xf32>
      %1622 = arith.andi %1619, %1621 : vector<1x128xi1>
      %cst_466 = arith.constant 2.560000e+02 : f32
      %1623 = vector.broadcast %cst_466 : f32 to vector<1x128xf32>
      %1624 = arith.mulf %1605, %1623 : vector<1x128xf32>
      %cst_467 = arith.constant 1.600000e+01 : f32
      %1625 = vector.broadcast %cst_467 : f32 to vector<1x128xf32>
      %1626 = arith.mulf %1602, %1625 : vector<1x128xf32>
      %1627 = arith.addf %1624, %1626 : vector<1x128xf32>
      %1628 = arith.addf %1627, %1599 : vector<1x128xf32>
      %cst_468 = arith.constant -1.000000e+00 : f32
      %1629 = vector.broadcast %cst_468 : f32 to vector<1x128xf32>
      %1630 = arith.select %1622, %1628, %1629 : vector<1x128xi1>, vector<1x128xf32>
      %c6_469 = arith.constant 6 : index
      %c0_470 = arith.constant 0 : index
      %1631 = vector.load %arg6[%c6_469, %c0_470] : memref<8x128xf32, #tpu.memory_space<vmem>>, vector<1x128xf32>
      tpu.vector_store %arg6[%c6_469, %c0_470], %1630 {strides = array<i32>} : memref<8x128xf32, #tpu.memory_space<vmem>>, vector<1x128xf32>,
      %c2_i32_471 = arith.constant 2 : i32
      %1632 = arith.muli %arg0, %c2_i32_471 : i32
      %c1_i32_472 = arith.constant 1 : i32
      %1633 = arith.addi %1632, %c1_i32_472 : i32
      %c4_i32_473 = arith.constant 4 : i32
      %1634 = arith.muli %1633, %c4_i32_473 : i32
      %c3_i32_474 = arith.constant 3 : i32
      %1635 = arith.addi %1634, %c3_i32_474 : i32
      %1636 = arith.index_cast %1635 : i32 to index
      %c0_475 = arith.constant 0 : index
      %1637 = memref.load %arg2[%1636, %c0_475] : memref<16x16xf32, #tpu.memory_space<smem>>
      %1638 = vector.broadcast %1637 : f32 to vector<1x128xf32>
      %1639 = arith.mulf %1638, %1267 : vector<1x128xf32>
      %1640 = arith.index_cast %1635 : i32 to index
      %c1_476 = arith.constant 1 : index
      %1641 = memref.load %arg2[%1640, %c1_476] : memref<16x16xf32, #tpu.memory_space<smem>>
      %1642 = vector.broadcast %1641 : f32 to vector<1x128xf32>
      %1643 = arith.mulf %1642, %1269 : vector<1x128xf32>
      %1644 = arith.addf %1639, %1643 : vector<1x128xf32>
      %1645 = arith.index_cast %1635 : i32 to index
      %c2_477 = arith.constant 2 : index
      %1646 = memref.load %arg2[%1645, %c2_477] : memref<16x16xf32, #tpu.memory_space<smem>>
      %1647 = vector.broadcast %1646 : f32 to vector<1x128xf32>
      %1648 = arith.mulf %1647, %1271 : vector<1x128xf32>
      %1649 = arith.addf %1644, %1648 : vector<1x128xf32>
      %1650 = arith.index_cast %1635 : i32 to index
      %c3_478 = arith.constant 3 : index
      %1651 = memref.load %arg2[%1650, %c3_478] : memref<16x16xf32, #tpu.memory_space<smem>>
      %1652 = vector.broadcast %1651 : f32 to vector<1x128xf32>
      %1653 = arith.addf %1649, %1652 : vector<1x128xf32>
      %1654 = arith.index_cast %1635 : i32 to index
      %c4_479 = arith.constant 4 : index
      %1655 = memref.load %arg2[%1654, %c4_479] : memref<16x16xf32, #tpu.memory_space<smem>>
      %1656 = vector.broadcast %1655 : f32 to vector<1x128xf32>
      %1657 = arith.mulf %1656, %1267 : vector<1x128xf32>
      %1658 = arith.index_cast %1635 : i32 to index
      %c5_480 = arith.constant 5 : index
      %1659 = memref.load %arg2[%1658, %c5_480] : memref<16x16xf32, #tpu.memory_space<smem>>
      %1660 = vector.broadcast %1659 : f32 to vector<1x128xf32>
      %1661 = arith.mulf %1660, %1269 : vector<1x128xf32>
      %1662 = arith.addf %1657, %1661 : vector<1x128xf32>
      %1663 = arith.index_cast %1635 : i32 to index
      %c6_481 = arith.constant 6 : index
      %1664 = memref.load %arg2[%1663, %c6_481] : memref<16x16xf32, #tpu.memory_space<smem>>
      %1665 = vector.broadcast %1664 : f32 to vector<1x128xf32>
      %1666 = arith.mulf %1665, %1271 : vector<1x128xf32>
      %1667 = arith.addf %1662, %1666 : vector<1x128xf32>
      %1668 = arith.index_cast %1635 : i32 to index
      %c7_482 = arith.constant 7 : index
      %1669 = memref.load %arg2[%1668, %c7_482] : memref<16x16xf32, #tpu.memory_space<smem>>
      %1670 = vector.broadcast %1669 : f32 to vector<1x128xf32>
      %1671 = arith.addf %1667, %1670 : vector<1x128xf32>
      %1672 = arith.index_cast %1635 : i32 to index
      %c8_483 = arith.constant 8 : index
      %1673 = memref.load %arg2[%1672, %c8_483] : memref<16x16xf32, #tpu.memory_space<smem>>
      %1674 = vector.broadcast %1673 : f32 to vector<1x128xf32>
      %1675 = arith.mulf %1674, %1267 : vector<1x128xf32>
      %1676 = arith.index_cast %1635 : i32 to index
      %c9_484 = arith.constant 9 : index
      %1677 = memref.load %arg2[%1676, %c9_484] : memref<16x16xf32, #tpu.memory_space<smem>>
      %1678 = vector.broadcast %1677 : f32 to vector<1x128xf32>
      %1679 = arith.mulf %1678, %1269 : vector<1x128xf32>
      %1680 = arith.addf %1675, %1679 : vector<1x128xf32>
      %1681 = arith.index_cast %1635 : i32 to index
      %c10_485 = arith.constant 10 : index
      %1682 = memref.load %arg2[%1681, %c10_485] : memref<16x16xf32, #tpu.memory_space<smem>>
      %1683 = vector.broadcast %1682 : f32 to vector<1x128xf32>
      %1684 = arith.mulf %1683, %1271 : vector<1x128xf32>
      %1685 = arith.addf %1680, %1684 : vector<1x128xf32>
      %1686 = arith.index_cast %1635 : i32 to index
      %c11_486 = arith.constant 11 : index
      %1687 = memref.load %arg2[%1686, %c11_486] : memref<16x16xf32, #tpu.memory_space<smem>>
      %1688 = vector.broadcast %1687 : f32 to vector<1x128xf32>
      %1689 = arith.addf %1685, %1688 : vector<1x128xf32>
      %c7_487 = arith.constant 7 : index
      %c0_488 = arith.constant 0 : index
      %c0_489 = arith.constant 0 : index
      %1690 = vector.load %arg4[%c7_487, %c0_488, %c0_489] : memref<8x3x128xf32, #tpu.memory_space<vmem>>, vector<1x1x128xf32>
      %1691 = vector.shape_cast %1690 : vector<1x1x128xf32> to vector<1x128xf32>
      %1692 = vector.shape_cast %1653 : vector<1x128xf32> to vector<1x1x128xf32>
      tpu.vector_store %arg4[%c7_487, %c0_488, %c0_489], %1692 {strides = array<i32>} : memref<8x3x128xf32, #tpu.memory_space<vmem>>, vector<1x1x128xf32>,
      %c7_490 = arith.constant 7 : index
      %c1_491 = arith.constant 1 : index
      %c0_492 = arith.constant 0 : index
      %1693 = vector.load %arg4[%c7_490, %c1_491, %c0_492] : memref<8x3x128xf32, #tpu.memory_space<vmem>>, vector<1x1x128xf32>
      %1694 = vector.shape_cast %1693 : vector<1x1x128xf32> to vector<1x128xf32>
      %1695 = vector.shape_cast %1671 : vector<1x128xf32> to vector<1x1x128xf32>
      tpu.vector_store %arg4[%c7_490, %c1_491, %c0_492], %1695 {strides = array<i32>} : memref<8x3x128xf32, #tpu.memory_space<vmem>>, vector<1x1x128xf32>,
      %c7_493 = arith.constant 7 : index
      %c2_494 = arith.constant 2 : index
      %c0_495 = arith.constant 0 : index
      %1696 = vector.load %arg4[%c7_493, %c2_494, %c0_495] : memref<8x3x128xf32, #tpu.memory_space<vmem>>, vector<1x1x128xf32>
      %1697 = vector.shape_cast %1696 : vector<1x1x128xf32> to vector<1x128xf32>
      %1698 = vector.shape_cast %1689 : vector<1x128xf32> to vector<1x1x128xf32>
      tpu.vector_store %arg4[%c7_493, %c2_494, %c0_495], %1698 {strides = array<i32>} : memref<8x3x128xf32, #tpu.memory_space<vmem>>, vector<1x1x128xf32>,
      %cst_496 = arith.constant -8.000000e+00 : f32
      %1699 = vector.broadcast %cst_496 : f32 to vector<1x128xf32>
      %1700 = arith.subf %1653, %1699 : vector<1x128xf32>
      %cst_497 = arith.constant 1.000000e+00 : f32
      %1701 = vector.broadcast %cst_497 : f32 to vector<1x128xf32>
      %1702 = arith.mulf %1700, %1701 : vector<1x128xf32>
      %cst_498 = arith.constant 5.000000e-01 : f32
      %1703 = vector.broadcast %cst_498 : f32 to vector<1x128xf32>
      %1704 = arith.subf %1702, %1703 : vector<1x128xf32>
      %cst_499 = arith.constant -8.000000e+00 : f32
      %1705 = vector.broadcast %cst_499 : f32 to vector<1x128xf32>
      %1706 = arith.subf %1671, %1705 : vector<1x128xf32>
      %cst_500 = arith.constant 1.000000e+00 : f32
      %1707 = vector.broadcast %cst_500 : f32 to vector<1x128xf32>
      %1708 = arith.mulf %1706, %1707 : vector<1x128xf32>
      %cst_501 = arith.constant 5.000000e-01 : f32
      %1709 = vector.broadcast %cst_501 : f32 to vector<1x128xf32>
      %1710 = arith.subf %1708, %1709 : vector<1x128xf32>
      %cst_502 = arith.constant 1.000000e+01 : f32
      %1711 = vector.broadcast %cst_502 : f32 to vector<1x128xf32>
      %1712 = arith.subf %1689, %1711 : vector<1x128xf32>
      %cst_503 = arith.constant 1.000000e+00 : f32
      %1713 = vector.broadcast %cst_503 : f32 to vector<1x128xf32>
      %1714 = arith.mulf %1712, %1713 : vector<1x128xf32>
      %cst_504 = arith.constant 5.000000e-01 : f32
      %1715 = vector.broadcast %cst_504 : f32 to vector<1x128xf32>
      %1716 = arith.subf %1714, %1715 : vector<1x128xf32>
      %cst_505 = arith.constant 5.000000e-01 : f32
      %1717 = vector.broadcast %cst_505 : f32 to vector<1x128xf32>
      %1718 = arith.addf %1704, %1717 : vector<1x128xf32>
      %1719 = math.floor %1718 : vector<1x128xf32>
      %cst_506 = arith.constant 5.000000e-01 : f32
      %1720 = vector.broadcast %cst_506 : f32 to vector<1x128xf32>
      %1721 = arith.addf %1710, %1720 : vector<1x128xf32>
      %1722 = math.floor %1721 : vector<1x128xf32>
      %cst_507 = arith.constant 5.000000e-01 : f32
      %1723 = vector.broadcast %cst_507 : f32 to vector<1x128xf32>
      %1724 = arith.addf %1716, %1723 : vector<1x128xf32>
      %1725 = math.floor %1724 : vector<1x128xf32>
      %cst_508 = arith.constant 0.000000e+00 : f32
      %1726 = vector.broadcast %cst_508 : f32 to vector<1x128xf32>
      %1727 = arith.cmpf oge, %1719, %1726 : vector<1x128xf32>
      %cst_509 = arith.constant 1.500000e+01 : f32
      %1728 = vector.broadcast %cst_509 : f32 to vector<1x128xf32>
      %1729 = arith.cmpf ole, %1719, %1728 : vector<1x128xf32>
      %1730 = arith.andi %1727, %1729 : vector<1x128xi1>
      %cst_510 = arith.constant 0.000000e+00 : f32
      %1731 = vector.broadcast %cst_510 : f32 to vector<1x128xf32>
      %1732 = arith.cmpf oge, %1722, %1731 : vector<1x128xf32>
      %1733 = arith.andi %1730, %1732 : vector<1x128xi1>
      %cst_511 = arith.constant 1.500000e+01 : f32
      %1734 = vector.broadcast %cst_511 : f32 to vector<1x128xf32>
      %1735 = arith.cmpf ole, %1722, %1734 : vector<1x128xf32>
      %1736 = arith.andi %1733, %1735 : vector<1x128xi1>
      %cst_512 = arith.constant 0.000000e+00 : f32
      %1737 = vector.broadcast %cst_512 : f32 to vector<1x128xf32>
      %1738 = arith.cmpf oge, %1725, %1737 : vector<1x128xf32>
      %1739 = arith.andi %1736, %1738 : vector<1x128xi1>
      %cst_513 = arith.constant 1.500000e+01 : f32
      %1740 = vector.broadcast %cst_513 : f32 to vector<1x128xf32>
      %1741 = arith.cmpf ole, %1725, %1740 : vector<1x128xf32>
      %1742 = arith.andi %1739, %1741 : vector<1x128xi1>
      %cst_514 = arith.constant 2.560000e+02 : f32
      %1743 = vector.broadcast %cst_514 : f32 to vector<1x128xf32>
      %1744 = arith.mulf %1725, %1743 : vector<1x128xf32>
      %cst_515 = arith.constant 1.600000e+01 : f32
      %1745 = vector.broadcast %cst_515 : f32 to vector<1x128xf32>
      %1746 = arith.mulf %1722, %1745 : vector<1x128xf32>
      %1747 = arith.addf %1744, %1746 : vector<1x128xf32>
      %1748 = arith.addf %1747, %1719 : vector<1x128xf32>
      %cst_516 = arith.constant -1.000000e+00 : f32
      %1749 = vector.broadcast %cst_516 : f32 to vector<1x128xf32>
      %1750 = arith.select %1742, %1748, %1749 : vector<1x128xi1>, vector<1x128xf32>
      %c7_517 = arith.constant 7 : index
      %c0_518 = arith.constant 0 : index
      %1751 = vector.load %arg6[%c7_517, %c0_518] : memref<8x128xf32, #tpu.memory_space<vmem>>, vector<1x128xf32>
      tpu.vector_store %arg6[%c7_517, %c0_518], %1750 {strides = array<i32>} : memref<8x128xf32, #tpu.memory_space<vmem>>, vector<1x128xf32>,
    } else {
    }
    %c2048_i32 = arith.constant 2048 : i32
    %3 = arith.muli %arg1, %c2048_i32 : i32
    %4 = arith.sitofp %3 : i32 to f32
    %5 = tpu.iota {dimensions = array<i32: 1>} : vector<1x2048xi32>
    %6 = arith.sitofp %5 : vector<1x2048xi32> to vector<1x2048xf32>
    %7 = vector.broadcast %4 : f32 to vector<1x2048xf32>
    %8 = arith.addf %6, %7 : vector<1x2048xf32>
    %c0 = arith.constant 0 : index
    %c0_1 = arith.constant 0 : index
    %9 = vector.load %arg6[%c0, %c0_1] : memref<8x128xf32, #tpu.memory_space<vmem>>, vector<8x128xf32>
    %cst = arith.constant 0.000000e+00 : f32
    %10 = vector.broadcast %cst : f32 to vector<8x2048xf32>
    %11 = vector.extract_strided_slice %9 {offsets = [0, 0], sizes = [8, 1], strides = [1, 1]} : vector<8x128xf32> to vector<8x1xf32>
    %12 = vector.broadcast %11 : vector<8x1xf32> to vector<8x2048xf32>
    %13 = vector.broadcast %8 : vector<1x2048xf32> to vector<8x2048xf32>
    %14 = arith.cmpf oeq, %12, %13 : vector<8x2048xf32>
    %cst_2 = arith.constant 1.000000e+00 : f32
    %15 = vector.broadcast %cst_2 : f32 to vector<8x2048xf32>
    %16 = arith.select %14, %15, %10 : vector<8x2048xi1>, vector<8x2048xf32>
    %17 = vector.extract_strided_slice %9 {offsets = [0, 1], sizes = [8, 1], strides = [1, 1]} : vector<8x128xf32> to vector<8x1xf32>
    %18 = vector.broadcast %17 : vector<8x1xf32> to vector<8x2048xf32>
    %19 = vector.broadcast %8 : vector<1x2048xf32> to vector<8x2048xf32>
    %20 = arith.cmpf oeq, %18, %19 : vector<8x2048xf32>
    %cst_3 = arith.constant 1.000000e+00 : f32
    %21 = vector.broadcast %cst_3 : f32 to vector<8x2048xf32>
    %22 = arith.select %20, %21, %16 : vector<8x2048xi1>, vector<8x2048xf32>
    %23 = vector.extract_strided_slice %9 {offsets = [0, 2], sizes = [8, 1], strides = [1, 1]} : vector<8x128xf32> to vector<8x1xf32>
    %24 = vector.broadcast %23 : vector<8x1xf32> to vector<8x2048xf32>
    %25 = vector.broadcast %8 : vector<1x2048xf32> to vector<8x2048xf32>
    %26 = arith.cmpf oeq, %24, %25 : vector<8x2048xf32>
    %cst_4 = arith.constant 1.000000e+00 : f32
    %27 = vector.broadcast %cst_4 : f32 to vector<8x2048xf32>
    %28 = arith.select %26, %27, %22 : vector<8x2048xi1>, vector<8x2048xf32>
    %29 = vector.extract_strided_slice %9 {offsets = [0, 3], sizes = [8, 1], strides = [1, 1]} : vector<8x128xf32> to vector<8x1xf32>
    %30 = vector.broadcast %29 : vector<8x1xf32> to vector<8x2048xf32>
    %31 = vector.broadcast %8 : vector<1x2048xf32> to vector<8x2048xf32>
    %32 = arith.cmpf oeq, %30, %31 : vector<8x2048xf32>
    %cst_5 = arith.constant 1.000000e+00 : f32
    %33 = vector.broadcast %cst_5 : f32 to vector<8x2048xf32>
    %34 = arith.select %32, %33, %28 : vector<8x2048xi1>, vector<8x2048xf32>
    %35 = vector.extract_strided_slice %9 {offsets = [0, 4], sizes = [8, 1], strides = [1, 1]} : vector<8x128xf32> to vector<8x1xf32>
    %36 = vector.broadcast %35 : vector<8x1xf32> to vector<8x2048xf32>
    %37 = vector.broadcast %8 : vector<1x2048xf32> to vector<8x2048xf32>
    %38 = arith.cmpf oeq, %36, %37 : vector<8x2048xf32>
    %cst_6 = arith.constant 1.000000e+00 : f32
    %39 = vector.broadcast %cst_6 : f32 to vector<8x2048xf32>
    %40 = arith.select %38, %39, %34 : vector<8x2048xi1>, vector<8x2048xf32>
    %41 = vector.extract_strided_slice %9 {offsets = [0, 5], sizes = [8, 1], strides = [1, 1]} : vector<8x128xf32> to vector<8x1xf32>
    %42 = vector.broadcast %41 : vector<8x1xf32> to vector<8x2048xf32>
    %43 = vector.broadcast %8 : vector<1x2048xf32> to vector<8x2048xf32>
    %44 = arith.cmpf oeq, %42, %43 : vector<8x2048xf32>
    %cst_7 = arith.constant 1.000000e+00 : f32
    %45 = vector.broadcast %cst_7 : f32 to vector<8x2048xf32>
    %46 = arith.select %44, %45, %40 : vector<8x2048xi1>, vector<8x2048xf32>
    %47 = vector.extract_strided_slice %9 {offsets = [0, 6], sizes = [8, 1], strides = [1, 1]} : vector<8x128xf32> to vector<8x1xf32>
    %48 = vector.broadcast %47 : vector<8x1xf32> to vector<8x2048xf32>
    %49 = vector.broadcast %8 : vector<1x2048xf32> to vector<8x2048xf32>
    %50 = arith.cmpf oeq, %48, %49 : vector<8x2048xf32>
    %cst_8 = arith.constant 1.000000e+00 : f32
    %51 = vector.broadcast %cst_8 : f32 to vector<8x2048xf32>
    %52 = arith.select %50, %51, %46 : vector<8x2048xi1>, vector<8x2048xf32>
    %53 = vector.extract_strided_slice %9 {offsets = [0, 7], sizes = [8, 1], strides = [1, 1]} : vector<8x128xf32> to vector<8x1xf32>
    %54 = vector.broadcast %53 : vector<8x1xf32> to vector<8x2048xf32>
    %55 = vector.broadcast %8 : vector<1x2048xf32> to vector<8x2048xf32>
    %56 = arith.cmpf oeq, %54, %55 : vector<8x2048xf32>
    %cst_9 = arith.constant 1.000000e+00 : f32
    %57 = vector.broadcast %cst_9 : f32 to vector<8x2048xf32>
    %58 = arith.select %56, %57, %52 : vector<8x2048xi1>, vector<8x2048xf32>
    %59 = vector.extract_strided_slice %9 {offsets = [0, 8], sizes = [8, 1], strides = [1, 1]} : vector<8x128xf32> to vector<8x1xf32>
    %60 = vector.broadcast %59 : vector<8x1xf32> to vector<8x2048xf32>
    %61 = vector.broadcast %8 : vector<1x2048xf32> to vector<8x2048xf32>
    %62 = arith.cmpf oeq, %60, %61 : vector<8x2048xf32>
    %cst_10 = arith.constant 1.000000e+00 : f32
    %63 = vector.broadcast %cst_10 : f32 to vector<8x2048xf32>
    %64 = arith.select %62, %63, %58 : vector<8x2048xi1>, vector<8x2048xf32>
    %65 = vector.extract_strided_slice %9 {offsets = [0, 9], sizes = [8, 1], strides = [1, 1]} : vector<8x128xf32> to vector<8x1xf32>
    %66 = vector.broadcast %65 : vector<8x1xf32> to vector<8x2048xf32>
    %67 = vector.broadcast %8 : vector<1x2048xf32> to vector<8x2048xf32>
    %68 = arith.cmpf oeq, %66, %67 : vector<8x2048xf32>
    %cst_11 = arith.constant 1.000000e+00 : f32
    %69 = vector.broadcast %cst_11 : f32 to vector<8x2048xf32>
    %70 = arith.select %68, %69, %64 : vector<8x2048xi1>, vector<8x2048xf32>
    %71 = vector.extract_strided_slice %9 {offsets = [0, 10], sizes = [8, 1], strides = [1, 1]} : vector<8x128xf32> to vector<8x1xf32>
    %72 = vector.broadcast %71 : vector<8x1xf32> to vector<8x2048xf32>
    %73 = vector.broadcast %8 : vector<1x2048xf32> to vector<8x2048xf32>
    %74 = arith.cmpf oeq, %72, %73 : vector<8x2048xf32>
    %cst_12 = arith.constant 1.000000e+00 : f32
    %75 = vector.broadcast %cst_12 : f32 to vector<8x2048xf32>
    %76 = arith.select %74, %75, %70 : vector<8x2048xi1>, vector<8x2048xf32>
    %77 = vector.extract_strided_slice %9 {offsets = [0, 11], sizes = [8, 1], strides = [1, 1]} : vector<8x128xf32> to vector<8x1xf32>
    %78 = vector.broadcast %77 : vector<8x1xf32> to vector<8x2048xf32>
    %79 = vector.broadcast %8 : vector<1x2048xf32> to vector<8x2048xf32>
    %80 = arith.cmpf oeq, %78, %79 : vector<8x2048xf32>
    %cst_13 = arith.constant 1.000000e+00 : f32
    %81 = vector.broadcast %cst_13 : f32 to vector<8x2048xf32>
    %82 = arith.select %80, %81, %76 : vector<8x2048xi1>, vector<8x2048xf32>
    %83 = vector.extract_strided_slice %9 {offsets = [0, 12], sizes = [8, 1], strides = [1, 1]} : vector<8x128xf32> to vector<8x1xf32>
    %84 = vector.broadcast %83 : vector<8x1xf32> to vector<8x2048xf32>
    %85 = vector.broadcast %8 : vector<1x2048xf32> to vector<8x2048xf32>
    %86 = arith.cmpf oeq, %84, %85 : vector<8x2048xf32>
    %cst_14 = arith.constant 1.000000e+00 : f32
    %87 = vector.broadcast %cst_14 : f32 to vector<8x2048xf32>
    %88 = arith.select %86, %87, %82 : vector<8x2048xi1>, vector<8x2048xf32>
    %89 = vector.extract_strided_slice %9 {offsets = [0, 13], sizes = [8, 1], strides = [1, 1]} : vector<8x128xf32> to vector<8x1xf32>
    %90 = vector.broadcast %89 : vector<8x1xf32> to vector<8x2048xf32>
    %91 = vector.broadcast %8 : vector<1x2048xf32> to vector<8x2048xf32>
    %92 = arith.cmpf oeq, %90, %91 : vector<8x2048xf32>
    %cst_15 = arith.constant 1.000000e+00 : f32
    %93 = vector.broadcast %cst_15 : f32 to vector<8x2048xf32>
    %94 = arith.select %92, %93, %88 : vector<8x2048xi1>, vector<8x2048xf32>
    %95 = vector.extract_strided_slice %9 {offsets = [0, 14], sizes = [8, 1], strides = [1, 1]} : vector<8x128xf32> to vector<8x1xf32>
    %96 = vector.broadcast %95 : vector<8x1xf32> to vector<8x2048xf32>
    %97 = vector.broadcast %8 : vector<1x2048xf32> to vector<8x2048xf32>
    %98 = arith.cmpf oeq, %96, %97 : vector<8x2048xf32>
    %cst_16 = arith.constant 1.000000e+00 : f32
    %99 = vector.broadcast %cst_16 : f32 to vector<8x2048xf32>
    %100 = arith.select %98, %99, %94 : vector<8x2048xi1>, vector<8x2048xf32>
    %101 = vector.extract_strided_slice %9 {offsets = [0, 15], sizes = [8, 1], strides = [1, 1]} : vector<8x128xf32> to vector<8x1xf32>
    %102 = vector.broadcast %101 : vector<8x1xf32> to vector<8x2048xf32>
    %103 = vector.broadcast %8 : vector<1x2048xf32> to vector<8x2048xf32>
    %104 = arith.cmpf oeq, %102, %103 : vector<8x2048xf32>
    %cst_17 = arith.constant 1.000000e+00 : f32
    %105 = vector.broadcast %cst_17 : f32 to vector<8x2048xf32>
    %106 = arith.select %104, %105, %100 : vector<8x2048xi1>, vector<8x2048xf32>
    %107 = vector.extract_strided_slice %9 {offsets = [0, 16], sizes = [8, 1], strides = [1, 1]} : vector<8x128xf32> to vector<8x1xf32>
    %108 = vector.broadcast %107 : vector<8x1xf32> to vector<8x2048xf32>
    %109 = vector.broadcast %8 : vector<1x2048xf32> to vector<8x2048xf32>
    %110 = arith.cmpf oeq, %108, %109 : vector<8x2048xf32>
    %cst_18 = arith.constant 1.000000e+00 : f32
    %111 = vector.broadcast %cst_18 : f32 to vector<8x2048xf32>
    %112 = arith.select %110, %111, %106 : vector<8x2048xi1>, vector<8x2048xf32>
    %113 = vector.extract_strided_slice %9 {offsets = [0, 17], sizes = [8, 1], strides = [1, 1]} : vector<8x128xf32> to vector<8x1xf32>
    %114 = vector.broadcast %113 : vector<8x1xf32> to vector<8x2048xf32>
    %115 = vector.broadcast %8 : vector<1x2048xf32> to vector<8x2048xf32>
    %116 = arith.cmpf oeq, %114, %115 : vector<8x2048xf32>
    %cst_19 = arith.constant 1.000000e+00 : f32
    %117 = vector.broadcast %cst_19 : f32 to vector<8x2048xf32>
    %118 = arith.select %116, %117, %112 : vector<8x2048xi1>, vector<8x2048xf32>
    %119 = vector.extract_strided_slice %9 {offsets = [0, 18], sizes = [8, 1], strides = [1, 1]} : vector<8x128xf32> to vector<8x1xf32>
    %120 = vector.broadcast %119 : vector<8x1xf32> to vector<8x2048xf32>
    %121 = vector.broadcast %8 : vector<1x2048xf32> to vector<8x2048xf32>
    %122 = arith.cmpf oeq, %120, %121 : vector<8x2048xf32>
    %cst_20 = arith.constant 1.000000e+00 : f32
    %123 = vector.broadcast %cst_20 : f32 to vector<8x2048xf32>
    %124 = arith.select %122, %123, %118 : vector<8x2048xi1>, vector<8x2048xf32>
    %125 = vector.extract_strided_slice %9 {offsets = [0, 19], sizes = [8, 1], strides = [1, 1]} : vector<8x128xf32> to vector<8x1xf32>
    %126 = vector.broadcast %125 : vector<8x1xf32> to vector<8x2048xf32>
    %127 = vector.broadcast %8 : vector<1x2048xf32> to vector<8x2048xf32>
    %128 = arith.cmpf oeq, %126, %127 : vector<8x2048xf32>
    %cst_21 = arith.constant 1.000000e+00 : f32
    %129 = vector.broadcast %cst_21 : f32 to vector<8x2048xf32>
    %130 = arith.select %128, %129, %124 : vector<8x2048xi1>, vector<8x2048xf32>
    %131 = vector.extract_strided_slice %9 {offsets = [0, 20], sizes = [8, 1], strides = [1, 1]} : vector<8x128xf32> to vector<8x1xf32>
    %132 = vector.broadcast %131 : vector<8x1xf32> to vector<8x2048xf32>
    %133 = vector.broadcast %8 : vector<1x2048xf32> to vector<8x2048xf32>
    %134 = arith.cmpf oeq, %132, %133 : vector<8x2048xf32>
    %cst_22 = arith.constant 1.000000e+00 : f32
    %135 = vector.broadcast %cst_22 : f32 to vector<8x2048xf32>
    %136 = arith.select %134, %135, %130 : vector<8x2048xi1>, vector<8x2048xf32>
    %137 = vector.extract_strided_slice %9 {offsets = [0, 21], sizes = [8, 1], strides = [1, 1]} : vector<8x128xf32> to vector<8x1xf32>
    %138 = vector.broadcast %137 : vector<8x1xf32> to vector<8x2048xf32>
    %139 = vector.broadcast %8 : vector<1x2048xf32> to vector<8x2048xf32>
    %140 = arith.cmpf oeq, %138, %139 : vector<8x2048xf32>
    %cst_23 = arith.constant 1.000000e+00 : f32
    %141 = vector.broadcast %cst_23 : f32 to vector<8x2048xf32>
    %142 = arith.select %140, %141, %136 : vector<8x2048xi1>, vector<8x2048xf32>
    %143 = vector.extract_strided_slice %9 {offsets = [0, 22], sizes = [8, 1], strides = [1, 1]} : vector<8x128xf32> to vector<8x1xf32>
    %144 = vector.broadcast %143 : vector<8x1xf32> to vector<8x2048xf32>
    %145 = vector.broadcast %8 : vector<1x2048xf32> to vector<8x2048xf32>
    %146 = arith.cmpf oeq, %144, %145 : vector<8x2048xf32>
    %cst_24 = arith.constant 1.000000e+00 : f32
    %147 = vector.broadcast %cst_24 : f32 to vector<8x2048xf32>
    %148 = arith.select %146, %147, %142 : vector<8x2048xi1>, vector<8x2048xf32>
    %149 = vector.extract_strided_slice %9 {offsets = [0, 23], sizes = [8, 1], strides = [1, 1]} : vector<8x128xf32> to vector<8x1xf32>
    %150 = vector.broadcast %149 : vector<8x1xf32> to vector<8x2048xf32>
    %151 = vector.broadcast %8 : vector<1x2048xf32> to vector<8x2048xf32>
    %152 = arith.cmpf oeq, %150, %151 : vector<8x2048xf32>
    %cst_25 = arith.constant 1.000000e+00 : f32
    %153 = vector.broadcast %cst_25 : f32 to vector<8x2048xf32>
    %154 = arith.select %152, %153, %148 : vector<8x2048xi1>, vector<8x2048xf32>
    %155 = vector.extract_strided_slice %9 {offsets = [0, 24], sizes = [8, 1], strides = [1, 1]} : vector<8x128xf32> to vector<8x1xf32>
    %156 = vector.broadcast %155 : vector<8x1xf32> to vector<8x2048xf32>
    %157 = vector.broadcast %8 : vector<1x2048xf32> to vector<8x2048xf32>
    %158 = arith.cmpf oeq, %156, %157 : vector<8x2048xf32>
    %cst_26 = arith.constant 1.000000e+00 : f32
    %159 = vector.broadcast %cst_26 : f32 to vector<8x2048xf32>
    %160 = arith.select %158, %159, %154 : vector<8x2048xi1>, vector<8x2048xf32>
    %161 = vector.extract_strided_slice %9 {offsets = [0, 25], sizes = [8, 1], strides = [1, 1]} : vector<8x128xf32> to vector<8x1xf32>
    %162 = vector.broadcast %161 : vector<8x1xf32> to vector<8x2048xf32>
    %163 = vector.broadcast %8 : vector<1x2048xf32> to vector<8x2048xf32>
    %164 = arith.cmpf oeq, %162, %163 : vector<8x2048xf32>
    %cst_27 = arith.constant 1.000000e+00 : f32
    %165 = vector.broadcast %cst_27 : f32 to vector<8x2048xf32>
    %166 = arith.select %164, %165, %160 : vector<8x2048xi1>, vector<8x2048xf32>
    %167 = vector.extract_strided_slice %9 {offsets = [0, 26], sizes = [8, 1], strides = [1, 1]} : vector<8x128xf32> to vector<8x1xf32>
    %168 = vector.broadcast %167 : vector<8x1xf32> to vector<8x2048xf32>
    %169 = vector.broadcast %8 : vector<1x2048xf32> to vector<8x2048xf32>
    %170 = arith.cmpf oeq, %168, %169 : vector<8x2048xf32>
    %cst_28 = arith.constant 1.000000e+00 : f32
    %171 = vector.broadcast %cst_28 : f32 to vector<8x2048xf32>
    %172 = arith.select %170, %171, %166 : vector<8x2048xi1>, vector<8x2048xf32>
    %173 = vector.extract_strided_slice %9 {offsets = [0, 27], sizes = [8, 1], strides = [1, 1]} : vector<8x128xf32> to vector<8x1xf32>
    %174 = vector.broadcast %173 : vector<8x1xf32> to vector<8x2048xf32>
    %175 = vector.broadcast %8 : vector<1x2048xf32> to vector<8x2048xf32>
    %176 = arith.cmpf oeq, %174, %175 : vector<8x2048xf32>
    %cst_29 = arith.constant 1.000000e+00 : f32
    %177 = vector.broadcast %cst_29 : f32 to vector<8x2048xf32>
    %178 = arith.select %176, %177, %172 : vector<8x2048xi1>, vector<8x2048xf32>
    %179 = vector.extract_strided_slice %9 {offsets = [0, 28], sizes = [8, 1], strides = [1, 1]} : vector<8x128xf32> to vector<8x1xf32>
    %180 = vector.broadcast %179 : vector<8x1xf32> to vector<8x2048xf32>
    %181 = vector.broadcast %8 : vector<1x2048xf32> to vector<8x2048xf32>
    %182 = arith.cmpf oeq, %180, %181 : vector<8x2048xf32>
    %cst_30 = arith.constant 1.000000e+00 : f32
    %183 = vector.broadcast %cst_30 : f32 to vector<8x2048xf32>
    %184 = arith.select %182, %183, %178 : vector<8x2048xi1>, vector<8x2048xf32>
    %185 = vector.extract_strided_slice %9 {offsets = [0, 29], sizes = [8, 1], strides = [1, 1]} : vector<8x128xf32> to vector<8x1xf32>
    %186 = vector.broadcast %185 : vector<8x1xf32> to vector<8x2048xf32>
    %187 = vector.broadcast %8 : vector<1x2048xf32> to vector<8x2048xf32>
    %188 = arith.cmpf oeq, %186, %187 : vector<8x2048xf32>
    %cst_31 = arith.constant 1.000000e+00 : f32
    %189 = vector.broadcast %cst_31 : f32 to vector<8x2048xf32>
    %190 = arith.select %188, %189, %184 : vector<8x2048xi1>, vector<8x2048xf32>
    %191 = vector.extract_strided_slice %9 {offsets = [0, 30], sizes = [8, 1], strides = [1, 1]} : vector<8x128xf32> to vector<8x1xf32>
    %192 = vector.broadcast %191 : vector<8x1xf32> to vector<8x2048xf32>
    %193 = vector.broadcast %8 : vector<1x2048xf32> to vector<8x2048xf32>
    %194 = arith.cmpf oeq, %192, %193 : vector<8x2048xf32>
    %cst_32 = arith.constant 1.000000e+00 : f32
    %195 = vector.broadcast %cst_32 : f32 to vector<8x2048xf32>
    %196 = arith.select %194, %195, %190 : vector<8x2048xi1>, vector<8x2048xf32>
    %197 = vector.extract_strided_slice %9 {offsets = [0, 31], sizes = [8, 1], strides = [1, 1]} : vector<8x128xf32> to vector<8x1xf32>
    %198 = vector.broadcast %197 : vector<8x1xf32> to vector<8x2048xf32>
    %199 = vector.broadcast %8 : vector<1x2048xf32> to vector<8x2048xf32>
    %200 = arith.cmpf oeq, %198, %199 : vector<8x2048xf32>
    %cst_33 = arith.constant 1.000000e+00 : f32
    %201 = vector.broadcast %cst_33 : f32 to vector<8x2048xf32>
    %202 = arith.select %200, %201, %196 : vector<8x2048xi1>, vector<8x2048xf32>
    %203 = vector.extract_strided_slice %9 {offsets = [0, 32], sizes = [8, 1], strides = [1, 1]} : vector<8x128xf32> to vector<8x1xf32>
    %204 = vector.broadcast %203 : vector<8x1xf32> to vector<8x2048xf32>
    %205 = vector.broadcast %8 : vector<1x2048xf32> to vector<8x2048xf32>
    %206 = arith.cmpf oeq, %204, %205 : vector<8x2048xf32>
    %cst_34 = arith.constant 1.000000e+00 : f32
    %207 = vector.broadcast %cst_34 : f32 to vector<8x2048xf32>
    %208 = arith.select %206, %207, %202 : vector<8x2048xi1>, vector<8x2048xf32>
    %209 = vector.extract_strided_slice %9 {offsets = [0, 33], sizes = [8, 1], strides = [1, 1]} : vector<8x128xf32> to vector<8x1xf32>
    %210 = vector.broadcast %209 : vector<8x1xf32> to vector<8x2048xf32>
    %211 = vector.broadcast %8 : vector<1x2048xf32> to vector<8x2048xf32>
    %212 = arith.cmpf oeq, %210, %211 : vector<8x2048xf32>
    %cst_35 = arith.constant 1.000000e+00 : f32
    %213 = vector.broadcast %cst_35 : f32 to vector<8x2048xf32>
    %214 = arith.select %212, %213, %208 : vector<8x2048xi1>, vector<8x2048xf32>
    %215 = vector.extract_strided_slice %9 {offsets = [0, 34], sizes = [8, 1], strides = [1, 1]} : vector<8x128xf32> to vector<8x1xf32>
    %216 = vector.broadcast %215 : vector<8x1xf32> to vector<8x2048xf32>
    %217 = vector.broadcast %8 : vector<1x2048xf32> to vector<8x2048xf32>
    %218 = arith.cmpf oeq, %216, %217 : vector<8x2048xf32>
    %cst_36 = arith.constant 1.000000e+00 : f32
    %219 = vector.broadcast %cst_36 : f32 to vector<8x2048xf32>
    %220 = arith.select %218, %219, %214 : vector<8x2048xi1>, vector<8x2048xf32>
    %221 = vector.extract_strided_slice %9 {offsets = [0, 35], sizes = [8, 1], strides = [1, 1]} : vector<8x128xf32> to vector<8x1xf32>
    %222 = vector.broadcast %221 : vector<8x1xf32> to vector<8x2048xf32>
    %223 = vector.broadcast %8 : vector<1x2048xf32> to vector<8x2048xf32>
    %224 = arith.cmpf oeq, %222, %223 : vector<8x2048xf32>
    %cst_37 = arith.constant 1.000000e+00 : f32
    %225 = vector.broadcast %cst_37 : f32 to vector<8x2048xf32>
    %226 = arith.select %224, %225, %220 : vector<8x2048xi1>, vector<8x2048xf32>
    %227 = vector.extract_strided_slice %9 {offsets = [0, 36], sizes = [8, 1], strides = [1, 1]} : vector<8x128xf32> to vector<8x1xf32>
    %228 = vector.broadcast %227 : vector<8x1xf32> to vector<8x2048xf32>
    %229 = vector.broadcast %8 : vector<1x2048xf32> to vector<8x2048xf32>
    %230 = arith.cmpf oeq, %228, %229 : vector<8x2048xf32>
    %cst_38 = arith.constant 1.000000e+00 : f32
    %231 = vector.broadcast %cst_38 : f32 to vector<8x2048xf32>
    %232 = arith.select %230, %231, %226 : vector<8x2048xi1>, vector<8x2048xf32>
    %233 = vector.extract_strided_slice %9 {offsets = [0, 37], sizes = [8, 1], strides = [1, 1]} : vector<8x128xf32> to vector<8x1xf32>
    %234 = vector.broadcast %233 : vector<8x1xf32> to vector<8x2048xf32>
    %235 = vector.broadcast %8 : vector<1x2048xf32> to vector<8x2048xf32>
    %236 = arith.cmpf oeq, %234, %235 : vector<8x2048xf32>
    %cst_39 = arith.constant 1.000000e+00 : f32
    %237 = vector.broadcast %cst_39 : f32 to vector<8x2048xf32>
    %238 = arith.select %236, %237, %232 : vector<8x2048xi1>, vector<8x2048xf32>
    %239 = vector.extract_strided_slice %9 {offsets = [0, 38], sizes = [8, 1], strides = [1, 1]} : vector<8x128xf32> to vector<8x1xf32>
    %240 = vector.broadcast %239 : vector<8x1xf32> to vector<8x2048xf32>
    %241 = vector.broadcast %8 : vector<1x2048xf32> to vector<8x2048xf32>
    %242 = arith.cmpf oeq, %240, %241 : vector<8x2048xf32>
    %cst_40 = arith.constant 1.000000e+00 : f32
    %243 = vector.broadcast %cst_40 : f32 to vector<8x2048xf32>
    %244 = arith.select %242, %243, %238 : vector<8x2048xi1>, vector<8x2048xf32>
    %245 = vector.extract_strided_slice %9 {offsets = [0, 39], sizes = [8, 1], strides = [1, 1]} : vector<8x128xf32> to vector<8x1xf32>
    %246 = vector.broadcast %245 : vector<8x1xf32> to vector<8x2048xf32>
    %247 = vector.broadcast %8 : vector<1x2048xf32> to vector<8x2048xf32>
    %248 = arith.cmpf oeq, %246, %247 : vector<8x2048xf32>
    %cst_41 = arith.constant 1.000000e+00 : f32
    %249 = vector.broadcast %cst_41 : f32 to vector<8x2048xf32>
    %250 = arith.select %248, %249, %244 : vector<8x2048xi1>, vector<8x2048xf32>
    %251 = vector.extract_strided_slice %9 {offsets = [0, 40], sizes = [8, 1], strides = [1, 1]} : vector<8x128xf32> to vector<8x1xf32>
    %252 = vector.broadcast %251 : vector<8x1xf32> to vector<8x2048xf32>
    %253 = vector.broadcast %8 : vector<1x2048xf32> to vector<8x2048xf32>
    %254 = arith.cmpf oeq, %252, %253 : vector<8x2048xf32>
    %cst_42 = arith.constant 1.000000e+00 : f32
    %255 = vector.broadcast %cst_42 : f32 to vector<8x2048xf32>
    %256 = arith.select %254, %255, %250 : vector<8x2048xi1>, vector<8x2048xf32>
    %257 = vector.extract_strided_slice %9 {offsets = [0, 41], sizes = [8, 1], strides = [1, 1]} : vector<8x128xf32> to vector<8x1xf32>
    %258 = vector.broadcast %257 : vector<8x1xf32> to vector<8x2048xf32>
    %259 = vector.broadcast %8 : vector<1x2048xf32> to vector<8x2048xf32>
    %260 = arith.cmpf oeq, %258, %259 : vector<8x2048xf32>
    %cst_43 = arith.constant 1.000000e+00 : f32
    %261 = vector.broadcast %cst_43 : f32 to vector<8x2048xf32>
    %262 = arith.select %260, %261, %256 : vector<8x2048xi1>, vector<8x2048xf32>
    %263 = vector.extract_strided_slice %9 {offsets = [0, 42], sizes = [8, 1], strides = [1, 1]} : vector<8x128xf32> to vector<8x1xf32>
    %264 = vector.broadcast %263 : vector<8x1xf32> to vector<8x2048xf32>
    %265 = vector.broadcast %8 : vector<1x2048xf32> to vector<8x2048xf32>
    %266 = arith.cmpf oeq, %264, %265 : vector<8x2048xf32>
    %cst_44 = arith.constant 1.000000e+00 : f32
    %267 = vector.broadcast %cst_44 : f32 to vector<8x2048xf32>
    %268 = arith.select %266, %267, %262 : vector<8x2048xi1>, vector<8x2048xf32>
    %269 = vector.extract_strided_slice %9 {offsets = [0, 43], sizes = [8, 1], strides = [1, 1]} : vector<8x128xf32> to vector<8x1xf32>
    %270 = vector.broadcast %269 : vector<8x1xf32> to vector<8x2048xf32>
    %271 = vector.broadcast %8 : vector<1x2048xf32> to vector<8x2048xf32>
    %272 = arith.cmpf oeq, %270, %271 : vector<8x2048xf32>
    %cst_45 = arith.constant 1.000000e+00 : f32
    %273 = vector.broadcast %cst_45 : f32 to vector<8x2048xf32>
    %274 = arith.select %272, %273, %268 : vector<8x2048xi1>, vector<8x2048xf32>
    %275 = vector.extract_strided_slice %9 {offsets = [0, 44], sizes = [8, 1], strides = [1, 1]} : vector<8x128xf32> to vector<8x1xf32>
    %276 = vector.broadcast %275 : vector<8x1xf32> to vector<8x2048xf32>
    %277 = vector.broadcast %8 : vector<1x2048xf32> to vector<8x2048xf32>
    %278 = arith.cmpf oeq, %276, %277 : vector<8x2048xf32>
    %cst_46 = arith.constant 1.000000e+00 : f32
    %279 = vector.broadcast %cst_46 : f32 to vector<8x2048xf32>
    %280 = arith.select %278, %279, %274 : vector<8x2048xi1>, vector<8x2048xf32>
    %281 = vector.extract_strided_slice %9 {offsets = [0, 45], sizes = [8, 1], strides = [1, 1]} : vector<8x128xf32> to vector<8x1xf32>
    %282 = vector.broadcast %281 : vector<8x1xf32> to vector<8x2048xf32>
    %283 = vector.broadcast %8 : vector<1x2048xf32> to vector<8x2048xf32>
    %284 = arith.cmpf oeq, %282, %283 : vector<8x2048xf32>
    %cst_47 = arith.constant 1.000000e+00 : f32
    %285 = vector.broadcast %cst_47 : f32 to vector<8x2048xf32>
    %286 = arith.select %284, %285, %280 : vector<8x2048xi1>, vector<8x2048xf32>
    %287 = vector.extract_strided_slice %9 {offsets = [0, 46], sizes = [8, 1], strides = [1, 1]} : vector<8x128xf32> to vector<8x1xf32>
    %288 = vector.broadcast %287 : vector<8x1xf32> to vector<8x2048xf32>
    %289 = vector.broadcast %8 : vector<1x2048xf32> to vector<8x2048xf32>
    %290 = arith.cmpf oeq, %288, %289 : vector<8x2048xf32>
    %cst_48 = arith.constant 1.000000e+00 : f32
    %291 = vector.broadcast %cst_48 : f32 to vector<8x2048xf32>
    %292 = arith.select %290, %291, %286 : vector<8x2048xi1>, vector<8x2048xf32>
    %293 = vector.extract_strided_slice %9 {offsets = [0, 47], sizes = [8, 1], strides = [1, 1]} : vector<8x128xf32> to vector<8x1xf32>
    %294 = vector.broadcast %293 : vector<8x1xf32> to vector<8x2048xf32>
    %295 = vector.broadcast %8 : vector<1x2048xf32> to vector<8x2048xf32>
    %296 = arith.cmpf oeq, %294, %295 : vector<8x2048xf32>
    %cst_49 = arith.constant 1.000000e+00 : f32
    %297 = vector.broadcast %cst_49 : f32 to vector<8x2048xf32>
    %298 = arith.select %296, %297, %292 : vector<8x2048xi1>, vector<8x2048xf32>
    %299 = vector.extract_strided_slice %9 {offsets = [0, 48], sizes = [8, 1], strides = [1, 1]} : vector<8x128xf32> to vector<8x1xf32>
    %300 = vector.broadcast %299 : vector<8x1xf32> to vector<8x2048xf32>
    %301 = vector.broadcast %8 : vector<1x2048xf32> to vector<8x2048xf32>
    %302 = arith.cmpf oeq, %300, %301 : vector<8x2048xf32>
    %cst_50 = arith.constant 1.000000e+00 : f32
    %303 = vector.broadcast %cst_50 : f32 to vector<8x2048xf32>
    %304 = arith.select %302, %303, %298 : vector<8x2048xi1>, vector<8x2048xf32>
    %305 = vector.extract_strided_slice %9 {offsets = [0, 49], sizes = [8, 1], strides = [1, 1]} : vector<8x128xf32> to vector<8x1xf32>
    %306 = vector.broadcast %305 : vector<8x1xf32> to vector<8x2048xf32>
    %307 = vector.broadcast %8 : vector<1x2048xf32> to vector<8x2048xf32>
    %308 = arith.cmpf oeq, %306, %307 : vector<8x2048xf32>
    %cst_51 = arith.constant 1.000000e+00 : f32
    %309 = vector.broadcast %cst_51 : f32 to vector<8x2048xf32>
    %310 = arith.select %308, %309, %304 : vector<8x2048xi1>, vector<8x2048xf32>
    %311 = vector.extract_strided_slice %9 {offsets = [0, 50], sizes = [8, 1], strides = [1, 1]} : vector<8x128xf32> to vector<8x1xf32>
    %312 = vector.broadcast %311 : vector<8x1xf32> to vector<8x2048xf32>
    %313 = vector.broadcast %8 : vector<1x2048xf32> to vector<8x2048xf32>
    %314 = arith.cmpf oeq, %312, %313 : vector<8x2048xf32>
    %cst_52 = arith.constant 1.000000e+00 : f32
    %315 = vector.broadcast %cst_52 : f32 to vector<8x2048xf32>
    %316 = arith.select %314, %315, %310 : vector<8x2048xi1>, vector<8x2048xf32>
    %317 = vector.extract_strided_slice %9 {offsets = [0, 51], sizes = [8, 1], strides = [1, 1]} : vector<8x128xf32> to vector<8x1xf32>
    %318 = vector.broadcast %317 : vector<8x1xf32> to vector<8x2048xf32>
    %319 = vector.broadcast %8 : vector<1x2048xf32> to vector<8x2048xf32>
    %320 = arith.cmpf oeq, %318, %319 : vector<8x2048xf32>
    %cst_53 = arith.constant 1.000000e+00 : f32
    %321 = vector.broadcast %cst_53 : f32 to vector<8x2048xf32>
    %322 = arith.select %320, %321, %316 : vector<8x2048xi1>, vector<8x2048xf32>
    %323 = vector.extract_strided_slice %9 {offsets = [0, 52], sizes = [8, 1], strides = [1, 1]} : vector<8x128xf32> to vector<8x1xf32>
    %324 = vector.broadcast %323 : vector<8x1xf32> to vector<8x2048xf32>
    %325 = vector.broadcast %8 : vector<1x2048xf32> to vector<8x2048xf32>
    %326 = arith.cmpf oeq, %324, %325 : vector<8x2048xf32>
    %cst_54 = arith.constant 1.000000e+00 : f32
    %327 = vector.broadcast %cst_54 : f32 to vector<8x2048xf32>
    %328 = arith.select %326, %327, %322 : vector<8x2048xi1>, vector<8x2048xf32>
    %329 = vector.extract_strided_slice %9 {offsets = [0, 53], sizes = [8, 1], strides = [1, 1]} : vector<8x128xf32> to vector<8x1xf32>
    %330 = vector.broadcast %329 : vector<8x1xf32> to vector<8x2048xf32>
    %331 = vector.broadcast %8 : vector<1x2048xf32> to vector<8x2048xf32>
    %332 = arith.cmpf oeq, %330, %331 : vector<8x2048xf32>
    %cst_55 = arith.constant 1.000000e+00 : f32
    %333 = vector.broadcast %cst_55 : f32 to vector<8x2048xf32>
    %334 = arith.select %332, %333, %328 : vector<8x2048xi1>, vector<8x2048xf32>
    %335 = vector.extract_strided_slice %9 {offsets = [0, 54], sizes = [8, 1], strides = [1, 1]} : vector<8x128xf32> to vector<8x1xf32>
    %336 = vector.broadcast %335 : vector<8x1xf32> to vector<8x2048xf32>
    %337 = vector.broadcast %8 : vector<1x2048xf32> to vector<8x2048xf32>
    %338 = arith.cmpf oeq, %336, %337 : vector<8x2048xf32>
    %cst_56 = arith.constant 1.000000e+00 : f32
    %339 = vector.broadcast %cst_56 : f32 to vector<8x2048xf32>
    %340 = arith.select %338, %339, %334 : vector<8x2048xi1>, vector<8x2048xf32>
    %341 = vector.extract_strided_slice %9 {offsets = [0, 55], sizes = [8, 1], strides = [1, 1]} : vector<8x128xf32> to vector<8x1xf32>
    %342 = vector.broadcast %341 : vector<8x1xf32> to vector<8x2048xf32>
    %343 = vector.broadcast %8 : vector<1x2048xf32> to vector<8x2048xf32>
    %344 = arith.cmpf oeq, %342, %343 : vector<8x2048xf32>
    %cst_57 = arith.constant 1.000000e+00 : f32
    %345 = vector.broadcast %cst_57 : f32 to vector<8x2048xf32>
    %346 = arith.select %344, %345, %340 : vector<8x2048xi1>, vector<8x2048xf32>
    %347 = vector.extract_strided_slice %9 {offsets = [0, 56], sizes = [8, 1], strides = [1, 1]} : vector<8x128xf32> to vector<8x1xf32>
    %348 = vector.broadcast %347 : vector<8x1xf32> to vector<8x2048xf32>
    %349 = vector.broadcast %8 : vector<1x2048xf32> to vector<8x2048xf32>
    %350 = arith.cmpf oeq, %348, %349 : vector<8x2048xf32>
    %cst_58 = arith.constant 1.000000e+00 : f32
    %351 = vector.broadcast %cst_58 : f32 to vector<8x2048xf32>
    %352 = arith.select %350, %351, %346 : vector<8x2048xi1>, vector<8x2048xf32>
    %353 = vector.extract_strided_slice %9 {offsets = [0, 57], sizes = [8, 1], strides = [1, 1]} : vector<8x128xf32> to vector<8x1xf32>
    %354 = vector.broadcast %353 : vector<8x1xf32> to vector<8x2048xf32>
    %355 = vector.broadcast %8 : vector<1x2048xf32> to vector<8x2048xf32>
    %356 = arith.cmpf oeq, %354, %355 : vector<8x2048xf32>
    %cst_59 = arith.constant 1.000000e+00 : f32
    %357 = vector.broadcast %cst_59 : f32 to vector<8x2048xf32>
    %358 = arith.select %356, %357, %352 : vector<8x2048xi1>, vector<8x2048xf32>
    %359 = vector.extract_strided_slice %9 {offsets = [0, 58], sizes = [8, 1], strides = [1, 1]} : vector<8x128xf32> to vector<8x1xf32>
    %360 = vector.broadcast %359 : vector<8x1xf32> to vector<8x2048xf32>
    %361 = vector.broadcast %8 : vector<1x2048xf32> to vector<8x2048xf32>
    %362 = arith.cmpf oeq, %360, %361 : vector<8x2048xf32>
    %cst_60 = arith.constant 1.000000e+00 : f32
    %363 = vector.broadcast %cst_60 : f32 to vector<8x2048xf32>
    %364 = arith.select %362, %363, %358 : vector<8x2048xi1>, vector<8x2048xf32>
    %365 = vector.extract_strided_slice %9 {offsets = [0, 59], sizes = [8, 1], strides = [1, 1]} : vector<8x128xf32> to vector<8x1xf32>
    %366 = vector.broadcast %365 : vector<8x1xf32> to vector<8x2048xf32>
    %367 = vector.broadcast %8 : vector<1x2048xf32> to vector<8x2048xf32>
    %368 = arith.cmpf oeq, %366, %367 : vector<8x2048xf32>
    %cst_61 = arith.constant 1.000000e+00 : f32
    %369 = vector.broadcast %cst_61 : f32 to vector<8x2048xf32>
    %370 = arith.select %368, %369, %364 : vector<8x2048xi1>, vector<8x2048xf32>
    %371 = vector.extract_strided_slice %9 {offsets = [0, 60], sizes = [8, 1], strides = [1, 1]} : vector<8x128xf32> to vector<8x1xf32>
    %372 = vector.broadcast %371 : vector<8x1xf32> to vector<8x2048xf32>
    %373 = vector.broadcast %8 : vector<1x2048xf32> to vector<8x2048xf32>
    %374 = arith.cmpf oeq, %372, %373 : vector<8x2048xf32>
    %cst_62 = arith.constant 1.000000e+00 : f32
    %375 = vector.broadcast %cst_62 : f32 to vector<8x2048xf32>
    %376 = arith.select %374, %375, %370 : vector<8x2048xi1>, vector<8x2048xf32>
    %377 = vector.extract_strided_slice %9 {offsets = [0, 61], sizes = [8, 1], strides = [1, 1]} : vector<8x128xf32> to vector<8x1xf32>
    %378 = vector.broadcast %377 : vector<8x1xf32> to vector<8x2048xf32>
    %379 = vector.broadcast %8 : vector<1x2048xf32> to vector<8x2048xf32>
    %380 = arith.cmpf oeq, %378, %379 : vector<8x2048xf32>
    %cst_63 = arith.constant 1.000000e+00 : f32
    %381 = vector.broadcast %cst_63 : f32 to vector<8x2048xf32>
    %382 = arith.select %380, %381, %376 : vector<8x2048xi1>, vector<8x2048xf32>
    %383 = vector.extract_strided_slice %9 {offsets = [0, 62], sizes = [8, 1], strides = [1, 1]} : vector<8x128xf32> to vector<8x1xf32>
    %384 = vector.broadcast %383 : vector<8x1xf32> to vector<8x2048xf32>
    %385 = vector.broadcast %8 : vector<1x2048xf32> to vector<8x2048xf32>
    %386 = arith.cmpf oeq, %384, %385 : vector<8x2048xf32>
    %cst_64 = arith.constant 1.000000e+00 : f32
    %387 = vector.broadcast %cst_64 : f32 to vector<8x2048xf32>
    %388 = arith.select %386, %387, %382 : vector<8x2048xi1>, vector<8x2048xf32>
    %389 = vector.extract_strided_slice %9 {offsets = [0, 63], sizes = [8, 1], strides = [1, 1]} : vector<8x128xf32> to vector<8x1xf32>
    %390 = vector.broadcast %389 : vector<8x1xf32> to vector<8x2048xf32>
    %391 = vector.broadcast %8 : vector<1x2048xf32> to vector<8x2048xf32>
    %392 = arith.cmpf oeq, %390, %391 : vector<8x2048xf32>
    %cst_65 = arith.constant 1.000000e+00 : f32
    %393 = vector.broadcast %cst_65 : f32 to vector<8x2048xf32>
    %394 = arith.select %392, %393, %388 : vector<8x2048xi1>, vector<8x2048xf32>
    %395 = vector.extract_strided_slice %9 {offsets = [0, 64], sizes = [8, 1], strides = [1, 1]} : vector<8x128xf32> to vector<8x1xf32>
    %396 = vector.broadcast %395 : vector<8x1xf32> to vector<8x2048xf32>
    %397 = vector.broadcast %8 : vector<1x2048xf32> to vector<8x2048xf32>
    %398 = arith.cmpf oeq, %396, %397 : vector<8x2048xf32>
    %cst_66 = arith.constant 1.000000e+00 : f32
    %399 = vector.broadcast %cst_66 : f32 to vector<8x2048xf32>
    %400 = arith.select %398, %399, %394 : vector<8x2048xi1>, vector<8x2048xf32>
    %401 = vector.extract_strided_slice %9 {offsets = [0, 65], sizes = [8, 1], strides = [1, 1]} : vector<8x128xf32> to vector<8x1xf32>
    %402 = vector.broadcast %401 : vector<8x1xf32> to vector<8x2048xf32>
    %403 = vector.broadcast %8 : vector<1x2048xf32> to vector<8x2048xf32>
    %404 = arith.cmpf oeq, %402, %403 : vector<8x2048xf32>
    %cst_67 = arith.constant 1.000000e+00 : f32
    %405 = vector.broadcast %cst_67 : f32 to vector<8x2048xf32>
    %406 = arith.select %404, %405, %400 : vector<8x2048xi1>, vector<8x2048xf32>
    %407 = vector.extract_strided_slice %9 {offsets = [0, 66], sizes = [8, 1], strides = [1, 1]} : vector<8x128xf32> to vector<8x1xf32>
    %408 = vector.broadcast %407 : vector<8x1xf32> to vector<8x2048xf32>
    %409 = vector.broadcast %8 : vector<1x2048xf32> to vector<8x2048xf32>
    %410 = arith.cmpf oeq, %408, %409 : vector<8x2048xf32>
    %cst_68 = arith.constant 1.000000e+00 : f32
    %411 = vector.broadcast %cst_68 : f32 to vector<8x2048xf32>
    %412 = arith.select %410, %411, %406 : vector<8x2048xi1>, vector<8x2048xf32>
    %413 = vector.extract_strided_slice %9 {offsets = [0, 67], sizes = [8, 1], strides = [1, 1]} : vector<8x128xf32> to vector<8x1xf32>
    %414 = vector.broadcast %413 : vector<8x1xf32> to vector<8x2048xf32>
    %415 = vector.broadcast %8 : vector<1x2048xf32> to vector<8x2048xf32>
    %416 = arith.cmpf oeq, %414, %415 : vector<8x2048xf32>
    %cst_69 = arith.constant 1.000000e+00 : f32
    %417 = vector.broadcast %cst_69 : f32 to vector<8x2048xf32>
    %418 = arith.select %416, %417, %412 : vector<8x2048xi1>, vector<8x2048xf32>
    %419 = vector.extract_strided_slice %9 {offsets = [0, 68], sizes = [8, 1], strides = [1, 1]} : vector<8x128xf32> to vector<8x1xf32>
    %420 = vector.broadcast %419 : vector<8x1xf32> to vector<8x2048xf32>
    %421 = vector.broadcast %8 : vector<1x2048xf32> to vector<8x2048xf32>
    %422 = arith.cmpf oeq, %420, %421 : vector<8x2048xf32>
    %cst_70 = arith.constant 1.000000e+00 : f32
    %423 = vector.broadcast %cst_70 : f32 to vector<8x2048xf32>
    %424 = arith.select %422, %423, %418 : vector<8x2048xi1>, vector<8x2048xf32>
    %425 = vector.extract_strided_slice %9 {offsets = [0, 69], sizes = [8, 1], strides = [1, 1]} : vector<8x128xf32> to vector<8x1xf32>
    %426 = vector.broadcast %425 : vector<8x1xf32> to vector<8x2048xf32>
    %427 = vector.broadcast %8 : vector<1x2048xf32> to vector<8x2048xf32>
    %428 = arith.cmpf oeq, %426, %427 : vector<8x2048xf32>
    %cst_71 = arith.constant 1.000000e+00 : f32
    %429 = vector.broadcast %cst_71 : f32 to vector<8x2048xf32>
    %430 = arith.select %428, %429, %424 : vector<8x2048xi1>, vector<8x2048xf32>
    %431 = vector.extract_strided_slice %9 {offsets = [0, 70], sizes = [8, 1], strides = [1, 1]} : vector<8x128xf32> to vector<8x1xf32>
    %432 = vector.broadcast %431 : vector<8x1xf32> to vector<8x2048xf32>
    %433 = vector.broadcast %8 : vector<1x2048xf32> to vector<8x2048xf32>
    %434 = arith.cmpf oeq, %432, %433 : vector<8x2048xf32>
    %cst_72 = arith.constant 1.000000e+00 : f32
    %435 = vector.broadcast %cst_72 : f32 to vector<8x2048xf32>
    %436 = arith.select %434, %435, %430 : vector<8x2048xi1>, vector<8x2048xf32>
    %437 = vector.extract_strided_slice %9 {offsets = [0, 71], sizes = [8, 1], strides = [1, 1]} : vector<8x128xf32> to vector<8x1xf32>
    %438 = vector.broadcast %437 : vector<8x1xf32> to vector<8x2048xf32>
    %439 = vector.broadcast %8 : vector<1x2048xf32> to vector<8x2048xf32>
    %440 = arith.cmpf oeq, %438, %439 : vector<8x2048xf32>
    %cst_73 = arith.constant 1.000000e+00 : f32
    %441 = vector.broadcast %cst_73 : f32 to vector<8x2048xf32>
    %442 = arith.select %440, %441, %436 : vector<8x2048xi1>, vector<8x2048xf32>
    %443 = vector.extract_strided_slice %9 {offsets = [0, 72], sizes = [8, 1], strides = [1, 1]} : vector<8x128xf32> to vector<8x1xf32>
    %444 = vector.broadcast %443 : vector<8x1xf32> to vector<8x2048xf32>
    %445 = vector.broadcast %8 : vector<1x2048xf32> to vector<8x2048xf32>
    %446 = arith.cmpf oeq, %444, %445 : vector<8x2048xf32>
    %cst_74 = arith.constant 1.000000e+00 : f32
    %447 = vector.broadcast %cst_74 : f32 to vector<8x2048xf32>
    %448 = arith.select %446, %447, %442 : vector<8x2048xi1>, vector<8x2048xf32>
    %449 = vector.extract_strided_slice %9 {offsets = [0, 73], sizes = [8, 1], strides = [1, 1]} : vector<8x128xf32> to vector<8x1xf32>
    %450 = vector.broadcast %449 : vector<8x1xf32> to vector<8x2048xf32>
    %451 = vector.broadcast %8 : vector<1x2048xf32> to vector<8x2048xf32>
    %452 = arith.cmpf oeq, %450, %451 : vector<8x2048xf32>
    %cst_75 = arith.constant 1.000000e+00 : f32
    %453 = vector.broadcast %cst_75 : f32 to vector<8x2048xf32>
    %454 = arith.select %452, %453, %448 : vector<8x2048xi1>, vector<8x2048xf32>
    %455 = vector.extract_strided_slice %9 {offsets = [0, 74], sizes = [8, 1], strides = [1, 1]} : vector<8x128xf32> to vector<8x1xf32>
    %456 = vector.broadcast %455 : vector<8x1xf32> to vector<8x2048xf32>
    %457 = vector.broadcast %8 : vector<1x2048xf32> to vector<8x2048xf32>
    %458 = arith.cmpf oeq, %456, %457 : vector<8x2048xf32>
    %cst_76 = arith.constant 1.000000e+00 : f32
    %459 = vector.broadcast %cst_76 : f32 to vector<8x2048xf32>
    %460 = arith.select %458, %459, %454 : vector<8x2048xi1>, vector<8x2048xf32>
    %461 = vector.extract_strided_slice %9 {offsets = [0, 75], sizes = [8, 1], strides = [1, 1]} : vector<8x128xf32> to vector<8x1xf32>
    %462 = vector.broadcast %461 : vector<8x1xf32> to vector<8x2048xf32>
    %463 = vector.broadcast %8 : vector<1x2048xf32> to vector<8x2048xf32>
    %464 = arith.cmpf oeq, %462, %463 : vector<8x2048xf32>
    %cst_77 = arith.constant 1.000000e+00 : f32
    %465 = vector.broadcast %cst_77 : f32 to vector<8x2048xf32>
    %466 = arith.select %464, %465, %460 : vector<8x2048xi1>, vector<8x2048xf32>
    %467 = vector.extract_strided_slice %9 {offsets = [0, 76], sizes = [8, 1], strides = [1, 1]} : vector<8x128xf32> to vector<8x1xf32>
    %468 = vector.broadcast %467 : vector<8x1xf32> to vector<8x2048xf32>
    %469 = vector.broadcast %8 : vector<1x2048xf32> to vector<8x2048xf32>
    %470 = arith.cmpf oeq, %468, %469 : vector<8x2048xf32>
    %cst_78 = arith.constant 1.000000e+00 : f32
    %471 = vector.broadcast %cst_78 : f32 to vector<8x2048xf32>
    %472 = arith.select %470, %471, %466 : vector<8x2048xi1>, vector<8x2048xf32>
    %473 = vector.extract_strided_slice %9 {offsets = [0, 77], sizes = [8, 1], strides = [1, 1]} : vector<8x128xf32> to vector<8x1xf32>
    %474 = vector.broadcast %473 : vector<8x1xf32> to vector<8x2048xf32>
    %475 = vector.broadcast %8 : vector<1x2048xf32> to vector<8x2048xf32>
    %476 = arith.cmpf oeq, %474, %475 : vector<8x2048xf32>
    %cst_79 = arith.constant 1.000000e+00 : f32
    %477 = vector.broadcast %cst_79 : f32 to vector<8x2048xf32>
    %478 = arith.select %476, %477, %472 : vector<8x2048xi1>, vector<8x2048xf32>
    %479 = vector.extract_strided_slice %9 {offsets = [0, 78], sizes = [8, 1], strides = [1, 1]} : vector<8x128xf32> to vector<8x1xf32>
    %480 = vector.broadcast %479 : vector<8x1xf32> to vector<8x2048xf32>
    %481 = vector.broadcast %8 : vector<1x2048xf32> to vector<8x2048xf32>
    %482 = arith.cmpf oeq, %480, %481 : vector<8x2048xf32>
    %cst_80 = arith.constant 1.000000e+00 : f32
    %483 = vector.broadcast %cst_80 : f32 to vector<8x2048xf32>
    %484 = arith.select %482, %483, %478 : vector<8x2048xi1>, vector<8x2048xf32>
    %485 = vector.extract_strided_slice %9 {offsets = [0, 79], sizes = [8, 1], strides = [1, 1]} : vector<8x128xf32> to vector<8x1xf32>
    %486 = vector.broadcast %485 : vector<8x1xf32> to vector<8x2048xf32>
    %487 = vector.broadcast %8 : vector<1x2048xf32> to vector<8x2048xf32>
    %488 = arith.cmpf oeq, %486, %487 : vector<8x2048xf32>
    %cst_81 = arith.constant 1.000000e+00 : f32
    %489 = vector.broadcast %cst_81 : f32 to vector<8x2048xf32>
    %490 = arith.select %488, %489, %484 : vector<8x2048xi1>, vector<8x2048xf32>
    %491 = vector.extract_strided_slice %9 {offsets = [0, 80], sizes = [8, 1], strides = [1, 1]} : vector<8x128xf32> to vector<8x1xf32>
    %492 = vector.broadcast %491 : vector<8x1xf32> to vector<8x2048xf32>
    %493 = vector.broadcast %8 : vector<1x2048xf32> to vector<8x2048xf32>
    %494 = arith.cmpf oeq, %492, %493 : vector<8x2048xf32>
    %cst_82 = arith.constant 1.000000e+00 : f32
    %495 = vector.broadcast %cst_82 : f32 to vector<8x2048xf32>
    %496 = arith.select %494, %495, %490 : vector<8x2048xi1>, vector<8x2048xf32>
    %497 = vector.extract_strided_slice %9 {offsets = [0, 81], sizes = [8, 1], strides = [1, 1]} : vector<8x128xf32> to vector<8x1xf32>
    %498 = vector.broadcast %497 : vector<8x1xf32> to vector<8x2048xf32>
    %499 = vector.broadcast %8 : vector<1x2048xf32> to vector<8x2048xf32>
    %500 = arith.cmpf oeq, %498, %499 : vector<8x2048xf32>
    %cst_83 = arith.constant 1.000000e+00 : f32
    %501 = vector.broadcast %cst_83 : f32 to vector<8x2048xf32>
    %502 = arith.select %500, %501, %496 : vector<8x2048xi1>, vector<8x2048xf32>
    %503 = vector.extract_strided_slice %9 {offsets = [0, 82], sizes = [8, 1], strides = [1, 1]} : vector<8x128xf32> to vector<8x1xf32>
    %504 = vector.broadcast %503 : vector<8x1xf32> to vector<8x2048xf32>
    %505 = vector.broadcast %8 : vector<1x2048xf32> to vector<8x2048xf32>
    %506 = arith.cmpf oeq, %504, %505 : vector<8x2048xf32>
    %cst_84 = arith.constant 1.000000e+00 : f32
    %507 = vector.broadcast %cst_84 : f32 to vector<8x2048xf32>
    %508 = arith.select %506, %507, %502 : vector<8x2048xi1>, vector<8x2048xf32>
    %509 = vector.extract_strided_slice %9 {offsets = [0, 83], sizes = [8, 1], strides = [1, 1]} : vector<8x128xf32> to vector<8x1xf32>
    %510 = vector.broadcast %509 : vector<8x1xf32> to vector<8x2048xf32>
    %511 = vector.broadcast %8 : vector<1x2048xf32> to vector<8x2048xf32>
    %512 = arith.cmpf oeq, %510, %511 : vector<8x2048xf32>
    %cst_85 = arith.constant 1.000000e+00 : f32
    %513 = vector.broadcast %cst_85 : f32 to vector<8x2048xf32>
    %514 = arith.select %512, %513, %508 : vector<8x2048xi1>, vector<8x2048xf32>
    %515 = vector.extract_strided_slice %9 {offsets = [0, 84], sizes = [8, 1], strides = [1, 1]} : vector<8x128xf32> to vector<8x1xf32>
    %516 = vector.broadcast %515 : vector<8x1xf32> to vector<8x2048xf32>
    %517 = vector.broadcast %8 : vector<1x2048xf32> to vector<8x2048xf32>
    %518 = arith.cmpf oeq, %516, %517 : vector<8x2048xf32>
    %cst_86 = arith.constant 1.000000e+00 : f32
    %519 = vector.broadcast %cst_86 : f32 to vector<8x2048xf32>
    %520 = arith.select %518, %519, %514 : vector<8x2048xi1>, vector<8x2048xf32>
    %521 = vector.extract_strided_slice %9 {offsets = [0, 85], sizes = [8, 1], strides = [1, 1]} : vector<8x128xf32> to vector<8x1xf32>
    %522 = vector.broadcast %521 : vector<8x1xf32> to vector<8x2048xf32>
    %523 = vector.broadcast %8 : vector<1x2048xf32> to vector<8x2048xf32>
    %524 = arith.cmpf oeq, %522, %523 : vector<8x2048xf32>
    %cst_87 = arith.constant 1.000000e+00 : f32
    %525 = vector.broadcast %cst_87 : f32 to vector<8x2048xf32>
    %526 = arith.select %524, %525, %520 : vector<8x2048xi1>, vector<8x2048xf32>
    %527 = vector.extract_strided_slice %9 {offsets = [0, 86], sizes = [8, 1], strides = [1, 1]} : vector<8x128xf32> to vector<8x1xf32>
    %528 = vector.broadcast %527 : vector<8x1xf32> to vector<8x2048xf32>
    %529 = vector.broadcast %8 : vector<1x2048xf32> to vector<8x2048xf32>
    %530 = arith.cmpf oeq, %528, %529 : vector<8x2048xf32>
    %cst_88 = arith.constant 1.000000e+00 : f32
    %531 = vector.broadcast %cst_88 : f32 to vector<8x2048xf32>
    %532 = arith.select %530, %531, %526 : vector<8x2048xi1>, vector<8x2048xf32>
    %533 = vector.extract_strided_slice %9 {offsets = [0, 87], sizes = [8, 1], strides = [1, 1]} : vector<8x128xf32> to vector<8x1xf32>
    %534 = vector.broadcast %533 : vector<8x1xf32> to vector<8x2048xf32>
    %535 = vector.broadcast %8 : vector<1x2048xf32> to vector<8x2048xf32>
    %536 = arith.cmpf oeq, %534, %535 : vector<8x2048xf32>
    %cst_89 = arith.constant 1.000000e+00 : f32
    %537 = vector.broadcast %cst_89 : f32 to vector<8x2048xf32>
    %538 = arith.select %536, %537, %532 : vector<8x2048xi1>, vector<8x2048xf32>
    %539 = vector.extract_strided_slice %9 {offsets = [0, 88], sizes = [8, 1], strides = [1, 1]} : vector<8x128xf32> to vector<8x1xf32>
    %540 = vector.broadcast %539 : vector<8x1xf32> to vector<8x2048xf32>
    %541 = vector.broadcast %8 : vector<1x2048xf32> to vector<8x2048xf32>
    %542 = arith.cmpf oeq, %540, %541 : vector<8x2048xf32>
    %cst_90 = arith.constant 1.000000e+00 : f32
    %543 = vector.broadcast %cst_90 : f32 to vector<8x2048xf32>
    %544 = arith.select %542, %543, %538 : vector<8x2048xi1>, vector<8x2048xf32>
    %545 = vector.extract_strided_slice %9 {offsets = [0, 89], sizes = [8, 1], strides = [1, 1]} : vector<8x128xf32> to vector<8x1xf32>
    %546 = vector.broadcast %545 : vector<8x1xf32> to vector<8x2048xf32>
    %547 = vector.broadcast %8 : vector<1x2048xf32> to vector<8x2048xf32>
    %548 = arith.cmpf oeq, %546, %547 : vector<8x2048xf32>
    %cst_91 = arith.constant 1.000000e+00 : f32
    %549 = vector.broadcast %cst_91 : f32 to vector<8x2048xf32>
    %550 = arith.select %548, %549, %544 : vector<8x2048xi1>, vector<8x2048xf32>
    %551 = vector.extract_strided_slice %9 {offsets = [0, 90], sizes = [8, 1], strides = [1, 1]} : vector<8x128xf32> to vector<8x1xf32>
    %552 = vector.broadcast %551 : vector<8x1xf32> to vector<8x2048xf32>
    %553 = vector.broadcast %8 : vector<1x2048xf32> to vector<8x2048xf32>
    %554 = arith.cmpf oeq, %552, %553 : vector<8x2048xf32>
    %cst_92 = arith.constant 1.000000e+00 : f32
    %555 = vector.broadcast %cst_92 : f32 to vector<8x2048xf32>
    %556 = arith.select %554, %555, %550 : vector<8x2048xi1>, vector<8x2048xf32>
    %557 = vector.extract_strided_slice %9 {offsets = [0, 91], sizes = [8, 1], strides = [1, 1]} : vector<8x128xf32> to vector<8x1xf32>
    %558 = vector.broadcast %557 : vector<8x1xf32> to vector<8x2048xf32>
    %559 = vector.broadcast %8 : vector<1x2048xf32> to vector<8x2048xf32>
    %560 = arith.cmpf oeq, %558, %559 : vector<8x2048xf32>
    %cst_93 = arith.constant 1.000000e+00 : f32
    %561 = vector.broadcast %cst_93 : f32 to vector<8x2048xf32>
    %562 = arith.select %560, %561, %556 : vector<8x2048xi1>, vector<8x2048xf32>
    %563 = vector.extract_strided_slice %9 {offsets = [0, 92], sizes = [8, 1], strides = [1, 1]} : vector<8x128xf32> to vector<8x1xf32>
    %564 = vector.broadcast %563 : vector<8x1xf32> to vector<8x2048xf32>
    %565 = vector.broadcast %8 : vector<1x2048xf32> to vector<8x2048xf32>
    %566 = arith.cmpf oeq, %564, %565 : vector<8x2048xf32>
    %cst_94 = arith.constant 1.000000e+00 : f32
    %567 = vector.broadcast %cst_94 : f32 to vector<8x2048xf32>
    %568 = arith.select %566, %567, %562 : vector<8x2048xi1>, vector<8x2048xf32>
    %569 = vector.extract_strided_slice %9 {offsets = [0, 93], sizes = [8, 1], strides = [1, 1]} : vector<8x128xf32> to vector<8x1xf32>
    %570 = vector.broadcast %569 : vector<8x1xf32> to vector<8x2048xf32>
    %571 = vector.broadcast %8 : vector<1x2048xf32> to vector<8x2048xf32>
    %572 = arith.cmpf oeq, %570, %571 : vector<8x2048xf32>
    %cst_95 = arith.constant 1.000000e+00 : f32
    %573 = vector.broadcast %cst_95 : f32 to vector<8x2048xf32>
    %574 = arith.select %572, %573, %568 : vector<8x2048xi1>, vector<8x2048xf32>
    %575 = vector.extract_strided_slice %9 {offsets = [0, 94], sizes = [8, 1], strides = [1, 1]} : vector<8x128xf32> to vector<8x1xf32>
    %576 = vector.broadcast %575 : vector<8x1xf32> to vector<8x2048xf32>
    %577 = vector.broadcast %8 : vector<1x2048xf32> to vector<8x2048xf32>
    %578 = arith.cmpf oeq, %576, %577 : vector<8x2048xf32>
    %cst_96 = arith.constant 1.000000e+00 : f32
    %579 = vector.broadcast %cst_96 : f32 to vector<8x2048xf32>
    %580 = arith.select %578, %579, %574 : vector<8x2048xi1>, vector<8x2048xf32>
    %581 = vector.extract_strided_slice %9 {offsets = [0, 95], sizes = [8, 1], strides = [1, 1]} : vector<8x128xf32> to vector<8x1xf32>
    %582 = vector.broadcast %581 : vector<8x1xf32> to vector<8x2048xf32>
    %583 = vector.broadcast %8 : vector<1x2048xf32> to vector<8x2048xf32>
    %584 = arith.cmpf oeq, %582, %583 : vector<8x2048xf32>
    %cst_97 = arith.constant 1.000000e+00 : f32
    %585 = vector.broadcast %cst_97 : f32 to vector<8x2048xf32>
    %586 = arith.select %584, %585, %580 : vector<8x2048xi1>, vector<8x2048xf32>
    %587 = vector.extract_strided_slice %9 {offsets = [0, 96], sizes = [8, 1], strides = [1, 1]} : vector<8x128xf32> to vector<8x1xf32>
    %588 = vector.broadcast %587 : vector<8x1xf32> to vector<8x2048xf32>
    %589 = vector.broadcast %8 : vector<1x2048xf32> to vector<8x2048xf32>
    %590 = arith.cmpf oeq, %588, %589 : vector<8x2048xf32>
    %cst_98 = arith.constant 1.000000e+00 : f32
    %591 = vector.broadcast %cst_98 : f32 to vector<8x2048xf32>
    %592 = arith.select %590, %591, %586 : vector<8x2048xi1>, vector<8x2048xf32>
    %593 = vector.extract_strided_slice %9 {offsets = [0, 97], sizes = [8, 1], strides = [1, 1]} : vector<8x128xf32> to vector<8x1xf32>
    %594 = vector.broadcast %593 : vector<8x1xf32> to vector<8x2048xf32>
    %595 = vector.broadcast %8 : vector<1x2048xf32> to vector<8x2048xf32>
    %596 = arith.cmpf oeq, %594, %595 : vector<8x2048xf32>
    %cst_99 = arith.constant 1.000000e+00 : f32
    %597 = vector.broadcast %cst_99 : f32 to vector<8x2048xf32>
    %598 = arith.select %596, %597, %592 : vector<8x2048xi1>, vector<8x2048xf32>
    %599 = vector.extract_strided_slice %9 {offsets = [0, 98], sizes = [8, 1], strides = [1, 1]} : vector<8x128xf32> to vector<8x1xf32>
    %600 = vector.broadcast %599 : vector<8x1xf32> to vector<8x2048xf32>
    %601 = vector.broadcast %8 : vector<1x2048xf32> to vector<8x2048xf32>
    %602 = arith.cmpf oeq, %600, %601 : vector<8x2048xf32>
    %cst_100 = arith.constant 1.000000e+00 : f32
    %603 = vector.broadcast %cst_100 : f32 to vector<8x2048xf32>
    %604 = arith.select %602, %603, %598 : vector<8x2048xi1>, vector<8x2048xf32>
    %605 = vector.extract_strided_slice %9 {offsets = [0, 99], sizes = [8, 1], strides = [1, 1]} : vector<8x128xf32> to vector<8x1xf32>
    %606 = vector.broadcast %605 : vector<8x1xf32> to vector<8x2048xf32>
    %607 = vector.broadcast %8 : vector<1x2048xf32> to vector<8x2048xf32>
    %608 = arith.cmpf oeq, %606, %607 : vector<8x2048xf32>
    %cst_101 = arith.constant 1.000000e+00 : f32
    %609 = vector.broadcast %cst_101 : f32 to vector<8x2048xf32>
    %610 = arith.select %608, %609, %604 : vector<8x2048xi1>, vector<8x2048xf32>
    %611 = vector.extract_strided_slice %9 {offsets = [0, 100], sizes = [8, 1], strides = [1, 1]} : vector<8x128xf32> to vector<8x1xf32>
    %612 = vector.broadcast %611 : vector<8x1xf32> to vector<8x2048xf32>
    %613 = vector.broadcast %8 : vector<1x2048xf32> to vector<8x2048xf32>
    %614 = arith.cmpf oeq, %612, %613 : vector<8x2048xf32>
    %cst_102 = arith.constant 1.000000e+00 : f32
    %615 = vector.broadcast %cst_102 : f32 to vector<8x2048xf32>
    %616 = arith.select %614, %615, %610 : vector<8x2048xi1>, vector<8x2048xf32>
    %617 = vector.extract_strided_slice %9 {offsets = [0, 101], sizes = [8, 1], strides = [1, 1]} : vector<8x128xf32> to vector<8x1xf32>
    %618 = vector.broadcast %617 : vector<8x1xf32> to vector<8x2048xf32>
    %619 = vector.broadcast %8 : vector<1x2048xf32> to vector<8x2048xf32>
    %620 = arith.cmpf oeq, %618, %619 : vector<8x2048xf32>
    %cst_103 = arith.constant 1.000000e+00 : f32
    %621 = vector.broadcast %cst_103 : f32 to vector<8x2048xf32>
    %622 = arith.select %620, %621, %616 : vector<8x2048xi1>, vector<8x2048xf32>
    %623 = vector.extract_strided_slice %9 {offsets = [0, 102], sizes = [8, 1], strides = [1, 1]} : vector<8x128xf32> to vector<8x1xf32>
    %624 = vector.broadcast %623 : vector<8x1xf32> to vector<8x2048xf32>
    %625 = vector.broadcast %8 : vector<1x2048xf32> to vector<8x2048xf32>
    %626 = arith.cmpf oeq, %624, %625 : vector<8x2048xf32>
    %cst_104 = arith.constant 1.000000e+00 : f32
    %627 = vector.broadcast %cst_104 : f32 to vector<8x2048xf32>
    %628 = arith.select %626, %627, %622 : vector<8x2048xi1>, vector<8x2048xf32>
    %629 = vector.extract_strided_slice %9 {offsets = [0, 103], sizes = [8, 1], strides = [1, 1]} : vector<8x128xf32> to vector<8x1xf32>
    %630 = vector.broadcast %629 : vector<8x1xf32> to vector<8x2048xf32>
    %631 = vector.broadcast %8 : vector<1x2048xf32> to vector<8x2048xf32>
    %632 = arith.cmpf oeq, %630, %631 : vector<8x2048xf32>
    %cst_105 = arith.constant 1.000000e+00 : f32
    %633 = vector.broadcast %cst_105 : f32 to vector<8x2048xf32>
    %634 = arith.select %632, %633, %628 : vector<8x2048xi1>, vector<8x2048xf32>
    %635 = vector.extract_strided_slice %9 {offsets = [0, 104], sizes = [8, 1], strides = [1, 1]} : vector<8x128xf32> to vector<8x1xf32>
    %636 = vector.broadcast %635 : vector<8x1xf32> to vector<8x2048xf32>
    %637 = vector.broadcast %8 : vector<1x2048xf32> to vector<8x2048xf32>
    %638 = arith.cmpf oeq, %636, %637 : vector<8x2048xf32>
    %cst_106 = arith.constant 1.000000e+00 : f32
    %639 = vector.broadcast %cst_106 : f32 to vector<8x2048xf32>
    %640 = arith.select %638, %639, %634 : vector<8x2048xi1>, vector<8x2048xf32>
    %641 = vector.extract_strided_slice %9 {offsets = [0, 105], sizes = [8, 1], strides = [1, 1]} : vector<8x128xf32> to vector<8x1xf32>
    %642 = vector.broadcast %641 : vector<8x1xf32> to vector<8x2048xf32>
    %643 = vector.broadcast %8 : vector<1x2048xf32> to vector<8x2048xf32>
    %644 = arith.cmpf oeq, %642, %643 : vector<8x2048xf32>
    %cst_107 = arith.constant 1.000000e+00 : f32
    %645 = vector.broadcast %cst_107 : f32 to vector<8x2048xf32>
    %646 = arith.select %644, %645, %640 : vector<8x2048xi1>, vector<8x2048xf32>
    %647 = vector.extract_strided_slice %9 {offsets = [0, 106], sizes = [8, 1], strides = [1, 1]} : vector<8x128xf32> to vector<8x1xf32>
    %648 = vector.broadcast %647 : vector<8x1xf32> to vector<8x2048xf32>
    %649 = vector.broadcast %8 : vector<1x2048xf32> to vector<8x2048xf32>
    %650 = arith.cmpf oeq, %648, %649 : vector<8x2048xf32>
    %cst_108 = arith.constant 1.000000e+00 : f32
    %651 = vector.broadcast %cst_108 : f32 to vector<8x2048xf32>
    %652 = arith.select %650, %651, %646 : vector<8x2048xi1>, vector<8x2048xf32>
    %653 = vector.extract_strided_slice %9 {offsets = [0, 107], sizes = [8, 1], strides = [1, 1]} : vector<8x128xf32> to vector<8x1xf32>
    %654 = vector.broadcast %653 : vector<8x1xf32> to vector<8x2048xf32>
    %655 = vector.broadcast %8 : vector<1x2048xf32> to vector<8x2048xf32>
    %656 = arith.cmpf oeq, %654, %655 : vector<8x2048xf32>
    %cst_109 = arith.constant 1.000000e+00 : f32
    %657 = vector.broadcast %cst_109 : f32 to vector<8x2048xf32>
    %658 = arith.select %656, %657, %652 : vector<8x2048xi1>, vector<8x2048xf32>
    %659 = vector.extract_strided_slice %9 {offsets = [0, 108], sizes = [8, 1], strides = [1, 1]} : vector<8x128xf32> to vector<8x1xf32>
    %660 = vector.broadcast %659 : vector<8x1xf32> to vector<8x2048xf32>
    %661 = vector.broadcast %8 : vector<1x2048xf32> to vector<8x2048xf32>
    %662 = arith.cmpf oeq, %660, %661 : vector<8x2048xf32>
    %cst_110 = arith.constant 1.000000e+00 : f32
    %663 = vector.broadcast %cst_110 : f32 to vector<8x2048xf32>
    %664 = arith.select %662, %663, %658 : vector<8x2048xi1>, vector<8x2048xf32>
    %665 = vector.extract_strided_slice %9 {offsets = [0, 109], sizes = [8, 1], strides = [1, 1]} : vector<8x128xf32> to vector<8x1xf32>
    %666 = vector.broadcast %665 : vector<8x1xf32> to vector<8x2048xf32>
    %667 = vector.broadcast %8 : vector<1x2048xf32> to vector<8x2048xf32>
    %668 = arith.cmpf oeq, %666, %667 : vector<8x2048xf32>
    %cst_111 = arith.constant 1.000000e+00 : f32
    %669 = vector.broadcast %cst_111 : f32 to vector<8x2048xf32>
    %670 = arith.select %668, %669, %664 : vector<8x2048xi1>, vector<8x2048xf32>
    %671 = vector.extract_strided_slice %9 {offsets = [0, 110], sizes = [8, 1], strides = [1, 1]} : vector<8x128xf32> to vector<8x1xf32>
    %672 = vector.broadcast %671 : vector<8x1xf32> to vector<8x2048xf32>
    %673 = vector.broadcast %8 : vector<1x2048xf32> to vector<8x2048xf32>
    %674 = arith.cmpf oeq, %672, %673 : vector<8x2048xf32>
    %cst_112 = arith.constant 1.000000e+00 : f32
    %675 = vector.broadcast %cst_112 : f32 to vector<8x2048xf32>
    %676 = arith.select %674, %675, %670 : vector<8x2048xi1>, vector<8x2048xf32>
    %677 = vector.extract_strided_slice %9 {offsets = [0, 111], sizes = [8, 1], strides = [1, 1]} : vector<8x128xf32> to vector<8x1xf32>
    %678 = vector.broadcast %677 : vector<8x1xf32> to vector<8x2048xf32>
    %679 = vector.broadcast %8 : vector<1x2048xf32> to vector<8x2048xf32>
    %680 = arith.cmpf oeq, %678, %679 : vector<8x2048xf32>
    %cst_113 = arith.constant 1.000000e+00 : f32
    %681 = vector.broadcast %cst_113 : f32 to vector<8x2048xf32>
    %682 = arith.select %680, %681, %676 : vector<8x2048xi1>, vector<8x2048xf32>
    %683 = vector.extract_strided_slice %9 {offsets = [0, 112], sizes = [8, 1], strides = [1, 1]} : vector<8x128xf32> to vector<8x1xf32>
    %684 = vector.broadcast %683 : vector<8x1xf32> to vector<8x2048xf32>
    %685 = vector.broadcast %8 : vector<1x2048xf32> to vector<8x2048xf32>
    %686 = arith.cmpf oeq, %684, %685 : vector<8x2048xf32>
    %cst_114 = arith.constant 1.000000e+00 : f32
    %687 = vector.broadcast %cst_114 : f32 to vector<8x2048xf32>
    %688 = arith.select %686, %687, %682 : vector<8x2048xi1>, vector<8x2048xf32>
    %689 = vector.extract_strided_slice %9 {offsets = [0, 113], sizes = [8, 1], strides = [1, 1]} : vector<8x128xf32> to vector<8x1xf32>
    %690 = vector.broadcast %689 : vector<8x1xf32> to vector<8x2048xf32>
    %691 = vector.broadcast %8 : vector<1x2048xf32> to vector<8x2048xf32>
    %692 = arith.cmpf oeq, %690, %691 : vector<8x2048xf32>
    %cst_115 = arith.constant 1.000000e+00 : f32
    %693 = vector.broadcast %cst_115 : f32 to vector<8x2048xf32>
    %694 = arith.select %692, %693, %688 : vector<8x2048xi1>, vector<8x2048xf32>
    %695 = vector.extract_strided_slice %9 {offsets = [0, 114], sizes = [8, 1], strides = [1, 1]} : vector<8x128xf32> to vector<8x1xf32>
    %696 = vector.broadcast %695 : vector<8x1xf32> to vector<8x2048xf32>
    %697 = vector.broadcast %8 : vector<1x2048xf32> to vector<8x2048xf32>
    %698 = arith.cmpf oeq, %696, %697 : vector<8x2048xf32>
    %cst_116 = arith.constant 1.000000e+00 : f32
    %699 = vector.broadcast %cst_116 : f32 to vector<8x2048xf32>
    %700 = arith.select %698, %699, %694 : vector<8x2048xi1>, vector<8x2048xf32>
    %701 = vector.extract_strided_slice %9 {offsets = [0, 115], sizes = [8, 1], strides = [1, 1]} : vector<8x128xf32> to vector<8x1xf32>
    %702 = vector.broadcast %701 : vector<8x1xf32> to vector<8x2048xf32>
    %703 = vector.broadcast %8 : vector<1x2048xf32> to vector<8x2048xf32>
    %704 = arith.cmpf oeq, %702, %703 : vector<8x2048xf32>
    %cst_117 = arith.constant 1.000000e+00 : f32
    %705 = vector.broadcast %cst_117 : f32 to vector<8x2048xf32>
    %706 = arith.select %704, %705, %700 : vector<8x2048xi1>, vector<8x2048xf32>
    %707 = vector.extract_strided_slice %9 {offsets = [0, 116], sizes = [8, 1], strides = [1, 1]} : vector<8x128xf32> to vector<8x1xf32>
    %708 = vector.broadcast %707 : vector<8x1xf32> to vector<8x2048xf32>
    %709 = vector.broadcast %8 : vector<1x2048xf32> to vector<8x2048xf32>
    %710 = arith.cmpf oeq, %708, %709 : vector<8x2048xf32>
    %cst_118 = arith.constant 1.000000e+00 : f32
    %711 = vector.broadcast %cst_118 : f32 to vector<8x2048xf32>
    %712 = arith.select %710, %711, %706 : vector<8x2048xi1>, vector<8x2048xf32>
    %713 = vector.extract_strided_slice %9 {offsets = [0, 117], sizes = [8, 1], strides = [1, 1]} : vector<8x128xf32> to vector<8x1xf32>
    %714 = vector.broadcast %713 : vector<8x1xf32> to vector<8x2048xf32>
    %715 = vector.broadcast %8 : vector<1x2048xf32> to vector<8x2048xf32>
    %716 = arith.cmpf oeq, %714, %715 : vector<8x2048xf32>
    %cst_119 = arith.constant 1.000000e+00 : f32
    %717 = vector.broadcast %cst_119 : f32 to vector<8x2048xf32>
    %718 = arith.select %716, %717, %712 : vector<8x2048xi1>, vector<8x2048xf32>
    %719 = vector.extract_strided_slice %9 {offsets = [0, 118], sizes = [8, 1], strides = [1, 1]} : vector<8x128xf32> to vector<8x1xf32>
    %720 = vector.broadcast %719 : vector<8x1xf32> to vector<8x2048xf32>
    %721 = vector.broadcast %8 : vector<1x2048xf32> to vector<8x2048xf32>
    %722 = arith.cmpf oeq, %720, %721 : vector<8x2048xf32>
    %cst_120 = arith.constant 1.000000e+00 : f32
    %723 = vector.broadcast %cst_120 : f32 to vector<8x2048xf32>
    %724 = arith.select %722, %723, %718 : vector<8x2048xi1>, vector<8x2048xf32>
    %725 = vector.extract_strided_slice %9 {offsets = [0, 119], sizes = [8, 1], strides = [1, 1]} : vector<8x128xf32> to vector<8x1xf32>
    %726 = vector.broadcast %725 : vector<8x1xf32> to vector<8x2048xf32>
    %727 = vector.broadcast %8 : vector<1x2048xf32> to vector<8x2048xf32>
    %728 = arith.cmpf oeq, %726, %727 : vector<8x2048xf32>
    %cst_121 = arith.constant 1.000000e+00 : f32
    %729 = vector.broadcast %cst_121 : f32 to vector<8x2048xf32>
    %730 = arith.select %728, %729, %724 : vector<8x2048xi1>, vector<8x2048xf32>
    %731 = vector.extract_strided_slice %9 {offsets = [0, 120], sizes = [8, 1], strides = [1, 1]} : vector<8x128xf32> to vector<8x1xf32>
    %732 = vector.broadcast %731 : vector<8x1xf32> to vector<8x2048xf32>
    %733 = vector.broadcast %8 : vector<1x2048xf32> to vector<8x2048xf32>
    %734 = arith.cmpf oeq, %732, %733 : vector<8x2048xf32>
    %cst_122 = arith.constant 1.000000e+00 : f32
    %735 = vector.broadcast %cst_122 : f32 to vector<8x2048xf32>
    %736 = arith.select %734, %735, %730 : vector<8x2048xi1>, vector<8x2048xf32>
    %737 = vector.extract_strided_slice %9 {offsets = [0, 121], sizes = [8, 1], strides = [1, 1]} : vector<8x128xf32> to vector<8x1xf32>
    %738 = vector.broadcast %737 : vector<8x1xf32> to vector<8x2048xf32>
    %739 = vector.broadcast %8 : vector<1x2048xf32> to vector<8x2048xf32>
    %740 = arith.cmpf oeq, %738, %739 : vector<8x2048xf32>
    %cst_123 = arith.constant 1.000000e+00 : f32
    %741 = vector.broadcast %cst_123 : f32 to vector<8x2048xf32>
    %742 = arith.select %740, %741, %736 : vector<8x2048xi1>, vector<8x2048xf32>
    %743 = vector.extract_strided_slice %9 {offsets = [0, 122], sizes = [8, 1], strides = [1, 1]} : vector<8x128xf32> to vector<8x1xf32>
    %744 = vector.broadcast %743 : vector<8x1xf32> to vector<8x2048xf32>
    %745 = vector.broadcast %8 : vector<1x2048xf32> to vector<8x2048xf32>
    %746 = arith.cmpf oeq, %744, %745 : vector<8x2048xf32>
    %cst_124 = arith.constant 1.000000e+00 : f32
    %747 = vector.broadcast %cst_124 : f32 to vector<8x2048xf32>
    %748 = arith.select %746, %747, %742 : vector<8x2048xi1>, vector<8x2048xf32>
    %749 = vector.extract_strided_slice %9 {offsets = [0, 123], sizes = [8, 1], strides = [1, 1]} : vector<8x128xf32> to vector<8x1xf32>
    %750 = vector.broadcast %749 : vector<8x1xf32> to vector<8x2048xf32>
    %751 = vector.broadcast %8 : vector<1x2048xf32> to vector<8x2048xf32>
    %752 = arith.cmpf oeq, %750, %751 : vector<8x2048xf32>
    %cst_125 = arith.constant 1.000000e+00 : f32
    %753 = vector.broadcast %cst_125 : f32 to vector<8x2048xf32>
    %754 = arith.select %752, %753, %748 : vector<8x2048xi1>, vector<8x2048xf32>
    %755 = vector.extract_strided_slice %9 {offsets = [0, 124], sizes = [8, 1], strides = [1, 1]} : vector<8x128xf32> to vector<8x1xf32>
    %756 = vector.broadcast %755 : vector<8x1xf32> to vector<8x2048xf32>
    %757 = vector.broadcast %8 : vector<1x2048xf32> to vector<8x2048xf32>
    %758 = arith.cmpf oeq, %756, %757 : vector<8x2048xf32>
    %cst_126 = arith.constant 1.000000e+00 : f32
    %759 = vector.broadcast %cst_126 : f32 to vector<8x2048xf32>
    %760 = arith.select %758, %759, %754 : vector<8x2048xi1>, vector<8x2048xf32>
    %761 = vector.extract_strided_slice %9 {offsets = [0, 125], sizes = [8, 1], strides = [1, 1]} : vector<8x128xf32> to vector<8x1xf32>
    %762 = vector.broadcast %761 : vector<8x1xf32> to vector<8x2048xf32>
    %763 = vector.broadcast %8 : vector<1x2048xf32> to vector<8x2048xf32>
    %764 = arith.cmpf oeq, %762, %763 : vector<8x2048xf32>
    %cst_127 = arith.constant 1.000000e+00 : f32
    %765 = vector.broadcast %cst_127 : f32 to vector<8x2048xf32>
    %766 = arith.select %764, %765, %760 : vector<8x2048xi1>, vector<8x2048xf32>
    %767 = vector.extract_strided_slice %9 {offsets = [0, 126], sizes = [8, 1], strides = [1, 1]} : vector<8x128xf32> to vector<8x1xf32>
    %768 = vector.broadcast %767 : vector<8x1xf32> to vector<8x2048xf32>
    %769 = vector.broadcast %8 : vector<1x2048xf32> to vector<8x2048xf32>
    %770 = arith.cmpf oeq, %768, %769 : vector<8x2048xf32>
    %cst_128 = arith.constant 1.000000e+00 : f32
    %771 = vector.broadcast %cst_128 : f32 to vector<8x2048xf32>
    %772 = arith.select %770, %771, %766 : vector<8x2048xi1>, vector<8x2048xf32>
    %773 = vector.extract_strided_slice %9 {offsets = [0, 127], sizes = [8, 1], strides = [1, 1]} : vector<8x128xf32> to vector<8x1xf32>
    %774 = vector.broadcast %773 : vector<8x1xf32> to vector<8x2048xf32>
    %775 = vector.broadcast %8 : vector<1x2048xf32> to vector<8x2048xf32>
    %776 = arith.cmpf oeq, %774, %775 : vector<8x2048xf32>
    %cst_129 = arith.constant 1.000000e+00 : f32
    %777 = vector.broadcast %cst_129 : f32 to vector<8x2048xf32>
    %778 = arith.select %776, %777, %772 : vector<8x2048xi1>, vector<8x2048xf32>
    %c0_130 = arith.constant 0 : index
    %c0_131 = arith.constant 0 : index
    %779 = vector.load %arg5[%c0_130, %c0_131] : memref<8x2048xf32, #tpu.memory_space<vmem>>, vector<8x2048xf32>
    tpu.vector_store %arg5[%c0_130, %c0_131], %778 {strides = array<i32>} : memref<8x2048xf32, #tpu.memory_space<vmem>>, vector<8x2048xf32>,
    return
  }
  func.func @transform_0(%arg0: i32, %arg1: i32) -> (i32, i32) {
    %c0_i32 = arith.constant 0 : i32
    %c0_i32_0 = arith.constant 0 : i32
    %c0_i32_1 = arith.constant 0 : i32
    return %c0_i32, %c0_i32_0 : i32, i32
  }
  func.func @transform_1(%arg0: i32, %arg1: i32) -> (i32, i32, i32) {
    %c0_i32 = arith.constant 0 : i32
    %c0_i32_0 = arith.constant 0 : i32
    %c0_i32_1 = arith.constant 0 : i32
    return %arg0, %c0_i32, %c0_i32_0 : i32, i32, i32
  }
  func.func @transform_2(%arg0: i32, %arg1: i32) -> (i32, i32, i32) {
    %c0_i32 = arith.constant 0 : i32
    %c0_i32_0 = arith.constant 0 : i32
    %c0_i32_1 = arith.constant 0 : i32
    return %arg0, %c0_i32, %c0_i32_0 : i32, i32, i32
  }
  func.func @transform_3(%arg0: i32, %arg1: i32) -> (i32, i32) {
    %c0_i32 = arith.constant 0 : i32
    return %arg0, %arg1 : i32, i32
  }
}

</mosaic_0001>

<llo_original>
// kernel: tpu_custom_call.1
$region0: #{tpu_custom_call.1}
  #allocation0 [shape = 'u32[]', space=smem, size = 0x4, offset = 0x4, fixed_abs, tag = 'smem constant byte address 0x4 - core index']
  #allocation1 [shape = 'u32[144,128]{1,0:T(1,128)}', space=vmem, size = 0x12000, scoped, tag = 'internal scratch']
  #allocation2 [shape = 'f32[8,128]{1,0:T(8,128)}', space=vmem, size = 0x1000, scoped, tag = 'scratch operand']
  %s0 = inlined_call_operand.vmem [shape: f32[16,16], index: 0, kind: input, shape index: {}]
  %s1 = inlined_call_operand.vmem [shape: f32[4,3,128], index: 1, kind: input, shape index: {}]
  %s2 = inlined_call_operand.vmem [shape: f32[16,3,128], index: 2, kind: output, shape index: {0}]
  %s3 = inlined_call_operand.hbm [shape: f32[16,4096], index: 3, kind: output, shape index: {1}]
  %4 = xla_tuple %s2, %s3
  %s5 = sld [smem:[#allocation0]]
  $region57: #{tpu_custom_call.1} parent=0
    _
  %s7 = ssub.s32 1, %s5
  %s8 = scalar_select 0, %s7, %s5
  $region1: #{tpu_custom_call.1} parent=0
    #allocation3 [shape = 'u8[8192]{0}', space=smem, size = 0x2000, scoped, tag = 'input window, operand 0, single buffered']
    #allocation4 [shape = 's32[2]{0}', space=sflag, size = 0x8, scoped, tag = 'scoped memory for tpu_custom_call.1']
    #allocation5 [shape = 's32[2]{0}', space=sflag, size = 0x8, scoped, tag = 'scoped memory for tpu_custom_call.1']
    #allocation6 [shape = 'u8[131072]{0}', space=vmem, size = 0x20000, scoped, tag = 'output window, operand 1']
    %9 = vsyncpa [#allocation5], 0
    %10 = vsyncpa [#allocation4], 0
    %s11 = scalar_lea.sflag [#allocation4], 1
    %12 = vsyncpa %s11, 0
    loop: start=0, step=1, limit=6
    $region2: #{tpu_custom_call.1} parent=1 // loop_pre_header
      _
    $region3: #{tpu_custom_call.1} parent=1 // loop_header
      %s14 = sphi 0, %s18
      %p15 = scmp.ge.s32.totalorder %s14, 6
      %s21 = sphi 0, %s33
      %s22 = sphi 0, %s29
      %s23 = sphi 0, %s21
      %s24 = sphi 0, %s22
      %s25 = sphi 0, %s23
      %s26 = sphi 0, %s24
      %s34 = sphi 0, %s34
      %s36 = sphi 0, %s34
      %s37 = sphi 0, %s36
      %s51 = sphi 0, %s37
      %s57 = sphi 0, %s59
      %s60 = sphi 0, %s57
      %s61 = sphi 0, %s60
      %s77 = sphi 0, %s61
      %s83 = sphi 0, %s85
      %s86 = sphi 0, %s83
      %s87 = sphi 0, %s86
      %s103 = sphi 0, %s87
      %s111 = sphi 0, %s113
      %s114 = sphi 0, %s111
      %s115 = sphi 0, %s114
      %s131 = sphi 0, %s115
    $region4: #{tpu_custom_call.1} parent=1 // loop_header_branch
      %17 = sbr.rel (%p15) target = $region8
    $region5: #{tpu_custom_call.1} parent=1 // loop_body
      %s19 = ssub.s32 %s14, 1
      %s20 = ssub.s32 %s14, 2
      %s27 = sadd.s32 1, %s22
      %p28 = scmp.ge.s32.totalorder %s27, 2
      %s29 = scalar_select %p28, 0, %s27
      %s30 = sadd.s32 1, %s21
      %s31 = scalar_select %p28, %s30, %s21
      %p32 = scmp.ge.s32.totalorder %s31, 2
      %s33 = scalar_select %p32, 0, %s31
      %s35 = sadd.s32 %s34, 1
      %p38 = scmp.eq.s32.totalorder %s14, 3
      %p39 = scmp.ne.s32.totalorder %s34, %s36
      %p40 = scmp.eq.s32.totalorder %s14, 0
      %p41 = por %p39, %p40
      %p42 = scmp.ne.s32.totalorder %s34, %s36
      %p43 = scmp.eq.s32.totalorder %s19, 3
      %p44 = por %p42, %p43
      %p45 = scmp.ne.s32.totalorder %s36, %s37
      %p46 = scmp.eq.s32.totalorder %s19, 0
      %p47 = por %p45, %p46
      %p48 = scmp.ne.s32.totalorder %s36, %s37
      %p49 = scmp.eq.s32.totalorder %s20, 3
      %p50 = por %p48, %p49
      %p52 = scmp.ne.s32.totalorder %s37, %s51
      %p53 = scmp.eq.s32.totalorder %s20, 0
      %p54 = por %p52, %p53
      %s55 = ssub.s32 %s21, %s33
      %p56 = scmp.eq.s32.totalorder %s55, 0
      %s58 = sadd.s32 %s57, 1
      %s59 = scalar_select %p56, %s57, %s58
      %p62 = pneg %p56
      %p63 = scmp.eq.s32.totalorder %s14, 3
      %p64 = por %p62, %p63
      %p65 = scmp.ne.s32.totalorder %s57, %s60
      %p66 = scmp.eq.s32.totalorder %s14, 0
      %p67 = por %p65, %p66
      %p68 = scmp.ne.s32.totalorder %s57, %s60
      %p69 = scmp.eq.s32.totalorder %s19, 3
      %p70 = por %p68, %p69
      %p71 = scmp.ne.s32.totalorder %s60, %s61
      %p72 = scmp.eq.s32.totalorder %s19, 0
      %p73 = por %p71, %p72
      %p74 = scmp.ne.s32.totalorder %s60, %s61
      %p75 = scmp.eq.s32.totalorder %s20, 3
      %p76 = por %p74, %p75
      %p78 = scmp.ne.s32.totalorder %s61, %s77
      %p79 = scmp.eq.s32.totalorder %s20, 0
      %p80 = por %p78, %p79
      %s81 = ssub.s32 %s21, %s33
      %p82 = scmp.eq.s32.totalorder %s81, 0
      %s84 = sadd.s32 %s83, 1
      %s85 = scalar_select %p82, %s83, %s84
      %p88 = pneg %p82
      %p89 = scmp.eq.s32.totalorder %s14, 3
      %p90 = por %p88, %p89
      %p91 = scmp.ne.s32.totalorder %s83, %s86
      %p92 = scmp.eq.s32.totalorder %s14, 0
      %p93 = por %p91, %p92
      %p94 = scmp.ne.s32.totalorder %s83, %s86
      %p95 = scmp.eq.s32.totalorder %s19, 3
      %p96 = por %p94, %p95
      %p97 = scmp.ne.s32.totalorder %s86, %s87
      %p98 = scmp.eq.s32.totalorder %s19, 0
      %p99 = por %p97, %p98
      %p100 = scmp.ne.s32.totalorder %s86, %s87
      %p101 = scmp.eq.s32.totalorder %s20, 3
      %p102 = por %p100, %p101
      %p104 = scmp.ne.s32.totalorder %s87, %s103
      %p105 = scmp.eq.s32.totalorder %s20, 0
      %p106 = por %p104, %p105
      %s107 = ssub.s32 %s21, %s33
      %s108 = ssub.s32 %s22, %s29
      %s109 = sor.u32 %s107, %s108
      %p110 = scmp.eq.s32.totalorder %s109, 0
      %s112 = sadd.s32 %s111, 1
      %s113 = scalar_select %p110, %s111, %s112
      %p116 = pneg %p110
      %p117 = scmp.eq.s32.totalorder %s14, 3
      %p118 = por %p116, %p117
      %p119 = scmp.ne.s32.totalorder %s111, %s114
      %p120 = scmp.eq.s32.totalorder %s14, 0
      %p121 = por %p119, %p120
      %p122 = scmp.ne.s32.totalorder %s111, %s114
      %p123 = scmp.eq.s32.totalorder %s19, 3
      %p124 = por %p122, %p123
      %p125 = scmp.ne.s32.totalorder %s114, %s115
      %p126 = scmp.eq.s32.totalorder %s19, 0
      %p127 = por %p125, %p126
      %p128 = scmp.ne.s32.totalorder %s114, %s115
      %p129 = scmp.eq.s32.totalorder %s20, 3
      %p130 = por %p128, %p129
      %p132 = scmp.ne.s32.totalorder %s115, %s131
      %p133 = scmp.eq.s32.totalorder %s20, 0
      %p134 = por %p132, %p133
      %p135 = scmp.le.s32.totalorder 1, %s14
      %p136 = scmp.lt.s32.totalorder %s14, 5
      %p137 = pnand %p135, %p136
      %p138 = pneg %p137
      // Predicated region
      $region9: #{tpu_custom_call.1} parent=5 // pred_check
        _
      $region10: #{tpu_custom_call.1} parent=5 // pred_check_branch
        %140 = sbr.rel (%p137) target = $region12
      $region11: #{tpu_custom_call.1} parent=5 // pred_region
        %s141 = ssub.s32 %s14, 1
        // Predicated region
        $region13: #{tpu_custom_call.1} parent=11 // pred_check
          %p142 = pneg %p47
        $region14: #{tpu_custom_call.1} parent=11 // pred_check_branch
          %144 = sbr.rel (%p142) target = $region16
        $region15: #{tpu_custom_call.1} parent=11 // pred_region
          %s146 = ssub.s32 256, 256
          %147 = vsyncadd [#allocation5], %s146
          %s148 = sshll.u32 %s0, 4
          %s149 = int_to_ptr.vmem [resolvable:$true] %s148
          %154 = dma.vmem_to_smem %s149, 256, [#allocation3], [#allocation5], 128, 128, 8
        $region16: #{tpu_custom_call.1} parent=11 // pred_fallthru
          _
      $region12: #{tpu_custom_call.1} parent=5 // pred_fallthru
        _
      %p155 = scmp.lt.s32.totalorder %s14, 4
      // Predicated region
      $region17: #{tpu_custom_call.1} parent=5 // pred_check
        %p156 = pneg %p155
      $region18: #{tpu_custom_call.1} parent=5 // pred_check_branch
        %158 = sbr.rel (%p156) target = $region20
      $region19: #{tpu_custom_call.1} parent=5 // pred_region
        // Predicated region
        $region21: #{tpu_custom_call.1} parent=19 // pred_check
          %p159 = pneg %p67
        $region22: #{tpu_custom_call.1} parent=19 // pred_check_branch
          %161 = sbr.rel (%p159) target = $region24
        $region23: #{tpu_custom_call.1} parent=19 // pred_region
          %s162 = smul.u32 2, %s21
          %p163 = scmp.lt.s32.totalorder %s162, 3
          %s164 = scalar_select %p163, %s162, 3
          %s165 = smul.addr %s164, 4
          %s166 = scalar_lea.vmem %s1, %s165
          %s167 = smul.u32 2, %s21
        $region24: #{tpu_custom_call.1} parent=19 // pred_fallthru
          _
      $region20: #{tpu_custom_call.1} parent=5 // pred_fallthru
        _
      %p168 = scmp.le.s32.totalorder 1, %s14
      %p169 = scmp.lt.s32.totalorder %s14, 5
      %p170 = pnand %p168, %p169
      %p171 = pneg %p170
      // Predicated region
      $region25: #{tpu_custom_call.1} parent=5 // pred_check
        _
      $region26: #{tpu_custom_call.1} parent=5 // pred_check_branch
        %173 = sbr.rel (%p170) target = $region28
      $region27: #{tpu_custom_call.1} parent=5 // pred_region
        %s174 = ssub.s32 %s14, 1
        // Predicated region
        $region29: #{tpu_custom_call.1} parent=27 // pred_check
          %p175 = pneg %p47
        $region30: #{tpu_custom_call.1} parent=27 // pred_check_branch
          %177 = sbr.rel (%p175) target = $region32
        $region31: #{tpu_custom_call.1} parent=27 // pred_region
          %178 = dma.done [#allocation5], 256
        $region32: #{tpu_custom_call.1} parent=27 // pred_fallthru
          _
        %179 = sfence
        %p180 = pneg %p47
        %p181 = pneg %p44
        %s182 = smul.u32 2, %s23
        %p183 = scmp.lt.s32.totalorder %s182, 3
        %s184 = scalar_select %p183, %s182, 3
        %s185 = smul.addr %s184, 4
        %s186 = scalar_lea.vmem %s1, %s185
        %p187 = pneg %p73
        %p188 = pneg %p70
        %p189 = pneg %p99
        %p190 = pneg %p96
        %s191 = smul.u32 8, %s23
        %p192 = scmp.lt.s32.totalorder %s191, 15
        %s193 = scalar_select %p192, %s191, 15
        %s194 = smul.addr %s193, 4
        %s195 = scalar_lea.vmem %s2, %s194
        %p196 = pneg %p127
        %p197 = pneg %p124
        %s198 = sand.u32 %s114, 1
        %s199 = scalar_lea.sflag [#allocation4], %s198
        %s200 = sand.u32 %s114, 1
        %s201 = smul.addr %s200, 128
        %s202 = scalar_lea.vmem [#allocation6], %s201
        %s203 = smul.u32 2, %s23
        %p204 = scmp.lt.s32.totalorder %s203, 3
        %s205 = scalar_select %p204, %s203, 3
        %s206 = smul.addr %s205, 4
        %s207 = scalar_lea.vmem %s1, %s206
        %s208 = smul.u32 2, %s23
        %s209 = smul.u32 8, %s23
        %p210 = scmp.lt.s32.totalorder %s209, 15
        %s211 = scalar_select %p210, %s209, 15
        %s212 = smul.addr %s211, 4
        %s213 = scalar_lea.vmem %s2, %s212
        %s214 = smul.u32 8, %s23
        %s215 = smul.u32 16, %s24
        %p216 = scmp.eq.s32.totalorder %s24, 0
        // Predicated region
        $region33: #{tpu_custom_call.1} parent=27 // pred_check
          %p217 = pneg %p216
        $region34: #{tpu_custom_call.1} parent=27 // pred_check_branch
          %219 = sbr.rel (%p217) target = $region36
        $region35: #{tpu_custom_call.1} parent=27 // pred_region
          %v220 = vld [vmem:[%s207] sm:$0x1]
          %v221 = vld [vmem:[%s207 + $0x1] sm:$0x1]
          %v222 = vld [vmem:[%s207 + $0x2] sm:$0x1]
          %s223 = smul.u32 %s23, 8
          %s224 = smul.u32 %s223, 128
          %s225 = sld [smem:[#allocation3 + %s224]]
          %v226 = vstv %s225
          %v227 = vmul.f32 %v226, %v220
          %s228 = sadd.s32 %s224, 1
          %s229 = sld [smem:[#allocation3 + %s228]]
          %v230 = vstv %s229
          %v231 = vmul.f32 %v230, %v221
          %v232 = vadd.f32 %v227, %v231
          %s233 = sadd.s32 %s224, 2
          %s234 = sld [smem:[#allocation3 + %s233]]
          %v235 = vstv %s234
          %v236 = vmul.f32 %v235, %v222
          %v237 = vadd.f32 %v232, %v236
          %s238 = sadd.s32 %s224, 3
          %s239 = sld [smem:[#allocation3 + %s238]]
          %v240 = vstv %s239
          %v241 = vadd.f32 %v237, %v240
          %s242 = sadd.s32 %s224, 4
          %s243 = sld [smem:[#allocation3 + %s242]]
          %v244 = vstv %s243
          %v245 = vmul.f32 %v244, %v220
          %s246 = sadd.s32 %s224, 5
          %s247 = sld [smem:[#allocation3 + %s246]]
          %v248 = vstv %s247
          %v249 = vmul.f32 %v248, %v221
          %v250 = vadd.f32 %v245, %v249
          %s251 = sadd.s32 %s224, 6
          %s252 = sld [smem:[#allocation3 + %s251]]
          %v253 = vstv %s252
          %v254 = vmul.f32 %v253, %v222
          %v255 = vadd.f32 %v250, %v254
          %s256 = sadd.s32 %s224, 7
          %s257 = sld [smem:[#allocation3 + %s256]]
          %v258 = vstv %s257
          %v259 = vadd.f32 %v255, %v258
          %s260 = sadd.s32 %s224, 8
          %s261 = sld [smem:[#allocation3 + %s260]]
          %v262 = vstv %s261
          %v263 = vmul.f32 %v262, %v220
          %s264 = sadd.s32 %s224, 9
          %s265 = sld [smem:[#allocation3 + %s264]]
          %v266 = vstv %s265
          %v267 = vmul.f32 %v266, %v221
          %v268 = vadd.f32 %v263, %v267
          %s269 = sadd.s32 %s224, 10
          %s270 = sld [smem:[#allocation3 + %s269]]
          %v271 = vstv %s270
          %v272 = vmul.f32 %v271, %v222
          %v273 = vadd.f32 %v268, %v272
          %s274 = sadd.s32 %s224, 11
          %s275 = sld [smem:[#allocation3 + %s274]]
          %v276 = vstv %s275
          %v277 = vadd.f32 %v273, %v276
          %278 = vst [vmem:[%s213] sm:$0x1] %v241
          %279 = vst [vmem:[%s213 + $0x1] sm:$0x1] %v259
          %280 = vst [vmem:[%s213 + $0x2] sm:$0x1] %v277
          %v281 = vsub.f32 %v241, -8.0
          %v282 = vsub.f32 %v281, 0.5
          %v283 = vsub.f32 %v259, -8.0
          %v284 = vsub.f32 %v283, 0.5
          %v285 = vsub.f32 %v277, 10.0
          %v286 = vsub.f32 %v285, 0.5
          %v287 = vadd.f32 %v282, 0.5
          %v288 = vfloor.f32 %v287
          %v289 = vadd.f32 %v284, 0.5
          %v290 = vfloor.f32 %v289
          %v291 = vadd.f32 %v286, 0.5
          %v292 = vfloor.f32 %v291
          %vm293 = vcmp.ge.f32.partialorder %v288, 0.0
          %vm294 = vcmp.le.f32.partialorder %v288, 15.0
          %vm295 = vmand %vm293, %vm294
          %vm296 = vcmp.ge.f32.partialorder %v290, 0.0
          %vm297 = vmand %vm295, %vm296
          %vm298 = vcmp.le.f32.partialorder %v290, 15.0
          %vm299 = vmand %vm297, %vm298
          %vm300 = vcmp.ge.f32.partialorder %v292, 0.0
          %vm301 = vmand %vm299, %vm300
          %vm302 = vcmp.le.f32.partialorder %v292, 15.0
          %vm303 = vmand %vm301, %vm302
          %v304 = vmul.f32 %v292, 256.0
          %v305 = vmul.f32 %v290, 16.0
          %v306 = vadd.f32 %v304, %v305
          %v307 = vadd.f32 %v306, %v288
          %v308 = vsel %vm303, %v307, -1.0
          %309 = vst [vmem:[#allocation2] sm:$0x1] %v308
          %s310 = sadd.s32 %s223, 1
          %s311 = smul.u32 %s310, 128
          %s312 = sld [smem:[#allocation3 + %s311]]
          %v313 = vstv %s312
          %v314 = vmul.f32 %v313, %v220
          %s315 = sadd.s32 %s311, 1
          %s316 = sld [smem:[#allocation3 + %s315]]
          %v317 = vstv %s316
          %v318 = vmul.f32 %v317, %v221
          %v319 = vadd.f32 %v314, %v318
          %s320 = sadd.s32 %s311, 2
          %s321 = sld [smem:[#allocation3 + %s320]]
          %v322 = vstv %s321
          %v323 = vmul.f32 %v322, %v222
          %v324 = vadd.f32 %v319, %v323
          %s325 = sadd.s32 %s311, 3
          %s326 = sld [smem:[#allocation3 + %s325]]
          %v327 = vstv %s326
          %v328 = vadd.f32 %v324, %v327
          %s329 = sadd.s32 %s311, 4
          %s330 = sld [smem:[#allocation3 + %s329]]
          %v331 = vstv %s330
          %v332 = vmul.f32 %v331, %v220
          %s333 = sadd.s32 %s311, 5
          %s334 = sld [smem:[#allocation3 + %s333]]
          %v335 = vstv %s334
          %v336 = vmul.f32 %v335, %v221
          %v337 = vadd.f32 %v332, %v336
          %s338 = sadd.s32 %s311, 6
          %s339 = sld [smem:[#allocation3 + %s338]]
          %v340 = vstv %s339
          %v341 = vmul.f32 %v340, %v222
          %v342 = vadd.f32 %v337, %v341
          %s343 = sadd.s32 %s311, 7
          %s344 = sld [smem:[#allocation3 + %s343]]
          %v345 = vstv %s344
          %v346 = vadd.f32 %v342, %v345
          %s347 = sadd.s32 %s311, 8
          %s348 = sld [smem:[#allocation3 + %s347]]
          %v349 = vstv %s348
          %v350 = vmul.f32 %v349, %v220
          %s351 = sadd.s32 %s311, 9
          %s352 = sld [smem:[#allocation3 + %s351]]
          %v353 = vstv %s352
          %v354 = vmul.f32 %v353, %v221
          %v355 = vadd.f32 %v350, %v354
          %s356 = sadd.s32 %s311, 10
          %s357 = sld [smem:[#allocation3 + %s356]]
          %v358 = vstv %s357
          %v359 = vmul.f32 %v358, %v222
          %v360 = vadd.f32 %v355, %v359
          %s361 = sadd.s32 %s311, 11
          %s362 = sld [smem:[#allocation3 + %s361]]
          %v363 = vstv %s362
          %v364 = vadd.f32 %v360, %v363
          %s365 = scalar_lea.vmem %s213, 4
          %366 = vst [vmem:[%s365] sm:$0x1] %v328
          %367 = vst [vmem:[%s365 + $0x1] sm:$0x1] %v346
          %368 = vst [vmem:[%s365 + $0x2] sm:$0x1] %v364
          %v369 = vsub.f32 %v328, -8.0
          %v370 = vsub.f32 %v369, 0.5
          %v371 = vsub.f32 %v346, -8.0
          %v372 = vsub.f32 %v371, 0.5
          %v373 = vsub.f32 %v364, 10.0
          %v374 = vsub.f32 %v373, 0.5
          %v375 = vadd.f32 %v370, 0.5
          %v376 = vfloor.f32 %v375
          %v377 = vadd.f32 %v372, 0.5
          %v378 = vfloor.f32 %v377
          %v379 = vadd.f32 %v374, 0.5
          %v380 = vfloor.f32 %v379
          %vm381 = vcmp.ge.f32.partialorder %v376, 0.0
          %vm382 = vcmp.le.f32.partialorder %v376, 15.0
          %vm383 = vmand %vm381, %vm382
          %vm384 = vcmp.ge.f32.partialorder %v378, 0.0
          %vm385 = vmand %vm383, %vm384
          %vm386 = vcmp.le.f32.partialorder %v378, 15.0
          %vm387 = vmand %vm385, %vm386
          %vm388 = vcmp.ge.f32.partialorder %v380, 0.0
          %vm389 = vmand %vm387, %vm388
          %vm390 = vcmp.le.f32.partialorder %v380, 15.0
          %vm391 = vmand %vm389, %vm390
          %v392 = vmul.f32 %v380, 256.0
          %v393 = vmul.f32 %v378, 16.0
          %v394 = vadd.f32 %v392, %v393
          %v395 = vadd.f32 %v394, %v376
          %v396 = vsel %vm391, %v395, -1.0
          %397 = vst [vmem:[#allocation2 + $0x1] sm:$0x1] %v396
          %s398 = sadd.s32 %s223, 2
          %s399 = smul.u32 %s398, 128
          %s400 = sld [smem:[#allocation3 + %s399]]
          %v401 = vstv %s400
          %v402 = vmul.f32 %v401, %v220
          %s403 = sadd.s32 %s399, 1
          %s404 = sld [smem:[#allocation3 + %s403]]
          %v405 = vstv %s404
          %v406 = vmul.f32 %v405, %v221
          %v407 = vadd.f32 %v402, %v406
          %s408 = sadd.s32 %s399, 2
          %s409 = sld [smem:[#allocation3 + %s408]]
          %v410 = vstv %s409
          %v411 = vmul.f32 %v410, %v222
          %v412 = vadd.f32 %v407, %v411
          %s413 = sadd.s32 %s399, 3
          %s414 = sld [smem:[#allocation3 + %s413]]
          %v415 = vstv %s414
          %v416 = vadd.f32 %v412, %v415
          %s417 = sadd.s32 %s399, 4
          %s418 = sld [smem:[#allocation3 + %s417]]
          %v419 = vstv %s418
          %v420 = vmul.f32 %v419, %v220
          %s421 = sadd.s32 %s399, 5
          %s422 = sld [smem:[#allocation3 + %s421]]
          %v423 = vstv %s422
          %v424 = vmul.f32 %v423, %v221
          %v425 = vadd.f32 %v420, %v424
          %s426 = sadd.s32 %s399, 6
          %s427 = sld [smem:[#allocation3 + %s426]]
          %v428 = vstv %s427
          %v429 = vmul.f32 %v428, %v222
          %v430 = vadd.f32 %v425, %v429
          %s431 = sadd.s32 %s399, 7
          %s432 = sld [smem:[#allocation3 + %s431]]
          %v433 = vstv %s432
          %v434 = vadd.f32 %v430, %v433
          %s435 = sadd.s32 %s399, 8
          %s436 = sld [smem:[#allocation3 + %s435]]
          %v437 = vstv %s436
          %v438 = vmul.f32 %v437, %v220
          %s439 = sadd.s32 %s399, 9
          %s440 = sld [smem:[#allocation3 + %s439]]
          %v441 = vstv %s440
          %v442 = vmul.f32 %v441, %v221
          %v443 = vadd.f32 %v438, %v442
          %s444 = sadd.s32 %s399, 10
          %s445 = sld [smem:[#allocation3 + %s444]]
          %v446 = vstv %s445
          %v447 = vmul.f32 %v446, %v222
          %v448 = vadd.f32 %v443, %v447
          %s449 = sadd.s32 %s399, 11
          %s450 = sld [smem:[#allocation3 + %s449]]
          %v451 = vstv %s450
          %v452 = vadd.f32 %v448, %v451
          %s453 = scalar_lea.vmem %s213, 8
          %454 = vst [vmem:[%s453] sm:$0x1] %v416
          %455 = vst [vmem:[%s453 + $0x1] sm:$0x1] %v434
          %456 = vst [vmem:[%s453 + $0x2] sm:$0x1] %v452
          %v457 = vsub.f32 %v416, -8.0
          %v458 = vsub.f32 %v457, 0.5
          %v459 = vsub.f32 %v434, -8.0
          %v460 = vsub.f32 %v459, 0.5
          %v461 = vsub.f32 %v452, 10.0
          %v462 = vsub.f32 %v461, 0.5
          %v463 = vadd.f32 %v458, 0.5
          %v464 = vfloor.f32 %v463
          %v465 = vadd.f32 %v460, 0.5
          %v466 = vfloor.f32 %v465
          %v467 = vadd.f32 %v462, 0.5
          %v468 = vfloor.f32 %v467
          %vm469 = vcmp.ge.f32.partialorder %v464, 0.0
          %vm470 = vcmp.le.f32.partialorder %v464, 15.0
          %vm471 = vmand %vm469, %vm470
          %vm472 = vcmp.ge.f32.partialorder %v466, 0.0
          %vm473 = vmand %vm471, %vm472
          %vm474 = vcmp.le.f32.partialorder %v466, 15.0
          %vm475 = vmand %vm473, %vm474
          %vm476 = vcmp.ge.f32.partialorder %v468, 0.0
          %vm477 = vmand %vm475, %vm476
          %vm478 = vcmp.le.f32.partialorder %v468, 15.0
          %vm479 = vmand %vm477, %vm478
          %v480 = vmul.f32 %v468, 256.0
          %v481 = vmul.f32 %v466, 16.0
          %v482 = vadd.f32 %v480, %v481
          %v483 = vadd.f32 %v482, %v464
          %v484 = vsel %vm479, %v483, -1.0
          %485 = vst [vmem:[#allocation2 + $0x2] sm:$0x1] %v484
          %s486 = sadd.s32 %s223, 3
          %s487 = smul.u32 %s486, 128
          %s488 = sld [smem:[#allocation3 + %s487]]
          %v489 = vstv %s488
          %v490 = vmul.f32 %v489, %v220
          %s491 = sadd.s32 %s487, 1
          %s492 = sld [smem:[#allocation3 + %s491]]
          %v493 = vstv %s492
          %v494 = vmul.f32 %v493, %v221
          %v495 = vadd.f32 %v490, %v494
          %s496 = sadd.s32 %s487, 2
          %s497 = sld [smem:[#allocation3 + %s496]]
          %v498 = vstv %s497
          %v499 = vmul.f32 %v498, %v222
          %v500 = vadd.f32 %v495, %v499
          %s501 = sadd.s32 %s487, 3
          %s502 = sld [smem:[#allocation3 + %s501]]
          %v503 = vstv %s502
          %v504 = vadd.f32 %v500, %v503
          %s505 = sadd.s32 %s487, 4
          %s506 = sld [smem:[#allocation3 + %s505]]
          %v507 = vstv %s506
          %v508 = vmul.f32 %v507, %v220
          %s509 = sadd.s32 %s487, 5
          %s510 = sld [smem:[#allocation3 + %s509]]
          %v511 = vstv %s510
          %v512 = vmul.f32 %v511, %v221
          %v513 = vadd.f32 %v508, %v512
          %s514 = sadd.s32 %s487, 6
          %s515 = sld [smem:[#allocation3 + %s514]]
          %v516 = vstv %s515
          %v517 = vmul.f32 %v516, %v222
          %v518 = vadd.f32 %v513, %v517
          %s519 = sadd.s32 %s487, 7
          %s520 = sld [smem:[#allocation3 + %s519]]
          %v521 = vstv %s520
          %v522 = vadd.f32 %v518, %v521
          %s523 = sadd.s32 %s487, 8
          %s524 = sld [smem:[#allocation3 + %s523]]
          %v525 = vstv %s524
          %v526 = vmul.f32 %v525, %v220
          %s527 = sadd.s32 %s487, 9
          %s528 = sld [smem:[#allocation3 + %s527]]
          %v529 = vstv %s528
          %v530 = vmul.f32 %v529, %v221
          %v531 = vadd.f32 %v526, %v530
          %s532 = sadd.s32 %s487, 10
          %s533 = sld [smem:[#allocation3 + %s532]]
          %v534 = vstv %s533
          %v535 = vmul.f32 %v534, %v222
          %v536 = vadd.f32 %v531, %v535
          %s537 = sadd.s32 %s487, 11
          %s538 = sld [smem:[#allocation3 + %s537]]
          %v539 = vstv %s538
          %v540 = vadd.f32 %v536, %v539
          %s541 = scalar_lea.vmem %s213, 12
          %542 = vst [vmem:[%s541] sm:$0x1] %v504
          %543 = vst [vmem:[%s541 + $0x1] sm:$0x1] %v522
          %544 = vst [vmem:[%s541 + $0x2] sm:$0x1] %v540
          %v545 = vsub.f32 %v504, -8.0
          %v546 = vsub.f32 %v545, 0.5
          %v547 = vsub.f32 %v522, -8.0
          %v548 = vsub.f32 %v547, 0.5
          %v549 = vsub.f32 %v540, 10.0
          %v550 = vsub.f32 %v549, 0.5
          %v551 = vadd.f32 %v546, 0.5
          %v552 = vfloor.f32 %v551
          %v553 = vadd.f32 %v548, 0.5
          %v554 = vfloor.f32 %v553
          %v555 = vadd.f32 %v550, 0.5
          %v556 = vfloor.f32 %v555
          %vm557 = vcmp.ge.f32.partialorder %v552, 0.0
          %vm558 = vcmp.le.f32.partialorder %v552, 15.0
          %vm559 = vmand %vm557, %vm558
          %vm560 = vcmp.ge.f32.partialorder %v554, 0.0
          %vm561 = vmand %vm559, %vm560
          %vm562 = vcmp.le.f32.partialorder %v554, 15.0
          %vm563 = vmand %vm561, %vm562
          %vm564 = vcmp.ge.f32.partialorder %v556, 0.0
          %vm565 = vmand %vm563, %vm564
          %vm566 = vcmp.le.f32.partialorder %v556, 15.0
          %vm567 = vmand %vm565, %vm566
          %v568 = vmul.f32 %v556, 256.0
          %v569 = vmul.f32 %v554, 16.0
          %v570 = vadd.f32 %v568, %v569
          %v571 = vadd.f32 %v570, %v552
          %v572 = vsel %vm567, %v571, -1.0
          %573 = vst [vmem:[#allocation2 + $0x3] sm:$0x1] %v572
          %s574 = scalar_lea.vmem %s207, 4
          %v575 = vld [vmem:[%s574] sm:$0x1]
          %v576 = vld [vmem:[%s574 + $0x1] sm:$0x1]
          %v577 = vld [vmem:[%s574 + $0x2] sm:$0x1]
          %s578 = smul.u32 %s23, 2
          %s579 = sadd.s32 %s578, 1
          %s580 = smul.u32 %s579, 4
          %s581 = smul.u32 %s580, 128
          %s582 = sld [smem:[#allocation3 + %s581]]
          %v583 = vstv %s582
          %v584 = vmul.f32 %v583, %v575
          %s585 = sadd.s32 %s581, 1
          %s586 = sld [smem:[#allocation3 + %s585]]
          %v587 = vstv %s586
          %v588 = vmul.f32 %v587, %v576
          %v589 = vadd.f32 %v584, %v588
          %s590 = sadd.s32 %s581, 2
          %s591 = sld [smem:[#allocation3 + %s590]]
          %v592 = vstv %s591
          %v593 = vmul.f32 %v592, %v577
          %v594 = vadd.f32 %v589, %v593
          %s595 = sadd.s32 %s581, 3
          %s596 = sld [smem:[#allocation3 + %s595]]
          %v597 = vstv %s596
          %v598 = vadd.f32 %v594, %v597
          %s599 = sadd.s32 %s581, 4
          %s600 = sld [smem:[#allocation3 + %s599]]
          %v601 = vstv %s600
          %v602 = vmul.f32 %v601, %v575
          %s603 = sadd.s32 %s581, 5
          %s604 = sld [smem:[#allocation3 + %s603]]
          %v605 = vstv %s604
          %v606 = vmul.f32 %v605, %v576
          %v607 = vadd.f32 %v602, %v606
          %s608 = sadd.s32 %s581, 6
          %s609 = sld [smem:[#allocation3 + %s608]]
          %v610 = vstv %s609
          %v611 = vmul.f32 %v610, %v577
          %v612 = vadd.f32 %v607, %v611
          %s613 = sadd.s32 %s581, 7
          %s614 = sld [smem:[#allocation3 + %s613]]
          %v615 = vstv %s614
          %v616 = vadd.f32 %v612, %v615
          %s617 = sadd.s32 %s581, 8
          %s618 = sld [smem:[#allocation3 + %s617]]
          %v619 = vstv %s618
          %v620 = vmul.f32 %v619, %v575
          %s621 = sadd.s32 %s581, 9
          %s622 = sld [smem:[#allocation3 + %s621]]
          %v623 = vstv %s622
          %v624 = vmul.f32 %v623, %v576
          %v625 = vadd.f32 %v620, %v624
          %s626 = sadd.s32 %s581, 10
          %s627 = sld [smem:[#allocation3 + %s626]]
          %v628 = vstv %s627
          %v629 = vmul.f32 %v628, %v577
          %v630 = vadd.f32 %v625, %v629
          %s631 = sadd.s32 %s581, 11
          %s632 = sld [smem:[#allocation3 + %s631]]
          %v633 = vstv %s632
          %v634 = vadd.f32 %v630, %v633
          %s635 = scalar_lea.vmem %s213, 16
          %636 = vst [vmem:[%s635] sm:$0x1] %v598
          %637 = vst [vmem:[%s635 + $0x1] sm:$0x1] %v616
          %638 = vst [vmem:[%s635 + $0x2] sm:$0x1] %v634
          %v639 = vsub.f32 %v598, -8.0
          %v640 = vsub.f32 %v639, 0.5
          %v641 = vsub.f32 %v616, -8.0
          %v642 = vsub.f32 %v641, 0.5
          %v643 = vsub.f32 %v634, 10.0
          %v644 = vsub.f32 %v643, 0.5
          %v645 = vadd.f32 %v640, 0.5
          %v646 = vfloor.f32 %v645
          %v647 = vadd.f32 %v642, 0.5
          %v648 = vfloor.f32 %v647
          %v649 = vadd.f32 %v644, 0.5
          %v650 = vfloor.f32 %v649
          %vm651 = vcmp.ge.f32.partialorder %v646, 0.0
          %vm652 = vcmp.le.f32.partialorder %v646, 15.0
          %vm653 = vmand %vm651, %vm652
          %vm654 = vcmp.ge.f32.partialorder %v648, 0.0
          %vm655 = vmand %vm653, %vm654
          %vm656 = vcmp.le.f32.partialorder %v648, 15.0
          %vm657 = vmand %vm655, %vm656
          %vm658 = vcmp.ge.f32.partialorder %v650, 0.0
          %vm659 = vmand %vm657, %vm658
          %vm660 = vcmp.le.f32.partialorder %v650, 15.0
          %vm661 = vmand %vm659, %vm660
          %v662 = vmul.f32 %v650, 256.0
          %v663 = vmul.f32 %v648, 16.0
          %v664 = vadd.f32 %v662, %v663
          %v665 = vadd.f32 %v664, %v646
          %v666 = vsel %vm661, %v665, -1.0
          %667 = vst [vmem:[#allocation2 + $0x4] sm:$0x1] %v666
          %s668 = sadd.s32 %s580, 1
          %s669 = smul.u32 %s668, 128
          %s670 = sld [smem:[#allocation3 + %s669]]
          %v671 = vstv %s670
          %v672 = vmul.f32 %v671, %v575
          %s673 = sadd.s32 %s669, 1
          %s674 = sld [smem:[#allocation3 + %s673]]
          %v675 = vstv %s674
          %v676 = vmul.f32 %v675, %v576
          %v677 = vadd.f32 %v672, %v676
          %s678 = sadd.s32 %s669, 2
          %s679 = sld [smem:[#allocation3 + %s678]]
          %v680 = vstv %s679
          %v681 = vmul.f32 %v680, %v577
          %v682 = vadd.f32 %v677, %v681
          %s683 = sadd.s32 %s669, 3
          %s684 = sld [smem:[#allocation3 + %s683]]
          %v685 = vstv %s684
          %v686 = vadd.f32 %v682, %v685
          %s687 = sadd.s32 %s669, 4
          %s688 = sld [smem:[#allocation3 + %s687]]
          %v689 = vstv %s688
          %v690 = vmul.f32 %v689, %v575
          %s691 = sadd.s32 %s669, 5
          %s692 = sld [smem:[#allocation3 + %s691]]
          %v693 = vstv %s692
          %v694 = vmul.f32 %v693, %v576
          %v695 = vadd.f32 %v690, %v694
          %s696 = sadd.s32 %s669, 6
          %s697 = sld [smem:[#allocation3 + %s696]]
          %v698 = vstv %s697
          %v699 = vmul.f32 %v698, %v577
          %v700 = vadd.f32 %v695, %v699
          %s701 = sadd.s32 %s669, 7
          %s702 = sld [smem:[#allocation3 + %s701]]
          %v703 = vstv %s702
          %v704 = vadd.f32 %v700, %v703
          %s705 = sadd.s32 %s669, 8
          %s706 = sld [smem:[#allocation3 + %s705]]
          %v707 = vstv %s706
          %v708 = vmul.f32 %v707, %v575
          %s709 = sadd.s32 %s669, 9
          %s710 = sld [smem:[#allocation3 + %s709]]
          %v711 = vstv %s710
          %v712 = vmul.f32 %v711, %v576
          %v713 = vadd.f32 %v708, %v712
          %s714 = sadd.s32 %s669, 10
          %s715 = sld [smem:[#allocation3 + %s714]]
          %v716 = vstv %s715
          %v717 = vmul.f32 %v716, %v577
          %v718 = vadd.f32 %v713, %v717
          %s719 = sadd.s32 %s669, 11
          %s720 = sld [smem:[#allocation3 + %s719]]
          %v721 = vstv %s720
          %v722 = vadd.f32 %v718, %v721
          %s723 = scalar_lea.vmem %s213, 20
          %724 = vst [vmem:[%s723] sm:$0x1] %v686
          %725 = vst [vmem:[%s723 + $0x1] sm:$0x1] %v704
          %726 = vst [vmem:[%s723 + $0x2] sm:$0x1] %v722
          %v727 = vsub.f32 %v686, -8.0
          %v728 = vsub.f32 %v727, 0.5
          %v729 = vsub.f32 %v704, -8.0
          %v730 = vsub.f32 %v729, 0.5
          %v731 = vsub.f32 %v722, 10.0
          %v732 = vsub.f32 %v731, 0.5
          %v733 = vadd.f32 %v728, 0.5
          %v734 = vfloor.f32 %v733
          %v735 = vadd.f32 %v730, 0.5
          %v736 = vfloor.f32 %v735
          %v737 = vadd.f32 %v732, 0.5
          %v738 = vfloor.f32 %v737
          %vm739 = vcmp.ge.f32.partialorder %v734, 0.0
          %vm740 = vcmp.le.f32.partialorder %v734, 15.0
          %vm741 = vmand %vm739, %vm740
          %vm742 = vcmp.ge.f32.partialorder %v736, 0.0
          %vm743 = vmand %vm741, %vm742
          %vm744 = vcmp.le.f32.partialorder %v736, 15.0
          %vm745 = vmand %vm743, %vm744
          %vm746 = vcmp.ge.f32.partialorder %v738, 0.0
          %vm747 = vmand %vm745, %vm746
          %vm748 = vcmp.le.f32.partialorder %v738, 15.0
          %vm749 = vmand %vm747, %vm748
          %v750 = vmul.f32 %v738, 256.0
          %v751 = vmul.f32 %v736, 16.0
          %v752 = vadd.f32 %v750, %v751
          %v753 = vadd.f32 %v752, %v734
          %v754 = vsel %vm749, %v753, -1.0
          %755 = vst [vmem:[#allocation2 + $0x5] sm:$0x1] %v754
          %s756 = sadd.s32 %s580, 2
          %s757 = smul.u32 %s756, 128
          %s758 = sld [smem:[#allocation3 + %s757]]
          %v759 = vstv %s758
          %v760 = vmul.f32 %v759, %v575
          %s761 = sadd.s32 %s757, 1
          %s762 = sld [smem:[#allocation3 + %s761]]
          %v763 = vstv %s762
          %v764 = vmul.f32 %v763, %v576
          %v765 = vadd.f32 %v760, %v764
          %s766 = sadd.s32 %s757, 2
          %s767 = sld [smem:[#allocation3 + %s766]]
          %v768 = vstv %s767
          %v769 = vmul.f32 %v768, %v577
          %v770 = vadd.f32 %v765, %v769
          %s771 = sadd.s32 %s757, 3
          %s772 = sld [smem:[#allocation3 + %s771]]
          %v773 = vstv %s772
          %v774 = vadd.f32 %v770, %v773
          %s775 = sadd.s32 %s757, 4
          %s776 = sld [smem:[#allocation3 + %s775]]
          %v777 = vstv %s776
          %v778 = vmul.f32 %v777, %v575
          %s779 = sadd.s32 %s757, 5
          %s780 = sld [smem:[#allocation3 + %s779]]
          %v781 = vstv %s780
          %v782 = vmul.f32 %v781, %v576
          %v783 = vadd.f32 %v778, %v782
          %s784 = sadd.s32 %s757, 6
          %s785 = sld [smem:[#allocation3 + %s784]]
          %v786 = vstv %s785
          %v787 = vmul.f32 %v786, %v577
          %v788 = vadd.f32 %v783, %v787
          %s789 = sadd.s32 %s757, 7
          %s790 = sld [smem:[#allocation3 + %s789]]
          %v791 = vstv %s790
          %v792 = vadd.f32 %v788, %v791
          %s793 = sadd.s32 %s757, 8
          %s794 = sld [smem:[#allocation3 + %s793]]
          %v795 = vstv %s794
          %v796 = vmul.f32 %v795, %v575
          %s797 = sadd.s32 %s757, 9
          %s798 = sld [smem:[#allocation3 + %s797]]
          %v799 = vstv %s798
          %v800 = vmul.f32 %v799, %v576
          %v801 = vadd.f32 %v796, %v800
          %s802 = sadd.s32 %s757, 10
          %s803 = sld [smem:[#allocation3 + %s802]]
          %v804 = vstv %s803
          %v805 = vmul.f32 %v804, %v577
          %v806 = vadd.f32 %v801, %v805
          %s807 = sadd.s32 %s757, 11
          %s808 = sld [smem:[#allocation3 + %s807]]
          %v809 = vstv %s808
          %v810 = vadd.f32 %v806, %v809
          %s811 = scalar_lea.vmem %s213, 24
          %812 = vst [vmem:[%s811] sm:$0x1] %v774
          %813 = vst [vmem:[%s811 + $0x1] sm:$0x1] %v792
          %814 = vst [vmem:[%s811 + $0x2] sm:$0x1] %v810
          %v815 = vsub.f32 %v774, -8.0
          %v816 = vsub.f32 %v815, 0.5
          %v817 = vsub.f32 %v792, -8.0
          %v818 = vsub.f32 %v817, 0.5
          %v819 = vsub.f32 %v810, 10.0
          %v820 = vsub.f32 %v819, 0.5
          %v821 = vadd.f32 %v816, 0.5
          %v822 = vfloor.f32 %v821
          %v823 = vadd.f32 %v818, 0.5
          %v824 = vfloor.f32 %v823
          %v825 = vadd.f32 %v820, 0.5
          %v826 = vfloor.f32 %v825
          %vm827 = vcmp.ge.f32.partialorder %v822, 0.0
          %vm828 = vcmp.le.f32.partialorder %v822, 15.0
          %vm829 = vmand %vm827, %vm828
          %vm830 = vcmp.ge.f32.partialorder %v824, 0.0
          %vm831 = vmand %vm829, %vm830
          %vm832 = vcmp.le.f32.partialorder %v824, 15.0
          %vm833 = vmand %vm831, %vm832
          %vm834 = vcmp.ge.f32.partialorder %v826, 0.0
          %vm835 = vmand %vm833, %vm834
          %vm836 = vcmp.le.f32.partialorder %v826, 15.0
          %vm837 = vmand %vm835, %vm836
          %v838 = vmul.f32 %v826, 256.0
          %v839 = vmul.f32 %v824, 16.0
          %v840 = vadd.f32 %v838, %v839
          %v841 = vadd.f32 %v840, %v822
          %v842 = vsel %vm837, %v841, -1.0
          %843 = vst [vmem:[#allocation2 + $0x6] sm:$0x1] %v842
          %s844 = sadd.s32 %s580, 3
          %s845 = smul.u32 %s844, 128
          %s846 = sld [smem:[#allocation3 + %s845]]
          %v847 = vstv %s846
          %v848 = vmul.f32 %v847, %v575
          %s849 = sadd.s32 %s845, 1
          %s850 = sld [smem:[#allocation3 + %s849]]
          %v851 = vstv %s850
          %v852 = vmul.f32 %v851, %v576
          %v853 = vadd.f32 %v848, %v852
          %s854 = sadd.s32 %s845, 2
          %s855 = sld [smem:[#allocation3 + %s854]]
          %v856 = vstv %s855
          %v857 = vmul.f32 %v856, %v577
          %v858 = vadd.f32 %v853, %v857
          %s859 = sadd.s32 %s845, 3
          %s860 = sld [smem:[#allocation3 + %s859]]
          %v861 = vstv %s860
          %v862 = vadd.f32 %v858, %v861
          %s863 = sadd.s32 %s845, 4
          %s864 = sld [smem:[#allocation3 + %s863]]
          %v865 = vstv %s864
          %v866 = vmul.f32 %v865, %v575
          %s867 = sadd.s32 %s845, 5
          %s868 = sld [smem:[#allocation3 + %s867]]
          %v869 = vstv %s868
          %v870 = vmul.f32 %v869, %v576
          %v871 = vadd.f32 %v866, %v870
          %s872 = sadd.s32 %s845, 6
          %s873 = sld [smem:[#allocation3 + %s872]]
          %v874 = vstv %s873
          %v875 = vmul.f32 %v874, %v577
          %v876 = vadd.f32 %v871, %v875
          %s877 = sadd.s32 %s845, 7
          %s878 = sld [smem:[#allocation3 + %s877]]
          %v879 = vstv %s878
          %v880 = vadd.f32 %v876, %v879
          %s881 = sadd.s32 %s845, 8
          %s882 = sld [smem:[#allocation3 + %s881]]
          %v883 = vstv %s882
          %v884 = vmul.f32 %v883, %v575
          %s885 = sadd.s32 %s845, 9
          %s886 = sld [smem:[#allocation3 + %s885]]
          %v887 = vstv %s886
          %v888 = vmul.f32 %v887, %v576
          %v889 = vadd.f32 %v884, %v888
          %s890 = sadd.s32 %s845, 10
          %s891 = sld [smem:[#allocation3 + %s890]]
          %v892 = vstv %s891
          %v893 = vmul.f32 %v892, %v577
          %v894 = vadd.f32 %v889, %v893
          %s895 = sadd.s32 %s845, 11
          %s896 = sld [smem:[#allocation3 + %s895]]
          %v897 = vstv %s896
          %v898 = vadd.f32 %v894, %v897
          %s899 = scalar_lea.vmem %s213, 28
          %900 = vst [vmem:[%s899] sm:$0x1] %v862
          %901 = vst [vmem:[%s899 + $0x1] sm:$0x1] %v880
          %902 = vst [vmem:[%s899 + $0x2] sm:$0x1] %v898
          %v903 = vsub.f32 %v862, -8.0
          %v904 = vsub.f32 %v903, 0.5
          %v905 = vsub.f32 %v880, -8.0
          %v906 = vsub.f32 %v905, 0.5
          %v907 = vsub.f32 %v898, 10.0
          %v908 = vsub.f32 %v907, 0.5
          %v909 = vadd.f32 %v904, 0.5
          %v910 = vfloor.f32 %v909
          %v911 = vadd.f32 %v906, 0.5
          %v912 = vfloor.f32 %v911
          %v913 = vadd.f32 %v908, 0.5
          %v914 = vfloor.f32 %v913
          %vm915 = vcmp.ge.f32.partialorder %v910, 0.0
          %vm916 = vcmp.le.f32.partialorder %v910, 15.0
          %vm917 = vmand %vm915, %vm916
          %vm918 = vcmp.ge.f32.partialorder %v912, 0.0
          %vm919 = vmand %vm917, %vm918
          %vm920 = vcmp.le.f32.partialorder %v912, 15.0
          %vm921 = vmand %vm919, %vm920
          %vm922 = vcmp.ge.f32.partialorder %v914, 0.0
          %vm923 = vmand %vm921, %vm922
          %vm924 = vcmp.le.f32.partialorder %v914, 15.0
          %vm925 = vmand %vm923, %vm924
          %v926 = vmul.f32 %v914, 256.0
          %v927 = vmul.f32 %v912, 16.0
          %v928 = vadd.f32 %v926, %v927
          %v929 = vadd.f32 %v928, %v910
          %v930 = vsel %vm925, %v929, -1.0
          %931 = vst [vmem:[#allocation2 + $0x7] sm:$0x1] %v930
        $region36: #{tpu_custom_call.1} parent=27 // pred_fallthru
          _
        %s932 = smul.u32 %s24, 2048
        %s933 = scvt.s32.f32 %s932
        %v934 = vlaneseq
        %v935 = vand.u32 %v934, 127
        %v936 = vadd.s32 %v935, 128
        %v937 = vadd.s32 %v935, 256
        %v938 = vadd.s32 %v935, 384
        %v939 = vadd.s32 %v935, 512
        %v940 = vadd.s32 %v935, 640
        %v941 = vadd.s32 %v935, 768
        %v942 = vadd.s32 %v935, 896
        %v943 = vadd.s32 %v935, 1024
        %v944 = vadd.s32 %v935, 1152
        %v945 = vadd.s32 %v935, 1280
        %v946 = vadd.s32 %v935, 1408
        %v947 = vadd.s32 %v935, 1536
        %v948 = vadd.s32 %v935, 1664
        %v949 = vadd.s32 %v935, 1792
        %v950 = vadd.s32 %v935, 1920
        %v951 = vcvt.s32.f32 %v935
        %v952 = vcvt.s32.f32 %v936
        %v953 = vcvt.s32.f32 %v937
        %v954 = vcvt.s32.f32 %v938
        %v955 = vcvt.s32.f32 %v939
        %v956 = vcvt.s32.f32 %v940
        %v957 = vcvt.s32.f32 %v941
        %v958 = vcvt.s32.f32 %v942
        %v959 = vcvt.s32.f32 %v943
        %v960 = vcvt.s32.f32 %v944
        %v961 = vcvt.s32.f32 %v945
        %v962 = vcvt.s32.f32 %v946
        %v963 = vcvt.s32.f32 %v947
        %v964 = vcvt.s32.f32 %v948
        %v965 = vcvt.s32.f32 %v949
        %v966 = vcvt.s32.f32 %v950
        %v967 = vstv %s933
        %v968 = vadd.f32 %v951, %v967
        %v969 = vadd.f32 %v952, %v967
        %v970 = vadd.f32 %v953, %v967
        %v971 = vadd.f32 %v954, %v967
        %v972 = vadd.f32 %v955, %v967
        %v973 = vadd.f32 %v956, %v967
        %v974 = vadd.f32 %v957, %v967
        %v975 = vadd.f32 %v958, %v967
        %v976 = vadd.f32 %v959, %v967
        %v977 = vadd.f32 %v960, %v967
        %v978 = vadd.f32 %v961, %v967
        %v979 = vadd.f32 %v962, %v967
        %v980 = vadd.f32 %v963, %v967
        %v981 = vadd.f32 %v964, %v967
        %v982 = vadd.f32 %v965, %v967
        %v983 = vadd.f32 %v966, %v967
        %v984 = vld [vmem:[#allocation2] sm:$0xff]
        %986 = vset.pattern.permute.xlu0 0
        %987 = vperm.xlu0 %986, %v984
        %v988 = vpop.permute.xlu0 %987
        %vm990 = vcmp.eq.f32.partialorder %v988, %v968
        %vm991 = vcmp.eq.f32.partialorder %v988, %v969
        %vm992 = vcmp.eq.f32.partialorder %v988, %v970
        %vm993 = vcmp.eq.f32.partialorder %v988, %v971
        %vm994 = vcmp.eq.f32.partialorder %v988, %v972
        %vm995 = vcmp.eq.f32.partialorder %v988, %v973
        %vm996 = vcmp.eq.f32.partialorder %v988, %v974
        %vm997 = vcmp.eq.f32.partialorder %v988, %v975
        %vm998 = vcmp.eq.f32.partialorder %v988, %v976
        %vm999 = vcmp.eq.f32.partialorder %v988, %v977
        %vm1000 = vcmp.eq.f32.partialorder %v988, %v978
        %vm1001 = vcmp.eq.f32.partialorder %v988, %v979
        %vm1002 = vcmp.eq.f32.partialorder %v988, %v980
        %vm1003 = vcmp.eq.f32.partialorder %v988, %v981
        %vm1004 = vcmp.eq.f32.partialorder %v988, %v982
        %vm1005 = vcmp.eq.f32.partialorder %v988, %v983
        %v1006 = vsel %vm990, 1.0, 0.0
        %v1007 = vsel %vm991, 1.0, 0.0
        %v1008 = vsel %vm992, 1.0, 0.0
        %v1009 = vsel %vm993, 1.0, 0.0
        %v1010 = vsel %vm994, 1.0, 0.0
        %v1011 = vsel %vm995, 1.0, 0.0
        %v1012 = vsel %vm996, 1.0, 0.0
        %v1013 = vsel %vm997, 1.0, 0.0
        %v1014 = vsel %vm998, 1.0, 0.0
        %v1015 = vsel %vm999, 1.0, 0.0
        %v1016 = vsel %vm1000, 1.0, 0.0
        %v1017 = vsel %vm1001, 1.0, 0.0
        %v1018 = vsel %vm1002, 1.0, 0.0
        %v1019 = vsel %vm1003, 1.0, 0.0
        %v1020 = vsel %vm1004, 1.0, 0.0
        %v1021 = vsel %vm1005, 1.0, 0.0
        %1022 = vset.pattern.permute.xlu0 1
        %1023 = vperm.xlu0 %1022, %v984
        %v1024 = vpop.permute.xlu0 %1023
        %vm1026 = vcmp.eq.f32.partialorder %v1024, %v968
        %vm1027 = vcmp.eq.f32.partialorder %v1024, %v969
        %vm1028 = vcmp.eq.f32.partialorder %v1024, %v970
        %vm1029 = vcmp.eq.f32.partialorder %v1024, %v971
        %vm1030 = vcmp.eq.f32.partialorder %v1024, %v972
        %vm1031 = vcmp.eq.f32.partialorder %v1024, %v973
        %vm1032 = vcmp.eq.f32.partialorder %v1024, %v974
        %vm1033 = vcmp.eq.f32.partialorder %v1024, %v975
        %vm1034 = vcmp.eq.f32.partialorder %v1024, %v976
        %vm1035 = vcmp.eq.f32.partialorder %v1024, %v977
        %vm1036 = vcmp.eq.f32.partialorder %v1024, %v978
        %vm1037 = vcmp.eq.f32.partialorder %v1024, %v979
        %vm1038 = vcmp.eq.f32.partialorder %v1024, %v980
        %vm1039 = vcmp.eq.f32.partialorder %v1024, %v981
        %vm1040 = vcmp.eq.f32.partialorder %v1024, %v982
        %vm1041 = vcmp.eq.f32.partialorder %v1024, %v983
        %v1042 = vsel %vm1026, 1.0, %v1006
        %v1043 = vsel %vm1027, 1.0, %v1007
        %v1044 = vsel %vm1028, 1.0, %v1008
        %v1045 = vsel %vm1029, 1.0, %v1009
        %v1046 = vsel %vm1030, 1.0, %v1010
        %v1047 = vsel %vm1031, 1.0, %v1011
        %v1048 = vsel %vm1032, 1.0, %v1012
        %v1049 = vsel %vm1033, 1.0, %v1013
        %v1050 = vsel %vm1034, 1.0, %v1014
        %v1051 = vsel %vm1035, 1.0, %v1015
        %v1052 = vsel %vm1036, 1.0, %v1016
        %v1053 = vsel %vm1037, 1.0, %v1017
        %v1054 = vsel %vm1038, 1.0, %v1018
        %v1055 = vsel %vm1039, 1.0, %v1019
        %v1056 = vsel %vm1040, 1.0, %v1020
        %v1057 = vsel %vm1041, 1.0, %v1021
        %1058 = vset.pattern.permute.xlu0 2
        %1059 = vperm.xlu0 %1058, %v984
        %v1060 = vpop.permute.xlu0 %1059
        %vm1062 = vcmp.eq.f32.partialorder %v1060, %v968
        %vm1063 = vcmp.eq.f32.partialorder %v1060, %v969
        %vm1064 = vcmp.eq.f32.partialorder %v1060, %v970
        %vm1065 = vcmp.eq.f32.partialorder %v1060, %v971
        %vm1066 = vcmp.eq.f32.partialorder %v1060, %v972
        %vm1067 = vcmp.eq.f32.partialorder %v1060, %v973
        %vm1068 = vcmp.eq.f32.partialorder %v1060, %v974
        %vm1069 = vcmp.eq.f32.partialorder %v1060, %v975
        %vm1070 = vcmp.eq.f32.partialorder %v1060, %v976
        %vm1071 = vcmp.eq.f32.partialorder %v1060, %v977
        %vm1072 = vcmp.eq.f32.partialorder %v1060, %v978
        %vm1073 = vcmp.eq.f32.partialorder %v1060, %v979
        %vm1074 = vcmp.eq.f32.partialorder %v1060, %v980
        %vm1075 = vcmp.eq.f32.partialorder %v1060, %v981
        %vm1076 = vcmp.eq.f32.partialorder %v1060, %v982
        %vm1077 = vcmp.eq.f32.partialorder %v1060, %v983
        %v1078 = vsel %vm1062, 1.0, %v1042
        %v1079 = vsel %vm1063, 1.0, %v1043
        %v1080 = vsel %vm1064, 1.0, %v1044
        %v1081 = vsel %vm1065, 1.0, %v1045
        %v1082 = vsel %vm1066, 1.0, %v1046
        %v1083 = vsel %vm1067, 1.0, %v1047
        %v1084 = vsel %vm1068, 1.0, %v1048
        %v1085 = vsel %vm1069, 1.0, %v1049
        %v1086 = vsel %vm1070, 1.0, %v1050
        %v1087 = vsel %vm1071, 1.0, %v1051
        %v1088 = vsel %vm1072, 1.0, %v1052
        %v1089 = vsel %vm1073, 1.0, %v1053
        %v1090 = vsel %vm1074, 1.0, %v1054
        %v1091 = vsel %vm1075, 1.0, %v1055
        %v1092 = vsel %vm1076, 1.0, %v1056
        %v1093 = vsel %vm1077, 1.0, %v1057
        %1094 = vset.pattern.permute.xlu0 3
        %1095 = vperm.xlu0 %1094, %v984
        %v1096 = vpop.permute.xlu0 %1095
        %vm1098 = vcmp.eq.f32.partialorder %v1096, %v968
        %vm1099 = vcmp.eq.f32.partialorder %v1096, %v969
        %vm1100 = vcmp.eq.f32.partialorder %v1096, %v970
        %vm1101 = vcmp.eq.f32.partialorder %v1096, %v971
        %vm1102 = vcmp.eq.f32.partialorder %v1096, %v972
        %vm1103 = vcmp.eq.f32.partialorder %v1096, %v973
        %vm1104 = vcmp.eq.f32.partialorder %v1096, %v974
        %vm1105 = vcmp.eq.f32.partialorder %v1096, %v975
        %vm1106 = vcmp.eq.f32.partialorder %v1096, %v976
        %vm1107 = vcmp.eq.f32.partialorder %v1096, %v977
        %vm1108 = vcmp.eq.f32.partialorder %v1096, %v978
        %vm1109 = vcmp.eq.f32.partialorder %v1096, %v979
        %vm1110 = vcmp.eq.f32.partialorder %v1096, %v980
        %vm1111 = vcmp.eq.f32.partialorder %v1096, %v981
        %vm1112 = vcmp.eq.f32.partialorder %v1096, %v982
        %vm1113 = vcmp.eq.f32.partialorder %v1096, %v983
        %v1114 = vsel %vm1098, 1.0, %v1078
        %v1115 = vsel %vm1099, 1.0, %v1079
        %v1116 = vsel %vm1100, 1.0, %v1080
        %v1117 = vsel %vm1101, 1.0, %v1081
        %v1118 = vsel %vm1102, 1.0, %v1082
        %v1119 = vsel %vm1103, 1.0, %v1083
        %v1120 = vsel %vm1104, 1.0, %v1084
        %v1121 = vsel %vm1105, 1.0, %v1085
        %v1122 = vsel %vm1106, 1.0, %v1086
        %v1123 = vsel %vm1107, 1.0, %v1087
        %v1124 = vsel %vm1108, 1.0, %v1088
        %v1125 = vsel %vm1109, 1.0, %v1089
        %v1126 = vsel %vm1110, 1.0, %v1090
        %v1127 = vsel %vm1111, 1.0, %v1091
        %v1128 = vsel %vm1112, 1.0, %v1092
        %v1129 = vsel %vm1113, 1.0, %v1093
        %1130 = vset.pattern.permute.xlu0 4
        %1131 = vperm.xlu0 %1130, %v984
        %v1132 = vpop.permute.xlu0 %1131
        %vm1134 = vcmp.eq.f32.partialorder %v1132, %v968
        %vm1135 = vcmp.eq.f32.partialorder %v1132, %v969
        %vm1136 = vcmp.eq.f32.partialorder %v1132, %v970
        %vm1137 = vcmp.eq.f32.partialorder %v1132, %v971
        %vm1138 = vcmp.eq.f32.partialorder %v1132, %v972
        %vm1139 = vcmp.eq.f32.partialorder %v1132, %v973
        %vm1140 = vcmp.eq.f32.partialorder %v1132, %v974
        %vm1141 = vcmp.eq.f32.partialorder %v1132, %v975
        %vm1142 = vcmp.eq.f32.partialorder %v1132, %v976
        %vm1143 = vcmp.eq.f32.partialorder %v1132, %v977
        %vm1144 = vcmp.eq.f32.partialorder %v1132, %v978
        %vm1145 = vcmp.eq.f32.partialorder %v1132, %v979
        %vm1146 = vcmp.eq.f32.partialorder %v1132, %v980
        %vm1147 = vcmp.eq.f32.partialorder %v1132, %v981
        %vm1148 = vcmp.eq.f32.partialorder %v1132, %v982
        %vm1149 = vcmp.eq.f32.partialorder %v1132, %v983
        %v1150 = vsel %vm1134, 1.0, %v1114
        %v1151 = vsel %vm1135, 1.0, %v1115
        %v1152 = vsel %vm1136, 1.0, %v1116
        %v1153 = vsel %vm1137, 1.0, %v1117
        %v1154 = vsel %vm1138, 1.0, %v1118
        %v1155 = vsel %vm1139, 1.0, %v1119
        %v1156 = vsel %vm1140, 1.0, %v1120
        %v1157 = vsel %vm1141, 1.0, %v1121
        %v1158 = vsel %vm1142, 1.0, %v1122
        %v1159 = vsel %vm1143, 1.0, %v1123
        %v1160 = vsel %vm1144, 1.0, %v1124
        %v1161 = vsel %vm1145, 1.0, %v1125
        %v1162 = vsel %vm1146, 1.0, %v1126
        %v1163 = vsel %vm1147, 1.0, %v1127
        %v1164 = vsel %vm1148, 1.0, %v1128
        %v1165 = vsel %vm1149, 1.0, %v1129
        %1166 = vset.pattern.permute.xlu0 5
        %1167 = vperm.xlu0 %1166, %v984
        %v1168 = vpop.permute.xlu0 %1167
        %vm1170 = vcmp.eq.f32.partialorder %v1168, %v968
        %vm1171 = vcmp.eq.f32.partialorder %v1168, %v969
        %vm1172 = vcmp.eq.f32.partialorder %v1168, %v970
        %vm1173 = vcmp.eq.f32.partialorder %v1168, %v971
        %vm1174 = vcmp.eq.f32.partialorder %v1168, %v972
        %vm1175 = vcmp.eq.f32.partialorder %v1168, %v973
        %vm1176 = vcmp.eq.f32.partialorder %v1168, %v974
        %vm1177 = vcmp.eq.f32.partialorder %v1168, %v975
        %vm1178 = vcmp.eq.f32.partialorder %v1168, %v976
        %vm1179 = vcmp.eq.f32.partialorder %v1168, %v977
        %vm1180 = vcmp.eq.f32.partialorder %v1168, %v978
        %vm1181 = vcmp.eq.f32.partialorder %v1168, %v979
        %vm1182 = vcmp.eq.f32.partialorder %v1168, %v980
        %vm1183 = vcmp.eq.f32.partialorder %v1168, %v981
        %vm1184 = vcmp.eq.f32.partialorder %v1168, %v982
        %vm1185 = vcmp.eq.f32.partialorder %v1168, %v983
        %v1186 = vsel %vm1170, 1.0, %v1150
        %v1187 = vsel %vm1171, 1.0, %v1151
        %v1188 = vsel %vm1172, 1.0, %v1152
        %v1189 = vsel %vm1173, 1.0, %v1153
        %v1190 = vsel %vm1174, 1.0, %v1154
        %v1191 = vsel %vm1175, 1.0, %v1155
        %v1192 = vsel %vm1176, 1.0, %v1156
        %v1193 = vsel %vm1177, 1.0, %v1157
        %v1194 = vsel %vm1178, 1.0, %v1158
        %v1195 = vsel %vm1179, 1.0, %v1159
        %v1196 = vsel %vm1180, 1.0, %v1160
        %v1197 = vsel %vm1181, 1.0, %v1161
        %v1198 = vsel %vm1182, 1.0, %v1162
        %v1199 = vsel %vm1183, 1.0, %v1163
        %v1200 = vsel %vm1184, 1.0, %v1164
        %v1201 = vsel %vm1185, 1.0, %v1165
        %1202 = vset.pattern.permute.xlu0 6
        %1203 = vperm.xlu0 %1202, %v984
        %v1204 = vpop.permute.xlu0 %1203
        %vm1206 = vcmp.eq.f32.partialorder %v1204, %v968
        %vm1207 = vcmp.eq.f32.partialorder %v1204, %v969
        %vm1208 = vcmp.eq.f32.partialorder %v1204, %v970
        %vm1209 = vcmp.eq.f32.partialorder %v1204, %v971
        %vm1210 = vcmp.eq.f32.partialorder %v1204, %v972
        %vm1211 = vcmp.eq.f32.partialorder %v1204, %v973
        %vm1212 = vcmp.eq.f32.partialorder %v1204, %v974
        %vm1213 = vcmp.eq.f32.partialorder %v1204, %v975
        %vm1214 = vcmp.eq.f32.partialorder %v1204, %v976
        %vm1215 = vcmp.eq.f32.partialorder %v1204, %v977
        %vm1216 = vcmp.eq.f32.partialorder %v1204, %v978
        %vm1217 = vcmp.eq.f32.partialorder %v1204, %v979
        %vm1218 = vcmp.eq.f32.partialorder %v1204, %v980
        %vm1219 = vcmp.eq.f32.partialorder %v1204, %v981
        %vm1220 = vcmp.eq.f32.partialorder %v1204, %v982
        %vm1221 = vcmp.eq.f32.partialorder %v1204, %v983
        %v1222 = vsel %vm1206, 1.0, %v1186
        %v1223 = vsel %vm1207, 1.0, %v1187
        %v1224 = vsel %vm1208, 1.0, %v1188
        %v1225 = vsel %vm1209, 1.0, %v1189
        %v1226 = vsel %vm1210, 1.0, %v1190
        %v1227 = vsel %vm1211, 1.0, %v1191
        %v1228 = vsel %vm1212, 1.0, %v1192
        %v1229 = vsel %vm1213, 1.0, %v1193
        %v1230 = vsel %vm1214, 1.0, %v1194
        %v1231 = vsel %vm1215, 1.0, %v1195
        %v1232 = vsel %vm1216, 1.0, %v1196
        %v1233 = vsel %vm1217, 1.0, %v1197
        %v1234 = vsel %vm1218, 1.0, %v1198
        %v1235 = vsel %vm1219, 1.0, %v1199
        %v1236 = vsel %vm1220, 1.0, %v1200
        %v1237 = vsel %vm1221, 1.0, %v1201
        %1238 = vset.pattern.permute.xlu0 7
        %1239 = vperm.xlu0 %1238, %v984
        %v1240 = vpop.permute.xlu0 %1239
        %vm1242 = vcmp.eq.f32.partialorder %v1240, %v968
        %vm1243 = vcmp.eq.f32.partialorder %v1240, %v969
        %vm1244 = vcmp.eq.f32.partialorder %v1240, %v970
        %vm1245 = vcmp.eq.f32.partialorder %v1240, %v971
        %vm1246 = vcmp.eq.f32.partialorder %v1240, %v972
        %vm1247 = vcmp.eq.f32.partialorder %v1240, %v973
        %vm1248 = vcmp.eq.f32.partialorder %v1240, %v974
        %vm1249 = vcmp.eq.f32.partialorder %v1240, %v975
        %vm1250 = vcmp.eq.f32.partialorder %v1240, %v976
        %vm1251 = vcmp.eq.f32.partialorder %v1240, %v977
        %vm1252 = vcmp.eq.f32.partialorder %v1240, %v978
        %vm1253 = vcmp.eq.f32.partialorder %v1240, %v979
        %vm1254 = vcmp.eq.f32.partialorder %v1240, %v980
        %vm1255 = vcmp.eq.f32.partialorder %v1240, %v981
        %vm1256 = vcmp.eq.f32.partialorder %v1240, %v982
        %vm1257 = vcmp.eq.f32.partialorder %v1240, %v983
        %v1258 = vsel %vm1242, 1.0, %v1222
        %v1259 = vsel %vm1243, 1.0, %v1223
        %v1260 = vsel %vm1244, 1.0, %v1224
        %v1261 = vsel %vm1245, 1.0, %v1225
        %v1262 = vsel %vm1246, 1.0, %v1226
        %v1263 = vsel %vm1247, 1.0, %v1227
        %v1264 = vsel %vm1248, 1.0, %v1228
        %v1265 = vsel %vm1249, 1.0, %v1229
        %v1266 = vsel %vm1250, 1.0, %v1230
        %v1267 = vsel %vm1251, 1.0, %v1231
        %v1268 = vsel %vm1252, 1.0, %v1232
        %v1269 = vsel %vm1253, 1.0, %v1233
        %v1270 = vsel %vm1254, 1.0, %v1234
        %v1271 = vsel %vm1255, 1.0, %v1235
        %v1272 = vsel %vm1256, 1.0, %v1236
        %v1273 = vsel %vm1257, 1.0, %v1237
        %1274 = vset.pattern.permute.xlu0 8
        %1275 = vperm.xlu0 %1274, %v984
        %v1276 = vpop.permute.xlu0 %1275
        %vm1278 = vcmp.eq.f32.partialorder %v1276, %v968
        %vm1279 = vcmp.eq.f32.partialorder %v1276, %v969
        %vm1280 = vcmp.eq.f32.partialorder %v1276, %v970
        %vm1281 = vcmp.eq.f32.partialorder %v1276, %v971
        %vm1282 = vcmp.eq.f32.partialorder %v1276, %v972
        %vm1283 = vcmp.eq.f32.partialorder %v1276, %v973
        %vm1284 = vcmp.eq.f32.partialorder %v1276, %v974
        %vm1285 = vcmp.eq.f32.partialorder %v1276, %v975
        %vm1286 = vcmp.eq.f32.partialorder %v1276, %v976
        %vm1287 = vcmp.eq.f32.partialorder %v1276, %v977
        %vm1288 = vcmp.eq.f32.partialorder %v1276, %v978
        %vm1289 = vcmp.eq.f32.partialorder %v1276, %v979
        %vm1290 = vcmp.eq.f32.partialorder %v1276, %v980
        %vm1291 = vcmp.eq.f32.partialorder %v1276, %v981
        %vm1292 = vcmp.eq.f32.partialorder %v1276, %v982
        %vm1293 = vcmp.eq.f32.partialorder %v1276, %v983
        %v1294 = vsel %vm1278, 1.0, %v1258
        %v1295 = vsel %vm1279, 1.0, %v1259
        %v1296 = vsel %vm1280, 1.0, %v1260
        %v1297 = vsel %vm1281, 1.0, %v1261
        %v1298 = vsel %vm1282, 1.0, %v1262
        %v1299 = vsel %vm1283, 1.0, %v1263
        %v1300 = vsel %vm1284, 1.0, %v1264
        %v1301 = vsel %vm1285, 1.0, %v1265
        %v1302 = vsel %vm1286, 1.0, %v1266
        %v1303 = vsel %vm1287, 1.0, %v1267
        %v1304 = vsel %vm1288, 1.0, %v1268
        %v1305 = vsel %vm1289, 1.0, %v1269
        %v1306 = vsel %vm1290, 1.0, %v1270
        %v1307 = vsel %vm1291, 1.0, %v1271
        %v1308 = vsel %vm1292, 1.0, %v1272
        %v1309 = vsel %vm1293, 1.0, %v1273
        %1310 = vset.pattern.permute.xlu0 9
        %1311 = vperm.xlu0 %1310, %v984
        %v1312 = vpop.permute.xlu0 %1311
        %vm1314 = vcmp.eq.f32.partialorder %v1312, %v968
        %vm1315 = vcmp.eq.f32.partialorder %v1312, %v969
        %vm1316 = vcmp.eq.f32.partialorder %v1312, %v970
        %vm1317 = vcmp.eq.f32.partialorder %v1312, %v971
        %vm1318 = vcmp.eq.f32.partialorder %v1312, %v972
        %vm1319 = vcmp.eq.f32.partialorder %v1312, %v973
        %vm1320 = vcmp.eq.f32.partialorder %v1312, %v974
        %vm1321 = vcmp.eq.f32.partialorder %v1312, %v975
        %vm1322 = vcmp.eq.f32.partialorder %v1312, %v976
        %vm1323 = vcmp.eq.f32.partialorder %v1312, %v977
        %vm1324 = vcmp.eq.f32.partialorder %v1312, %v978
        %vm1325 = vcmp.eq.f32.partialorder %v1312, %v979
        %vm1326 = vcmp.eq.f32.partialorder %v1312, %v980
        %vm1327 = vcmp.eq.f32.partialorder %v1312, %v981
        %vm1328 = vcmp.eq.f32.partialorder %v1312, %v982
        %vm1329 = vcmp.eq.f32.partialorder %v1312, %v983
        %v1330 = vsel %vm1314, 1.0, %v1294
        %v1331 = vsel %vm1315, 1.0, %v1295
        %v1332 = vsel %vm1316, 1.0, %v1296
        %v1333 = vsel %vm1317, 1.0, %v1297
        %v1334 = vsel %vm1318, 1.0, %v1298
        %v1335 = vsel %vm1319, 1.0, %v1299
        %v1336 = vsel %vm1320, 1.0, %v1300
        %v1337 = vsel %vm1321, 1.0, %v1301
        %v1338 = vsel %vm1322, 1.0, %v1302
        %v1339 = vsel %vm1323, 1.0, %v1303
        %v1340 = vsel %vm1324, 1.0, %v1304
        %v1341 = vsel %vm1325, 1.0, %v1305
        %v1342 = vsel %vm1326, 1.0, %v1306
        %v1343 = vsel %vm1327, 1.0, %v1307
        %v1344 = vsel %vm1328, 1.0, %v1308
        %v1345 = vsel %vm1329, 1.0, %v1309
        %1346 = vset.pattern.permute.xlu0 10
        %1347 = vperm.xlu0 %1346, %v984
        %v1348 = vpop.permute.xlu0 %1347
        %vm1350 = vcmp.eq.f32.partialorder %v1348, %v968
        %vm1351 = vcmp.eq.f32.partialorder %v1348, %v969
        %vm1352 = vcmp.eq.f32.partialorder %v1348, %v970
        %vm1353 = vcmp.eq.f32.partialorder %v1348, %v971
        %vm1354 = vcmp.eq.f32.partialorder %v1348, %v972
        %vm1355 = vcmp.eq.f32.partialorder %v1348, %v973
        %vm1356 = vcmp.eq.f32.partialorder %v1348, %v974
        %vm1357 = vcmp.eq.f32.partialorder %v1348, %v975
        %vm1358 = vcmp.eq.f32.partialorder %v1348, %v976
        %vm1359 = vcmp.eq.f32.partialorder %v1348, %v977
        %vm1360 = vcmp.eq.f32.partialorder %v1348, %v978
        %vm1361 = vcmp.eq.f32.partialorder %v1348, %v979
        %vm1362 = vcmp.eq.f32.partialorder %v1348, %v980
        %vm1363 = vcmp.eq.f32.partialorder %v1348, %v981
        %vm1364 = vcmp.eq.f32.partialorder %v1348, %v982
        %vm1365 = vcmp.eq.f32.partialorder %v1348, %v983
        %v1366 = vsel %vm1350, 1.0, %v1330
        %v1367 = vsel %vm1351, 1.0, %v1331
        %v1368 = vsel %vm1352, 1.0, %v1332
        %v1369 = vsel %vm1353, 1.0, %v1333
        %v1370 = vsel %vm1354, 1.0, %v1334
        %v1371 = vsel %vm1355, 1.0, %v1335
        %v1372 = vsel %vm1356, 1.0, %v1336
        %v1373 = vsel %vm1357, 1.0, %v1337
        %v1374 = vsel %vm1358, 1.0, %v1338
        %v1375 = vsel %vm1359, 1.0, %v1339
        %v1376 = vsel %vm1360, 1.0, %v1340
        %v1377 = vsel %vm1361, 1.0, %v1341
        %v1378 = vsel %vm1362, 1.0, %v1342
        %v1379 = vsel %vm1363, 1.0, %v1343
        %v1380 = vsel %vm1364, 1.0, %v1344
        %v1381 = vsel %vm1365, 1.0, %v1345
        %1382 = vset.pattern.permute.xlu0 11
        %1383 = vperm.xlu0 %1382, %v984
        %v1384 = vpop.permute.xlu0 %1383
        %vm1386 = vcmp.eq.f32.partialorder %v1384, %v968
        %vm1387 = vcmp.eq.f32.partialorder %v1384, %v969
        %vm1388 = vcmp.eq.f32.partialorder %v1384, %v970
        %vm1389 = vcmp.eq.f32.partialorder %v1384, %v971
        %vm1390 = vcmp.eq.f32.partialorder %v1384, %v972
        %vm1391 = vcmp.eq.f32.partialorder %v1384, %v973
        %vm1392 = vcmp.eq.f32.partialorder %v1384, %v974
        %vm1393 = vcmp.eq.f32.partialorder %v1384, %v975
        %vm1394 = vcmp.eq.f32.partialorder %v1384, %v976
        %vm1395 = vcmp.eq.f32.partialorder %v1384, %v977
        %vm1396 = vcmp.eq.f32.partialorder %v1384, %v978
        %vm1397 = vcmp.eq.f32.partialorder %v1384, %v979
        %vm1398 = vcmp.eq.f32.partialorder %v1384, %v980
        %vm1399 = vcmp.eq.f32.partialorder %v1384, %v981
        %vm1400 = vcmp.eq.f32.partialorder %v1384, %v982
        %vm1401 = vcmp.eq.f32.partialorder %v1384, %v983
        %v1402 = vsel %vm1386, 1.0, %v1366
        %v1403 = vsel %vm1387, 1.0, %v1367
        %v1404 = vsel %vm1388, 1.0, %v1368
        %v1405 = vsel %vm1389, 1.0, %v1369
        %v1406 = vsel %vm1390, 1.0, %v1370
        %v1407 = vsel %vm1391, 1.0, %v1371
        %v1408 = vsel %vm1392, 1.0, %v1372
        %v1409 = vsel %vm1393, 1.0, %v1373
        %v1410 = vsel %vm1394, 1.0, %v1374
        %v1411 = vsel %vm1395, 1.0, %v1375
        %v1412 = vsel %vm1396, 1.0, %v1376
        %v1413 = vsel %vm1397, 1.0, %v1377
        %v1414 = vsel %vm1398, 1.0, %v1378
        %v1415 = vsel %vm1399, 1.0, %v1379
        %v1416 = vsel %vm1400, 1.0, %v1380
        %v1417 = vsel %vm1401, 1.0, %v1381
        %1418 = vset.pattern.permute.xlu0 12
        %1419 = vperm.xlu0 %1418, %v984
        %v1420 = vpop.permute.xlu0 %1419
        %vm1422 = vcmp.eq.f32.partialorder %v1420, %v968
        %vm1423 = vcmp.eq.f32.partialorder %v1420, %v969
        %vm1424 = vcmp.eq.f32.partialorder %v1420, %v970
        %vm1425 = vcmp.eq.f32.partialorder %v1420, %v971
        %vm1426 = vcmp.eq.f32.partialorder %v1420, %v972
        %vm1427 = vcmp.eq.f32.partialorder %v1420, %v973
        %vm1428 = vcmp.eq.f32.partialorder %v1420, %v974
        %vm1429 = vcmp.eq.f32.partialorder %v1420, %v975
        %vm1430 = vcmp.eq.f32.partialorder %v1420, %v976
        %vm1431 = vcmp.eq.f32.partialorder %v1420, %v977
        %vm1432 = vcmp.eq.f32.partialorder %v1420, %v978
        %vm1433 = vcmp.eq.f32.partialorder %v1420, %v979
        %vm1434 = vcmp.eq.f32.partialorder %v1420, %v980
        %vm1435 = vcmp.eq.f32.partialorder %v1420, %v981
        %vm1436 = vcmp.eq.f32.partialorder %v1420, %v982
        %vm1437 = vcmp.eq.f32.partialorder %v1420, %v983
        %v1438 = vsel %vm1422, 1.0, %v1402
        %v1439 = vsel %vm1423, 1.0, %v1403
        %v1440 = vsel %vm1424, 1.0, %v1404
        %v1441 = vsel %vm1425, 1.0, %v1405
        %v1442 = vsel %vm1426, 1.0, %v1406
        %v1443 = vsel %vm1427, 1.0, %v1407
        %v1444 = vsel %vm1428, 1.0, %v1408
        %v1445 = vsel %vm1429, 1.0, %v1409
        %v1446 = vsel %vm1430, 1.0, %v1410
        %v1447 = vsel %vm1431, 1.0, %v1411
        %v1448 = vsel %vm1432, 1.0, %v1412
        %v1449 = vsel %vm1433, 1.0, %v1413
        %v1450 = vsel %vm1434, 1.0, %v1414
        %v1451 = vsel %vm1435, 1.0, %v1415
        %v1452 = vsel %vm1436, 1.0, %v1416
        %v1453 = vsel %vm1437, 1.0, %v1417
        %1454 = vset.pattern.permute.xlu0 13
        %1455 = vperm.xlu0 %1454, %v984
        %v1456 = vpop.permute.xlu0 %1455
        %vm1458 = vcmp.eq.f32.partialorder %v1456, %v968
        %vm1459 = vcmp.eq.f32.partialorder %v1456, %v969
        %vm1460 = vcmp.eq.f32.partialorder %v1456, %v970
        %vm1461 = vcmp.eq.f32.partialorder %v1456, %v971
        %vm1462 = vcmp.eq.f32.partialorder %v1456, %v972
        %vm1463 = vcmp.eq.f32.partialorder %v1456, %v973
        %vm1464 = vcmp.eq.f32.partialorder %v1456, %v974
        %vm1465 = vcmp.eq.f32.partialorder %v1456, %v975
        %vm1466 = vcmp.eq.f32.partialorder %v1456, %v976
        %vm1467 = vcmp.eq.f32.partialorder %v1456, %v977
        %vm1468 = vcmp.eq.f32.partialorder %v1456, %v978
        %vm1469 = vcmp.eq.f32.partialorder %v1456, %v979
        %vm1470 = vcmp.eq.f32.partialorder %v1456, %v980
        %vm1471 = vcmp.eq.f32.partialorder %v1456, %v981
        %vm1472 = vcmp.eq.f32.partialorder %v1456, %v982
        %vm1473 = vcmp.eq.f32.partialorder %v1456, %v983
        %v1474 = vsel %vm1458, 1.0, %v1438
        %v1475 = vsel %vm1459, 1.0, %v1439
        %v1476 = vsel %vm1460, 1.0, %v1440
        %v1477 = vsel %vm1461, 1.0, %v1441
        %v1478 = vsel %vm1462, 1.0, %v1442
        %v1479 = vsel %vm1463, 1.0, %v1443
        %v1480 = vsel %vm1464, 1.0, %v1444
        %v1481 = vsel %vm1465, 1.0, %v1445
        %v1482 = vsel %vm1466, 1.0, %v1446
        %v1483 = vsel %vm1467, 1.0, %v1447
        %v1484 = vsel %vm1468, 1.0, %v1448
        %v1485 = vsel %vm1469, 1.0, %v1449
        %v1486 = vsel %vm1470, 1.0, %v1450
        %v1487 = vsel %vm1471, 1.0, %v1451
        %v1488 = vsel %vm1472, 1.0, %v1452
        %v1489 = vsel %vm1473, 1.0, %v1453
        %1490 = vset.pattern.permute.xlu0 14
        %1491 = vperm.xlu0 %1490, %v984
        %v1492 = vpop.permute.xlu0 %1491
        %vm1494 = vcmp.eq.f32.partialorder %v1492, %v968
        %vm1495 = vcmp.eq.f32.partialorder %v1492, %v969
        %vm1496 = vcmp.eq.f32.partialorder %v1492, %v970
        %vm1497 = vcmp.eq.f32.partialorder %v1492, %v971
        %vm1498 = vcmp.eq.f32.partialorder %v1492, %v972
        %vm1499 = vcmp.eq.f32.partialorder %v1492, %v973
        %vm1500 = vcmp.eq.f32.partialorder %v1492, %v974
        %vm1501 = vcmp.eq.f32.partialorder %v1492, %v975
        %vm1502 = vcmp.eq.f32.partialorder %v1492, %v976
        %vm1503 = vcmp.eq.f32.partialorder %v1492, %v977
        %vm1504 = vcmp.eq.f32.partialorder %v1492, %v978
        %vm1505 = vcmp.eq.f32.partialorder %v1492, %v979
        %vm1506 = vcmp.eq.f32.partialorder %v1492, %v980
        %vm1507 = vcmp.eq.f32.partialorder %v1492, %v981
        %vm1508 = vcmp.eq.f32.partialorder %v1492, %v982
        %vm1509 = vcmp.eq.f32.partialorder %v1492, %v983
        %v1510 = vsel %vm1494, 1.0, %v1474
        %v1511 = vsel %vm1495, 1.0, %v1475
        %v1512 = vsel %vm1496, 1.0, %v1476
        %v1513 = vsel %vm1497, 1.0, %v1477
        %v1514 = vsel %vm1498, 1.0, %v1478
        %v1515 = vsel %vm1499, 1.0, %v1479
        %v1516 = vsel %vm1500, 1.0, %v1480
        %v1517 = vsel %vm1501, 1.0, %v1481
        %v1518 = vsel %vm1502, 1.0, %v1482
        %v1519 = vsel %vm1503, 1.0, %v1483
        %v1520 = vsel %vm1504, 1.0, %v1484
        %v1521 = vsel %vm1505, 1.0, %v1485
        %v1522 = vsel %vm1506, 1.0, %v1486
        %v1523 = vsel %vm1507, 1.0, %v1487
        %v1524 = vsel %vm1508, 1.0, %v1488
        %v1525 = vsel %vm1509, 1.0, %v1489
        %1526 = vset.pattern.permute.xlu0 15
        %1527 = vperm.xlu0 %1526, %v984
        %v1528 = vpop.permute.xlu0 %1527
        %vm1530 = vcmp.eq.f32.partialorder %v1528, %v968
        %vm1531 = vcmp.eq.f32.partialorder %v1528, %v969
        %vm1532 = vcmp.eq.f32.partialorder %v1528, %v970
        %vm1533 = vcmp.eq.f32.partialorder %v1528, %v971
        %vm1534 = vcmp.eq.f32.partialorder %v1528, %v972
        %vm1535 = vcmp.eq.f32.partialorder %v1528, %v973
        %vm1536 = vcmp.eq.f32.partialorder %v1528, %v974
        %vm1537 = vcmp.eq.f32.partialorder %v1528, %v975
        %vm1538 = vcmp.eq.f32.partialorder %v1528, %v976
        %vm1539 = vcmp.eq.f32.partialorder %v1528, %v977
        %vm1540 = vcmp.eq.f32.partialorder %v1528, %v978
        %vm1541 = vcmp.eq.f32.partialorder %v1528, %v979
        %vm1542 = vcmp.eq.f32.partialorder %v1528, %v980
        %vm1543 = vcmp.eq.f32.partialorder %v1528, %v981
        %vm1544 = vcmp.eq.f32.partialorder %v1528, %v982
        %vm1545 = vcmp.eq.f32.partialorder %v1528, %v983
        %v1546 = vsel %vm1530, 1.0, %v1510
        %v1547 = vsel %vm1531, 1.0, %v1511
        %v1548 = vsel %vm1532, 1.0, %v1512
        %v1549 = vsel %vm1533, 1.0, %v1513
        %v1550 = vsel %vm1534, 1.0, %v1514
        %v1551 = vsel %vm1535, 1.0, %v1515
        %v1552 = vsel %vm1536, 1.0, %v1516
        %v1553 = vsel %vm1537, 1.0, %v1517
        %v1554 = vsel %vm1538, 1.0, %v1518
        %v1555 = vsel %vm1539, 1.0, %v1519
        %v1556 = vsel %vm1540, 1.0, %v1520
        %v1557 = vsel %vm1541, 1.0, %v1521
        %v1558 = vsel %vm1542, 1.0, %v1522
        %v1559 = vsel %vm1543, 1.0, %v1523
        %v1560 = vsel %vm1544, 1.0, %v1524
        %v1561 = vsel %vm1545, 1.0, %v1525
        %1562 = vset.pattern.permute.xlu0 16
        %1563 = vperm.xlu0 %1562, %v984
        %v1564 = vpop.permute.xlu0 %1563
        %vm1566 = vcmp.eq.f32.partialorder %v1564, %v968
        %vm1567 = vcmp.eq.f32.partialorder %v1564, %v969
        %vm1568 = vcmp.eq.f32.partialorder %v1564, %v970
        %vm1569 = vcmp.eq.f32.partialorder %v1564, %v971
        %vm1570 = vcmp.eq.f32.partialorder %v1564, %v972
        %vm1571 = vcmp.eq.f32.partialorder %v1564, %v973
        %vm1572 = vcmp.eq.f32.partialorder %v1564, %v974
        %vm1573 = vcmp.eq.f32.partialorder %v1564, %v975
        %vm1574 = vcmp.eq.f32.partialorder %v1564, %v976
        %vm1575 = vcmp.eq.f32.partialorder %v1564, %v977
        %vm1576 = vcmp.eq.f32.partialorder %v1564, %v978
        %vm1577 = vcmp.eq.f32.partialorder %v1564, %v979
        %vm1578 = vcmp.eq.f32.partialorder %v1564, %v980
        %vm1579 = vcmp.eq.f32.partialorder %v1564, %v981
        %vm1580 = vcmp.eq.f32.partialorder %v1564, %v982
        %vm1581 = vcmp.eq.f32.partialorder %v1564, %v983
        %v1582 = vsel %vm1566, 1.0, %v1546
        %v1583 = vsel %vm1567, 1.0, %v1547
        %v1584 = vsel %vm1568, 1.0, %v1548
        %v1585 = vsel %vm1569, 1.0, %v1549
        %v1586 = vsel %vm1570, 1.0, %v1550
        %v1587 = vsel %vm1571, 1.0, %v1551
        %v1588 = vsel %vm1572, 1.0, %v1552
        %v1589 = vsel %vm1573, 1.0, %v1553
        %v1590 = vsel %vm1574, 1.0, %v1554
        %v1591 = vsel %vm1575, 1.0, %v1555
        %v1592 = vsel %vm1576, 1.0, %v1556
        %v1593 = vsel %vm1577, 1.0, %v1557
        %v1594 = vsel %vm1578, 1.0, %v1558
        %v1595 = vsel %vm1579, 1.0, %v1559
        %v1596 = vsel %vm1580, 1.0, %v1560
        %v1597 = vsel %vm1581, 1.0, %v1561
        %1598 = vset.pattern.permute.xlu0 17
        %1599 = vperm.xlu0 %1598, %v984
        %v1600 = vpop.permute.xlu0 %1599
        %vm1602 = vcmp.eq.f32.partialorder %v1600, %v968
        %vm1603 = vcmp.eq.f32.partialorder %v1600, %v969
        %vm1604 = vcmp.eq.f32.partialorder %v1600, %v970
        %vm1605 = vcmp.eq.f32.partialorder %v1600, %v971
        %vm1606 = vcmp.eq.f32.partialorder %v1600, %v972
        %vm1607 = vcmp.eq.f32.partialorder %v1600, %v973
        %vm1608 = vcmp.eq.f32.partialorder %v1600, %v974
        %vm1609 = vcmp.eq.f32.partialorder %v1600, %v975
        %vm1610 = vcmp.eq.f32.partialorder %v1600, %v976
        %vm1611 = vcmp.eq.f32.partialorder %v1600, %v977
        %vm1612 = vcmp.eq.f32.partialorder %v1600, %v978
        %vm1613 = vcmp.eq.f32.partialorder %v1600, %v979
        %vm1614 = vcmp.eq.f32.partialorder %v1600, %v980
        %vm1615 = vcmp.eq.f32.partialorder %v1600, %v981
        %vm1616 = vcmp.eq.f32.partialorder %v1600, %v982
        %vm1617 = vcmp.eq.f32.partialorder %v1600, %v983
        %v1618 = vsel %vm1602, 1.0, %v1582
        %v1619 = vsel %vm1603, 1.0, %v1583
        %v1620 = vsel %vm1604, 1.0, %v1584
        %v1621 = vsel %vm1605, 1.0, %v1585
        %v1622 = vsel %vm1606, 1.0, %v1586
        %v1623 = vsel %vm1607, 1.0, %v1587
        %v1624 = vsel %vm1608, 1.0, %v1588
        %v1625 = vsel %vm1609, 1.0, %v1589
        %v1626 = vsel %vm1610, 1.0, %v1590
        %v1627 = vsel %vm1611, 1.0, %v1591
        %v1628 = vsel %vm1612, 1.0, %v1592
        %v1629 = vsel %vm1613, 1.0, %v1593
        %v1630 = vsel %vm1614, 1.0, %v1594
        %v1631 = vsel %vm1615, 1.0, %v1595
        %v1632 = vsel %vm1616, 1.0, %v1596
        %v1633 = vsel %vm1617, 1.0, %v1597
        %1634 = vset.pattern.permute.xlu0 18
        %1635 = vperm.xlu0 %1634, %v984
        %v1636 = vpop.permute.xlu0 %1635
        %vm1638 = vcmp.eq.f32.partialorder %v1636, %v968
        %vm1639 = vcmp.eq.f32.partialorder %v1636, %v969
        %vm1640 = vcmp.eq.f32.partialorder %v1636, %v970
        %vm1641 = vcmp.eq.f32.partialorder %v1636, %v971
        %vm1642 = vcmp.eq.f32.partialorder %v1636, %v972
        %vm1643 = vcmp.eq.f32.partialorder %v1636, %v973
        %vm1644 = vcmp.eq.f32.partialorder %v1636, %v974
        %vm1645 = vcmp.eq.f32.partialorder %v1636, %v975
        %vm1646 = vcmp.eq.f32.partialorder %v1636, %v976
        %vm1647 = vcmp.eq.f32.partialorder %v1636, %v977
        %vm1648 = vcmp.eq.f32.partialorder %v1636, %v978
        %vm1649 = vcmp.eq.f32.partialorder %v1636, %v979
        %vm1650 = vcmp.eq.f32.partialorder %v1636, %v980
        %vm1651 = vcmp.eq.f32.partialorder %v1636, %v981
        %vm1652 = vcmp.eq.f32.partialorder %v1636, %v982
        %vm1653 = vcmp.eq.f32.partialorder %v1636, %v983
        %v1654 = vsel %vm1638, 1.0, %v1618
        %v1655 = vsel %vm1639, 1.0, %v1619
        %v1656 = vsel %vm1640, 1.0, %v1620
        %v1657 = vsel %vm1641, 1.0, %v1621
        %v1658 = vsel %vm1642, 1.0, %v1622
        %v1659 = vsel %vm1643, 1.0, %v1623
        %v1660 = vsel %vm1644, 1.0, %v1624
        %v1661 = vsel %vm1645, 1.0, %v1625
        %v1662 = vsel %vm1646, 1.0, %v1626
        %v1663 = vsel %vm1647, 1.0, %v1627
        %v1664 = vsel %vm1648, 1.0, %v1628
        %v1665 = vsel %vm1649, 1.0, %v1629
        %v1666 = vsel %vm1650, 1.0, %v1630
        %v1667 = vsel %vm1651, 1.0, %v1631
        %v1668 = vsel %vm1652, 1.0, %v1632
        %v1669 = vsel %vm1653, 1.0, %v1633
        %1670 = vset.pattern.permute.xlu0 19
        %1671 = vperm.xlu0 %1670, %v984
        %v1672 = vpop.permute.xlu0 %1671
        %vm1674 = vcmp.eq.f32.partialorder %v1672, %v968
        %vm1675 = vcmp.eq.f32.partialorder %v1672, %v969
        %vm1676 = vcmp.eq.f32.partialorder %v1672, %v970
        %vm1677 = vcmp.eq.f32.partialorder %v1672, %v971
        %vm1678 = vcmp.eq.f32.partialorder %v1672, %v972
        %vm1679 = vcmp.eq.f32.partialorder %v1672, %v973
        %vm1680 = vcmp.eq.f32.partialorder %v1672, %v974
        %vm1681 = vcmp.eq.f32.partialorder %v1672, %v975
        %vm1682 = vcmp.eq.f32.partialorder %v1672, %v976
        %vm1683 = vcmp.eq.f32.partialorder %v1672, %v977
        %vm1684 = vcmp.eq.f32.partialorder %v1672, %v978
        %vm1685 = vcmp.eq.f32.partialorder %v1672, %v979
        %vm1686 = vcmp.eq.f32.partialorder %v1672, %v980
        %vm1687 = vcmp.eq.f32.partialorder %v1672, %v981
        %vm1688 = vcmp.eq.f32.partialorder %v1672, %v982
        %vm1689 = vcmp.eq.f32.partialorder %v1672, %v983
        %v1690 = vsel %vm1674, 1.0, %v1654
        %v1691 = vsel %vm1675, 1.0, %v1655
        %v1692 = vsel %vm1676, 1.0, %v1656
        %v1693 = vsel %vm1677, 1.0, %v1657
        %v1694 = vsel %vm1678, 1.0, %v1658
        %v1695 = vsel %vm1679, 1.0, %v1659
        %v1696 = vsel %vm1680, 1.0, %v1660
        %v1697 = vsel %vm1681, 1.0, %v1661
        %v1698 = vsel %vm1682, 1.0, %v1662
        %v1699 = vsel %vm1683, 1.0, %v1663
        %v1700 = vsel %vm1684, 1.0, %v1664
        %v1701 = vsel %vm1685, 1.0, %v1665
        %v1702 = vsel %vm1686, 1.0, %v1666
        %v1703 = vsel %vm1687, 1.0, %v1667
        %v1704 = vsel %vm1688, 1.0, %v1668
        %v1705 = vsel %vm1689, 1.0, %v1669
        %1706 = vset.pattern.permute.xlu0 20
        %1707 = vperm.xlu0 %1706, %v984
        %v1708 = vpop.permute.xlu0 %1707
        %vm1710 = vcmp.eq.f32.partialorder %v1708, %v968
        %vm1711 = vcmp.eq.f32.partialorder %v1708, %v969
        %vm1712 = vcmp.eq.f32.partialorder %v1708, %v970
        %vm1713 = vcmp.eq.f32.partialorder %v1708, %v971
        %vm1714 = vcmp.eq.f32.partialorder %v1708, %v972
        %vm1715 = vcmp.eq.f32.partialorder %v1708, %v973
        %vm1716 = vcmp.eq.f32.partialorder %v1708, %v974
        %vm1717 = vcmp.eq.f32.partialorder %v1708, %v975
        %vm1718 = vcmp.eq.f32.partialorder %v1708, %v976
        %vm1719 = vcmp.eq.f32.partialorder %v1708, %v977
        %vm1720 = vcmp.eq.f32.partialorder %v1708, %v978
        %vm1721 = vcmp.eq.f32.partialorder %v1708, %v979
        %vm1722 = vcmp.eq.f32.partialorder %v1708, %v980
        %vm1723 = vcmp.eq.f32.partialorder %v1708, %v981
        %vm1724 = vcmp.eq.f32.partialorder %v1708, %v982
        %vm1725 = vcmp.eq.f32.partialorder %v1708, %v983
        %v1726 = vsel %vm1710, 1.0, %v1690
        %v1727 = vsel %vm1711, 1.0, %v1691
        %v1728 = vsel %vm1712, 1.0, %v1692
        %v1729 = vsel %vm1713, 1.0, %v1693
        %v1730 = vsel %vm1714, 1.0, %v1694
        %v1731 = vsel %vm1715, 1.0, %v1695
        %v1732 = vsel %vm1716, 1.0, %v1696
        %v1733 = vsel %vm1717, 1.0, %v1697
        %v1734 = vsel %vm1718, 1.0, %v1698
        %v1735 = vsel %vm1719, 1.0, %v1699
        %v1736 = vsel %vm1720, 1.0, %v1700
        %v1737 = vsel %vm1721, 1.0, %v1701
        %v1738 = vsel %vm1722, 1.0, %v1702
        %v1739 = vsel %vm1723, 1.0, %v1703
        %v1740 = vsel %vm1724, 1.0, %v1704
        %v1741 = vsel %vm1725, 1.0, %v1705
        %1742 = vset.pattern.permute.xlu0 21
        %1743 = vperm.xlu0 %1742, %v984
        %v1744 = vpop.permute.xlu0 %1743
        %vm1746 = vcmp.eq.f32.partialorder %v1744, %v968
        %vm1747 = vcmp.eq.f32.partialorder %v1744, %v969
        %vm1748 = vcmp.eq.f32.partialorder %v1744, %v970
        %vm1749 = vcmp.eq.f32.partialorder %v1744, %v971
        %vm1750 = vcmp.eq.f32.partialorder %v1744, %v972
        %vm1751 = vcmp.eq.f32.partialorder %v1744, %v973
        %vm1752 = vcmp.eq.f32.partialorder %v1744, %v974
        %vm1753 = vcmp.eq.f32.partialorder %v1744, %v975
        %vm1754 = vcmp.eq.f32.partialorder %v1744, %v976
        %vm1755 = vcmp.eq.f32.partialorder %v1744, %v977
        %vm1756 = vcmp.eq.f32.partialorder %v1744, %v978
        %vm1757 = vcmp.eq.f32.partialorder %v1744, %v979
        %vm1758 = vcmp.eq.f32.partialorder %v1744, %v980
        %vm1759 = vcmp.eq.f32.partialorder %v1744, %v981
        %vm1760 = vcmp.eq.f32.partialorder %v1744, %v982
        %vm1761 = vcmp.eq.f32.partialorder %v1744, %v983
        %v1762 = vsel %vm1746, 1.0, %v1726
        %v1763 = vsel %vm1747, 1.0, %v1727
        %v1764 = vsel %vm1748, 1.0, %v1728
        %v1765 = vsel %vm1749, 1.0, %v1729
        %v1766 = vsel %vm1750, 1.0, %v1730
        %v1767 = vsel %vm1751, 1.0, %v1731
        %v1768 = vsel %vm1752, 1.0, %v1732
        %v1769 = vsel %vm1753, 1.0, %v1733
        %v1770 = vsel %vm1754, 1.0, %v1734
        %v1771 = vsel %vm1755, 1.0, %v1735
        %v1772 = vsel %vm1756, 1.0, %v1736
        %v1773 = vsel %vm1757, 1.0, %v1737
        %v1774 = vsel %vm1758, 1.0, %v1738
        %v1775 = vsel %vm1759, 1.0, %v1739
        %v1776 = vsel %vm1760, 1.0, %v1740
        %v1777 = vsel %vm1761, 1.0, %v1741
        %1778 = vset.pattern.permute.xlu0 22
        %1779 = vperm.xlu0 %1778, %v984
        %v1780 = vpop.permute.xlu0 %1779
        %vm1782 = vcmp.eq.f32.partialorder %v1780, %v968
        %vm1783 = vcmp.eq.f32.partialorder %v1780, %v969
        %vm1784 = vcmp.eq.f32.partialorder %v1780, %v970
        %vm1785 = vcmp.eq.f32.partialorder %v1780, %v971
        %vm1786 = vcmp.eq.f32.partialorder %v1780, %v972
        %vm1787 = vcmp.eq.f32.partialorder %v1780, %v973
        %vm1788 = vcmp.eq.f32.partialorder %v1780, %v974
        %vm1789 = vcmp.eq.f32.partialorder %v1780, %v975
        %vm1790 = vcmp.eq.f32.partialorder %v1780, %v976
        %vm1791 = vcmp.eq.f32.partialorder %v1780, %v977
        %vm1792 = vcmp.eq.f32.partialorder %v1780, %v978
        %vm1793 = vcmp.eq.f32.partialorder %v1780, %v979
        %vm1794 = vcmp.eq.f32.partialorder %v1780, %v980
        %vm1795 = vcmp.eq.f32.partialorder %v1780, %v981
        %vm1796 = vcmp.eq.f32.partialorder %v1780, %v982
        %vm1797 = vcmp.eq.f32.partialorder %v1780, %v983
        %v1798 = vsel %vm1782, 1.0, %v1762
        %v1799 = vsel %vm1783, 1.0, %v1763
        %v1800 = vsel %vm1784, 1.0, %v1764
        %v1801 = vsel %vm1785, 1.0, %v1765
        %v1802 = vsel %vm1786, 1.0, %v1766
        %v1803 = vsel %vm1787, 1.0, %v1767
        %v1804 = vsel %vm1788, 1.0, %v1768
        %v1805 = vsel %vm1789, 1.0, %v1769
        %v1806 = vsel %vm1790, 1.0, %v1770
        %v1807 = vsel %vm1791, 1.0, %v1771
        %v1808 = vsel %vm1792, 1.0, %v1772
        %v1809 = vsel %vm1793, 1.0, %v1773
        %v1810 = vsel %vm1794, 1.0, %v1774
        %v1811 = vsel %vm1795, 1.0, %v1775
        %v1812 = vsel %vm1796, 1.0, %v1776
        %v1813 = vsel %vm1797, 1.0, %v1777
        %1814 = vset.pattern.permute.xlu0 23
        %1815 = vperm.xlu0 %1814, %v984
        %v1816 = vpop.permute.xlu0 %1815
        %vm1818 = vcmp.eq.f32.partialorder %v1816, %v968
        %vm1819 = vcmp.eq.f32.partialorder %v1816, %v969
        %vm1820 = vcmp.eq.f32.partialorder %v1816, %v970
        %vm1821 = vcmp.eq.f32.partialorder %v1816, %v971
        %vm1822 = vcmp.eq.f32.partialorder %v1816, %v972
        %vm1823 = vcmp.eq.f32.partialorder %v1816, %v973
        %vm1824 = vcmp.eq.f32.partialorder %v1816, %v974
        %vm1825 = vcmp.eq.f32.partialorder %v1816, %v975
        %vm1826 = vcmp.eq.f32.partialorder %v1816, %v976
        %vm1827 = vcmp.eq.f32.partialorder %v1816, %v977
        %vm1828 = vcmp.eq.f32.partialorder %v1816, %v978
        %vm1829 = vcmp.eq.f32.partialorder %v1816, %v979
        %vm1830 = vcmp.eq.f32.partialorder %v1816, %v980
        %vm1831 = vcmp.eq.f32.partialorder %v1816, %v981
        %vm1832 = vcmp.eq.f32.partialorder %v1816, %v982
        %vm1833 = vcmp.eq.f32.partialorder %v1816, %v983
        %v1834 = vsel %vm1818, 1.0, %v1798
        %v1835 = vsel %vm1819, 1.0, %v1799
        %v1836 = vsel %vm1820, 1.0, %v1800
        %v1837 = vsel %vm1821, 1.0, %v1801
        %v1838 = vsel %vm1822, 1.0, %v1802
        %v1839 = vsel %vm1823, 1.0, %v1803
        %v1840 = vsel %vm1824, 1.0, %v1804
        %v1841 = vsel %vm1825, 1.0, %v1805
        %v1842 = vsel %vm1826, 1.0, %v1806
        %v1843 = vsel %vm1827, 1.0, %v1807
        %v1844 = vsel %vm1828, 1.0, %v1808
        %v1845 = vsel %vm1829, 1.0, %v1809
        %v1846 = vsel %vm1830, 1.0, %v1810
        %v1847 = vsel %vm1831, 1.0, %v1811
        %v1848 = vsel %vm1832, 1.0, %v1812
        %v1849 = vsel %vm1833, 1.0, %v1813
        %1850 = vset.pattern.permute.xlu0 24
        %1851 = vperm.xlu0 %1850, %v984
        %v1852 = vpop.permute.xlu0 %1851
        %vm1854 = vcmp.eq.f32.partialorder %v1852, %v968
        %vm1855 = vcmp.eq.f32.partialorder %v1852, %v969
        %vm1856 = vcmp.eq.f32.partialorder %v1852, %v970
        %vm1857 = vcmp.eq.f32.partialorder %v1852, %v971
        %vm1858 = vcmp.eq.f32.partialorder %v1852, %v972
        %vm1859 = vcmp.eq.f32.partialorder %v1852, %v973
        %vm1860 = vcmp.eq.f32.partialorder %v1852, %v974
        %vm1861 = vcmp.eq.f32.partialorder %v1852, %v975
        %vm1862 = vcmp.eq.f32.partialorder %v1852, %v976
        %vm1863 = vcmp.eq.f32.partialorder %v1852, %v977
        %vm1864 = vcmp.eq.f32.partialorder %v1852, %v978
        %vm1865 = vcmp.eq.f32.partialorder %v1852, %v979
        %vm1866 = vcmp.eq.f32.partialorder %v1852, %v980
        %vm1867 = vcmp.eq.f32.partialorder %v1852, %v981
        %vm1868 = vcmp.eq.f32.partialorder %v1852, %v982
        %vm1869 = vcmp.eq.f32.partialorder %v1852, %v983
        %v1870 = vsel %vm1854, 1.0, %v1834
        %v1871 = vsel %vm1855, 1.0, %v1835
        %v1872 = vsel %vm1856, 1.0, %v1836
        %v1873 = vsel %vm1857, 1.0, %v1837
        %v1874 = vsel %vm1858, 1.0, %v1838
        %v1875 = vsel %vm1859, 1.0, %v1839
        %v1876 = vsel %vm1860, 1.0, %v1840
        %v1877 = vsel %vm1861, 1.0, %v1841
        %v1878 = vsel %vm1862, 1.0, %v1842
        %v1879 = vsel %vm1863, 1.0, %v1843
        %v1880 = vsel %vm1864, 1.0, %v1844
        %v1881 = vsel %vm1865, 1.0, %v1845
        %v1882 = vsel %vm1866, 1.0, %v1846
        %v1883 = vsel %vm1867, 1.0, %v1847
        %v1884 = vsel %vm1868, 1.0, %v1848
        %v1885 = vsel %vm1869, 1.0, %v1849
        %1886 = vset.pattern.permute.xlu0 25
        %1887 = vperm.xlu0 %1886, %v984
        %v1888 = vpop.permute.xlu0 %1887
        %vm1890 = vcmp.eq.f32.partialorder %v1888, %v968
        %vm1891 = vcmp.eq.f32.partialorder %v1888, %v969
        %vm1892 = vcmp.eq.f32.partialorder %v1888, %v970
        %vm1893 = vcmp.eq.f32.partialorder %v1888, %v971
        %vm1894 = vcmp.eq.f32.partialorder %v1888, %v972
        %vm1895 = vcmp.eq.f32.partialorder %v1888, %v973
        %vm1896 = vcmp.eq.f32.partialorder %v1888, %v974
        %vm1897 = vcmp.eq.f32.partialorder %v1888, %v975
        %vm1898 = vcmp.eq.f32.partialorder %v1888, %v976
        %vm1899 = vcmp.eq.f32.partialorder %v1888, %v977
        %vm1900 = vcmp.eq.f32.partialorder %v1888, %v978
        %vm1901 = vcmp.eq.f32.partialorder %v1888, %v979
        %vm1902 = vcmp.eq.f32.partialorder %v1888, %v980
        %vm1903 = vcmp.eq.f32.partialorder %v1888, %v981
        %vm1904 = vcmp.eq.f32.partialorder %v1888, %v982
        %vm1905 = vcmp.eq.f32.partialorder %v1888, %v983
        %v1906 = vsel %vm1890, 1.0, %v1870
        %v1907 = vsel %vm1891, 1.0, %v1871
        %v1908 = vsel %vm1892, 1.0, %v1872
        %v1909 = vsel %vm1893, 1.0, %v1873
        %v1910 = vsel %vm1894, 1.0, %v1874
        %v1911 = vsel %vm1895, 1.0, %v1875
        %v1912 = vsel %vm1896, 1.0, %v1876
        %v1913 = vsel %vm1897, 1.0, %v1877
        %v1914 = vsel %vm1898, 1.0, %v1878
        %v1915 = vsel %vm1899, 1.0, %v1879
        %v1916 = vsel %vm1900, 1.0, %v1880
        %v1917 = vsel %vm1901, 1.0, %v1881
        %v1918 = vsel %vm1902, 1.0, %v1882
        %v1919 = vsel %vm1903, 1.0, %v1883
        %v1920 = vsel %vm1904, 1.0, %v1884
        %v1921 = vsel %vm1905, 1.0, %v1885
        %1922 = vset.pattern.permute.xlu0 26
        %1923 = vperm.xlu0 %1922, %v984
        %v1924 = vpop.permute.xlu0 %1923
        %vm1926 = vcmp.eq.f32.partialorder %v1924, %v968
        %vm1927 = vcmp.eq.f32.partialorder %v1924, %v969
        %vm1928 = vcmp.eq.f32.partialorder %v1924, %v970
        %vm1929 = vcmp.eq.f32.partialorder %v1924, %v971
        %vm1930 = vcmp.eq.f32.partialorder %v1924, %v972
        %vm1931 = vcmp.eq.f32.partialorder %v1924, %v973
        %vm1932 = vcmp.eq.f32.partialorder %v1924, %v974
        %vm1933 = vcmp.eq.f32.partialorder %v1924, %v975
        %vm1934 = vcmp.eq.f32.partialorder %v1924, %v976
        %vm1935 = vcmp.eq.f32.partialorder %v1924, %v977
        %vm1936 = vcmp.eq.f32.partialorder %v1924, %v978
        %vm1937 = vcmp.eq.f32.partialorder %v1924, %v979
        %vm1938 = vcmp.eq.f32.partialorder %v1924, %v980
        %vm1939 = vcmp.eq.f32.partialorder %v1924, %v981
        %vm1940 = vcmp.eq.f32.partialorder %v1924, %v982
        %vm1941 = vcmp.eq.f32.partialorder %v1924, %v983
        %v1942 = vsel %vm1926, 1.0, %v1906
        %v1943 = vsel %vm1927, 1.0, %v1907
        %v1944 = vsel %vm1928, 1.0, %v1908
        %v1945 = vsel %vm1929, 1.0, %v1909
        %v1946 = vsel %vm1930, 1.0, %v1910
        %v1947 = vsel %vm1931, 1.0, %v1911
        %v1948 = vsel %vm1932, 1.0, %v1912
        %v1949 = vsel %vm1933, 1.0, %v1913
        %v1950 = vsel %vm1934, 1.0, %v1914
        %v1951 = vsel %vm1935, 1.0, %v1915
        %v1952 = vsel %vm1936, 1.0, %v1916
        %v1953 = vsel %vm1937, 1.0, %v1917
        %v1954 = vsel %vm1938, 1.0, %v1918
        %v1955 = vsel %vm1939, 1.0, %v1919
        %v1956 = vsel %vm1940, 1.0, %v1920
        %v1957 = vsel %vm1941, 1.0, %v1921
        %1958 = vset.pattern.permute.xlu0 27
        %1959 = vperm.xlu0 %1958, %v984
        %v1960 = vpop.permute.xlu0 %1959
        %vm1962 = vcmp.eq.f32.partialorder %v1960, %v968
        %vm1963 = vcmp.eq.f32.partialorder %v1960, %v969
        %vm1964 = vcmp.eq.f32.partialorder %v1960, %v970
        %vm1965 = vcmp.eq.f32.partialorder %v1960, %v971
        %vm1966 = vcmp.eq.f32.partialorder %v1960, %v972
        %vm1967 = vcmp.eq.f32.partialorder %v1960, %v973
        %vm1968 = vcmp.eq.f32.partialorder %v1960, %v974
        %vm1969 = vcmp.eq.f32.partialorder %v1960, %v975
        %vm1970 = vcmp.eq.f32.partialorder %v1960, %v976
        %vm1971 = vcmp.eq.f32.partialorder %v1960, %v977
        %vm1972 = vcmp.eq.f32.partialorder %v1960, %v978
        %vm1973 = vcmp.eq.f32.partialorder %v1960, %v979
        %vm1974 = vcmp.eq.f32.partialorder %v1960, %v980
        %vm1975 = vcmp.eq.f32.partialorder %v1960, %v981
        %vm1976 = vcmp.eq.f32.partialorder %v1960, %v982
        %vm1977 = vcmp.eq.f32.partialorder %v1960, %v983
        %v1978 = vsel %vm1962, 1.0, %v1942
        %v1979 = vsel %vm1963, 1.0, %v1943
        %v1980 = vsel %vm1964, 1.0, %v1944
        %v1981 = vsel %vm1965, 1.0, %v1945
        %v1982 = vsel %vm1966, 1.0, %v1946
        %v1983 = vsel %vm1967, 1.0, %v1947
        %v1984 = vsel %vm1968, 1.0, %v1948
        %v1985 = vsel %vm1969, 1.0, %v1949
        %v1986 = vsel %vm1970, 1.0, %v1950
        %v1987 = vsel %vm1971, 1.0, %v1951
        %v1988 = vsel %vm1972, 1.0, %v1952
        %v1989 = vsel %vm1973, 1.0, %v1953
        %v1990 = vsel %vm1974, 1.0, %v1954
        %v1991 = vsel %vm1975, 1.0, %v1955
        %v1992 = vsel %vm1976, 1.0, %v1956
        %v1993 = vsel %vm1977, 1.0, %v1957
        %1994 = vset.pattern.permute.xlu0 28
        %1995 = vperm.xlu0 %1994, %v984
        %v1996 = vpop.permute.xlu0 %1995
        %vm1998 = vcmp.eq.f32.partialorder %v1996, %v968
        %vm1999 = vcmp.eq.f32.partialorder %v1996, %v969
        %vm2000 = vcmp.eq.f32.partialorder %v1996, %v970
        %vm2001 = vcmp.eq.f32.partialorder %v1996, %v971
        %vm2002 = vcmp.eq.f32.partialorder %v1996, %v972
        %vm2003 = vcmp.eq.f32.partialorder %v1996, %v973
        %vm2004 = vcmp.eq.f32.partialorder %v1996, %v974
        %vm2005 = vcmp.eq.f32.partialorder %v1996, %v975
        %vm2006 = vcmp.eq.f32.partialorder %v1996, %v976
        %vm2007 = vcmp.eq.f32.partialorder %v1996, %v977
        %vm2008 = vcmp.eq.f32.partialorder %v1996, %v978
        %vm2009 = vcmp.eq.f32.partialorder %v1996, %v979
        %vm2010 = vcmp.eq.f32.partialorder %v1996, %v980
        %vm2011 = vcmp.eq.f32.partialorder %v1996, %v981
        %vm2012 = vcmp.eq.f32.partialorder %v1996, %v982
        %vm2013 = vcmp.eq.f32.partialorder %v1996, %v983
        %v2014 = vsel %vm1998, 1.0, %v1978
        %v2015 = vsel %vm1999, 1.0, %v1979
        %v2016 = vsel %vm2000, 1.0, %v1980
        %v2017 = vsel %vm2001, 1.0, %v1981
        %v2018 = vsel %vm2002, 1.0, %v1982
        %v2019 = vsel %vm2003, 1.0, %v1983
        %v2020 = vsel %vm2004, 1.0, %v1984
        %v2021 = vsel %vm2005, 1.0, %v1985
        %v2022 = vsel %vm2006, 1.0, %v1986
        %v2023 = vsel %vm2007, 1.0, %v1987
        %v2024 = vsel %vm2008, 1.0, %v1988
        %v2025 = vsel %vm2009, 1.0, %v1989
        %v2026 = vsel %vm2010, 1.0, %v1990
        %v2027 = vsel %vm2011, 1.0, %v1991
        %v2028 = vsel %vm2012, 1.0, %v1992
        %v2029 = vsel %vm2013, 1.0, %v1993
        %2030 = vset.pattern.permute.xlu0 29
        %2031 = vperm.xlu0 %2030, %v984
        %v2032 = vpop.permute.xlu0 %2031
        %vm2034 = vcmp.eq.f32.partialorder %v2032, %v968
        %vm2035 = vcmp.eq.f32.partialorder %v2032, %v969
        %vm2036 = vcmp.eq.f32.partialorder %v2032, %v970
        %vm2037 = vcmp.eq.f32.partialorder %v2032, %v971
        %vm2038 = vcmp.eq.f32.partialorder %v2032, %v972
        %vm2039 = vcmp.eq.f32.partialorder %v2032, %v973
        %vm2040 = vcmp.eq.f32.partialorder %v2032, %v974
        %vm2041 = vcmp.eq.f32.partialorder %v2032, %v975
        %vm2042 = vcmp.eq.f32.partialorder %v2032, %v976
        %vm2043 = vcmp.eq.f32.partialorder %v2032, %v977
        %vm2044 = vcmp.eq.f32.partialorder %v2032, %v978
        %vm2045 = vcmp.eq.f32.partialorder %v2032, %v979
        %vm2046 = vcmp.eq.f32.partialorder %v2032, %v980
        %vm2047 = vcmp.eq.f32.partialorder %v2032, %v981
        %vm2048 = vcmp.eq.f32.partialorder %v2032, %v982
        %vm2049 = vcmp.eq.f32.partialorder %v2032, %v983
        %v2050 = vsel %vm2034, 1.0, %v2014
        %v2051 = vsel %vm2035, 1.0, %v2015
        %v2052 = vsel %vm2036, 1.0, %v2016
        %v2053 = vsel %vm2037, 1.0, %v2017
        %v2054 = vsel %vm2038, 1.0, %v2018
        %v2055 = vsel %vm2039, 1.0, %v2019
        %v2056 = vsel %vm2040, 1.0, %v2020
        %v2057 = vsel %vm2041, 1.0, %v2021
        %v2058 = vsel %vm2042, 1.0, %v2022
        %v2059 = vsel %vm2043, 1.0, %v2023
        %v2060 = vsel %vm2044, 1.0, %v2024
        %v2061 = vsel %vm2045, 1.0, %v2025
        %v2062 = vsel %vm2046, 1.0, %v2026
        %v2063 = vsel %vm2047, 1.0, %v2027
        %v2064 = vsel %vm2048, 1.0, %v2028
        %v2065 = vsel %vm2049, 1.0, %v2029
        %2066 = vset.pattern.permute.xlu0 30
        %2067 = vperm.xlu0 %2066, %v984
        %v2068 = vpop.permute.xlu0 %2067
        %vm2070 = vcmp.eq.f32.partialorder %v2068, %v968
        %vm2071 = vcmp.eq.f32.partialorder %v2068, %v969
        %vm2072 = vcmp.eq.f32.partialorder %v2068, %v970
        %vm2073 = vcmp.eq.f32.partialorder %v2068, %v971
        %vm2074 = vcmp.eq.f32.partialorder %v2068, %v972
        %vm2075 = vcmp.eq.f32.partialorder %v2068, %v973
        %vm2076 = vcmp.eq.f32.partialorder %v2068, %v974
        %vm2077 = vcmp.eq.f32.partialorder %v2068, %v975
        %vm2078 = vcmp.eq.f32.partialorder %v2068, %v976
        %vm2079 = vcmp.eq.f32.partialorder %v2068, %v977
        %vm2080 = vcmp.eq.f32.partialorder %v2068, %v978
        %vm2081 = vcmp.eq.f32.partialorder %v2068, %v979
        %vm2082 = vcmp.eq.f32.partialorder %v2068, %v980
        %vm2083 = vcmp.eq.f32.partialorder %v2068, %v981
        %vm2084 = vcmp.eq.f32.partialorder %v2068, %v982
        %vm2085 = vcmp.eq.f32.partialorder %v2068, %v983
        %v2086 = vsel %vm2070, 1.0, %v2050
        %v2087 = vsel %vm2071, 1.0, %v2051
        %v2088 = vsel %vm2072, 1.0, %v2052
        %v2089 = vsel %vm2073, 1.0, %v2053
        %v2090 = vsel %vm2074, 1.0, %v2054
        %v2091 = vsel %vm2075, 1.0, %v2055
        %v2092 = vsel %vm2076, 1.0, %v2056
        %v2093 = vsel %vm2077, 1.0, %v2057
        %v2094 = vsel %vm2078, 1.0, %v2058
        %v2095 = vsel %vm2079, 1.0, %v2059
        %v2096 = vsel %vm2080, 1.0, %v2060
        %v2097 = vsel %vm2081, 1.0, %v2061
        %v2098 = vsel %vm2082, 1.0, %v2062
        %v2099 = vsel %vm2083, 1.0, %v2063
        %v2100 = vsel %vm2084, 1.0, %v2064
        %v2101 = vsel %vm2085, 1.0, %v2065
        %2102 = vset.pattern.permute.xlu0 31
        %2103 = vperm.xlu0 %2102, %v984
        %v2104 = vpop.permute.xlu0 %2103
        %vm2106 = vcmp.eq.f32.partialorder %v2104, %v968
        %vm2107 = vcmp.eq.f32.partialorder %v2104, %v969
        %vm2108 = vcmp.eq.f32.partialorder %v2104, %v970
        %vm2109 = vcmp.eq.f32.partialorder %v2104, %v971
        %vm2110 = vcmp.eq.f32.partialorder %v2104, %v972
        %vm2111 = vcmp.eq.f32.partialorder %v2104, %v973
        %vm2112 = vcmp.eq.f32.partialorder %v2104, %v974
        %vm2113 = vcmp.eq.f32.partialorder %v2104, %v975
        %vm2114 = vcmp.eq.f32.partialorder %v2104, %v976
        %vm2115 = vcmp.eq.f32.partialorder %v2104, %v977
        %vm2116 = vcmp.eq.f32.partialorder %v2104, %v978
        %vm2117 = vcmp.eq.f32.partialorder %v2104, %v979
        %vm2118 = vcmp.eq.f32.partialorder %v2104, %v980
        %vm2119 = vcmp.eq.f32.partialorder %v2104, %v981
        %vm2120 = vcmp.eq.f32.partialorder %v2104, %v982
        %vm2121 = vcmp.eq.f32.partialorder %v2104, %v983
        %v2122 = vsel %vm2106, 1.0, %v2086
        %v2123 = vsel %vm2107, 1.0, %v2087
        %v2124 = vsel %vm2108, 1.0, %v2088
        %v2125 = vsel %vm2109, 1.0, %v2089
        %v2126 = vsel %vm2110, 1.0, %v2090
        %v2127 = vsel %vm2111, 1.0, %v2091
        %v2128 = vsel %vm2112, 1.0, %v2092
        %v2129 = vsel %vm2113, 1.0, %v2093
        %v2130 = vsel %vm2114, 1.0, %v2094
        %v2131 = vsel %vm2115, 1.0, %v2095
        %v2132 = vsel %vm2116, 1.0, %v2096
        %v2133 = vsel %vm2117, 1.0, %v2097
        %v2134 = vsel %vm2118, 1.0, %v2098
        %v2135 = vsel %vm2119, 1.0, %v2099
        %v2136 = vsel %vm2120, 1.0, %v2100
        %v2137 = vsel %vm2121, 1.0, %v2101
        %2138 = vset.pattern.permute.xlu0 32
        %2139 = vperm.xlu0 %2138, %v984
        %v2140 = vpop.permute.xlu0 %2139
        %vm2142 = vcmp.eq.f32.partialorder %v2140, %v968
        %vm2143 = vcmp.eq.f32.partialorder %v2140, %v969
        %vm2144 = vcmp.eq.f32.partialorder %v2140, %v970
        %vm2145 = vcmp.eq.f32.partialorder %v2140, %v971
        %vm2146 = vcmp.eq.f32.partialorder %v2140, %v972
        %vm2147 = vcmp.eq.f32.partialorder %v2140, %v973
        %vm2148 = vcmp.eq.f32.partialorder %v2140, %v974
        %vm2149 = vcmp.eq.f32.partialorder %v2140, %v975
        %vm2150 = vcmp.eq.f32.partialorder %v2140, %v976
        %vm2151 = vcmp.eq.f32.partialorder %v2140, %v977
        %vm2152 = vcmp.eq.f32.partialorder %v2140, %v978
        %vm2153 = vcmp.eq.f32.partialorder %v2140, %v979
        %vm2154 = vcmp.eq.f32.partialorder %v2140, %v980
        %vm2155 = vcmp.eq.f32.partialorder %v2140, %v981
        %vm2156 = vcmp.eq.f32.partialorder %v2140, %v982
        %vm2157 = vcmp.eq.f32.partialorder %v2140, %v983
        %v2158 = vsel %vm2142, 1.0, %v2122
        %v2159 = vsel %vm2143, 1.0, %v2123
        %v2160 = vsel %vm2144, 1.0, %v2124
        %v2161 = vsel %vm2145, 1.0, %v2125
        %v2162 = vsel %vm2146, 1.0, %v2126
        %v2163 = vsel %vm2147, 1.0, %v2127
        %v2164 = vsel %vm2148, 1.0, %v2128
        %v2165 = vsel %vm2149, 1.0, %v2129
        %v2166 = vsel %vm2150, 1.0, %v2130
        %v2167 = vsel %vm2151, 1.0, %v2131
        %v2168 = vsel %vm2152, 1.0, %v2132
        %v2169 = vsel %vm2153, 1.0, %v2133
        %v2170 = vsel %vm2154, 1.0, %v2134
        %v2171 = vsel %vm2155, 1.0, %v2135
        %v2172 = vsel %vm2156, 1.0, %v2136
        %v2173 = vsel %vm2157, 1.0, %v2137
        %2174 = vset.pattern.permute.xlu0 33
        %2175 = vperm.xlu0 %2174, %v984
        %v2176 = vpop.permute.xlu0 %2175
        %vm2178 = vcmp.eq.f32.partialorder %v2176, %v968
        %vm2179 = vcmp.eq.f32.partialorder %v2176, %v969
        %vm2180 = vcmp.eq.f32.partialorder %v2176, %v970
        %vm2181 = vcmp.eq.f32.partialorder %v2176, %v971
        %vm2182 = vcmp.eq.f32.partialorder %v2176, %v972
        %vm2183 = vcmp.eq.f32.partialorder %v2176, %v973
        %vm2184 = vcmp.eq.f32.partialorder %v2176, %v974
        %vm2185 = vcmp.eq.f32.partialorder %v2176, %v975
        %vm2186 = vcmp.eq.f32.partialorder %v2176, %v976
        %vm2187 = vcmp.eq.f32.partialorder %v2176, %v977
        %vm2188 = vcmp.eq.f32.partialorder %v2176, %v978
        %vm2189 = vcmp.eq.f32.partialorder %v2176, %v979
        %vm2190 = vcmp.eq.f32.partialorder %v2176, %v980
        %vm2191 = vcmp.eq.f32.partialorder %v2176, %v981
        %vm2192 = vcmp.eq.f32.partialorder %v2176, %v982
        %vm2193 = vcmp.eq.f32.partialorder %v2176, %v983
        %v2194 = vsel %vm2178, 1.0, %v2158
        %v2195 = vsel %vm2179, 1.0, %v2159
        %v2196 = vsel %vm2180, 1.0, %v2160
        %v2197 = vsel %vm2181, 1.0, %v2161
        %v2198 = vsel %vm2182, 1.0, %v2162
        %v2199 = vsel %vm2183, 1.0, %v2163
        %v2200 = vsel %vm2184, 1.0, %v2164
        %v2201 = vsel %vm2185, 1.0, %v2165
        %v2202 = vsel %vm2186, 1.0, %v2166
        %v2203 = vsel %vm2187, 1.0, %v2167
        %v2204 = vsel %vm2188, 1.0, %v2168
        %v2205 = vsel %vm2189, 1.0, %v2169
        %v2206 = vsel %vm2190, 1.0, %v2170
        %v2207 = vsel %vm2191, 1.0, %v2171
        %v2208 = vsel %vm2192, 1.0, %v2172
        %v2209 = vsel %vm2193, 1.0, %v2173
        %2210 = vset.pattern.permute.xlu0 34
        %2211 = vperm.xlu0 %2210, %v984
        %v2212 = vpop.permute.xlu0 %2211
        %vm2214 = vcmp.eq.f32.partialorder %v2212, %v968
        %vm2215 = vcmp.eq.f32.partialorder %v2212, %v969
        %vm2216 = vcmp.eq.f32.partialorder %v2212, %v970
        %vm2217 = vcmp.eq.f32.partialorder %v2212, %v971
        %vm2218 = vcmp.eq.f32.partialorder %v2212, %v972
        %vm2219 = vcmp.eq.f32.partialorder %v2212, %v973
        %vm2220 = vcmp.eq.f32.partialorder %v2212, %v974
        %vm2221 = vcmp.eq.f32.partialorder %v2212, %v975
        %vm2222 = vcmp.eq.f32.partialorder %v2212, %v976
        %vm2223 = vcmp.eq.f32.partialorder %v2212, %v977
        %vm2224 = vcmp.eq.f32.partialorder %v2212, %v978
        %vm2225 = vcmp.eq.f32.partialorder %v2212, %v979
        %vm2226 = vcmp.eq.f32.partialorder %v2212, %v980
        %vm2227 = vcmp.eq.f32.partialorder %v2212, %v981
        %vm2228 = vcmp.eq.f32.partialorder %v2212, %v982
        %vm2229 = vcmp.eq.f32.partialorder %v2212, %v983
        %v2230 = vsel %vm2214, 1.0, %v2194
        %v2231 = vsel %vm2215, 1.0, %v2195
        %v2232 = vsel %vm2216, 1.0, %v2196
        %v2233 = vsel %vm2217, 1.0, %v2197
        %v2234 = vsel %vm2218, 1.0, %v2198
        %v2235 = vsel %vm2219, 1.0, %v2199
        %v2236 = vsel %vm2220, 1.0, %v2200
        %v2237 = vsel %vm2221, 1.0, %v2201
        %v2238 = vsel %vm2222, 1.0, %v2202
        %v2239 = vsel %vm2223, 1.0, %v2203
        %v2240 = vsel %vm2224, 1.0, %v2204
        %v2241 = vsel %vm2225, 1.0, %v2205
        %v2242 = vsel %vm2226, 1.0, %v2206
        %v2243 = vsel %vm2227, 1.0, %v2207
        %v2244 = vsel %vm2228, 1.0, %v2208
        %v2245 = vsel %vm2229, 1.0, %v2209
        %2246 = vset.pattern.permute.xlu0 35
        %2247 = vperm.xlu0 %2246, %v984
        %v2248 = vpop.permute.xlu0 %2247
        %vm2250 = vcmp.eq.f32.partialorder %v2248, %v968
        %vm2251 = vcmp.eq.f32.partialorder %v2248, %v969
        %vm2252 = vcmp.eq.f32.partialorder %v2248, %v970
        %vm2253 = vcmp.eq.f32.partialorder %v2248, %v971
        %vm2254 = vcmp.eq.f32.partialorder %v2248, %v972
        %vm2255 = vcmp.eq.f32.partialorder %v2248, %v973
        %vm2256 = vcmp.eq.f32.partialorder %v2248, %v974
        %vm2257 = vcmp.eq.f32.partialorder %v2248, %v975
        %vm2258 = vcmp.eq.f32.partialorder %v2248, %v976
        %vm2259 = vcmp.eq.f32.partialorder %v2248, %v977
        %vm2260 = vcmp.eq.f32.partialorder %v2248, %v978
        %vm2261 = vcmp.eq.f32.partialorder %v2248, %v979
        %vm2262 = vcmp.eq.f32.partialorder %v2248, %v980
        %vm2263 = vcmp.eq.f32.partialorder %v2248, %v981
        %vm2264 = vcmp.eq.f32.partialorder %v2248, %v982
        %vm2265 = vcmp.eq.f32.partialorder %v2248, %v983
        %v2266 = vsel %vm2250, 1.0, %v2230
        %v2267 = vsel %vm2251, 1.0, %v2231
        %v2268 = vsel %vm2252, 1.0, %v2232
        %v2269 = vsel %vm2253, 1.0, %v2233
        %v2270 = vsel %vm2254, 1.0, %v2234
        %v2271 = vsel %vm2255, 1.0, %v2235
        %v2272 = vsel %vm2256, 1.0, %v2236
        %v2273 = vsel %vm2257, 1.0, %v2237
        %v2274 = vsel %vm2258, 1.0, %v2238
        %v2275 = vsel %vm2259, 1.0, %v2239
        %v2276 = vsel %vm2260, 1.0, %v2240
        %v2277 = vsel %vm2261, 1.0, %v2241
        %v2278 = vsel %vm2262, 1.0, %v2242
        %v2279 = vsel %vm2263, 1.0, %v2243
        %v2280 = vsel %vm2264, 1.0, %v2244
        %v2281 = vsel %vm2265, 1.0, %v2245
        %2282 = vset.pattern.permute.xlu0 36
        %2283 = vperm.xlu0 %2282, %v984
        %v2284 = vpop.permute.xlu0 %2283
        %vm2286 = vcmp.eq.f32.partialorder %v2284, %v968
        %vm2287 = vcmp.eq.f32.partialorder %v2284, %v969
        %vm2288 = vcmp.eq.f32.partialorder %v2284, %v970
        %vm2289 = vcmp.eq.f32.partialorder %v2284, %v971
        %vm2290 = vcmp.eq.f32.partialorder %v2284, %v972
        %vm2291 = vcmp.eq.f32.partialorder %v2284, %v973
        %vm2292 = vcmp.eq.f32.partialorder %v2284, %v974
        %vm2293 = vcmp.eq.f32.partialorder %v2284, %v975
        %vm2294 = vcmp.eq.f32.partialorder %v2284, %v976
        %vm2295 = vcmp.eq.f32.partialorder %v2284, %v977
        %vm2296 = vcmp.eq.f32.partialorder %v2284, %v978
        %vm2297 = vcmp.eq.f32.partialorder %v2284, %v979
        %vm2298 = vcmp.eq.f32.partialorder %v2284, %v980
        %vm2299 = vcmp.eq.f32.partialorder %v2284, %v981
        %vm2300 = vcmp.eq.f32.partialorder %v2284, %v982
        %vm2301 = vcmp.eq.f32.partialorder %v2284, %v983
        %v2302 = vsel %vm2286, 1.0, %v2266
        %v2303 = vsel %vm2287, 1.0, %v2267
        %v2304 = vsel %vm2288, 1.0, %v2268
        %v2305 = vsel %vm2289, 1.0, %v2269
        %v2306 = vsel %vm2290, 1.0, %v2270
        %v2307 = vsel %vm2291, 1.0, %v2271
        %v2308 = vsel %vm2292, 1.0, %v2272
        %v2309 = vsel %vm2293, 1.0, %v2273
        %v2310 = vsel %vm2294, 1.0, %v2274
        %v2311 = vsel %vm2295, 1.0, %v2275
        %v2312 = vsel %vm2296, 1.0, %v2276
        %v2313 = vsel %vm2297, 1.0, %v2277
        %v2314 = vsel %vm2298, 1.0, %v2278
        %v2315 = vsel %vm2299, 1.0, %v2279
        %v2316 = vsel %vm2300, 1.0, %v2280
        %v2317 = vsel %vm2301, 1.0, %v2281
        %2318 = vset.pattern.permute.xlu0 37
        %2319 = vperm.xlu0 %2318, %v984
        %v2320 = vpop.permute.xlu0 %2319
        %vm2322 = vcmp.eq.f32.partialorder %v2320, %v968
        %vm2323 = vcmp.eq.f32.partialorder %v2320, %v969
        %vm2324 = vcmp.eq.f32.partialorder %v2320, %v970
        %vm2325 = vcmp.eq.f32.partialorder %v2320, %v971
        %vm2326 = vcmp.eq.f32.partialorder %v2320, %v972
        %vm2327 = vcmp.eq.f32.partialorder %v2320, %v973
        %vm2328 = vcmp.eq.f32.partialorder %v2320, %v974
        %vm2329 = vcmp.eq.f32.partialorder %v2320, %v975
        %vm2330 = vcmp.eq.f32.partialorder %v2320, %v976
        %vm2331 = vcmp.eq.f32.partialorder %v2320, %v977
        %vm2332 = vcmp.eq.f32.partialorder %v2320, %v978
        %vm2333 = vcmp.eq.f32.partialorder %v2320, %v979
        %vm2334 = vcmp.eq.f32.partialorder %v2320, %v980
        %vm2335 = vcmp.eq.f32.partialorder %v2320, %v981
        %vm2336 = vcmp.eq.f32.partialorder %v2320, %v982
        %vm2337 = vcmp.eq.f32.partialorder %v2320, %v983
        %v2338 = vsel %vm2322, 1.0, %v2302
        %v2339 = vsel %vm2323, 1.0, %v2303
        %v2340 = vsel %vm2324, 1.0, %v2304
        %v2341 = vsel %vm2325, 1.0, %v2305
        %v2342 = vsel %vm2326, 1.0, %v2306
        %v2343 = vsel %vm2327, 1.0, %v2307
        %v2344 = vsel %vm2328, 1.0, %v2308
        %v2345 = vsel %vm2329, 1.0, %v2309
        %v2346 = vsel %vm2330, 1.0, %v2310
        %v2347 = vsel %vm2331, 1.0, %v2311
        %v2348 = vsel %vm2332, 1.0, %v2312
        %v2349 = vsel %vm2333, 1.0, %v2313
        %v2350 = vsel %vm2334, 1.0, %v2314
        %v2351 = vsel %vm2335, 1.0, %v2315
        %v2352 = vsel %vm2336, 1.0, %v2316
        %v2353 = vsel %vm2337, 1.0, %v2317
        %2354 = vset.pattern.permute.xlu0 38
        %2355 = vperm.xlu0 %2354, %v984
        %v2356 = vpop.permute.xlu0 %2355
        %vm2358 = vcmp.eq.f32.partialorder %v2356, %v968
        %vm2359 = vcmp.eq.f32.partialorder %v2356, %v969
        %vm2360 = vcmp.eq.f32.partialorder %v2356, %v970
        %vm2361 = vcmp.eq.f32.partialorder %v2356, %v971
        %vm2362 = vcmp.eq.f32.partialorder %v2356, %v972
        %vm2363 = vcmp.eq.f32.partialorder %v2356, %v973
        %vm2364 = vcmp.eq.f32.partialorder %v2356, %v974
        %vm2365 = vcmp.eq.f32.partialorder %v2356, %v975
        %vm2366 = vcmp.eq.f32.partialorder %v2356, %v976
        %vm2367 = vcmp.eq.f32.partialorder %v2356, %v977
        %vm2368 = vcmp.eq.f32.partialorder %v2356, %v978
        %vm2369 = vcmp.eq.f32.partialorder %v2356, %v979
        %vm2370 = vcmp.eq.f32.partialorder %v2356, %v980
        %vm2371 = vcmp.eq.f32.partialorder %v2356, %v981
        %vm2372 = vcmp.eq.f32.partialorder %v2356, %v982
        %vm2373 = vcmp.eq.f32.partialorder %v2356, %v983
        %v2374 = vsel %vm2358, 1.0, %v2338
        %v2375 = vsel %vm2359, 1.0, %v2339
        %v2376 = vsel %vm2360, 1.0, %v2340
        %v2377 = vsel %vm2361, 1.0, %v2341
        %v2378 = vsel %vm2362, 1.0, %v2342
        %v2379 = vsel %vm2363, 1.0, %v2343
        %v2380 = vsel %vm2364, 1.0, %v2344
        %v2381 = vsel %vm2365, 1.0, %v2345
        %v2382 = vsel %vm2366, 1.0, %v2346
        %v2383 = vsel %vm2367, 1.0, %v2347
        %v2384 = vsel %vm2368, 1.0, %v2348
        %v2385 = vsel %vm2369, 1.0, %v2349
        %v2386 = vsel %vm2370, 1.0, %v2350
        %v2387 = vsel %vm2371, 1.0, %v2351
        %v2388 = vsel %vm2372, 1.0, %v2352
        %v2389 = vsel %vm2373, 1.0, %v2353
        %2390 = vset.pattern.permute.xlu0 39
        %2391 = vperm.xlu0 %2390, %v984
        %v2392 = vpop.permute.xlu0 %2391
        %vm2394 = vcmp.eq.f32.partialorder %v2392, %v968
        %vm2395 = vcmp.eq.f32.partialorder %v2392, %v969
        %vm2396 = vcmp.eq.f32.partialorder %v2392, %v970
        %vm2397 = vcmp.eq.f32.partialorder %v2392, %v971
        %vm2398 = vcmp.eq.f32.partialorder %v2392, %v972
        %vm2399 = vcmp.eq.f32.partialorder %v2392, %v973
        %vm2400 = vcmp.eq.f32.partialorder %v2392, %v974
        %vm2401 = vcmp.eq.f32.partialorder %v2392, %v975
        %vm2402 = vcmp.eq.f32.partialorder %v2392, %v976
        %vm2403 = vcmp.eq.f32.partialorder %v2392, %v977
        %vm2404 = vcmp.eq.f32.partialorder %v2392, %v978
        %vm2405 = vcmp.eq.f32.partialorder %v2392, %v979
        %vm2406 = vcmp.eq.f32.partialorder %v2392, %v980
        %vm2407 = vcmp.eq.f32.partialorder %v2392, %v981
        %vm2408 = vcmp.eq.f32.partialorder %v2392, %v982
        %vm2409 = vcmp.eq.f32.partialorder %v2392, %v983
        %v2410 = vsel %vm2394, 1.0, %v2374
        %v2411 = vsel %vm2395, 1.0, %v2375
        %v2412 = vsel %vm2396, 1.0, %v2376
        %v2413 = vsel %vm2397, 1.0, %v2377
        %v2414 = vsel %vm2398, 1.0, %v2378
        %v2415 = vsel %vm2399, 1.0, %v2379
        %v2416 = vsel %vm2400, 1.0, %v2380
        %v2417 = vsel %vm2401, 1.0, %v2381
        %v2418 = vsel %vm2402, 1.0, %v2382
        %v2419 = vsel %vm2403, 1.0, %v2383
        %v2420 = vsel %vm2404, 1.0, %v2384
        %v2421 = vsel %vm2405, 1.0, %v2385
        %v2422 = vsel %vm2406, 1.0, %v2386
        %v2423 = vsel %vm2407, 1.0, %v2387
        %v2424 = vsel %vm2408, 1.0, %v2388
        %v2425 = vsel %vm2409, 1.0, %v2389
        %2426 = vset.pattern.permute.xlu0 40
        %2427 = vperm.xlu0 %2426, %v984
        %v2428 = vpop.permute.xlu0 %2427
        %vm2430 = vcmp.eq.f32.partialorder %v2428, %v968
        %vm2431 = vcmp.eq.f32.partialorder %v2428, %v969
        %vm2432 = vcmp.eq.f32.partialorder %v2428, %v970
        %vm2433 = vcmp.eq.f32.partialorder %v2428, %v971
        %vm2434 = vcmp.eq.f32.partialorder %v2428, %v972
        %vm2435 = vcmp.eq.f32.partialorder %v2428, %v973
        %vm2436 = vcmp.eq.f32.partialorder %v2428, %v974
        %vm2437 = vcmp.eq.f32.partialorder %v2428, %v975
        %vm2438 = vcmp.eq.f32.partialorder %v2428, %v976
        %vm2439 = vcmp.eq.f32.partialorder %v2428, %v977
        %vm2440 = vcmp.eq.f32.partialorder %v2428, %v978
        %vm2441 = vcmp.eq.f32.partialorder %v2428, %v979
        %vm2442 = vcmp.eq.f32.partialorder %v2428, %v980
        %vm2443 = vcmp.eq.f32.partialorder %v2428, %v981
        %vm2444 = vcmp.eq.f32.partialorder %v2428, %v982
        %vm2445 = vcmp.eq.f32.partialorder %v2428, %v983
        %v2446 = vsel %vm2430, 1.0, %v2410
        %v2447 = vsel %vm2431, 1.0, %v2411
        %v2448 = vsel %vm2432, 1.0, %v2412
        %v2449 = vsel %vm2433, 1.0, %v2413
        %v2450 = vsel %vm2434, 1.0, %v2414
        %v2451 = vsel %vm2435, 1.0, %v2415
        %v2452 = vsel %vm2436, 1.0, %v2416
        %v2453 = vsel %vm2437, 1.0, %v2417
        %v2454 = vsel %vm2438, 1.0, %v2418
        %v2455 = vsel %vm2439, 1.0, %v2419
        %v2456 = vsel %vm2440, 1.0, %v2420
        %v2457 = vsel %vm2441, 1.0, %v2421
        %v2458 = vsel %vm2442, 1.0, %v2422
        %v2459 = vsel %vm2443, 1.0, %v2423
        %v2460 = vsel %vm2444, 1.0, %v2424
        %v2461 = vsel %vm2445, 1.0, %v2425
        %2462 = vset.pattern.permute.xlu0 41
        %2463 = vperm.xlu0 %2462, %v984
        %v2464 = vpop.permute.xlu0 %2463
        %vm2466 = vcmp.eq.f32.partialorder %v2464, %v968
        %vm2467 = vcmp.eq.f32.partialorder %v2464, %v969
        %vm2468 = vcmp.eq.f32.partialorder %v2464, %v970
        %vm2469 = vcmp.eq.f32.partialorder %v2464, %v971
        %vm2470 = vcmp.eq.f32.partialorder %v2464, %v972
        %vm2471 = vcmp.eq.f32.partialorder %v2464, %v973
        %vm2472 = vcmp.eq.f32.partialorder %v2464, %v974
        %vm2473 = vcmp.eq.f32.partialorder %v2464, %v975
        %vm2474 = vcmp.eq.f32.partialorder %v2464, %v976
        %vm2475 = vcmp.eq.f32.partialorder %v2464, %v977
        %vm2476 = vcmp.eq.f32.partialorder %v2464, %v978
        %vm2477 = vcmp.eq.f32.partialorder %v2464, %v979
        %vm2478 = vcmp.eq.f32.partialorder %v2464, %v980
        %vm2479 = vcmp.eq.f32.partialorder %v2464, %v981
        %vm2480 = vcmp.eq.f32.partialorder %v2464, %v982
        %vm2481 = vcmp.eq.f32.partialorder %v2464, %v983
        %v2482 = vsel %vm2466, 1.0, %v2446
        %v2483 = vsel %vm2467, 1.0, %v2447
        %v2484 = vsel %vm2468, 1.0, %v2448
        %v2485 = vsel %vm2469, 1.0, %v2449
        %v2486 = vsel %vm2470, 1.0, %v2450
        %v2487 = vsel %vm2471, 1.0, %v2451
        %v2488 = vsel %vm2472, 1.0, %v2452
        %v2489 = vsel %vm2473, 1.0, %v2453
        %v2490 = vsel %vm2474, 1.0, %v2454
        %v2491 = vsel %vm2475, 1.0, %v2455
        %v2492 = vsel %vm2476, 1.0, %v2456
        %v2493 = vsel %vm2477, 1.0, %v2457
        %v2494 = vsel %vm2478, 1.0, %v2458
        %v2495 = vsel %vm2479, 1.0, %v2459
        %v2496 = vsel %vm2480, 1.0, %v2460
        %v2497 = vsel %vm2481, 1.0, %v2461
        %2498 = vset.pattern.permute.xlu0 42
        %2499 = vperm.xlu0 %2498, %v984
        %v2500 = vpop.permute.xlu0 %2499
        %vm2502 = vcmp.eq.f32.partialorder %v2500, %v968
        %vm2503 = vcmp.eq.f32.partialorder %v2500, %v969
        %vm2504 = vcmp.eq.f32.partialorder %v2500, %v970
        %vm2505 = vcmp.eq.f32.partialorder %v2500, %v971
        %vm2506 = vcmp.eq.f32.partialorder %v2500, %v972
        %vm2507 = vcmp.eq.f32.partialorder %v2500, %v973
        %vm2508 = vcmp.eq.f32.partialorder %v2500, %v974
        %vm2509 = vcmp.eq.f32.partialorder %v2500, %v975
        %vm2510 = vcmp.eq.f32.partialorder %v2500, %v976
        %vm2511 = vcmp.eq.f32.partialorder %v2500, %v977
        %vm2512 = vcmp.eq.f32.partialorder %v2500, %v978
        %vm2513 = vcmp.eq.f32.partialorder %v2500, %v979
        %vm2514 = vcmp.eq.f32.partialorder %v2500, %v980
        %vm2515 = vcmp.eq.f32.partialorder %v2500, %v981
        %vm2516 = vcmp.eq.f32.partialorder %v2500, %v982
        %vm2517 = vcmp.eq.f32.partialorder %v2500, %v983
        %v2518 = vsel %vm2502, 1.0, %v2482
        %v2519 = vsel %vm2503, 1.0, %v2483
        %v2520 = vsel %vm2504, 1.0, %v2484
        %v2521 = vsel %vm2505, 1.0, %v2485
        %v2522 = vsel %vm2506, 1.0, %v2486
        %v2523 = vsel %vm2507, 1.0, %v2487
        %v2524 = vsel %vm2508, 1.0, %v2488
        %v2525 = vsel %vm2509, 1.0, %v2489
        %v2526 = vsel %vm2510, 1.0, %v2490
        %v2527 = vsel %vm2511, 1.0, %v2491
        %v2528 = vsel %vm2512, 1.0, %v2492
        %v2529 = vsel %vm2513, 1.0, %v2493
        %v2530 = vsel %vm2514, 1.0, %v2494
        %v2531 = vsel %vm2515, 1.0, %v2495
        %v2532 = vsel %vm2516, 1.0, %v2496
        %v2533 = vsel %vm2517, 1.0, %v2497
        %2534 = vset.pattern.permute.xlu0 43
        %2535 = vperm.xlu0 %2534, %v984
        %v2536 = vpop.permute.xlu0 %2535
        %vm2538 = vcmp.eq.f32.partialorder %v2536, %v968
        %vm2539 = vcmp.eq.f32.partialorder %v2536, %v969
        %vm2540 = vcmp.eq.f32.partialorder %v2536, %v970
        %vm2541 = vcmp.eq.f32.partialorder %v2536, %v971
        %vm2542 = vcmp.eq.f32.partialorder %v2536, %v972
        %vm2543 = vcmp.eq.f32.partialorder %v2536, %v973
        %vm2544 = vcmp.eq.f32.partialorder %v2536, %v974
        %vm2545 = vcmp.eq.f32.partialorder %v2536, %v975
        %vm2546 = vcmp.eq.f32.partialorder %v2536, %v976
        %vm2547 = vcmp.eq.f32.partialorder %v2536, %v977
        %vm2548 = vcmp.eq.f32.partialorder %v2536, %v978
        %vm2549 = vcmp.eq.f32.partialorder %v2536, %v979
        %vm2550 = vcmp.eq.f32.partialorder %v2536, %v980
        %vm2551 = vcmp.eq.f32.partialorder %v2536, %v981
        %vm2552 = vcmp.eq.f32.partialorder %v2536, %v982
        %vm2553 = vcmp.eq.f32.partialorder %v2536, %v983
        %v2554 = vsel %vm2538, 1.0, %v2518
        %v2555 = vsel %vm2539, 1.0, %v2519
        %v2556 = vsel %vm2540, 1.0, %v2520
        %v2557 = vsel %vm2541, 1.0, %v2521
        %v2558 = vsel %vm2542, 1.0, %v2522
        %v2559 = vsel %vm2543, 1.0, %v2523
        %v2560 = vsel %vm2544, 1.0, %v2524
        %v2561 = vsel %vm2545, 1.0, %v2525
        %v2562 = vsel %vm2546, 1.0, %v2526
        %v2563 = vsel %vm2547, 1.0, %v2527
        %v2564 = vsel %vm2548, 1.0, %v2528
        %v2565 = vsel %vm2549, 1.0, %v2529
        %v2566 = vsel %vm2550, 1.0, %v2530
        %v2567 = vsel %vm2551, 1.0, %v2531
        %v2568 = vsel %vm2552, 1.0, %v2532
        %v2569 = vsel %vm2553, 1.0, %v2533
        %2570 = vset.pattern.permute.xlu0 44
        %2571 = vperm.xlu0 %2570, %v984
        %v2572 = vpop.permute.xlu0 %2571
        %vm2574 = vcmp.eq.f32.partialorder %v2572, %v968
        %vm2575 = vcmp.eq.f32.partialorder %v2572, %v969
        %vm2576 = vcmp.eq.f32.partialorder %v2572, %v970
        %vm2577 = vcmp.eq.f32.partialorder %v2572, %v971
        %vm2578 = vcmp.eq.f32.partialorder %v2572, %v972
        %vm2579 = vcmp.eq.f32.partialorder %v2572, %v973
        %vm2580 = vcmp.eq.f32.partialorder %v2572, %v974
        %vm2581 = vcmp.eq.f32.partialorder %v2572, %v975
        %vm2582 = vcmp.eq.f32.partialorder %v2572, %v976
        %vm2583 = vcmp.eq.f32.partialorder %v2572, %v977
        %vm2584 = vcmp.eq.f32.partialorder %v2572, %v978
        %vm2585 = vcmp.eq.f32.partialorder %v2572, %v979
        %vm2586 = vcmp.eq.f32.partialorder %v2572, %v980
        %vm2587 = vcmp.eq.f32.partialorder %v2572, %v981
        %vm2588 = vcmp.eq.f32.partialorder %v2572, %v982
        %vm2589 = vcmp.eq.f32.partialorder %v2572, %v983
        %v2590 = vsel %vm2574, 1.0, %v2554
        %v2591 = vsel %vm2575, 1.0, %v2555
        %v2592 = vsel %vm2576, 1.0, %v2556
        %v2593 = vsel %vm2577, 1.0, %v2557
        %v2594 = vsel %vm2578, 1.0, %v2558
        %v2595 = vsel %vm2579, 1.0, %v2559
        %v2596 = vsel %vm2580, 1.0, %v2560
        %v2597 = vsel %vm2581, 1.0, %v2561
        %v2598 = vsel %vm2582, 1.0, %v2562
        %v2599 = vsel %vm2583, 1.0, %v2563
        %v2600 = vsel %vm2584, 1.0, %v2564
        %v2601 = vsel %vm2585, 1.0, %v2565
        %v2602 = vsel %vm2586, 1.0, %v2566
        %v2603 = vsel %vm2587, 1.0, %v2567
        %v2604 = vsel %vm2588, 1.0, %v2568
        %v2605 = vsel %vm2589, 1.0, %v2569
        %2606 = vset.pattern.permute.xlu0 45
        %2607 = vperm.xlu0 %2606, %v984
        %v2608 = vpop.permute.xlu0 %2607
        %vm2610 = vcmp.eq.f32.partialorder %v2608, %v968
        %vm2611 = vcmp.eq.f32.partialorder %v2608, %v969
        %vm2612 = vcmp.eq.f32.partialorder %v2608, %v970
        %vm2613 = vcmp.eq.f32.partialorder %v2608, %v971
        %vm2614 = vcmp.eq.f32.partialorder %v2608, %v972
        %vm2615 = vcmp.eq.f32.partialorder %v2608, %v973
        %vm2616 = vcmp.eq.f32.partialorder %v2608, %v974
        %vm2617 = vcmp.eq.f32.partialorder %v2608, %v975
        %vm2618 = vcmp.eq.f32.partialorder %v2608, %v976
        %vm2619 = vcmp.eq.f32.partialorder %v2608, %v977
        %vm2620 = vcmp.eq.f32.partialorder %v2608, %v978
        %vm2621 = vcmp.eq.f32.partialorder %v2608, %v979
        %vm2622 = vcmp.eq.f32.partialorder %v2608, %v980
        %vm2623 = vcmp.eq.f32.partialorder %v2608, %v981
        %vm2624 = vcmp.eq.f32.partialorder %v2608, %v982
        %vm2625 = vcmp.eq.f32.partialorder %v2608, %v983
        %v2626 = vsel %vm2610, 1.0, %v2590
        %v2627 = vsel %vm2611, 1.0, %v2591
        %v2628 = vsel %vm2612, 1.0, %v2592
        %v2629 = vsel %vm2613, 1.0, %v2593
        %v2630 = vsel %vm2614, 1.0, %v2594
        %v2631 = vsel %vm2615, 1.0, %v2595
        %v2632 = vsel %vm2616, 1.0, %v2596
        %v2633 = vsel %vm2617, 1.0, %v2597
        %v2634 = vsel %vm2618, 1.0, %v2598
        %v2635 = vsel %vm2619, 1.0, %v2599
        %v2636 = vsel %vm2620, 1.0, %v2600
        %v2637 = vsel %vm2621, 1.0, %v2601
        %v2638 = vsel %vm2622, 1.0, %v2602
        %v2639 = vsel %vm2623, 1.0, %v2603
        %v2640 = vsel %vm2624, 1.0, %v2604
        %v2641 = vsel %vm2625, 1.0, %v2605
        %2642 = vset.pattern.permute.xlu0 46
        %2643 = vperm.xlu0 %2642, %v984
        %v2644 = vpop.permute.xlu0 %2643
        %vm2646 = vcmp.eq.f32.partialorder %v2644, %v968
        %vm2647 = vcmp.eq.f32.partialorder %v2644, %v969
        %vm2648 = vcmp.eq.f32.partialorder %v2644, %v970
        %vm2649 = vcmp.eq.f32.partialorder %v2644, %v971
        %vm2650 = vcmp.eq.f32.partialorder %v2644, %v972
        %vm2651 = vcmp.eq.f32.partialorder %v2644, %v973
        %vm2652 = vcmp.eq.f32.partialorder %v2644, %v974
        %vm2653 = vcmp.eq.f32.partialorder %v2644, %v975
        %vm2654 = vcmp.eq.f32.partialorder %v2644, %v976
        %vm2655 = vcmp.eq.f32.partialorder %v2644, %v977
        %vm2656 = vcmp.eq.f32.partialorder %v2644, %v978
        %vm2657 = vcmp.eq.f32.partialorder %v2644, %v979
        %vm2658 = vcmp.eq.f32.partialorder %v2644, %v980
        %vm2659 = vcmp.eq.f32.partialorder %v2644, %v981
        %vm2660 = vcmp.eq.f32.partialorder %v2644, %v982
        %vm2661 = vcmp.eq.f32.partialorder %v2644, %v983
        %v2662 = vsel %vm2646, 1.0, %v2626
        %v2663 = vsel %vm2647, 1.0, %v2627
        %v2664 = vsel %vm2648, 1.0, %v2628
        %v2665 = vsel %vm2649, 1.0, %v2629
        %v2666 = vsel %vm2650, 1.0, %v2630
        %v2667 = vsel %vm2651, 1.0, %v2631
        %v2668 = vsel %vm2652, 1.0, %v2632
        %v2669 = vsel %vm2653, 1.0, %v2633
        %v2670 = vsel %vm2654, 1.0, %v2634
        %v2671 = vsel %vm2655, 1.0, %v2635
        %v2672 = vsel %vm2656, 1.0, %v2636
        %v2673 = vsel %vm2657, 1.0, %v2637
        %v2674 = vsel %vm2658, 1.0, %v2638
        %v2675 = vsel %vm2659, 1.0, %v2639
        %v2676 = vsel %vm2660, 1.0, %v2640
        %v2677 = vsel %vm2661, 1.0, %v2641
        %2678 = vset.pattern.permute.xlu0 47
        %2679 = vperm.xlu0 %2678, %v984
        %v2680 = vpop.permute.xlu0 %2679
        %vm2682 = vcmp.eq.f32.partialorder %v2680, %v968
        %vm2683 = vcmp.eq.f32.partialorder %v2680, %v969
        %vm2684 = vcmp.eq.f32.partialorder %v2680, %v970
        %vm2685 = vcmp.eq.f32.partialorder %v2680, %v971
        %vm2686 = vcmp.eq.f32.partialorder %v2680, %v972
        %vm2687 = vcmp.eq.f32.partialorder %v2680, %v973
        %vm2688 = vcmp.eq.f32.partialorder %v2680, %v974
        %vm2689 = vcmp.eq.f32.partialorder %v2680, %v975
        %vm2690 = vcmp.eq.f32.partialorder %v2680, %v976
        %vm2691 = vcmp.eq.f32.partialorder %v2680, %v977
        %vm2692 = vcmp.eq.f32.partialorder %v2680, %v978
        %vm2693 = vcmp.eq.f32.partialorder %v2680, %v979
        %vm2694 = vcmp.eq.f32.partialorder %v2680, %v980
        %vm2695 = vcmp.eq.f32.partialorder %v2680, %v981
        %vm2696 = vcmp.eq.f32.partialorder %v2680, %v982
        %vm2697 = vcmp.eq.f32.partialorder %v2680, %v983
        %v2698 = vsel %vm2682, 1.0, %v2662
        %v2699 = vsel %vm2683, 1.0, %v2663
        %v2700 = vsel %vm2684, 1.0, %v2664
        %v2701 = vsel %vm2685, 1.0, %v2665
        %v2702 = vsel %vm2686, 1.0, %v2666
        %v2703 = vsel %vm2687, 1.0, %v2667
        %v2704 = vsel %vm2688, 1.0, %v2668
        %v2705 = vsel %vm2689, 1.0, %v2669
        %v2706 = vsel %vm2690, 1.0, %v2670
        %v2707 = vsel %vm2691, 1.0, %v2671
        %v2708 = vsel %vm2692, 1.0, %v2672
        %v2709 = vsel %vm2693, 1.0, %v2673
        %v2710 = vsel %vm2694, 1.0, %v2674
        %v2711 = vsel %vm2695, 1.0, %v2675
        %v2712 = vsel %vm2696, 1.0, %v2676
        %v2713 = vsel %vm2697, 1.0, %v2677
        %2714 = vset.pattern.permute.xlu0 48
        %2715 = vperm.xlu0 %2714, %v984
        %v2716 = vpop.permute.xlu0 %2715
        %vm2718 = vcmp.eq.f32.partialorder %v2716, %v968
        %vm2719 = vcmp.eq.f32.partialorder %v2716, %v969
        %vm2720 = vcmp.eq.f32.partialorder %v2716, %v970
        %vm2721 = vcmp.eq.f32.partialorder %v2716, %v971
        %vm2722 = vcmp.eq.f32.partialorder %v2716, %v972
        %vm2723 = vcmp.eq.f32.partialorder %v2716, %v973
        %vm2724 = vcmp.eq.f32.partialorder %v2716, %v974
        %vm2725 = vcmp.eq.f32.partialorder %v2716, %v975
        %vm2726 = vcmp.eq.f32.partialorder %v2716, %v976
        %vm2727 = vcmp.eq.f32.partialorder %v2716, %v977
        %vm2728 = vcmp.eq.f32.partialorder %v2716, %v978
        %vm2729 = vcmp.eq.f32.partialorder %v2716, %v979
        %vm2730 = vcmp.eq.f32.partialorder %v2716, %v980
        %vm2731 = vcmp.eq.f32.partialorder %v2716, %v981
        %vm2732 = vcmp.eq.f32.partialorder %v2716, %v982
        %vm2733 = vcmp.eq.f32.partialorder %v2716, %v983
        %v2734 = vsel %vm2718, 1.0, %v2698
        %v2735 = vsel %vm2719, 1.0, %v2699
        %v2736 = vsel %vm2720, 1.0, %v2700
        %v2737 = vsel %vm2721, 1.0, %v2701
        %v2738 = vsel %vm2722, 1.0, %v2702
        %v2739 = vsel %vm2723, 1.0, %v2703
        %v2740 = vsel %vm2724, 1.0, %v2704
        %v2741 = vsel %vm2725, 1.0, %v2705
        %v2742 = vsel %vm2726, 1.0, %v2706
        %v2743 = vsel %vm2727, 1.0, %v2707
        %v2744 = vsel %vm2728, 1.0, %v2708
        %v2745 = vsel %vm2729, 1.0, %v2709
        %v2746 = vsel %vm2730, 1.0, %v2710
        %v2747 = vsel %vm2731, 1.0, %v2711
        %v2748 = vsel %vm2732, 1.0, %v2712
        %v2749 = vsel %vm2733, 1.0, %v2713
        %2750 = vset.pattern.permute.xlu0 49
        %2751 = vperm.xlu0 %2750, %v984
        %v2752 = vpop.permute.xlu0 %2751
        %vm2754 = vcmp.eq.f32.partialorder %v2752, %v968
        %vm2755 = vcmp.eq.f32.partialorder %v2752, %v969
        %vm2756 = vcmp.eq.f32.partialorder %v2752, %v970
        %vm2757 = vcmp.eq.f32.partialorder %v2752, %v971
        %vm2758 = vcmp.eq.f32.partialorder %v2752, %v972
        %vm2759 = vcmp.eq.f32.partialorder %v2752, %v973
        %vm2760 = vcmp.eq.f32.partialorder %v2752, %v974
        %vm2761 = vcmp.eq.f32.partialorder %v2752, %v975
        %vm2762 = vcmp.eq.f32.partialorder %v2752, %v976
        %vm2763 = vcmp.eq.f32.partialorder %v2752, %v977
        %vm2764 = vcmp.eq.f32.partialorder %v2752, %v978
        %vm2765 = vcmp.eq.f32.partialorder %v2752, %v979
        %vm2766 = vcmp.eq.f32.partialorder %v2752, %v980
        %vm2767 = vcmp.eq.f32.partialorder %v2752, %v981
        %vm2768 = vcmp.eq.f32.partialorder %v2752, %v982
        %vm2769 = vcmp.eq.f32.partialorder %v2752, %v983
        %v2770 = vsel %vm2754, 1.0, %v2734
        %v2771 = vsel %vm2755, 1.0, %v2735
        %v2772 = vsel %vm2756, 1.0, %v2736
        %v2773 = vsel %vm2757, 1.0, %v2737
        %v2774 = vsel %vm2758, 1.0, %v2738
        %v2775 = vsel %vm2759, 1.0, %v2739
        %v2776 = vsel %vm2760, 1.0, %v2740
        %v2777 = vsel %vm2761, 1.0, %v2741
        %v2778 = vsel %vm2762, 1.0, %v2742
        %v2779 = vsel %vm2763, 1.0, %v2743
        %v2780 = vsel %vm2764, 1.0, %v2744
        %v2781 = vsel %vm2765, 1.0, %v2745
        %v2782 = vsel %vm2766, 1.0, %v2746
        %v2783 = vsel %vm2767, 1.0, %v2747
        %v2784 = vsel %vm2768, 1.0, %v2748
        %v2785 = vsel %vm2769, 1.0, %v2749
        %2786 = vset.pattern.permute.xlu0 50
        %2787 = vperm.xlu0 %2786, %v984
        %v2788 = vpop.permute.xlu0 %2787
        %vm2790 = vcmp.eq.f32.partialorder %v2788, %v968
        %vm2791 = vcmp.eq.f32.partialorder %v2788, %v969
        %vm2792 = vcmp.eq.f32.partialorder %v2788, %v970
        %vm2793 = vcmp.eq.f32.partialorder %v2788, %v971
        %vm2794 = vcmp.eq.f32.partialorder %v2788, %v972
        %vm2795 = vcmp.eq.f32.partialorder %v2788, %v973
        %vm2796 = vcmp.eq.f32.partialorder %v2788, %v974
        %vm2797 = vcmp.eq.f32.partialorder %v2788, %v975
        %vm2798 = vcmp.eq.f32.partialorder %v2788, %v976
        %vm2799 = vcmp.eq.f32.partialorder %v2788, %v977
        %vm2800 = vcmp.eq.f32.partialorder %v2788, %v978
        %vm2801 = vcmp.eq.f32.partialorder %v2788, %v979
        %vm2802 = vcmp.eq.f32.partialorder %v2788, %v980
        %vm2803 = vcmp.eq.f32.partialorder %v2788, %v981
        %vm2804 = vcmp.eq.f32.partialorder %v2788, %v982
        %vm2805 = vcmp.eq.f32.partialorder %v2788, %v983
        %v2806 = vsel %vm2790, 1.0, %v2770
        %v2807 = vsel %vm2791, 1.0, %v2771
        %v2808 = vsel %vm2792, 1.0, %v2772
        %v2809 = vsel %vm2793, 1.0, %v2773
        %v2810 = vsel %vm2794, 1.0, %v2774
        %v2811 = vsel %vm2795, 1.0, %v2775
        %v2812 = vsel %vm2796, 1.0, %v2776
        %v2813 = vsel %vm2797, 1.0, %v2777
        %v2814 = vsel %vm2798, 1.0, %v2778
        %v2815 = vsel %vm2799, 1.0, %v2779
        %v2816 = vsel %vm2800, 1.0, %v2780
        %v2817 = vsel %vm2801, 1.0, %v2781
        %v2818 = vsel %vm2802, 1.0, %v2782
        %v2819 = vsel %vm2803, 1.0, %v2783
        %v2820 = vsel %vm2804, 1.0, %v2784
        %v2821 = vsel %vm2805, 1.0, %v2785
        %2822 = vset.pattern.permute.xlu0 51
        %2823 = vperm.xlu0 %2822, %v984
        %v2824 = vpop.permute.xlu0 %2823
        %vm2826 = vcmp.eq.f32.partialorder %v2824, %v968
        %vm2827 = vcmp.eq.f32.partialorder %v2824, %v969
        %vm2828 = vcmp.eq.f32.partialorder %v2824, %v970
        %vm2829 = vcmp.eq.f32.partialorder %v2824, %v971
        %vm2830 = vcmp.eq.f32.partialorder %v2824, %v972
        %vm2831 = vcmp.eq.f32.partialorder %v2824, %v973
        %vm2832 = vcmp.eq.f32.partialorder %v2824, %v974
        %vm2833 = vcmp.eq.f32.partialorder %v2824, %v975
        %vm2834 = vcmp.eq.f32.partialorder %v2824, %v976
        %vm2835 = vcmp.eq.f32.partialorder %v2824, %v977
        %vm2836 = vcmp.eq.f32.partialorder %v2824, %v978
        %vm2837 = vcmp.eq.f32.partialorder %v2824, %v979
        %vm2838 = vcmp.eq.f32.partialorder %v2824, %v980
        %vm2839 = vcmp.eq.f32.partialorder %v2824, %v981
        %vm2840 = vcmp.eq.f32.partialorder %v2824, %v982
        %vm2841 = vcmp.eq.f32.partialorder %v2824, %v983
        %v2842 = vsel %vm2826, 1.0, %v2806
        %v2843 = vsel %vm2827, 1.0, %v2807
        %v2844 = vsel %vm2828, 1.0, %v2808
        %v2845 = vsel %vm2829, 1.0, %v2809
        %v2846 = vsel %vm2830, 1.0, %v2810
        %v2847 = vsel %vm2831, 1.0, %v2811
        %v2848 = vsel %vm2832, 1.0, %v2812
        %v2849 = vsel %vm2833, 1.0, %v2813
        %v2850 = vsel %vm2834, 1.0, %v2814
        %v2851 = vsel %vm2835, 1.0, %v2815
        %v2852 = vsel %vm2836, 1.0, %v2816
        %v2853 = vsel %vm2837, 1.0, %v2817
        %v2854 = vsel %vm2838, 1.0, %v2818
        %v2855 = vsel %vm2839, 1.0, %v2819
        %v2856 = vsel %vm2840, 1.0, %v2820
        %v2857 = vsel %vm2841, 1.0, %v2821
        %2858 = vset.pattern.permute.xlu0 52
        %2859 = vperm.xlu0 %2858, %v984
        %v2860 = vpop.permute.xlu0 %2859
        %vm2862 = vcmp.eq.f32.partialorder %v2860, %v968
        %vm2863 = vcmp.eq.f32.partialorder %v2860, %v969
        %vm2864 = vcmp.eq.f32.partialorder %v2860, %v970
        %vm2865 = vcmp.eq.f32.partialorder %v2860, %v971
        %vm2866 = vcmp.eq.f32.partialorder %v2860, %v972
        %vm2867 = vcmp.eq.f32.partialorder %v2860, %v973
        %vm2868 = vcmp.eq.f32.partialorder %v2860, %v974
        %vm2869 = vcmp.eq.f32.partialorder %v2860, %v975
        %vm2870 = vcmp.eq.f32.partialorder %v2860, %v976
        %vm2871 = vcmp.eq.f32.partialorder %v2860, %v977
        %vm2872 = vcmp.eq.f32.partialorder %v2860, %v978
        %vm2873 = vcmp.eq.f32.partialorder %v2860, %v979
        %vm2874 = vcmp.eq.f32.partialorder %v2860, %v980
        %vm2875 = vcmp.eq.f32.partialorder %v2860, %v981
        %vm2876 = vcmp.eq.f32.partialorder %v2860, %v982
        %vm2877 = vcmp.eq.f32.partialorder %v2860, %v983
        %v2878 = vsel %vm2862, 1.0, %v2842
        %v2879 = vsel %vm2863, 1.0, %v2843
        %v2880 = vsel %vm2864, 1.0, %v2844
        %v2881 = vsel %vm2865, 1.0, %v2845
        %v2882 = vsel %vm2866, 1.0, %v2846
        %v2883 = vsel %vm2867, 1.0, %v2847
        %v2884 = vsel %vm2868, 1.0, %v2848
        %v2885 = vsel %vm2869, 1.0, %v2849
        %v2886 = vsel %vm2870, 1.0, %v2850
        %v2887 = vsel %vm2871, 1.0, %v2851
        %v2888 = vsel %vm2872, 1.0, %v2852
        %v2889 = vsel %vm2873, 1.0, %v2853
        %v2890 = vsel %vm2874, 1.0, %v2854
        %v2891 = vsel %vm2875, 1.0, %v2855
        %v2892 = vsel %vm2876, 1.0, %v2856
        %v2893 = vsel %vm2877, 1.0, %v2857
        %2894 = vset.pattern.permute.xlu0 53
        %2895 = vperm.xlu0 %2894, %v984
        %v2896 = vpop.permute.xlu0 %2895
        %vm2898 = vcmp.eq.f32.partialorder %v2896, %v968
        %vm2899 = vcmp.eq.f32.partialorder %v2896, %v969
        %vm2900 = vcmp.eq.f32.partialorder %v2896, %v970
        %vm2901 = vcmp.eq.f32.partialorder %v2896, %v971
        %vm2902 = vcmp.eq.f32.partialorder %v2896, %v972
        %vm2903 = vcmp.eq.f32.partialorder %v2896, %v973
        %vm2904 = vcmp.eq.f32.partialorder %v2896, %v974
        %vm2905 = vcmp.eq.f32.partialorder %v2896, %v975
        %vm2906 = vcmp.eq.f32.partialorder %v2896, %v976
        %vm2907 = vcmp.eq.f32.partialorder %v2896, %v977
        %vm2908 = vcmp.eq.f32.partialorder %v2896, %v978
        %vm2909 = vcmp.eq.f32.partialorder %v2896, %v979
        %vm2910 = vcmp.eq.f32.partialorder %v2896, %v980
        %vm2911 = vcmp.eq.f32.partialorder %v2896, %v981
        %vm2912 = vcmp.eq.f32.partialorder %v2896, %v982
        %vm2913 = vcmp.eq.f32.partialorder %v2896, %v983
        %v2914 = vsel %vm2898, 1.0, %v2878
        %v2915 = vsel %vm2899, 1.0, %v2879
        %v2916 = vsel %vm2900, 1.0, %v2880
        %v2917 = vsel %vm2901, 1.0, %v2881
        %v2918 = vsel %vm2902, 1.0, %v2882
        %v2919 = vsel %vm2903, 1.0, %v2883
        %v2920 = vsel %vm2904, 1.0, %v2884
        %v2921 = vsel %vm2905, 1.0, %v2885
        %v2922 = vsel %vm2906, 1.0, %v2886
        %v2923 = vsel %vm2907, 1.0, %v2887
        %v2924 = vsel %vm2908, 1.0, %v2888
        %v2925 = vsel %vm2909, 1.0, %v2889
        %v2926 = vsel %vm2910, 1.0, %v2890
        %v2927 = vsel %vm2911, 1.0, %v2891
        %v2928 = vsel %vm2912, 1.0, %v2892
        %v2929 = vsel %vm2913, 1.0, %v2893
        %2930 = vset.pattern.permute.xlu0 54
        %2931 = vperm.xlu0 %2930, %v984
        %v2932 = vpop.permute.xlu0 %2931
        %vm2934 = vcmp.eq.f32.partialorder %v2932, %v968
        %vm2935 = vcmp.eq.f32.partialorder %v2932, %v969
        %vm2936 = vcmp.eq.f32.partialorder %v2932, %v970
        %vm2937 = vcmp.eq.f32.partialorder %v2932, %v971
        %vm2938 = vcmp.eq.f32.partialorder %v2932, %v972
        %vm2939 = vcmp.eq.f32.partialorder %v2932, %v973
        %vm2940 = vcmp.eq.f32.partialorder %v2932, %v974
        %vm2941 = vcmp.eq.f32.partialorder %v2932, %v975
        %vm2942 = vcmp.eq.f32.partialorder %v2932, %v976
        %vm2943 = vcmp.eq.f32.partialorder %v2932, %v977
        %vm2944 = vcmp.eq.f32.partialorder %v2932, %v978
        %vm2945 = vcmp.eq.f32.partialorder %v2932, %v979
        %vm2946 = vcmp.eq.f32.partialorder %v2932, %v980
        %vm2947 = vcmp.eq.f32.partialorder %v2932, %v981
        %vm2948 = vcmp.eq.f32.partialorder %v2932, %v982
        %vm2949 = vcmp.eq.f32.partialorder %v2932, %v983
        %v2950 = vsel %vm2934, 1.0, %v2914
        %v2951 = vsel %vm2935, 1.0, %v2915
        %v2952 = vsel %vm2936, 1.0, %v2916
        %v2953 = vsel %vm2937, 1.0, %v2917
        %v2954 = vsel %vm2938, 1.0, %v2918
        %v2955 = vsel %vm2939, 1.0, %v2919
        %v2956 = vsel %vm2940, 1.0, %v2920
        %v2957 = vsel %vm2941, 1.0, %v2921
        %v2958 = vsel %vm2942, 1.0, %v2922
        %v2959 = vsel %vm2943, 1.0, %v2923
        %v2960 = vsel %vm2944, 1.0, %v2924
        %v2961 = vsel %vm2945, 1.0, %v2925
        %v2962 = vsel %vm2946, 1.0, %v2926
        %v2963 = vsel %vm2947, 1.0, %v2927
        %v2964 = vsel %vm2948, 1.0, %v2928
        %v2965 = vsel %vm2949, 1.0, %v2929
        %2966 = vset.pattern.permute.xlu0 55
        %2967 = vperm.xlu0 %2966, %v984
        %v2968 = vpop.permute.xlu0 %2967
        %vm2970 = vcmp.eq.f32.partialorder %v2968, %v968
        %vm2971 = vcmp.eq.f32.partialorder %v2968, %v969
        %vm2972 = vcmp.eq.f32.partialorder %v2968, %v970
        %vm2973 = vcmp.eq.f32.partialorder %v2968, %v971
        %vm2974 = vcmp.eq.f32.partialorder %v2968, %v972
        %vm2975 = vcmp.eq.f32.partialorder %v2968, %v973
        %vm2976 = vcmp.eq.f32.partialorder %v2968, %v974
        %vm2977 = vcmp.eq.f32.partialorder %v2968, %v975
        %vm2978 = vcmp.eq.f32.partialorder %v2968, %v976
        %vm2979 = vcmp.eq.f32.partialorder %v2968, %v977
        %vm2980 = vcmp.eq.f32.partialorder %v2968, %v978
        %vm2981 = vcmp.eq.f32.partialorder %v2968, %v979
        %vm2982 = vcmp.eq.f32.partialorder %v2968, %v980
        %vm2983 = vcmp.eq.f32.partialorder %v2968, %v981
        %vm2984 = vcmp.eq.f32.partialorder %v2968, %v982
        %vm2985 = vcmp.eq.f32.partialorder %v2968, %v983
        %v2986 = vsel %vm2970, 1.0, %v2950
        %v2987 = vsel %vm2971, 1.0, %v2951
        %v2988 = vsel %vm2972, 1.0, %v2952
        %v2989 = vsel %vm2973, 1.0, %v2953
        %v2990 = vsel %vm2974, 1.0, %v2954
        %v2991 = vsel %vm2975, 1.0, %v2955
        %v2992 = vsel %vm2976, 1.0, %v2956
        %v2993 = vsel %vm2977, 1.0, %v2957
        %v2994 = vsel %vm2978, 1.0, %v2958
        %v2995 = vsel %vm2979, 1.0, %v2959
        %v2996 = vsel %vm2980, 1.0, %v2960
        %v2997 = vsel %vm2981, 1.0, %v2961
        %v2998 = vsel %vm2982, 1.0, %v2962
        %v2999 = vsel %vm2983, 1.0, %v2963
        %v3000 = vsel %vm2984, 1.0, %v2964
        %v3001 = vsel %vm2985, 1.0, %v2965
        %3002 = vset.pattern.permute.xlu0 56
        %3003 = vperm.xlu0 %3002, %v984
        %v3004 = vpop.permute.xlu0 %3003
        %vm3006 = vcmp.eq.f32.partialorder %v3004, %v968
        %vm3007 = vcmp.eq.f32.partialorder %v3004, %v969
        %vm3008 = vcmp.eq.f32.partialorder %v3004, %v970
        %vm3009 = vcmp.eq.f32.partialorder %v3004, %v971
        %vm3010 = vcmp.eq.f32.partialorder %v3004, %v972
        %vm3011 = vcmp.eq.f32.partialorder %v3004, %v973
        %vm3012 = vcmp.eq.f32.partialorder %v3004, %v974
        %vm3013 = vcmp.eq.f32.partialorder %v3004, %v975
        %vm3014 = vcmp.eq.f32.partialorder %v3004, %v976
        %vm3015 = vcmp.eq.f32.partialorder %v3004, %v977
        %vm3016 = vcmp.eq.f32.partialorder %v3004, %v978
        %vm3017 = vcmp.eq.f32.partialorder %v3004, %v979
        %vm3018 = vcmp.eq.f32.partialorder %v3004, %v980
        %vm3019 = vcmp.eq.f32.partialorder %v3004, %v981
        %vm3020 = vcmp.eq.f32.partialorder %v3004, %v982
        %vm3021 = vcmp.eq.f32.partialorder %v3004, %v983
        %v3022 = vsel %vm3006, 1.0, %v2986
        %v3023 = vsel %vm3007, 1.0, %v2987
        %v3024 = vsel %vm3008, 1.0, %v2988
        %v3025 = vsel %vm3009, 1.0, %v2989
        %v3026 = vsel %vm3010, 1.0, %v2990
        %v3027 = vsel %vm3011, 1.0, %v2991
        %v3028 = vsel %vm3012, 1.0, %v2992
        %v3029 = vsel %vm3013, 1.0, %v2993
        %v3030 = vsel %vm3014, 1.0, %v2994
        %v3031 = vsel %vm3015, 1.0, %v2995
        %v3032 = vsel %vm3016, 1.0, %v2996
        %v3033 = vsel %vm3017, 1.0, %v2997
        %v3034 = vsel %vm3018, 1.0, %v2998
        %v3035 = vsel %vm3019, 1.0, %v2999
        %v3036 = vsel %vm3020, 1.0, %v3000
        %v3037 = vsel %vm3021, 1.0, %v3001
        %3038 = vset.pattern.permute.xlu0 57
        %3039 = vperm.xlu0 %3038, %v984
        %v3040 = vpop.permute.xlu0 %3039
        %vm3042 = vcmp.eq.f32.partialorder %v3040, %v968
        %vm3043 = vcmp.eq.f32.partialorder %v3040, %v969
        %vm3044 = vcmp.eq.f32.partialorder %v3040, %v970
        %vm3045 = vcmp.eq.f32.partialorder %v3040, %v971
        %vm3046 = vcmp.eq.f32.partialorder %v3040, %v972
        %vm3047 = vcmp.eq.f32.partialorder %v3040, %v973
        %vm3048 = vcmp.eq.f32.partialorder %v3040, %v974
        %vm3049 = vcmp.eq.f32.partialorder %v3040, %v975
        %vm3050 = vcmp.eq.f32.partialorder %v3040, %v976
        %vm3051 = vcmp.eq.f32.partialorder %v3040, %v977
        %vm3052 = vcmp.eq.f32.partialorder %v3040, %v978
        %vm3053 = vcmp.eq.f32.partialorder %v3040, %v979
        %vm3054 = vcmp.eq.f32.partialorder %v3040, %v980
        %vm3055 = vcmp.eq.f32.partialorder %v3040, %v981
        %vm3056 = vcmp.eq.f32.partialorder %v3040, %v982
        %vm3057 = vcmp.eq.f32.partialorder %v3040, %v983
        %v3058 = vsel %vm3042, 1.0, %v3022
        %v3059 = vsel %vm3043, 1.0, %v3023
        %v3060 = vsel %vm3044, 1.0, %v3024
        %v3061 = vsel %vm3045, 1.0, %v3025
        %v3062 = vsel %vm3046, 1.0, %v3026
        %v3063 = vsel %vm3047, 1.0, %v3027
        %v3064 = vsel %vm3048, 1.0, %v3028
        %v3065 = vsel %vm3049, 1.0, %v3029
        %v3066 = vsel %vm3050, 1.0, %v3030
        %v3067 = vsel %vm3051, 1.0, %v3031
        %v3068 = vsel %vm3052, 1.0, %v3032
        %v3069 = vsel %vm3053, 1.0, %v3033
        %v3070 = vsel %vm3054, 1.0, %v3034
        %v3071 = vsel %vm3055, 1.0, %v3035
        %v3072 = vsel %vm3056, 1.0, %v3036
        %v3073 = vsel %vm3057, 1.0, %v3037
        %3074 = vset.pattern.permute.xlu0 58
        %3075 = vperm.xlu0 %3074, %v984
        %v3076 = vpop.permute.xlu0 %3075
        %vm3078 = vcmp.eq.f32.partialorder %v3076, %v968
        %vm3079 = vcmp.eq.f32.partialorder %v3076, %v969
        %vm3080 = vcmp.eq.f32.partialorder %v3076, %v970
        %vm3081 = vcmp.eq.f32.partialorder %v3076, %v971
        %vm3082 = vcmp.eq.f32.partialorder %v3076, %v972
        %vm3083 = vcmp.eq.f32.partialorder %v3076, %v973
        %vm3084 = vcmp.eq.f32.partialorder %v3076, %v974
        %vm3085 = vcmp.eq.f32.partialorder %v3076, %v975
        %vm3086 = vcmp.eq.f32.partialorder %v3076, %v976
        %vm3087 = vcmp.eq.f32.partialorder %v3076, %v977
        %vm3088 = vcmp.eq.f32.partialorder %v3076, %v978
        %vm3089 = vcmp.eq.f32.partialorder %v3076, %v979
        %vm3090 = vcmp.eq.f32.partialorder %v3076, %v980
        %vm3091 = vcmp.eq.f32.partialorder %v3076, %v981
        %vm3092 = vcmp.eq.f32.partialorder %v3076, %v982
        %vm3093 = vcmp.eq.f32.partialorder %v3076, %v983
        %v3094 = vsel %vm3078, 1.0, %v3058
        %v3095 = vsel %vm3079, 1.0, %v3059
        %v3096 = vsel %vm3080, 1.0, %v3060
        %v3097 = vsel %vm3081, 1.0, %v3061
        %v3098 = vsel %vm3082, 1.0, %v3062
        %v3099 = vsel %vm3083, 1.0, %v3063
        %v3100 = vsel %vm3084, 1.0, %v3064
        %v3101 = vsel %vm3085, 1.0, %v3065
        %v3102 = vsel %vm3086, 1.0, %v3066
        %v3103 = vsel %vm3087, 1.0, %v3067
        %v3104 = vsel %vm3088, 1.0, %v3068
        %v3105 = vsel %vm3089, 1.0, %v3069
        %v3106 = vsel %vm3090, 1.0, %v3070
        %v3107 = vsel %vm3091, 1.0, %v3071
        %v3108 = vsel %vm3092, 1.0, %v3072
        %v3109 = vsel %vm3093, 1.0, %v3073
        %3110 = vset.pattern.permute.xlu0 59
        %3111 = vperm.xlu0 %3110, %v984
        %v3112 = vpop.permute.xlu0 %3111
        %vm3114 = vcmp.eq.f32.partialorder %v3112, %v968
        %vm3115 = vcmp.eq.f32.partialorder %v3112, %v969
        %vm3116 = vcmp.eq.f32.partialorder %v3112, %v970
        %vm3117 = vcmp.eq.f32.partialorder %v3112, %v971
        %vm3118 = vcmp.eq.f32.partialorder %v3112, %v972
        %vm3119 = vcmp.eq.f32.partialorder %v3112, %v973
        %vm3120 = vcmp.eq.f32.partialorder %v3112, %v974
        %vm3121 = vcmp.eq.f32.partialorder %v3112, %v975
        %vm3122 = vcmp.eq.f32.partialorder %v3112, %v976
        %vm3123 = vcmp.eq.f32.partialorder %v3112, %v977
        %vm3124 = vcmp.eq.f32.partialorder %v3112, %v978
        %vm3125 = vcmp.eq.f32.partialorder %v3112, %v979
        %vm3126 = vcmp.eq.f32.partialorder %v3112, %v980
        %vm3127 = vcmp.eq.f32.partialorder %v3112, %v981
        %vm3128 = vcmp.eq.f32.partialorder %v3112, %v982
        %vm3129 = vcmp.eq.f32.partialorder %v3112, %v983
        %v3130 = vsel %vm3114, 1.0, %v3094
        %v3131 = vsel %vm3115, 1.0, %v3095
        %v3132 = vsel %vm3116, 1.0, %v3096
        %v3133 = vsel %vm3117, 1.0, %v3097
        %v3134 = vsel %vm3118, 1.0, %v3098
        %v3135 = vsel %vm3119, 1.0, %v3099
        %v3136 = vsel %vm3120, 1.0, %v3100
        %v3137 = vsel %vm3121, 1.0, %v3101
        %v3138 = vsel %vm3122, 1.0, %v3102
        %v3139 = vsel %vm3123, 1.0, %v3103
        %v3140 = vsel %vm3124, 1.0, %v3104
        %v3141 = vsel %vm3125, 1.0, %v3105
        %v3142 = vsel %vm3126, 1.0, %v3106
        %v3143 = vsel %vm3127, 1.0, %v3107
        %v3144 = vsel %vm3128, 1.0, %v3108
        %v3145 = vsel %vm3129, 1.0, %v3109
        %3146 = vset.pattern.permute.xlu0 60
        %3147 = vperm.xlu0 %3146, %v984
        %v3148 = vpop.permute.xlu0 %3147
        %vm3150 = vcmp.eq.f32.partialorder %v3148, %v968
        %vm3151 = vcmp.eq.f32.partialorder %v3148, %v969
        %vm3152 = vcmp.eq.f32.partialorder %v3148, %v970
        %vm3153 = vcmp.eq.f32.partialorder %v3148, %v971
        %vm3154 = vcmp.eq.f32.partialorder %v3148, %v972
        %vm3155 = vcmp.eq.f32.partialorder %v3148, %v973
        %vm3156 = vcmp.eq.f32.partialorder %v3148, %v974
        %vm3157 = vcmp.eq.f32.partialorder %v3148, %v975
        %vm3158 = vcmp.eq.f32.partialorder %v3148, %v976
        %vm3159 = vcmp.eq.f32.partialorder %v3148, %v977
        %vm3160 = vcmp.eq.f32.partialorder %v3148, %v978
        %vm3161 = vcmp.eq.f32.partialorder %v3148, %v979
        %vm3162 = vcmp.eq.f32.partialorder %v3148, %v980
        %vm3163 = vcmp.eq.f32.partialorder %v3148, %v981
        %vm3164 = vcmp.eq.f32.partialorder %v3148, %v982
        %vm3165 = vcmp.eq.f32.partialorder %v3148, %v983
        %v3166 = vsel %vm3150, 1.0, %v3130
        %v3167 = vsel %vm3151, 1.0, %v3131
        %v3168 = vsel %vm3152, 1.0, %v3132
        %v3169 = vsel %vm3153, 1.0, %v3133
        %v3170 = vsel %vm3154, 1.0, %v3134
        %v3171 = vsel %vm3155, 1.0, %v3135
        %v3172 = vsel %vm3156, 1.0, %v3136
        %v3173 = vsel %vm3157, 1.0, %v3137
        %v3174 = vsel %vm3158, 1.0, %v3138
        %v3175 = vsel %vm3159, 1.0, %v3139
        %v3176 = vsel %vm3160, 1.0, %v3140
        %v3177 = vsel %vm3161, 1.0, %v3141
        %v3178 = vsel %vm3162, 1.0, %v3142
        %v3179 = vsel %vm3163, 1.0, %v3143
        %v3180 = vsel %vm3164, 1.0, %v3144
        %v3181 = vsel %vm3165, 1.0, %v3145
        %3182 = vset.pattern.permute.xlu0 61
        %3183 = vperm.xlu0 %3182, %v984
        %v3184 = vpop.permute.xlu0 %3183
        %vm3186 = vcmp.eq.f32.partialorder %v3184, %v968
        %vm3187 = vcmp.eq.f32.partialorder %v3184, %v969
        %vm3188 = vcmp.eq.f32.partialorder %v3184, %v970
        %vm3189 = vcmp.eq.f32.partialorder %v3184, %v971
        %vm3190 = vcmp.eq.f32.partialorder %v3184, %v972
        %vm3191 = vcmp.eq.f32.partialorder %v3184, %v973
        %vm3192 = vcmp.eq.f32.partialorder %v3184, %v974
        %vm3193 = vcmp.eq.f32.partialorder %v3184, %v975
        %vm3194 = vcmp.eq.f32.partialorder %v3184, %v976
        %vm3195 = vcmp.eq.f32.partialorder %v3184, %v977
        %vm3196 = vcmp.eq.f32.partialorder %v3184, %v978
        %vm3197 = vcmp.eq.f32.partialorder %v3184, %v979
        %vm3198 = vcmp.eq.f32.partialorder %v3184, %v980
        %vm3199 = vcmp.eq.f32.partialorder %v3184, %v981
        %vm3200 = vcmp.eq.f32.partialorder %v3184, %v982
        %vm3201 = vcmp.eq.f32.partialorder %v3184, %v983
        %v3202 = vsel %vm3186, 1.0, %v3166
        %v3203 = vsel %vm3187, 1.0, %v3167
        %v3204 = vsel %vm3188, 1.0, %v3168
        %v3205 = vsel %vm3189, 1.0, %v3169
        %v3206 = vsel %vm3190, 1.0, %v3170
        %v3207 = vsel %vm3191, 1.0, %v3171
        %v3208 = vsel %vm3192, 1.0, %v3172
        %v3209 = vsel %vm3193, 1.0, %v3173
        %v3210 = vsel %vm3194, 1.0, %v3174
        %v3211 = vsel %vm3195, 1.0, %v3175
        %v3212 = vsel %vm3196, 1.0, %v3176
        %v3213 = vsel %vm3197, 1.0, %v3177
        %v3214 = vsel %vm3198, 1.0, %v3178
        %v3215 = vsel %vm3199, 1.0, %v3179
        %v3216 = vsel %vm3200, 1.0, %v3180
        %v3217 = vsel %vm3201, 1.0, %v3181
        %3218 = vset.pattern.permute.xlu0 62
        %3219 = vperm.xlu0 %3218, %v984
        %v3220 = vpop.permute.xlu0 %3219
        %vm3222 = vcmp.eq.f32.partialorder %v3220, %v968
        %vm3223 = vcmp.eq.f32.partialorder %v3220, %v969
        %vm3224 = vcmp.eq.f32.partialorder %v3220, %v970
        %vm3225 = vcmp.eq.f32.partialorder %v3220, %v971
        %vm3226 = vcmp.eq.f32.partialorder %v3220, %v972
        %vm3227 = vcmp.eq.f32.partialorder %v3220, %v973
        %vm3228 = vcmp.eq.f32.partialorder %v3220, %v974
        %vm3229 = vcmp.eq.f32.partialorder %v3220, %v975
        %vm3230 = vcmp.eq.f32.partialorder %v3220, %v976
        %vm3231 = vcmp.eq.f32.partialorder %v3220, %v977
        %vm3232 = vcmp.eq.f32.partialorder %v3220, %v978
        %vm3233 = vcmp.eq.f32.partialorder %v3220, %v979
        %vm3234 = vcmp.eq.f32.partialorder %v3220, %v980
        %vm3235 = vcmp.eq.f32.partialorder %v3220, %v981
        %vm3236 = vcmp.eq.f32.partialorder %v3220, %v982
        %vm3237 = vcmp.eq.f32.partialorder %v3220, %v983
        %v3238 = vsel %vm3222, 1.0, %v3202
        %v3239 = vsel %vm3223, 1.0, %v3203
        %v3240 = vsel %vm3224, 1.0, %v3204
        %v3241 = vsel %vm3225, 1.0, %v3205
        %v3242 = vsel %vm3226, 1.0, %v3206
        %v3243 = vsel %vm3227, 1.0, %v3207
        %v3244 = vsel %vm3228, 1.0, %v3208
        %v3245 = vsel %vm3229, 1.0, %v3209
        %v3246 = vsel %vm3230, 1.0, %v3210
        %v3247 = vsel %vm3231, 1.0, %v3211
        %v3248 = vsel %vm3232, 1.0, %v3212
        %v3249 = vsel %vm3233, 1.0, %v3213
        %v3250 = vsel %vm3234, 1.0, %v3214
        %v3251 = vsel %vm3235, 1.0, %v3215
        %v3252 = vsel %vm3236, 1.0, %v3216
        %v3253 = vsel %vm3237, 1.0, %v3217
        %3254 = vset.pattern.permute.xlu0 63
        %3255 = vperm.xlu0 %3254, %v984
        %v3256 = vpop.permute.xlu0 %3255
        %vm3258 = vcmp.eq.f32.partialorder %v3256, %v968
        %vm3259 = vcmp.eq.f32.partialorder %v3256, %v969
        %vm3260 = vcmp.eq.f32.partialorder %v3256, %v970
        %vm3261 = vcmp.eq.f32.partialorder %v3256, %v971
        %vm3262 = vcmp.eq.f32.partialorder %v3256, %v972
        %vm3263 = vcmp.eq.f32.partialorder %v3256, %v973
        %vm3264 = vcmp.eq.f32.partialorder %v3256, %v974
        %vm3265 = vcmp.eq.f32.partialorder %v3256, %v975
        %vm3266 = vcmp.eq.f32.partialorder %v3256, %v976
        %vm3267 = vcmp.eq.f32.partialorder %v3256, %v977
        %vm3268 = vcmp.eq.f32.partialorder %v3256, %v978
        %vm3269 = vcmp.eq.f32.partialorder %v3256, %v979
        %vm3270 = vcmp.eq.f32.partialorder %v3256, %v980
        %vm3271 = vcmp.eq.f32.partialorder %v3256, %v981
        %vm3272 = vcmp.eq.f32.partialorder %v3256, %v982
        %vm3273 = vcmp.eq.f32.partialorder %v3256, %v983
        %v3274 = vsel %vm3258, 1.0, %v3238
        %v3275 = vsel %vm3259, 1.0, %v3239
        %v3276 = vsel %vm3260, 1.0, %v3240
        %v3277 = vsel %vm3261, 1.0, %v3241
        %v3278 = vsel %vm3262, 1.0, %v3242
        %v3279 = vsel %vm3263, 1.0, %v3243
        %v3280 = vsel %vm3264, 1.0, %v3244
        %v3281 = vsel %vm3265, 1.0, %v3245
        %v3282 = vsel %vm3266, 1.0, %v3246
        %v3283 = vsel %vm3267, 1.0, %v3247
        %v3284 = vsel %vm3268, 1.0, %v3248
        %v3285 = vsel %vm3269, 1.0, %v3249
        %v3286 = vsel %vm3270, 1.0, %v3250
        %v3287 = vsel %vm3271, 1.0, %v3251
        %v3288 = vsel %vm3272, 1.0, %v3252
        %v3289 = vsel %vm3273, 1.0, %v3253
        %3290 = vset.pattern.permute.xlu0 64
        %3291 = vperm.xlu0 %3290, %v984
        %v3292 = vpop.permute.xlu0 %3291
        %vm3294 = vcmp.eq.f32.partialorder %v3292, %v968
        %vm3295 = vcmp.eq.f32.partialorder %v3292, %v969
        %vm3296 = vcmp.eq.f32.partialorder %v3292, %v970
        %vm3297 = vcmp.eq.f32.partialorder %v3292, %v971
        %vm3298 = vcmp.eq.f32.partialorder %v3292, %v972
        %vm3299 = vcmp.eq.f32.partialorder %v3292, %v973
        %vm3300 = vcmp.eq.f32.partialorder %v3292, %v974
        %vm3301 = vcmp.eq.f32.partialorder %v3292, %v975
        %vm3302 = vcmp.eq.f32.partialorder %v3292, %v976
        %vm3303 = vcmp.eq.f32.partialorder %v3292, %v977
        %vm3304 = vcmp.eq.f32.partialorder %v3292, %v978
        %vm3305 = vcmp.eq.f32.partialorder %v3292, %v979
        %vm3306 = vcmp.eq.f32.partialorder %v3292, %v980
        %vm3307 = vcmp.eq.f32.partialorder %v3292, %v981
        %vm3308 = vcmp.eq.f32.partialorder %v3292, %v982
        %vm3309 = vcmp.eq.f32.partialorder %v3292, %v983
        %v3310 = vsel %vm3294, 1.0, %v3274
        %v3311 = vsel %vm3295, 1.0, %v3275
        %v3312 = vsel %vm3296, 1.0, %v3276
        %v3313 = vsel %vm3297, 1.0, %v3277
        %v3314 = vsel %vm3298, 1.0, %v3278
        %v3315 = vsel %vm3299, 1.0, %v3279
        %v3316 = vsel %vm3300, 1.0, %v3280
        %v3317 = vsel %vm3301, 1.0, %v3281
        %v3318 = vsel %vm3302, 1.0, %v3282
        %v3319 = vsel %vm3303, 1.0, %v3283
        %v3320 = vsel %vm3304, 1.0, %v3284
        %v3321 = vsel %vm3305, 1.0, %v3285
        %v3322 = vsel %vm3306, 1.0, %v3286
        %v3323 = vsel %vm3307, 1.0, %v3287
        %v3324 = vsel %vm3308, 1.0, %v3288
        %v3325 = vsel %vm3309, 1.0, %v3289
        %3326 = vset.pattern.permute.xlu0 65
        %3327 = vperm.xlu0 %3326, %v984
        %v3328 = vpop.permute.xlu0 %3327
        %vm3330 = vcmp.eq.f32.partialorder %v3328, %v968
        %vm3331 = vcmp.eq.f32.partialorder %v3328, %v969
        %vm3332 = vcmp.eq.f32.partialorder %v3328, %v970
        %vm3333 = vcmp.eq.f32.partialorder %v3328, %v971
        %vm3334 = vcmp.eq.f32.partialorder %v3328, %v972
        %vm3335 = vcmp.eq.f32.partialorder %v3328, %v973
        %vm3336 = vcmp.eq.f32.partialorder %v3328, %v974
        %vm3337 = vcmp.eq.f32.partialorder %v3328, %v975
        %vm3338 = vcmp.eq.f32.partialorder %v3328, %v976
        %vm3339 = vcmp.eq.f32.partialorder %v3328, %v977
        %vm3340 = vcmp.eq.f32.partialorder %v3328, %v978
        %vm3341 = vcmp.eq.f32.partialorder %v3328, %v979
        %vm3342 = vcmp.eq.f32.partialorder %v3328, %v980
        %vm3343 = vcmp.eq.f32.partialorder %v3328, %v981
        %vm3344 = vcmp.eq.f32.partialorder %v3328, %v982
        %vm3345 = vcmp.eq.f32.partialorder %v3328, %v983
        %v3346 = vsel %vm3330, 1.0, %v3310
        %v3347 = vsel %vm3331, 1.0, %v3311
        %v3348 = vsel %vm3332, 1.0, %v3312
        %v3349 = vsel %vm3333, 1.0, %v3313
        %v3350 = vsel %vm3334, 1.0, %v3314
        %v3351 = vsel %vm3335, 1.0, %v3315
        %v3352 = vsel %vm3336, 1.0, %v3316
        %v3353 = vsel %vm3337, 1.0, %v3317
        %v3354 = vsel %vm3338, 1.0, %v3318
        %v3355 = vsel %vm3339, 1.0, %v3319
        %v3356 = vsel %vm3340, 1.0, %v3320
        %v3357 = vsel %vm3341, 1.0, %v3321
        %v3358 = vsel %vm3342, 1.0, %v3322
        %v3359 = vsel %vm3343, 1.0, %v3323
        %v3360 = vsel %vm3344, 1.0, %v3324
        %v3361 = vsel %vm3345, 1.0, %v3325
        %3362 = vset.pattern.permute.xlu0 66
        %3363 = vperm.xlu0 %3362, %v984
        %v3364 = vpop.permute.xlu0 %3363
        %vm3366 = vcmp.eq.f32.partialorder %v3364, %v968
        %vm3367 = vcmp.eq.f32.partialorder %v3364, %v969
        %vm3368 = vcmp.eq.f32.partialorder %v3364, %v970
        %vm3369 = vcmp.eq.f32.partialorder %v3364, %v971
        %vm3370 = vcmp.eq.f32.partialorder %v3364, %v972
        %vm3371 = vcmp.eq.f32.partialorder %v3364, %v973
        %vm3372 = vcmp.eq.f32.partialorder %v3364, %v974
        %vm3373 = vcmp.eq.f32.partialorder %v3364, %v975
        %vm3374 = vcmp.eq.f32.partialorder %v3364, %v976
        %vm3375 = vcmp.eq.f32.partialorder %v3364, %v977
        %vm3376 = vcmp.eq.f32.partialorder %v3364, %v978
        %vm3377 = vcmp.eq.f32.partialorder %v3364, %v979
        %vm3378 = vcmp.eq.f32.partialorder %v3364, %v980
        %vm3379 = vcmp.eq.f32.partialorder %v3364, %v981
        %vm3380 = vcmp.eq.f32.partialorder %v3364, %v982
        %vm3381 = vcmp.eq.f32.partialorder %v3364, %v983
        %v3382 = vsel %vm3366, 1.0, %v3346
        %v3383 = vsel %vm3367, 1.0, %v3347
        %v3384 = vsel %vm3368, 1.0, %v3348
        %v3385 = vsel %vm3369, 1.0, %v3349
        %v3386 = vsel %vm3370, 1.0, %v3350
        %v3387 = vsel %vm3371, 1.0, %v3351
        %v3388 = vsel %vm3372, 1.0, %v3352
        %v3389 = vsel %vm3373, 1.0, %v3353
        %v3390 = vsel %vm3374, 1.0, %v3354
        %v3391 = vsel %vm3375, 1.0, %v3355
        %v3392 = vsel %vm3376, 1.0, %v3356
        %v3393 = vsel %vm3377, 1.0, %v3357
        %v3394 = vsel %vm3378, 1.0, %v3358
        %v3395 = vsel %vm3379, 1.0, %v3359
        %v3396 = vsel %vm3380, 1.0, %v3360
        %v3397 = vsel %vm3381, 1.0, %v3361
        %3398 = vset.pattern.permute.xlu0 67
        %3399 = vperm.xlu0 %3398, %v984
        %v3400 = vpop.permute.xlu0 %3399
        %vm3402 = vcmp.eq.f32.partialorder %v3400, %v968
        %vm3403 = vcmp.eq.f32.partialorder %v3400, %v969
        %vm3404 = vcmp.eq.f32.partialorder %v3400, %v970
        %vm3405 = vcmp.eq.f32.partialorder %v3400, %v971
        %vm3406 = vcmp.eq.f32.partialorder %v3400, %v972
        %vm3407 = vcmp.eq.f32.partialorder %v3400, %v973
        %vm3408 = vcmp.eq.f32.partialorder %v3400, %v974
        %vm3409 = vcmp.eq.f32.partialorder %v3400, %v975
        %vm3410 = vcmp.eq.f32.partialorder %v3400, %v976
        %vm3411 = vcmp.eq.f32.partialorder %v3400, %v977
        %vm3412 = vcmp.eq.f32.partialorder %v3400, %v978
        %vm3413 = vcmp.eq.f32.partialorder %v3400, %v979
        %vm3414 = vcmp.eq.f32.partialorder %v3400, %v980
        %vm3415 = vcmp.eq.f32.partialorder %v3400, %v981
        %vm3416 = vcmp.eq.f32.partialorder %v3400, %v982
        %vm3417 = vcmp.eq.f32.partialorder %v3400, %v983
        %v3418 = vsel %vm3402, 1.0, %v3382
        %v3419 = vsel %vm3403, 1.0, %v3383
        %v3420 = vsel %vm3404, 1.0, %v3384
        %v3421 = vsel %vm3405, 1.0, %v3385
        %v3422 = vsel %vm3406, 1.0, %v3386
        %v3423 = vsel %vm3407, 1.0, %v3387
        %v3424 = vsel %vm3408, 1.0, %v3388
        %v3425 = vsel %vm3409, 1.0, %v3389
        %v3426 = vsel %vm3410, 1.0, %v3390
        %v3427 = vsel %vm3411, 1.0, %v3391
        %v3428 = vsel %vm3412, 1.0, %v3392
        %v3429 = vsel %vm3413, 1.0, %v3393
        %v3430 = vsel %vm3414, 1.0, %v3394
        %v3431 = vsel %vm3415, 1.0, %v3395
        %v3432 = vsel %vm3416, 1.0, %v3396
        %v3433 = vsel %vm3417, 1.0, %v3397
        %3434 = vset.pattern.permute.xlu0 68
        %3435 = vperm.xlu0 %3434, %v984
        %v3436 = vpop.permute.xlu0 %3435
        %vm3438 = vcmp.eq.f32.partialorder %v3436, %v968
        %vm3439 = vcmp.eq.f32.partialorder %v3436, %v969
        %vm3440 = vcmp.eq.f32.partialorder %v3436, %v970
        %vm3441 = vcmp.eq.f32.partialorder %v3436, %v971
        %vm3442 = vcmp.eq.f32.partialorder %v3436, %v972
        %vm3443 = vcmp.eq.f32.partialorder %v3436, %v973
        %vm3444 = vcmp.eq.f32.partialorder %v3436, %v974
        %vm3445 = vcmp.eq.f32.partialorder %v3436, %v975
        %vm3446 = vcmp.eq.f32.partialorder %v3436, %v976
        %vm3447 = vcmp.eq.f32.partialorder %v3436, %v977
        %vm3448 = vcmp.eq.f32.partialorder %v3436, %v978
        %vm3449 = vcmp.eq.f32.partialorder %v3436, %v979
        %vm3450 = vcmp.eq.f32.partialorder %v3436, %v980
        %vm3451 = vcmp.eq.f32.partialorder %v3436, %v981
        %vm3452 = vcmp.eq.f32.partialorder %v3436, %v982
        %vm3453 = vcmp.eq.f32.partialorder %v3436, %v983
        %v3454 = vsel %vm3438, 1.0, %v3418
        %v3455 = vsel %vm3439, 1.0, %v3419
        %v3456 = vsel %vm3440, 1.0, %v3420
        %v3457 = vsel %vm3441, 1.0, %v3421
        %v3458 = vsel %vm3442, 1.0, %v3422
        %v3459 = vsel %vm3443, 1.0, %v3423
        %v3460 = vsel %vm3444, 1.0, %v3424
        %v3461 = vsel %vm3445, 1.0, %v3425
        %v3462 = vsel %vm3446, 1.0, %v3426
        %v3463 = vsel %vm3447, 1.0, %v3427
        %v3464 = vsel %vm3448, 1.0, %v3428
        %v3465 = vsel %vm3449, 1.0, %v3429
        %v3466 = vsel %vm3450, 1.0, %v3430
        %v3467 = vsel %vm3451, 1.0, %v3431
        %v3468 = vsel %vm3452, 1.0, %v3432
        %v3469 = vsel %vm3453, 1.0, %v3433
        %3470 = vset.pattern.permute.xlu0 69
        %3471 = vperm.xlu0 %3470, %v984
        %v3472 = vpop.permute.xlu0 %3471
        %vm3474 = vcmp.eq.f32.partialorder %v3472, %v968
        %vm3475 = vcmp.eq.f32.partialorder %v3472, %v969
        %vm3476 = vcmp.eq.f32.partialorder %v3472, %v970
        %vm3477 = vcmp.eq.f32.partialorder %v3472, %v971
        %vm3478 = vcmp.eq.f32.partialorder %v3472, %v972
        %vm3479 = vcmp.eq.f32.partialorder %v3472, %v973
        %vm3480 = vcmp.eq.f32.partialorder %v3472, %v974
        %vm3481 = vcmp.eq.f32.partialorder %v3472, %v975
        %vm3482 = vcmp.eq.f32.partialorder %v3472, %v976
        %vm3483 = vcmp.eq.f32.partialorder %v3472, %v977
        %vm3484 = vcmp.eq.f32.partialorder %v3472, %v978
        %vm3485 = vcmp.eq.f32.partialorder %v3472, %v979
        %vm3486 = vcmp.eq.f32.partialorder %v3472, %v980
        %vm3487 = vcmp.eq.f32.partialorder %v3472, %v981
        %vm3488 = vcmp.eq.f32.partialorder %v3472, %v982
        %vm3489 = vcmp.eq.f32.partialorder %v3472, %v983
        %v3490 = vsel %vm3474, 1.0, %v3454
        %v3491 = vsel %vm3475, 1.0, %v3455
        %v3492 = vsel %vm3476, 1.0, %v3456
        %v3493 = vsel %vm3477, 1.0, %v3457
        %v3494 = vsel %vm3478, 1.0, %v3458
        %v3495 = vsel %vm3479, 1.0, %v3459
        %v3496 = vsel %vm3480, 1.0, %v3460
        %v3497 = vsel %vm3481, 1.0, %v3461
        %v3498 = vsel %vm3482, 1.0, %v3462
        %v3499 = vsel %vm3483, 1.0, %v3463
        %v3500 = vsel %vm3484, 1.0, %v3464
        %v3501 = vsel %vm3485, 1.0, %v3465
        %v3502 = vsel %vm3486, 1.0, %v3466
        %v3503 = vsel %vm3487, 1.0, %v3467
        %v3504 = vsel %vm3488, 1.0, %v3468
        %v3505 = vsel %vm3489, 1.0, %v3469
        %3506 = vset.pattern.permute.xlu0 70
        %3507 = vperm.xlu0 %3506, %v984
        %v3508 = vpop.permute.xlu0 %3507
        %vm3510 = vcmp.eq.f32.partialorder %v3508, %v968
        %vm3511 = vcmp.eq.f32.partialorder %v3508, %v969
        %vm3512 = vcmp.eq.f32.partialorder %v3508, %v970
        %vm3513 = vcmp.eq.f32.partialorder %v3508, %v971
        %vm3514 = vcmp.eq.f32.partialorder %v3508, %v972
        %vm3515 = vcmp.eq.f32.partialorder %v3508, %v973
        %vm3516 = vcmp.eq.f32.partialorder %v3508, %v974
        %vm3517 = vcmp.eq.f32.partialorder %v3508, %v975
        %vm3518 = vcmp.eq.f32.partialorder %v3508, %v976
        %vm3519 = vcmp.eq.f32.partialorder %v3508, %v977
        %vm3520 = vcmp.eq.f32.partialorder %v3508, %v978
        %vm3521 = vcmp.eq.f32.partialorder %v3508, %v979
        %vm3522 = vcmp.eq.f32.partialorder %v3508, %v980
        %vm3523 = vcmp.eq.f32.partialorder %v3508, %v981
        %vm3524 = vcmp.eq.f32.partialorder %v3508, %v982
        %vm3525 = vcmp.eq.f32.partialorder %v3508, %v983
        %v3526 = vsel %vm3510, 1.0, %v3490
        %v3527 = vsel %vm3511, 1.0, %v3491
        %v3528 = vsel %vm3512, 1.0, %v3492
        %v3529 = vsel %vm3513, 1.0, %v3493
        %v3530 = vsel %vm3514, 1.0, %v3494
        %v3531 = vsel %vm3515, 1.0, %v3495
        %v3532 = vsel %vm3516, 1.0, %v3496
        %v3533 = vsel %vm3517, 1.0, %v3497
        %v3534 = vsel %vm3518, 1.0, %v3498
        %v3535 = vsel %vm3519, 1.0, %v3499
        %v3536 = vsel %vm3520, 1.0, %v3500
        %v3537 = vsel %vm3521, 1.0, %v3501
        %v3538 = vsel %vm3522, 1.0, %v3502
        %v3539 = vsel %vm3523, 1.0, %v3503
        %v3540 = vsel %vm3524, 1.0, %v3504
        %v3541 = vsel %vm3525, 1.0, %v3505
        %3542 = vset.pattern.permute.xlu0 71
        %3543 = vperm.xlu0 %3542, %v984
        %v3544 = vpop.permute.xlu0 %3543
        %vm3546 = vcmp.eq.f32.partialorder %v3544, %v968
        %vm3547 = vcmp.eq.f32.partialorder %v3544, %v969
        %vm3548 = vcmp.eq.f32.partialorder %v3544, %v970
        %vm3549 = vcmp.eq.f32.partialorder %v3544, %v971
        %vm3550 = vcmp.eq.f32.partialorder %v3544, %v972
        %vm3551 = vcmp.eq.f32.partialorder %v3544, %v973
        %vm3552 = vcmp.eq.f32.partialorder %v3544, %v974
        %vm3553 = vcmp.eq.f32.partialorder %v3544, %v975
        %vm3554 = vcmp.eq.f32.partialorder %v3544, %v976
        %vm3555 = vcmp.eq.f32.partialorder %v3544, %v977
        %vm3556 = vcmp.eq.f32.partialorder %v3544, %v978
        %vm3557 = vcmp.eq.f32.partialorder %v3544, %v979
        %vm3558 = vcmp.eq.f32.partialorder %v3544, %v980
        %vm3559 = vcmp.eq.f32.partialorder %v3544, %v981
        %vm3560 = vcmp.eq.f32.partialorder %v3544, %v982
        %vm3561 = vcmp.eq.f32.partialorder %v3544, %v983
        %v3562 = vsel %vm3546, 1.0, %v3526
        %v3563 = vsel %vm3547, 1.0, %v3527
        %v3564 = vsel %vm3548, 1.0, %v3528
        %v3565 = vsel %vm3549, 1.0, %v3529
        %v3566 = vsel %vm3550, 1.0, %v3530
        %v3567 = vsel %vm3551, 1.0, %v3531
        %v3568 = vsel %vm3552, 1.0, %v3532
        %v3569 = vsel %vm3553, 1.0, %v3533
        %v3570 = vsel %vm3554, 1.0, %v3534
        %v3571 = vsel %vm3555, 1.0, %v3535
        %v3572 = vsel %vm3556, 1.0, %v3536
        %v3573 = vsel %vm3557, 1.0, %v3537
        %v3574 = vsel %vm3558, 1.0, %v3538
        %v3575 = vsel %vm3559, 1.0, %v3539
        %v3576 = vsel %vm3560, 1.0, %v3540
        %v3577 = vsel %vm3561, 1.0, %v3541
        %3578 = vset.pattern.permute.xlu0 72
        %3579 = vperm.xlu0 %3578, %v984
        %v3580 = vpop.permute.xlu0 %3579
        %vm3582 = vcmp.eq.f32.partialorder %v3580, %v968
        %vm3583 = vcmp.eq.f32.partialorder %v3580, %v969
        %vm3584 = vcmp.eq.f32.partialorder %v3580, %v970
        %vm3585 = vcmp.eq.f32.partialorder %v3580, %v971
        %vm3586 = vcmp.eq.f32.partialorder %v3580, %v972
        %vm3587 = vcmp.eq.f32.partialorder %v3580, %v973
        %vm3588 = vcmp.eq.f32.partialorder %v3580, %v974
        %vm3589 = vcmp.eq.f32.partialorder %v3580, %v975
        %vm3590 = vcmp.eq.f32.partialorder %v3580, %v976
        %vm3591 = vcmp.eq.f32.partialorder %v3580, %v977
        %vm3592 = vcmp.eq.f32.partialorder %v3580, %v978
        %vm3593 = vcmp.eq.f32.partialorder %v3580, %v979
        %vm3594 = vcmp.eq.f32.partialorder %v3580, %v980
        %vm3595 = vcmp.eq.f32.partialorder %v3580, %v981
        %vm3596 = vcmp.eq.f32.partialorder %v3580, %v982
        %vm3597 = vcmp.eq.f32.partialorder %v3580, %v983
        %v3598 = vsel %vm3582, 1.0, %v3562
        %v3599 = vsel %vm3583, 1.0, %v3563
        %v3600 = vsel %vm3584, 1.0, %v3564
        %v3601 = vsel %vm3585, 1.0, %v3565
        %v3602 = vsel %vm3586, 1.0, %v3566
        %v3603 = vsel %vm3587, 1.0, %v3567
        %v3604 = vsel %vm3588, 1.0, %v3568
        %v3605 = vsel %vm3589, 1.0, %v3569
        %v3606 = vsel %vm3590, 1.0, %v3570
        %v3607 = vsel %vm3591, 1.0, %v3571
        %v3608 = vsel %vm3592, 1.0, %v3572
        %v3609 = vsel %vm3593, 1.0, %v3573
        %v3610 = vsel %vm3594, 1.0, %v3574
        %v3611 = vsel %vm3595, 1.0, %v3575
        %v3612 = vsel %vm3596, 1.0, %v3576
        %v3613 = vsel %vm3597, 1.0, %v3577
        %3614 = vset.pattern.permute.xlu0 73
        %3615 = vperm.xlu0 %3614, %v984
        %v3616 = vpop.permute.xlu0 %3615
        %vm3618 = vcmp.eq.f32.partialorder %v3616, %v968
        %vm3619 = vcmp.eq.f32.partialorder %v3616, %v969
        %vm3620 = vcmp.eq.f32.partialorder %v3616, %v970
        %vm3621 = vcmp.eq.f32.partialorder %v3616, %v971
        %vm3622 = vcmp.eq.f32.partialorder %v3616, %v972
        %vm3623 = vcmp.eq.f32.partialorder %v3616, %v973
        %vm3624 = vcmp.eq.f32.partialorder %v3616, %v974
        %vm3625 = vcmp.eq.f32.partialorder %v3616, %v975
        %vm3626 = vcmp.eq.f32.partialorder %v3616, %v976
        %vm3627 = vcmp.eq.f32.partialorder %v3616, %v977
        %vm3628 = vcmp.eq.f32.partialorder %v3616, %v978
        %vm3629 = vcmp.eq.f32.partialorder %v3616, %v979
        %vm3630 = vcmp.eq.f32.partialorder %v3616, %v980
        %vm3631 = vcmp.eq.f32.partialorder %v3616, %v981
        %vm3632 = vcmp.eq.f32.partialorder %v3616, %v982
        %vm3633 = vcmp.eq.f32.partialorder %v3616, %v983
        %v3634 = vsel %vm3618, 1.0, %v3598
        %v3635 = vsel %vm3619, 1.0, %v3599
        %v3636 = vsel %vm3620, 1.0, %v3600
        %v3637 = vsel %vm3621, 1.0, %v3601
        %v3638 = vsel %vm3622, 1.0, %v3602
        %v3639 = vsel %vm3623, 1.0, %v3603
        %v3640 = vsel %vm3624, 1.0, %v3604
        %v3641 = vsel %vm3625, 1.0, %v3605
        %v3642 = vsel %vm3626, 1.0, %v3606
        %v3643 = vsel %vm3627, 1.0, %v3607
        %v3644 = vsel %vm3628, 1.0, %v3608
        %v3645 = vsel %vm3629, 1.0, %v3609
        %v3646 = vsel %vm3630, 1.0, %v3610
        %v3647 = vsel %vm3631, 1.0, %v3611
        %v3648 = vsel %vm3632, 1.0, %v3612
        %v3649 = vsel %vm3633, 1.0, %v3613
        %3650 = vset.pattern.permute.xlu0 74
        %3651 = vperm.xlu0 %3650, %v984
        %v3652 = vpop.permute.xlu0 %3651
        %vm3654 = vcmp.eq.f32.partialorder %v3652, %v968
        %vm3655 = vcmp.eq.f32.partialorder %v3652, %v969
        %vm3656 = vcmp.eq.f32.partialorder %v3652, %v970
        %vm3657 = vcmp.eq.f32.partialorder %v3652, %v971
        %vm3658 = vcmp.eq.f32.partialorder %v3652, %v972
        %vm3659 = vcmp.eq.f32.partialorder %v3652, %v973
        %vm3660 = vcmp.eq.f32.partialorder %v3652, %v974
        %vm3661 = vcmp.eq.f32.partialorder %v3652, %v975
        %vm3662 = vcmp.eq.f32.partialorder %v3652, %v976
        %vm3663 = vcmp.eq.f32.partialorder %v3652, %v977
        %vm3664 = vcmp.eq.f32.partialorder %v3652, %v978
        %vm3665 = vcmp.eq.f32.partialorder %v3652, %v979
        %vm3666 = vcmp.eq.f32.partialorder %v3652, %v980
        %vm3667 = vcmp.eq.f32.partialorder %v3652, %v981
        %vm3668 = vcmp.eq.f32.partialorder %v3652, %v982
        %vm3669 = vcmp.eq.f32.partialorder %v3652, %v983
        %v3670 = vsel %vm3654, 1.0, %v3634
        %v3671 = vsel %vm3655, 1.0, %v3635
        %v3672 = vsel %vm3656, 1.0, %v3636
        %v3673 = vsel %vm3657, 1.0, %v3637
        %v3674 = vsel %vm3658, 1.0, %v3638
        %v3675 = vsel %vm3659, 1.0, %v3639
        %v3676 = vsel %vm3660, 1.0, %v3640
        %v3677 = vsel %vm3661, 1.0, %v3641
        %v3678 = vsel %vm3662, 1.0, %v3642
        %v3679 = vsel %vm3663, 1.0, %v3643
        %v3680 = vsel %vm3664, 1.0, %v3644
        %v3681 = vsel %vm3665, 1.0, %v3645
        %v3682 = vsel %vm3666, 1.0, %v3646
        %v3683 = vsel %vm3667, 1.0, %v3647
        %v3684 = vsel %vm3668, 1.0, %v3648
        %v3685 = vsel %vm3669, 1.0, %v3649
        %3686 = vset.pattern.permute.xlu0 75
        %3687 = vperm.xlu0 %3686, %v984
        %v3688 = vpop.permute.xlu0 %3687
        %vm3690 = vcmp.eq.f32.partialorder %v3688, %v968
        %vm3691 = vcmp.eq.f32.partialorder %v3688, %v969
        %vm3692 = vcmp.eq.f32.partialorder %v3688, %v970
        %vm3693 = vcmp.eq.f32.partialorder %v3688, %v971
        %vm3694 = vcmp.eq.f32.partialorder %v3688, %v972
        %vm3695 = vcmp.eq.f32.partialorder %v3688, %v973
        %vm3696 = vcmp.eq.f32.partialorder %v3688, %v974
        %vm3697 = vcmp.eq.f32.partialorder %v3688, %v975
        %vm3698 = vcmp.eq.f32.partialorder %v3688, %v976
        %vm3699 = vcmp.eq.f32.partialorder %v3688, %v977
        %vm3700 = vcmp.eq.f32.partialorder %v3688, %v978
        %vm3701 = vcmp.eq.f32.partialorder %v3688, %v979
        %vm3702 = vcmp.eq.f32.partialorder %v3688, %v980
        %vm3703 = vcmp.eq.f32.partialorder %v3688, %v981
        %vm3704 = vcmp.eq.f32.partialorder %v3688, %v982
        %vm3705 = vcmp.eq.f32.partialorder %v3688, %v983
        %v3706 = vsel %vm3690, 1.0, %v3670
        %v3707 = vsel %vm3691, 1.0, %v3671
        %v3708 = vsel %vm3692, 1.0, %v3672
        %v3709 = vsel %vm3693, 1.0, %v3673
        %v3710 = vsel %vm3694, 1.0, %v3674
        %v3711 = vsel %vm3695, 1.0, %v3675
        %v3712 = vsel %vm3696, 1.0, %v3676
        %v3713 = vsel %vm3697, 1.0, %v3677
        %v3714 = vsel %vm3698, 1.0, %v3678
        %v3715 = vsel %vm3699, 1.0, %v3679
        %v3716 = vsel %vm3700, 1.0, %v3680
        %v3717 = vsel %vm3701, 1.0, %v3681
        %v3718 = vsel %vm3702, 1.0, %v3682
        %v3719 = vsel %vm3703, 1.0, %v3683
        %v3720 = vsel %vm3704, 1.0, %v3684
        %v3721 = vsel %vm3705, 1.0, %v3685
        %3722 = vset.pattern.permute.xlu0 76
        %3723 = vperm.xlu0 %3722, %v984
        %v3724 = vpop.permute.xlu0 %3723
        %vm3726 = vcmp.eq.f32.partialorder %v3724, %v968
        %vm3727 = vcmp.eq.f32.partialorder %v3724, %v969
        %vm3728 = vcmp.eq.f32.partialorder %v3724, %v970
        %vm3729 = vcmp.eq.f32.partialorder %v3724, %v971
        %vm3730 = vcmp.eq.f32.partialorder %v3724, %v972
        %vm3731 = vcmp.eq.f32.partialorder %v3724, %v973
        %vm3732 = vcmp.eq.f32.partialorder %v3724, %v974
        %vm3733 = vcmp.eq.f32.partialorder %v3724, %v975
        %vm3734 = vcmp.eq.f32.partialorder %v3724, %v976
        %vm3735 = vcmp.eq.f32.partialorder %v3724, %v977
        %vm3736 = vcmp.eq.f32.partialorder %v3724, %v978
        %vm3737 = vcmp.eq.f32.partialorder %v3724, %v979
        %vm3738 = vcmp.eq.f32.partialorder %v3724, %v980
        %vm3739 = vcmp.eq.f32.partialorder %v3724, %v981
        %vm3740 = vcmp.eq.f32.partialorder %v3724, %v982
        %vm3741 = vcmp.eq.f32.partialorder %v3724, %v983
        %v3742 = vsel %vm3726, 1.0, %v3706
        %v3743 = vsel %vm3727, 1.0, %v3707
        %v3744 = vsel %vm3728, 1.0, %v3708
        %v3745 = vsel %vm3729, 1.0, %v3709
        %v3746 = vsel %vm3730, 1.0, %v3710
        %v3747 = vsel %vm3731, 1.0, %v3711
        %v3748 = vsel %vm3732, 1.0, %v3712
        %v3749 = vsel %vm3733, 1.0, %v3713
        %v3750 = vsel %vm3734, 1.0, %v3714
        %v3751 = vsel %vm3735, 1.0, %v3715
        %v3752 = vsel %vm3736, 1.0, %v3716
        %v3753 = vsel %vm3737, 1.0, %v3717
        %v3754 = vsel %vm3738, 1.0, %v3718
        %v3755 = vsel %vm3739, 1.0, %v3719
        %v3756 = vsel %vm3740, 1.0, %v3720
        %v3757 = vsel %vm3741, 1.0, %v3721
        %3758 = vset.pattern.permute.xlu0 77
        %3759 = vperm.xlu0 %3758, %v984
        %v3760 = vpop.permute.xlu0 %3759
        %vm3762 = vcmp.eq.f32.partialorder %v3760, %v968
        %vm3763 = vcmp.eq.f32.partialorder %v3760, %v969
        %vm3764 = vcmp.eq.f32.partialorder %v3760, %v970
        %vm3765 = vcmp.eq.f32.partialorder %v3760, %v971
        %vm3766 = vcmp.eq.f32.partialorder %v3760, %v972
        %vm3767 = vcmp.eq.f32.partialorder %v3760, %v973
        %vm3768 = vcmp.eq.f32.partialorder %v3760, %v974
        %vm3769 = vcmp.eq.f32.partialorder %v3760, %v975
        %vm3770 = vcmp.eq.f32.partialorder %v3760, %v976
        %vm3771 = vcmp.eq.f32.partialorder %v3760, %v977
        %vm3772 = vcmp.eq.f32.partialorder %v3760, %v978
        %vm3773 = vcmp.eq.f32.partialorder %v3760, %v979
        %vm3774 = vcmp.eq.f32.partialorder %v3760, %v980
        %vm3775 = vcmp.eq.f32.partialorder %v3760, %v981
        %vm3776 = vcmp.eq.f32.partialorder %v3760, %v982
        %vm3777 = vcmp.eq.f32.partialorder %v3760, %v983
        %v3778 = vsel %vm3762, 1.0, %v3742
        %v3779 = vsel %vm3763, 1.0, %v3743
        %v3780 = vsel %vm3764, 1.0, %v3744
        %v3781 = vsel %vm3765, 1.0, %v3745
        %v3782 = vsel %vm3766, 1.0, %v3746
        %v3783 = vsel %vm3767, 1.0, %v3747
        %v3784 = vsel %vm3768, 1.0, %v3748
        %v3785 = vsel %vm3769, 1.0, %v3749
        %v3786 = vsel %vm3770, 1.0, %v3750
        %v3787 = vsel %vm3771, 1.0, %v3751
        %v3788 = vsel %vm3772, 1.0, %v3752
        %v3789 = vsel %vm3773, 1.0, %v3753
        %v3790 = vsel %vm3774, 1.0, %v3754
        %v3791 = vsel %vm3775, 1.0, %v3755
        %v3792 = vsel %vm3776, 1.0, %v3756
        %v3793 = vsel %vm3777, 1.0, %v3757
        %3794 = vset.pattern.permute.xlu0 78
        %3795 = vperm.xlu0 %3794, %v984
        %v3796 = vpop.permute.xlu0 %3795
        %vm3798 = vcmp.eq.f32.partialorder %v3796, %v968
        %vm3799 = vcmp.eq.f32.partialorder %v3796, %v969
        %vm3800 = vcmp.eq.f32.partialorder %v3796, %v970
        %vm3801 = vcmp.eq.f32.partialorder %v3796, %v971
        %vm3802 = vcmp.eq.f32.partialorder %v3796, %v972
        %vm3803 = vcmp.eq.f32.partialorder %v3796, %v973
        %vm3804 = vcmp.eq.f32.partialorder %v3796, %v974
        %vm3805 = vcmp.eq.f32.partialorder %v3796, %v975
        %vm3806 = vcmp.eq.f32.partialorder %v3796, %v976
        %vm3807 = vcmp.eq.f32.partialorder %v3796, %v977
        %vm3808 = vcmp.eq.f32.partialorder %v3796, %v978
        %vm3809 = vcmp.eq.f32.partialorder %v3796, %v979
        %vm3810 = vcmp.eq.f32.partialorder %v3796, %v980
        %vm3811 = vcmp.eq.f32.partialorder %v3796, %v981
        %vm3812 = vcmp.eq.f32.partialorder %v3796, %v982
        %vm3813 = vcmp.eq.f32.partialorder %v3796, %v983
        %v3814 = vsel %vm3798, 1.0, %v3778
        %v3815 = vsel %vm3799, 1.0, %v3779
        %v3816 = vsel %vm3800, 1.0, %v3780
        %v3817 = vsel %vm3801, 1.0, %v3781
        %v3818 = vsel %vm3802, 1.0, %v3782
        %v3819 = vsel %vm3803, 1.0, %v3783
        %v3820 = vsel %vm3804, 1.0, %v3784
        %v3821 = vsel %vm3805, 1.0, %v3785
        %v3822 = vsel %vm3806, 1.0, %v3786
        %v3823 = vsel %vm3807, 1.0, %v3787
        %v3824 = vsel %vm3808, 1.0, %v3788
        %v3825 = vsel %vm3809, 1.0, %v3789
        %v3826 = vsel %vm3810, 1.0, %v3790
        %v3827 = vsel %vm3811, 1.0, %v3791
        %v3828 = vsel %vm3812, 1.0, %v3792
        %v3829 = vsel %vm3813, 1.0, %v3793
        %3830 = vset.pattern.permute.xlu0 79
        %3831 = vperm.xlu0 %3830, %v984
        %v3832 = vpop.permute.xlu0 %3831
        %vm3834 = vcmp.eq.f32.partialorder %v3832, %v968
        %vm3835 = vcmp.eq.f32.partialorder %v3832, %v969
        %vm3836 = vcmp.eq.f32.partialorder %v3832, %v970
        %vm3837 = vcmp.eq.f32.partialorder %v3832, %v971
        %vm3838 = vcmp.eq.f32.partialorder %v3832, %v972
        %vm3839 = vcmp.eq.f32.partialorder %v3832, %v973
        %vm3840 = vcmp.eq.f32.partialorder %v3832, %v974
        %vm3841 = vcmp.eq.f32.partialorder %v3832, %v975
        %vm3842 = vcmp.eq.f32.partialorder %v3832, %v976
        %vm3843 = vcmp.eq.f32.partialorder %v3832, %v977
        %vm3844 = vcmp.eq.f32.partialorder %v3832, %v978
        %vm3845 = vcmp.eq.f32.partialorder %v3832, %v979
        %vm3846 = vcmp.eq.f32.partialorder %v3832, %v980
        %vm3847 = vcmp.eq.f32.partialorder %v3832, %v981
        %vm3848 = vcmp.eq.f32.partialorder %v3832, %v982
        %vm3849 = vcmp.eq.f32.partialorder %v3832, %v983
        %v3850 = vsel %vm3834, 1.0, %v3814
        %v3851 = vsel %vm3835, 1.0, %v3815
        %v3852 = vsel %vm3836, 1.0, %v3816
        %v3853 = vsel %vm3837, 1.0, %v3817
        %v3854 = vsel %vm3838, 1.0, %v3818
        %v3855 = vsel %vm3839, 1.0, %v3819
        %v3856 = vsel %vm3840, 1.0, %v3820
        %v3857 = vsel %vm3841, 1.0, %v3821
        %v3858 = vsel %vm3842, 1.0, %v3822
        %v3859 = vsel %vm3843, 1.0, %v3823
        %v3860 = vsel %vm3844, 1.0, %v3824
        %v3861 = vsel %vm3845, 1.0, %v3825
        %v3862 = vsel %vm3846, 1.0, %v3826
        %v3863 = vsel %vm3847, 1.0, %v3827
        %v3864 = vsel %vm3848, 1.0, %v3828
        %v3865 = vsel %vm3849, 1.0, %v3829
        %3866 = vset.pattern.permute.xlu0 80
        %3867 = vperm.xlu0 %3866, %v984
        %v3868 = vpop.permute.xlu0 %3867
        %vm3870 = vcmp.eq.f32.partialorder %v3868, %v968
        %vm3871 = vcmp.eq.f32.partialorder %v3868, %v969
        %vm3872 = vcmp.eq.f32.partialorder %v3868, %v970
        %vm3873 = vcmp.eq.f32.partialorder %v3868, %v971
        %vm3874 = vcmp.eq.f32.partialorder %v3868, %v972
        %vm3875 = vcmp.eq.f32.partialorder %v3868, %v973
        %vm3876 = vcmp.eq.f32.partialorder %v3868, %v974
        %vm3877 = vcmp.eq.f32.partialorder %v3868, %v975
        %vm3878 = vcmp.eq.f32.partialorder %v3868, %v976
        %vm3879 = vcmp.eq.f32.partialorder %v3868, %v977
        %vm3880 = vcmp.eq.f32.partialorder %v3868, %v978
        %vm3881 = vcmp.eq.f32.partialorder %v3868, %v979
        %vm3882 = vcmp.eq.f32.partialorder %v3868, %v980
        %vm3883 = vcmp.eq.f32.partialorder %v3868, %v981
        %vm3884 = vcmp.eq.f32.partialorder %v3868, %v982
        %vm3885 = vcmp.eq.f32.partialorder %v3868, %v983
        %v3886 = vsel %vm3870, 1.0, %v3850
        %v3887 = vsel %vm3871, 1.0, %v3851
        %v3888 = vsel %vm3872, 1.0, %v3852
        %v3889 = vsel %vm3873, 1.0, %v3853
        %v3890 = vsel %vm3874, 1.0, %v3854
        %v3891 = vsel %vm3875, 1.0, %v3855
        %v3892 = vsel %vm3876, 1.0, %v3856
        %v3893 = vsel %vm3877, 1.0, %v3857
        %v3894 = vsel %vm3878, 1.0, %v3858
        %v3895 = vsel %vm3879, 1.0, %v3859
        %v3896 = vsel %vm3880, 1.0, %v3860
        %v3897 = vsel %vm3881, 1.0, %v3861
        %v3898 = vsel %vm3882, 1.0, %v3862
        %v3899 = vsel %vm3883, 1.0, %v3863
        %v3900 = vsel %vm3884, 1.0, %v3864
        %v3901 = vsel %vm3885, 1.0, %v3865
        %3902 = vset.pattern.permute.xlu0 81
        %3903 = vperm.xlu0 %3902, %v984
        %v3904 = vpop.permute.xlu0 %3903
        %vm3906 = vcmp.eq.f32.partialorder %v3904, %v968
        %vm3907 = vcmp.eq.f32.partialorder %v3904, %v969
        %vm3908 = vcmp.eq.f32.partialorder %v3904, %v970
        %vm3909 = vcmp.eq.f32.partialorder %v3904, %v971
        %vm3910 = vcmp.eq.f32.partialorder %v3904, %v972
        %vm3911 = vcmp.eq.f32.partialorder %v3904, %v973
        %vm3912 = vcmp.eq.f32.partialorder %v3904, %v974
        %vm3913 = vcmp.eq.f32.partialorder %v3904, %v975
        %vm3914 = vcmp.eq.f32.partialorder %v3904, %v976
        %vm3915 = vcmp.eq.f32.partialorder %v3904, %v977
        %vm3916 = vcmp.eq.f32.partialorder %v3904, %v978
        %vm3917 = vcmp.eq.f32.partialorder %v3904, %v979
        %vm3918 = vcmp.eq.f32.partialorder %v3904, %v980
        %vm3919 = vcmp.eq.f32.partialorder %v3904, %v981
        %vm3920 = vcmp.eq.f32.partialorder %v3904, %v982
        %vm3921 = vcmp.eq.f32.partialorder %v3904, %v983
        %v3922 = vsel %vm3906, 1.0, %v3886
        %v3923 = vsel %vm3907, 1.0, %v3887
        %v3924 = vsel %vm3908, 1.0, %v3888
        %v3925 = vsel %vm3909, 1.0, %v3889
        %v3926 = vsel %vm3910, 1.0, %v3890
        %v3927 = vsel %vm3911, 1.0, %v3891
        %v3928 = vsel %vm3912, 1.0, %v3892
        %v3929 = vsel %vm3913, 1.0, %v3893
        %v3930 = vsel %vm3914, 1.0, %v3894
        %v3931 = vsel %vm3915, 1.0, %v3895
        %v3932 = vsel %vm3916, 1.0, %v3896
        %v3933 = vsel %vm3917, 1.0, %v3897
        %v3934 = vsel %vm3918, 1.0, %v3898
        %v3935 = vsel %vm3919, 1.0, %v3899
        %v3936 = vsel %vm3920, 1.0, %v3900
        %v3937 = vsel %vm3921, 1.0, %v3901
        %3938 = vset.pattern.permute.xlu0 82
        %3939 = vperm.xlu0 %3938, %v984
        %v3940 = vpop.permute.xlu0 %3939
        %vm3942 = vcmp.eq.f32.partialorder %v3940, %v968
        %vm3943 = vcmp.eq.f32.partialorder %v3940, %v969
        %vm3944 = vcmp.eq.f32.partialorder %v3940, %v970
        %vm3945 = vcmp.eq.f32.partialorder %v3940, %v971
        %vm3946 = vcmp.eq.f32.partialorder %v3940, %v972
        %vm3947 = vcmp.eq.f32.partialorder %v3940, %v973
        %vm3948 = vcmp.eq.f32.partialorder %v3940, %v974
        %vm3949 = vcmp.eq.f32.partialorder %v3940, %v975
        %vm3950 = vcmp.eq.f32.partialorder %v3940, %v976
        %vm3951 = vcmp.eq.f32.partialorder %v3940, %v977
        %vm3952 = vcmp.eq.f32.partialorder %v3940, %v978
        %vm3953 = vcmp.eq.f32.partialorder %v3940, %v979
        %vm3954 = vcmp.eq.f32.partialorder %v3940, %v980
        %vm3955 = vcmp.eq.f32.partialorder %v3940, %v981
        %vm3956 = vcmp.eq.f32.partialorder %v3940, %v982
        %vm3957 = vcmp.eq.f32.partialorder %v3940, %v983
        %v3958 = vsel %vm3942, 1.0, %v3922
        %v3959 = vsel %vm3943, 1.0, %v3923
        %v3960 = vsel %vm3944, 1.0, %v3924
        %v3961 = vsel %vm3945, 1.0, %v3925
        %v3962 = vsel %vm3946, 1.0, %v3926
        %v3963 = vsel %vm3947, 1.0, %v3927
        %v3964 = vsel %vm3948, 1.0, %v3928
        %v3965 = vsel %vm3949, 1.0, %v3929
        %v3966 = vsel %vm3950, 1.0, %v3930
        %v3967 = vsel %vm3951, 1.0, %v3931
        %v3968 = vsel %vm3952, 1.0, %v3932
        %v3969 = vsel %vm3953, 1.0, %v3933
        %v3970 = vsel %vm3954, 1.0, %v3934
        %v3971 = vsel %vm3955, 1.0, %v3935
        %v3972 = vsel %vm3956, 1.0, %v3936
        %v3973 = vsel %vm3957, 1.0, %v3937
        %3974 = vset.pattern.permute.xlu0 83
        %3975 = vperm.xlu0 %3974, %v984
        %v3976 = vpop.permute.xlu0 %3975
        %vm3978 = vcmp.eq.f32.partialorder %v3976, %v968
        %vm3979 = vcmp.eq.f32.partialorder %v3976, %v969
        %vm3980 = vcmp.eq.f32.partialorder %v3976, %v970
        %vm3981 = vcmp.eq.f32.partialorder %v3976, %v971
        %vm3982 = vcmp.eq.f32.partialorder %v3976, %v972
        %vm3983 = vcmp.eq.f32.partialorder %v3976, %v973
        %vm3984 = vcmp.eq.f32.partialorder %v3976, %v974
        %vm3985 = vcmp.eq.f32.partialorder %v3976, %v975
        %vm3986 = vcmp.eq.f32.partialorder %v3976, %v976
        %vm3987 = vcmp.eq.f32.partialorder %v3976, %v977
        %vm3988 = vcmp.eq.f32.partialorder %v3976, %v978
        %vm3989 = vcmp.eq.f32.partialorder %v3976, %v979
        %vm3990 = vcmp.eq.f32.partialorder %v3976, %v980
        %vm3991 = vcmp.eq.f32.partialorder %v3976, %v981
        %vm3992 = vcmp.eq.f32.partialorder %v3976, %v982
        %vm3993 = vcmp.eq.f32.partialorder %v3976, %v983
        %v3994 = vsel %vm3978, 1.0, %v3958
        %v3995 = vsel %vm3979, 1.0, %v3959
        %v3996 = vsel %vm3980, 1.0, %v3960
        %v3997 = vsel %vm3981, 1.0, %v3961
        %v3998 = vsel %vm3982, 1.0, %v3962
        %v3999 = vsel %vm3983, 1.0, %v3963
        %v4000 = vsel %vm3984, 1.0, %v3964
        %v4001 = vsel %vm3985, 1.0, %v3965
        %v4002 = vsel %vm3986, 1.0, %v3966
        %v4003 = vsel %vm3987, 1.0, %v3967
        %v4004 = vsel %vm3988, 1.0, %v3968
        %v4005 = vsel %vm3989, 1.0, %v3969
        %v4006 = vsel %vm3990, 1.0, %v3970
        %v4007 = vsel %vm3991, 1.0, %v3971
        %v4008 = vsel %vm3992, 1.0, %v3972
        %v4009 = vsel %vm3993, 1.0, %v3973
        %4010 = vset.pattern.permute.xlu0 84
        %4011 = vperm.xlu0 %4010, %v984
        %v4012 = vpop.permute.xlu0 %4011
        %vm4014 = vcmp.eq.f32.partialorder %v4012, %v968
        %vm4015 = vcmp.eq.f32.partialorder %v4012, %v969
        %vm4016 = vcmp.eq.f32.partialorder %v4012, %v970
        %vm4017 = vcmp.eq.f32.partialorder %v4012, %v971
        %vm4018 = vcmp.eq.f32.partialorder %v4012, %v972
        %vm4019 = vcmp.eq.f32.partialorder %v4012, %v973
        %vm4020 = vcmp.eq.f32.partialorder %v4012, %v974
        %vm4021 = vcmp.eq.f32.partialorder %v4012, %v975
        %vm4022 = vcmp.eq.f32.partialorder %v4012, %v976
        %vm4023 = vcmp.eq.f32.partialorder %v4012, %v977
        %vm4024 = vcmp.eq.f32.partialorder %v4012, %v978
        %vm4025 = vcmp.eq.f32.partialorder %v4012, %v979
        %vm4026 = vcmp.eq.f32.partialorder %v4012, %v980
        %vm4027 = vcmp.eq.f32.partialorder %v4012, %v981
        %vm4028 = vcmp.eq.f32.partialorder %v4012, %v982
        %vm4029 = vcmp.eq.f32.partialorder %v4012, %v983
        %v4030 = vsel %vm4014, 1.0, %v3994
        %v4031 = vsel %vm4015, 1.0, %v3995
        %v4032 = vsel %vm4016, 1.0, %v3996
        %v4033 = vsel %vm4017, 1.0, %v3997
        %v4034 = vsel %vm4018, 1.0, %v3998
        %v4035 = vsel %vm4019, 1.0, %v3999
        %v4036 = vsel %vm4020, 1.0, %v4000
        %v4037 = vsel %vm4021, 1.0, %v4001
        %v4038 = vsel %vm4022, 1.0, %v4002
        %v4039 = vsel %vm4023, 1.0, %v4003
        %v4040 = vsel %vm4024, 1.0, %v4004
        %v4041 = vsel %vm4025, 1.0, %v4005
        %v4042 = vsel %vm4026, 1.0, %v4006
        %v4043 = vsel %vm4027, 1.0, %v4007
        %v4044 = vsel %vm4028, 1.0, %v4008
        %v4045 = vsel %vm4029, 1.0, %v4009
        %4046 = vset.pattern.permute.xlu0 85
        %4047 = vperm.xlu0 %4046, %v984
        %v4048 = vpop.permute.xlu0 %4047
        %vm4050 = vcmp.eq.f32.partialorder %v4048, %v968
        %vm4051 = vcmp.eq.f32.partialorder %v4048, %v969
        %vm4052 = vcmp.eq.f32.partialorder %v4048, %v970
        %vm4053 = vcmp.eq.f32.partialorder %v4048, %v971
        %vm4054 = vcmp.eq.f32.partialorder %v4048, %v972
        %vm4055 = vcmp.eq.f32.partialorder %v4048, %v973
        %vm4056 = vcmp.eq.f32.partialorder %v4048, %v974
        %vm4057 = vcmp.eq.f32.partialorder %v4048, %v975
        %vm4058 = vcmp.eq.f32.partialorder %v4048, %v976
        %vm4059 = vcmp.eq.f32.partialorder %v4048, %v977
        %vm4060 = vcmp.eq.f32.partialorder %v4048, %v978
        %vm4061 = vcmp.eq.f32.partialorder %v4048, %v979
        %vm4062 = vcmp.eq.f32.partialorder %v4048, %v980
        %vm4063 = vcmp.eq.f32.partialorder %v4048, %v981
        %vm4064 = vcmp.eq.f32.partialorder %v4048, %v982
        %vm4065 = vcmp.eq.f32.partialorder %v4048, %v983
        %v4066 = vsel %vm4050, 1.0, %v4030
        %v4067 = vsel %vm4051, 1.0, %v4031
        %v4068 = vsel %vm4052, 1.0, %v4032
        %v4069 = vsel %vm4053, 1.0, %v4033
        %v4070 = vsel %vm4054, 1.0, %v4034
        %v4071 = vsel %vm4055, 1.0, %v4035
        %v4072 = vsel %vm4056, 1.0, %v4036
        %v4073 = vsel %vm4057, 1.0, %v4037
        %v4074 = vsel %vm4058, 1.0, %v4038
        %v4075 = vsel %vm4059, 1.0, %v4039
        %v4076 = vsel %vm4060, 1.0, %v4040
        %v4077 = vsel %vm4061, 1.0, %v4041
        %v4078 = vsel %vm4062, 1.0, %v4042
        %v4079 = vsel %vm4063, 1.0, %v4043
        %v4080 = vsel %vm4064, 1.0, %v4044
        %v4081 = vsel %vm4065, 1.0, %v4045
        %4082 = vset.pattern.permute.xlu0 86
        %4083 = vperm.xlu0 %4082, %v984
        %v4084 = vpop.permute.xlu0 %4083
        %vm4086 = vcmp.eq.f32.partialorder %v4084, %v968
        %vm4087 = vcmp.eq.f32.partialorder %v4084, %v969
        %vm4088 = vcmp.eq.f32.partialorder %v4084, %v970
        %vm4089 = vcmp.eq.f32.partialorder %v4084, %v971
        %vm4090 = vcmp.eq.f32.partialorder %v4084, %v972
        %vm4091 = vcmp.eq.f32.partialorder %v4084, %v973
        %vm4092 = vcmp.eq.f32.partialorder %v4084, %v974
        %vm4093 = vcmp.eq.f32.partialorder %v4084, %v975
        %vm4094 = vcmp.eq.f32.partialorder %v4084, %v976
        %vm4095 = vcmp.eq.f32.partialorder %v4084, %v977
        %vm4096 = vcmp.eq.f32.partialorder %v4084, %v978
        %vm4097 = vcmp.eq.f32.partialorder %v4084, %v979
        %vm4098 = vcmp.eq.f32.partialorder %v4084, %v980
        %vm4099 = vcmp.eq.f32.partialorder %v4084, %v981
        %vm4100 = vcmp.eq.f32.partialorder %v4084, %v982
        %vm4101 = vcmp.eq.f32.partialorder %v4084, %v983
        %v4102 = vsel %vm4086, 1.0, %v4066
        %v4103 = vsel %vm4087, 1.0, %v4067
        %v4104 = vsel %vm4088, 1.0, %v4068
        %v4105 = vsel %vm4089, 1.0, %v4069
        %v4106 = vsel %vm4090, 1.0, %v4070
        %v4107 = vsel %vm4091, 1.0, %v4071
        %v4108 = vsel %vm4092, 1.0, %v4072
        %v4109 = vsel %vm4093, 1.0, %v4073
        %v4110 = vsel %vm4094, 1.0, %v4074
        %v4111 = vsel %vm4095, 1.0, %v4075
        %v4112 = vsel %vm4096, 1.0, %v4076
        %v4113 = vsel %vm4097, 1.0, %v4077
        %v4114 = vsel %vm4098, 1.0, %v4078
        %v4115 = vsel %vm4099, 1.0, %v4079
        %v4116 = vsel %vm4100, 1.0, %v4080
        %v4117 = vsel %vm4101, 1.0, %v4081
        %4118 = vset.pattern.permute.xlu0 87
        %4119 = vperm.xlu0 %4118, %v984
        %v4120 = vpop.permute.xlu0 %4119
        %vm4122 = vcmp.eq.f32.partialorder %v4120, %v968
        %vm4123 = vcmp.eq.f32.partialorder %v4120, %v969
        %vm4124 = vcmp.eq.f32.partialorder %v4120, %v970
        %vm4125 = vcmp.eq.f32.partialorder %v4120, %v971
        %vm4126 = vcmp.eq.f32.partialorder %v4120, %v972
        %vm4127 = vcmp.eq.f32.partialorder %v4120, %v973
        %vm4128 = vcmp.eq.f32.partialorder %v4120, %v974
        %vm4129 = vcmp.eq.f32.partialorder %v4120, %v975
        %vm4130 = vcmp.eq.f32.partialorder %v4120, %v976
        %vm4131 = vcmp.eq.f32.partialorder %v4120, %v977
        %vm4132 = vcmp.eq.f32.partialorder %v4120, %v978
        %vm4133 = vcmp.eq.f32.partialorder %v4120, %v979
        %vm4134 = vcmp.eq.f32.partialorder %v4120, %v980
        %vm4135 = vcmp.eq.f32.partialorder %v4120, %v981
        %vm4136 = vcmp.eq.f32.partialorder %v4120, %v982
        %vm4137 = vcmp.eq.f32.partialorder %v4120, %v983
        %v4138 = vsel %vm4122, 1.0, %v4102
        %v4139 = vsel %vm4123, 1.0, %v4103
        %v4140 = vsel %vm4124, 1.0, %v4104
        %v4141 = vsel %vm4125, 1.0, %v4105
        %v4142 = vsel %vm4126, 1.0, %v4106
        %v4143 = vsel %vm4127, 1.0, %v4107
        %v4144 = vsel %vm4128, 1.0, %v4108
        %v4145 = vsel %vm4129, 1.0, %v4109
        %v4146 = vsel %vm4130, 1.0, %v4110
        %v4147 = vsel %vm4131, 1.0, %v4111
        %v4148 = vsel %vm4132, 1.0, %v4112
        %v4149 = vsel %vm4133, 1.0, %v4113
        %v4150 = vsel %vm4134, 1.0, %v4114
        %v4151 = vsel %vm4135, 1.0, %v4115
        %v4152 = vsel %vm4136, 1.0, %v4116
        %v4153 = vsel %vm4137, 1.0, %v4117
        %4154 = vset.pattern.permute.xlu0 88
        %4155 = vperm.xlu0 %4154, %v984
        %v4156 = vpop.permute.xlu0 %4155
        %vm4158 = vcmp.eq.f32.partialorder %v4156, %v968
        %vm4159 = vcmp.eq.f32.partialorder %v4156, %v969
        %vm4160 = vcmp.eq.f32.partialorder %v4156, %v970
        %vm4161 = vcmp.eq.f32.partialorder %v4156, %v971
        %vm4162 = vcmp.eq.f32.partialorder %v4156, %v972
        %vm4163 = vcmp.eq.f32.partialorder %v4156, %v973
        %vm4164 = vcmp.eq.f32.partialorder %v4156, %v974
        %vm4165 = vcmp.eq.f32.partialorder %v4156, %v975
        %vm4166 = vcmp.eq.f32.partialorder %v4156, %v976
        %vm4167 = vcmp.eq.f32.partialorder %v4156, %v977
        %vm4168 = vcmp.eq.f32.partialorder %v4156, %v978
        %vm4169 = vcmp.eq.f32.partialorder %v4156, %v979
        %vm4170 = vcmp.eq.f32.partialorder %v4156, %v980
        %vm4171 = vcmp.eq.f32.partialorder %v4156, %v981
        %vm4172 = vcmp.eq.f32.partialorder %v4156, %v982
        %vm4173 = vcmp.eq.f32.partialorder %v4156, %v983
        %v4174 = vsel %vm4158, 1.0, %v4138
        %v4175 = vsel %vm4159, 1.0, %v4139
        %v4176 = vsel %vm4160, 1.0, %v4140
        %v4177 = vsel %vm4161, 1.0, %v4141
        %v4178 = vsel %vm4162, 1.0, %v4142
        %v4179 = vsel %vm4163, 1.0, %v4143
        %v4180 = vsel %vm4164, 1.0, %v4144
        %v4181 = vsel %vm4165, 1.0, %v4145
        %v4182 = vsel %vm4166, 1.0, %v4146
        %v4183 = vsel %vm4167, 1.0, %v4147
        %v4184 = vsel %vm4168, 1.0, %v4148
        %v4185 = vsel %vm4169, 1.0, %v4149
        %v4186 = vsel %vm4170, 1.0, %v4150
        %v4187 = vsel %vm4171, 1.0, %v4151
        %v4188 = vsel %vm4172, 1.0, %v4152
        %v4189 = vsel %vm4173, 1.0, %v4153
        %4190 = vset.pattern.permute.xlu0 89
        %4191 = vperm.xlu0 %4190, %v984
        %v4192 = vpop.permute.xlu0 %4191
        %vm4194 = vcmp.eq.f32.partialorder %v4192, %v968
        %vm4195 = vcmp.eq.f32.partialorder %v4192, %v969
        %vm4196 = vcmp.eq.f32.partialorder %v4192, %v970
        %vm4197 = vcmp.eq.f32.partialorder %v4192, %v971
        %vm4198 = vcmp.eq.f32.partialorder %v4192, %v972
        %vm4199 = vcmp.eq.f32.partialorder %v4192, %v973
        %vm4200 = vcmp.eq.f32.partialorder %v4192, %v974
        %vm4201 = vcmp.eq.f32.partialorder %v4192, %v975
        %vm4202 = vcmp.eq.f32.partialorder %v4192, %v976
        %vm4203 = vcmp.eq.f32.partialorder %v4192, %v977
        %vm4204 = vcmp.eq.f32.partialorder %v4192, %v978
        %vm4205 = vcmp.eq.f32.partialorder %v4192, %v979
        %vm4206 = vcmp.eq.f32.partialorder %v4192, %v980
        %vm4207 = vcmp.eq.f32.partialorder %v4192, %v981
        %vm4208 = vcmp.eq.f32.partialorder %v4192, %v982
        %vm4209 = vcmp.eq.f32.partialorder %v4192, %v983
        %v4210 = vsel %vm4194, 1.0, %v4174
        %v4211 = vsel %vm4195, 1.0, %v4175
        %v4212 = vsel %vm4196, 1.0, %v4176
        %v4213 = vsel %vm4197, 1.0, %v4177
        %v4214 = vsel %vm4198, 1.0, %v4178
        %v4215 = vsel %vm4199, 1.0, %v4179
        %v4216 = vsel %vm4200, 1.0, %v4180
        %v4217 = vsel %vm4201, 1.0, %v4181
        %v4218 = vsel %vm4202, 1.0, %v4182
        %v4219 = vsel %vm4203, 1.0, %v4183
        %v4220 = vsel %vm4204, 1.0, %v4184
        %v4221 = vsel %vm4205, 1.0, %v4185
        %v4222 = vsel %vm4206, 1.0, %v4186
        %v4223 = vsel %vm4207, 1.0, %v4187
        %v4224 = vsel %vm4208, 1.0, %v4188
        %v4225 = vsel %vm4209, 1.0, %v4189
        %4226 = vset.pattern.permute.xlu0 90
        %4227 = vperm.xlu0 %4226, %v984
        %v4228 = vpop.permute.xlu0 %4227
        %vm4230 = vcmp.eq.f32.partialorder %v4228, %v968
        %vm4231 = vcmp.eq.f32.partialorder %v4228, %v969
        %vm4232 = vcmp.eq.f32.partialorder %v4228, %v970
        %vm4233 = vcmp.eq.f32.partialorder %v4228, %v971
        %vm4234 = vcmp.eq.f32.partialorder %v4228, %v972
        %vm4235 = vcmp.eq.f32.partialorder %v4228, %v973
        %vm4236 = vcmp.eq.f32.partialorder %v4228, %v974
        %vm4237 = vcmp.eq.f32.partialorder %v4228, %v975
        %vm4238 = vcmp.eq.f32.partialorder %v4228, %v976
        %vm4239 = vcmp.eq.f32.partialorder %v4228, %v977
        %vm4240 = vcmp.eq.f32.partialorder %v4228, %v978
        %vm4241 = vcmp.eq.f32.partialorder %v4228, %v979
        %vm4242 = vcmp.eq.f32.partialorder %v4228, %v980
        %vm4243 = vcmp.eq.f32.partialorder %v4228, %v981
        %vm4244 = vcmp.eq.f32.partialorder %v4228, %v982
        %vm4245 = vcmp.eq.f32.partialorder %v4228, %v983
        %v4246 = vsel %vm4230, 1.0, %v4210
        %v4247 = vsel %vm4231, 1.0, %v4211
        %v4248 = vsel %vm4232, 1.0, %v4212
        %v4249 = vsel %vm4233, 1.0, %v4213
        %v4250 = vsel %vm4234, 1.0, %v4214
        %v4251 = vsel %vm4235, 1.0, %v4215
        %v4252 = vsel %vm4236, 1.0, %v4216
        %v4253 = vsel %vm4237, 1.0, %v4217
        %v4254 = vsel %vm4238, 1.0, %v4218
        %v4255 = vsel %vm4239, 1.0, %v4219
        %v4256 = vsel %vm4240, 1.0, %v4220
        %v4257 = vsel %vm4241, 1.0, %v4221
        %v4258 = vsel %vm4242, 1.0, %v4222
        %v4259 = vsel %vm4243, 1.0, %v4223
        %v4260 = vsel %vm4244, 1.0, %v4224
        %v4261 = vsel %vm4245, 1.0, %v4225
        %4262 = vset.pattern.permute.xlu0 91
        %4263 = vperm.xlu0 %4262, %v984
        %v4264 = vpop.permute.xlu0 %4263
        %vm4266 = vcmp.eq.f32.partialorder %v4264, %v968
        %vm4267 = vcmp.eq.f32.partialorder %v4264, %v969
        %vm4268 = vcmp.eq.f32.partialorder %v4264, %v970
        %vm4269 = vcmp.eq.f32.partialorder %v4264, %v971
        %vm4270 = vcmp.eq.f32.partialorder %v4264, %v972
        %vm4271 = vcmp.eq.f32.partialorder %v4264, %v973
        %vm4272 = vcmp.eq.f32.partialorder %v4264, %v974
        %vm4273 = vcmp.eq.f32.partialorder %v4264, %v975
        %vm4274 = vcmp.eq.f32.partialorder %v4264, %v976
        %vm4275 = vcmp.eq.f32.partialorder %v4264, %v977
        %vm4276 = vcmp.eq.f32.partialorder %v4264, %v978
        %vm4277 = vcmp.eq.f32.partialorder %v4264, %v979
        %vm4278 = vcmp.eq.f32.partialorder %v4264, %v980
        %vm4279 = vcmp.eq.f32.partialorder %v4264, %v981
        %vm4280 = vcmp.eq.f32.partialorder %v4264, %v982
        %vm4281 = vcmp.eq.f32.partialorder %v4264, %v983
        %v4282 = vsel %vm4266, 1.0, %v4246
        %v4283 = vsel %vm4267, 1.0, %v4247
        %v4284 = vsel %vm4268, 1.0, %v4248
        %v4285 = vsel %vm4269, 1.0, %v4249
        %v4286 = vsel %vm4270, 1.0, %v4250
        %v4287 = vsel %vm4271, 1.0, %v4251
        %v4288 = vsel %vm4272, 1.0, %v4252
        %v4289 = vsel %vm4273, 1.0, %v4253
        %v4290 = vsel %vm4274, 1.0, %v4254
        %v4291 = vsel %vm4275, 1.0, %v4255
        %v4292 = vsel %vm4276, 1.0, %v4256
        %v4293 = vsel %vm4277, 1.0, %v4257
        %v4294 = vsel %vm4278, 1.0, %v4258
        %v4295 = vsel %vm4279, 1.0, %v4259
        %v4296 = vsel %vm4280, 1.0, %v4260
        %v4297 = vsel %vm4281, 1.0, %v4261
        %4298 = vset.pattern.permute.xlu0 92
        %4299 = vperm.xlu0 %4298, %v984
        %v4300 = vpop.permute.xlu0 %4299
        %vm4302 = vcmp.eq.f32.partialorder %v4300, %v968
        %vm4303 = vcmp.eq.f32.partialorder %v4300, %v969
        %vm4304 = vcmp.eq.f32.partialorder %v4300, %v970
        %vm4305 = vcmp.eq.f32.partialorder %v4300, %v971
        %vm4306 = vcmp.eq.f32.partialorder %v4300, %v972
        %vm4307 = vcmp.eq.f32.partialorder %v4300, %v973
        %vm4308 = vcmp.eq.f32.partialorder %v4300, %v974
        %vm4309 = vcmp.eq.f32.partialorder %v4300, %v975
        %vm4310 = vcmp.eq.f32.partialorder %v4300, %v976
        %vm4311 = vcmp.eq.f32.partialorder %v4300, %v977
        %vm4312 = vcmp.eq.f32.partialorder %v4300, %v978
        %vm4313 = vcmp.eq.f32.partialorder %v4300, %v979
        %vm4314 = vcmp.eq.f32.partialorder %v4300, %v980
        %vm4315 = vcmp.eq.f32.partialorder %v4300, %v981
        %vm4316 = vcmp.eq.f32.partialorder %v4300, %v982
        %vm4317 = vcmp.eq.f32.partialorder %v4300, %v983
        %v4318 = vsel %vm4302, 1.0, %v4282
        %v4319 = vsel %vm4303, 1.0, %v4283
        %v4320 = vsel %vm4304, 1.0, %v4284
        %v4321 = vsel %vm4305, 1.0, %v4285
        %v4322 = vsel %vm4306, 1.0, %v4286
        %v4323 = vsel %vm4307, 1.0, %v4287
        %v4324 = vsel %vm4308, 1.0, %v4288
        %v4325 = vsel %vm4309, 1.0, %v4289
        %v4326 = vsel %vm4310, 1.0, %v4290
        %v4327 = vsel %vm4311, 1.0, %v4291
        %v4328 = vsel %vm4312, 1.0, %v4292
        %v4329 = vsel %vm4313, 1.0, %v4293
        %v4330 = vsel %vm4314, 1.0, %v4294
        %v4331 = vsel %vm4315, 1.0, %v4295
        %v4332 = vsel %vm4316, 1.0, %v4296
        %v4333 = vsel %vm4317, 1.0, %v4297
        %4334 = vset.pattern.permute.xlu0 93
        %4335 = vperm.xlu0 %4334, %v984
        %v4336 = vpop.permute.xlu0 %4335
        %vm4338 = vcmp.eq.f32.partialorder %v4336, %v968
        %vm4339 = vcmp.eq.f32.partialorder %v4336, %v969
        %vm4340 = vcmp.eq.f32.partialorder %v4336, %v970
        %vm4341 = vcmp.eq.f32.partialorder %v4336, %v971
        %vm4342 = vcmp.eq.f32.partialorder %v4336, %v972
        %vm4343 = vcmp.eq.f32.partialorder %v4336, %v973
        %vm4344 = vcmp.eq.f32.partialorder %v4336, %v974
        %vm4345 = vcmp.eq.f32.partialorder %v4336, %v975
        %vm4346 = vcmp.eq.f32.partialorder %v4336, %v976
        %vm4347 = vcmp.eq.f32.partialorder %v4336, %v977
        %vm4348 = vcmp.eq.f32.partialorder %v4336, %v978
        %vm4349 = vcmp.eq.f32.partialorder %v4336, %v979
        %vm4350 = vcmp.eq.f32.partialorder %v4336, %v980
        %vm4351 = vcmp.eq.f32.partialorder %v4336, %v981
        %vm4352 = vcmp.eq.f32.partialorder %v4336, %v982
        %vm4353 = vcmp.eq.f32.partialorder %v4336, %v983
        %v4354 = vsel %vm4338, 1.0, %v4318
        %v4355 = vsel %vm4339, 1.0, %v4319
        %v4356 = vsel %vm4340, 1.0, %v4320
        %v4357 = vsel %vm4341, 1.0, %v4321
        %v4358 = vsel %vm4342, 1.0, %v4322
        %v4359 = vsel %vm4343, 1.0, %v4323
        %v4360 = vsel %vm4344, 1.0, %v4324
        %v4361 = vsel %vm4345, 1.0, %v4325
        %v4362 = vsel %vm4346, 1.0, %v4326
        %v4363 = vsel %vm4347, 1.0, %v4327
        %v4364 = vsel %vm4348, 1.0, %v4328
        %v4365 = vsel %vm4349, 1.0, %v4329
        %v4366 = vsel %vm4350, 1.0, %v4330
        %v4367 = vsel %vm4351, 1.0, %v4331
        %v4368 = vsel %vm4352, 1.0, %v4332
        %v4369 = vsel %vm4353, 1.0, %v4333
        %4370 = vset.pattern.permute.xlu0 94
        %4371 = vperm.xlu0 %4370, %v984
        %v4372 = vpop.permute.xlu0 %4371
        %vm4374 = vcmp.eq.f32.partialorder %v4372, %v968
        %vm4375 = vcmp.eq.f32.partialorder %v4372, %v969
        %vm4376 = vcmp.eq.f32.partialorder %v4372, %v970
        %vm4377 = vcmp.eq.f32.partialorder %v4372, %v971
        %vm4378 = vcmp.eq.f32.partialorder %v4372, %v972
        %vm4379 = vcmp.eq.f32.partialorder %v4372, %v973
        %vm4380 = vcmp.eq.f32.partialorder %v4372, %v974
        %vm4381 = vcmp.eq.f32.partialorder %v4372, %v975
        %vm4382 = vcmp.eq.f32.partialorder %v4372, %v976
        %vm4383 = vcmp.eq.f32.partialorder %v4372, %v977
        %vm4384 = vcmp.eq.f32.partialorder %v4372, %v978
        %vm4385 = vcmp.eq.f32.partialorder %v4372, %v979
        %vm4386 = vcmp.eq.f32.partialorder %v4372, %v980
        %vm4387 = vcmp.eq.f32.partialorder %v4372, %v981
        %vm4388 = vcmp.eq.f32.partialorder %v4372, %v982
        %vm4389 = vcmp.eq.f32.partialorder %v4372, %v983
        %v4390 = vsel %vm4374, 1.0, %v4354
        %v4391 = vsel %vm4375, 1.0, %v4355
        %v4392 = vsel %vm4376, 1.0, %v4356
        %v4393 = vsel %vm4377, 1.0, %v4357
        %v4394 = vsel %vm4378, 1.0, %v4358
        %v4395 = vsel %vm4379, 1.0, %v4359
        %v4396 = vsel %vm4380, 1.0, %v4360
        %v4397 = vsel %vm4381, 1.0, %v4361
        %v4398 = vsel %vm4382, 1.0, %v4362
        %v4399 = vsel %vm4383, 1.0, %v4363
        %v4400 = vsel %vm4384, 1.0, %v4364
        %v4401 = vsel %vm4385, 1.0, %v4365
        %v4402 = vsel %vm4386, 1.0, %v4366
        %v4403 = vsel %vm4387, 1.0, %v4367
        %v4404 = vsel %vm4388, 1.0, %v4368
        %v4405 = vsel %vm4389, 1.0, %v4369
        %4406 = vset.pattern.permute.xlu0 95
        %4407 = vperm.xlu0 %4406, %v984
        %v4408 = vpop.permute.xlu0 %4407
        %vm4410 = vcmp.eq.f32.partialorder %v4408, %v968
        %vm4411 = vcmp.eq.f32.partialorder %v4408, %v969
        %vm4412 = vcmp.eq.f32.partialorder %v4408, %v970
        %vm4413 = vcmp.eq.f32.partialorder %v4408, %v971
        %vm4414 = vcmp.eq.f32.partialorder %v4408, %v972
        %vm4415 = vcmp.eq.f32.partialorder %v4408, %v973
        %vm4416 = vcmp.eq.f32.partialorder %v4408, %v974
        %vm4417 = vcmp.eq.f32.partialorder %v4408, %v975
        %vm4418 = vcmp.eq.f32.partialorder %v4408, %v976
        %vm4419 = vcmp.eq.f32.partialorder %v4408, %v977
        %vm4420 = vcmp.eq.f32.partialorder %v4408, %v978
        %vm4421 = vcmp.eq.f32.partialorder %v4408, %v979
        %vm4422 = vcmp.eq.f32.partialorder %v4408, %v980
        %vm4423 = vcmp.eq.f32.partialorder %v4408, %v981
        %vm4424 = vcmp.eq.f32.partialorder %v4408, %v982
        %vm4425 = vcmp.eq.f32.partialorder %v4408, %v983
        %v4426 = vsel %vm4410, 1.0, %v4390
        %v4427 = vsel %vm4411, 1.0, %v4391
        %v4428 = vsel %vm4412, 1.0, %v4392
        %v4429 = vsel %vm4413, 1.0, %v4393
        %v4430 = vsel %vm4414, 1.0, %v4394
        %v4431 = vsel %vm4415, 1.0, %v4395
        %v4432 = vsel %vm4416, 1.0, %v4396
        %v4433 = vsel %vm4417, 1.0, %v4397
        %v4434 = vsel %vm4418, 1.0, %v4398
        %v4435 = vsel %vm4419, 1.0, %v4399
        %v4436 = vsel %vm4420, 1.0, %v4400
        %v4437 = vsel %vm4421, 1.0, %v4401
        %v4438 = vsel %vm4422, 1.0, %v4402
        %v4439 = vsel %vm4423, 1.0, %v4403
        %v4440 = vsel %vm4424, 1.0, %v4404
        %v4441 = vsel %vm4425, 1.0, %v4405
        %4442 = vset.pattern.permute.xlu0 96
        %4443 = vperm.xlu0 %4442, %v984
        %v4444 = vpop.permute.xlu0 %4443
        %vm4446 = vcmp.eq.f32.partialorder %v4444, %v968
        %vm4447 = vcmp.eq.f32.partialorder %v4444, %v969
        %vm4448 = vcmp.eq.f32.partialorder %v4444, %v970
        %vm4449 = vcmp.eq.f32.partialorder %v4444, %v971
        %vm4450 = vcmp.eq.f32.partialorder %v4444, %v972
        %vm4451 = vcmp.eq.f32.partialorder %v4444, %v973
        %vm4452 = vcmp.eq.f32.partialorder %v4444, %v974
        %vm4453 = vcmp.eq.f32.partialorder %v4444, %v975
        %vm4454 = vcmp.eq.f32.partialorder %v4444, %v976
        %vm4455 = vcmp.eq.f32.partialorder %v4444, %v977
        %vm4456 = vcmp.eq.f32.partialorder %v4444, %v978
        %vm4457 = vcmp.eq.f32.partialorder %v4444, %v979
        %vm4458 = vcmp.eq.f32.partialorder %v4444, %v980
        %vm4459 = vcmp.eq.f32.partialorder %v4444, %v981
        %vm4460 = vcmp.eq.f32.partialorder %v4444, %v982
        %vm4461 = vcmp.eq.f32.partialorder %v4444, %v983
        %v4462 = vsel %vm4446, 1.0, %v4426
        %v4463 = vsel %vm4447, 1.0, %v4427
        %v4464 = vsel %vm4448, 1.0, %v4428
        %v4465 = vsel %vm4449, 1.0, %v4429
        %v4466 = vsel %vm4450, 1.0, %v4430
        %v4467 = vsel %vm4451, 1.0, %v4431
        %v4468 = vsel %vm4452, 1.0, %v4432
        %v4469 = vsel %vm4453, 1.0, %v4433
        %v4470 = vsel %vm4454, 1.0, %v4434
        %v4471 = vsel %vm4455, 1.0, %v4435
        %v4472 = vsel %vm4456, 1.0, %v4436
        %v4473 = vsel %vm4457, 1.0, %v4437
        %v4474 = vsel %vm4458, 1.0, %v4438
        %v4475 = vsel %vm4459, 1.0, %v4439
        %v4476 = vsel %vm4460, 1.0, %v4440
        %v4477 = vsel %vm4461, 1.0, %v4441
        %4478 = vset.pattern.permute.xlu0 97
        %4479 = vperm.xlu0 %4478, %v984
        %v4480 = vpop.permute.xlu0 %4479
        %vm4482 = vcmp.eq.f32.partialorder %v4480, %v968
        %vm4483 = vcmp.eq.f32.partialorder %v4480, %v969
        %vm4484 = vcmp.eq.f32.partialorder %v4480, %v970
        %vm4485 = vcmp.eq.f32.partialorder %v4480, %v971
        %vm4486 = vcmp.eq.f32.partialorder %v4480, %v972
        %vm4487 = vcmp.eq.f32.partialorder %v4480, %v973
        %vm4488 = vcmp.eq.f32.partialorder %v4480, %v974
        %vm4489 = vcmp.eq.f32.partialorder %v4480, %v975
        %vm4490 = vcmp.eq.f32.partialorder %v4480, %v976
        %vm4491 = vcmp.eq.f32.partialorder %v4480, %v977
        %vm4492 = vcmp.eq.f32.partialorder %v4480, %v978
        %vm4493 = vcmp.eq.f32.partialorder %v4480, %v979
        %vm4494 = vcmp.eq.f32.partialorder %v4480, %v980
        %vm4495 = vcmp.eq.f32.partialorder %v4480, %v981
        %vm4496 = vcmp.eq.f32.partialorder %v4480, %v982
        %vm4497 = vcmp.eq.f32.partialorder %v4480, %v983
        %v4498 = vsel %vm4482, 1.0, %v4462
        %v4499 = vsel %vm4483, 1.0, %v4463
        %v4500 = vsel %vm4484, 1.0, %v4464
        %v4501 = vsel %vm4485, 1.0, %v4465
        %v4502 = vsel %vm4486, 1.0, %v4466
        %v4503 = vsel %vm4487, 1.0, %v4467
        %v4504 = vsel %vm4488, 1.0, %v4468
        %v4505 = vsel %vm4489, 1.0, %v4469
        %v4506 = vsel %vm4490, 1.0, %v4470
        %v4507 = vsel %vm4491, 1.0, %v4471
        %v4508 = vsel %vm4492, 1.0, %v4472
        %v4509 = vsel %vm4493, 1.0, %v4473
        %v4510 = vsel %vm4494, 1.0, %v4474
        %v4511 = vsel %vm4495, 1.0, %v4475
        %v4512 = vsel %vm4496, 1.0, %v4476
        %v4513 = vsel %vm4497, 1.0, %v4477
        %4514 = vset.pattern.permute.xlu0 98
        %4515 = vperm.xlu0 %4514, %v984
        %v4516 = vpop.permute.xlu0 %4515
        %vm4518 = vcmp.eq.f32.partialorder %v4516, %v968
        %vm4519 = vcmp.eq.f32.partialorder %v4516, %v969
        %vm4520 = vcmp.eq.f32.partialorder %v4516, %v970
        %vm4521 = vcmp.eq.f32.partialorder %v4516, %v971
        %vm4522 = vcmp.eq.f32.partialorder %v4516, %v972
        %vm4523 = vcmp.eq.f32.partialorder %v4516, %v973
        %vm4524 = vcmp.eq.f32.partialorder %v4516, %v974
        %vm4525 = vcmp.eq.f32.partialorder %v4516, %v975
        %vm4526 = vcmp.eq.f32.partialorder %v4516, %v976
        %vm4527 = vcmp.eq.f32.partialorder %v4516, %v977
        %vm4528 = vcmp.eq.f32.partialorder %v4516, %v978
        %vm4529 = vcmp.eq.f32.partialorder %v4516, %v979
        %vm4530 = vcmp.eq.f32.partialorder %v4516, %v980
        %vm4531 = vcmp.eq.f32.partialorder %v4516, %v981
        %vm4532 = vcmp.eq.f32.partialorder %v4516, %v982
        %vm4533 = vcmp.eq.f32.partialorder %v4516, %v983
        %v4534 = vsel %vm4518, 1.0, %v4498
        %v4535 = vsel %vm4519, 1.0, %v4499
        %v4536 = vsel %vm4520, 1.0, %v4500
        %v4537 = vsel %vm4521, 1.0, %v4501
        %v4538 = vsel %vm4522, 1.0, %v4502
        %v4539 = vsel %vm4523, 1.0, %v4503
        %v4540 = vsel %vm4524, 1.0, %v4504
        %v4541 = vsel %vm4525, 1.0, %v4505
        %v4542 = vsel %vm4526, 1.0, %v4506
        %v4543 = vsel %vm4527, 1.0, %v4507
        %v4544 = vsel %vm4528, 1.0, %v4508
        %v4545 = vsel %vm4529, 1.0, %v4509
        %v4546 = vsel %vm4530, 1.0, %v4510
        %v4547 = vsel %vm4531, 1.0, %v4511
        %v4548 = vsel %vm4532, 1.0, %v4512
        %v4549 = vsel %vm4533, 1.0, %v4513
        %4550 = vset.pattern.permute.xlu0 99
        %4551 = vperm.xlu0 %4550, %v984
        %v4552 = vpop.permute.xlu0 %4551
        %vm4554 = vcmp.eq.f32.partialorder %v4552, %v968
        %vm4555 = vcmp.eq.f32.partialorder %v4552, %v969
        %vm4556 = vcmp.eq.f32.partialorder %v4552, %v970
        %vm4557 = vcmp.eq.f32.partialorder %v4552, %v971
        %vm4558 = vcmp.eq.f32.partialorder %v4552, %v972
        %vm4559 = vcmp.eq.f32.partialorder %v4552, %v973
        %vm4560 = vcmp.eq.f32.partialorder %v4552, %v974
        %vm4561 = vcmp.eq.f32.partialorder %v4552, %v975
        %vm4562 = vcmp.eq.f32.partialorder %v4552, %v976
        %vm4563 = vcmp.eq.f32.partialorder %v4552, %v977
        %vm4564 = vcmp.eq.f32.partialorder %v4552, %v978
        %vm4565 = vcmp.eq.f32.partialorder %v4552, %v979
        %vm4566 = vcmp.eq.f32.partialorder %v4552, %v980
        %vm4567 = vcmp.eq.f32.partialorder %v4552, %v981
        %vm4568 = vcmp.eq.f32.partialorder %v4552, %v982
        %vm4569 = vcmp.eq.f32.partialorder %v4552, %v983
        %v4570 = vsel %vm4554, 1.0, %v4534
        %v4571 = vsel %vm4555, 1.0, %v4535
        %v4572 = vsel %vm4556, 1.0, %v4536
        %v4573 = vsel %vm4557, 1.0, %v4537
        %v4574 = vsel %vm4558, 1.0, %v4538
        %v4575 = vsel %vm4559, 1.0, %v4539
        %v4576 = vsel %vm4560, 1.0, %v4540
        %v4577 = vsel %vm4561, 1.0, %v4541
        %v4578 = vsel %vm4562, 1.0, %v4542
        %v4579 = vsel %vm4563, 1.0, %v4543
        %v4580 = vsel %vm4564, 1.0, %v4544
        %v4581 = vsel %vm4565, 1.0, %v4545
        %v4582 = vsel %vm4566, 1.0, %v4546
        %v4583 = vsel %vm4567, 1.0, %v4547
        %v4584 = vsel %vm4568, 1.0, %v4548
        %v4585 = vsel %vm4569, 1.0, %v4549
        %4586 = vset.pattern.permute.xlu0 100
        %4587 = vperm.xlu0 %4586, %v984
        %v4588 = vpop.permute.xlu0 %4587
        %vm4590 = vcmp.eq.f32.partialorder %v4588, %v968
        %vm4591 = vcmp.eq.f32.partialorder %v4588, %v969
        %vm4592 = vcmp.eq.f32.partialorder %v4588, %v970
        %vm4593 = vcmp.eq.f32.partialorder %v4588, %v971
        %vm4594 = vcmp.eq.f32.partialorder %v4588, %v972
        %vm4595 = vcmp.eq.f32.partialorder %v4588, %v973
        %vm4596 = vcmp.eq.f32.partialorder %v4588, %v974
        %vm4597 = vcmp.eq.f32.partialorder %v4588, %v975
        %vm4598 = vcmp.eq.f32.partialorder %v4588, %v976
        %vm4599 = vcmp.eq.f32.partialorder %v4588, %v977
        %vm4600 = vcmp.eq.f32.partialorder %v4588, %v978
        %vm4601 = vcmp.eq.f32.partialorder %v4588, %v979
        %vm4602 = vcmp.eq.f32.partialorder %v4588, %v980
        %vm4603 = vcmp.eq.f32.partialorder %v4588, %v981
        %vm4604 = vcmp.eq.f32.partialorder %v4588, %v982
        %vm4605 = vcmp.eq.f32.partialorder %v4588, %v983
        %v4606 = vsel %vm4590, 1.0, %v4570
        %v4607 = vsel %vm4591, 1.0, %v4571
        %v4608 = vsel %vm4592, 1.0, %v4572
        %v4609 = vsel %vm4593, 1.0, %v4573
        %v4610 = vsel %vm4594, 1.0, %v4574
        %v4611 = vsel %vm4595, 1.0, %v4575
        %v4612 = vsel %vm4596, 1.0, %v4576
        %v4613 = vsel %vm4597, 1.0, %v4577
        %v4614 = vsel %vm4598, 1.0, %v4578
        %v4615 = vsel %vm4599, 1.0, %v4579
        %v4616 = vsel %vm4600, 1.0, %v4580
        %v4617 = vsel %vm4601, 1.0, %v4581
        %v4618 = vsel %vm4602, 1.0, %v4582
        %v4619 = vsel %vm4603, 1.0, %v4583
        %v4620 = vsel %vm4604, 1.0, %v4584
        %v4621 = vsel %vm4605, 1.0, %v4585
        %4622 = vset.pattern.permute.xlu0 101
        %4623 = vperm.xlu0 %4622, %v984
        %v4624 = vpop.permute.xlu0 %4623
        %vm4626 = vcmp.eq.f32.partialorder %v4624, %v968
        %vm4627 = vcmp.eq.f32.partialorder %v4624, %v969
        %vm4628 = vcmp.eq.f32.partialorder %v4624, %v970
        %vm4629 = vcmp.eq.f32.partialorder %v4624, %v971
        %vm4630 = vcmp.eq.f32.partialorder %v4624, %v972
        %vm4631 = vcmp.eq.f32.partialorder %v4624, %v973
        %vm4632 = vcmp.eq.f32.partialorder %v4624, %v974
        %vm4633 = vcmp.eq.f32.partialorder %v4624, %v975
        %vm4634 = vcmp.eq.f32.partialorder %v4624, %v976
        %vm4635 = vcmp.eq.f32.partialorder %v4624, %v977
        %vm4636 = vcmp.eq.f32.partialorder %v4624, %v978
        %vm4637 = vcmp.eq.f32.partialorder %v4624, %v979
        %vm4638 = vcmp.eq.f32.partialorder %v4624, %v980
        %vm4639 = vcmp.eq.f32.partialorder %v4624, %v981
        %vm4640 = vcmp.eq.f32.partialorder %v4624, %v982
        %vm4641 = vcmp.eq.f32.partialorder %v4624, %v983
        %v4642 = vsel %vm4626, 1.0, %v4606
        %v4643 = vsel %vm4627, 1.0, %v4607
        %v4644 = vsel %vm4628, 1.0, %v4608
        %v4645 = vsel %vm4629, 1.0, %v4609
        %v4646 = vsel %vm4630, 1.0, %v4610
        %v4647 = vsel %vm4631, 1.0, %v4611
        %v4648 = vsel %vm4632, 1.0, %v4612
        %v4649 = vsel %vm4633, 1.0, %v4613
        %v4650 = vsel %vm4634, 1.0, %v4614
        %v4651 = vsel %vm4635, 1.0, %v4615
        %v4652 = vsel %vm4636, 1.0, %v4616
        %v4653 = vsel %vm4637, 1.0, %v4617
        %v4654 = vsel %vm4638, 1.0, %v4618
        %v4655 = vsel %vm4639, 1.0, %v4619
        %v4656 = vsel %vm4640, 1.0, %v4620
        %v4657 = vsel %vm4641, 1.0, %v4621
        %4658 = vset.pattern.permute.xlu0 102
        %4659 = vperm.xlu0 %4658, %v984
        %v4660 = vpop.permute.xlu0 %4659
        %vm4662 = vcmp.eq.f32.partialorder %v4660, %v968
        %vm4663 = vcmp.eq.f32.partialorder %v4660, %v969
        %vm4664 = vcmp.eq.f32.partialorder %v4660, %v970
        %vm4665 = vcmp.eq.f32.partialorder %v4660, %v971
        %vm4666 = vcmp.eq.f32.partialorder %v4660, %v972
        %vm4667 = vcmp.eq.f32.partialorder %v4660, %v973
        %vm4668 = vcmp.eq.f32.partialorder %v4660, %v974
        %vm4669 = vcmp.eq.f32.partialorder %v4660, %v975
        %vm4670 = vcmp.eq.f32.partialorder %v4660, %v976
        %vm4671 = vcmp.eq.f32.partialorder %v4660, %v977
        %vm4672 = vcmp.eq.f32.partialorder %v4660, %v978
        %vm4673 = vcmp.eq.f32.partialorder %v4660, %v979
        %vm4674 = vcmp.eq.f32.partialorder %v4660, %v980
        %vm4675 = vcmp.eq.f32.partialorder %v4660, %v981
        %vm4676 = vcmp.eq.f32.partialorder %v4660, %v982
        %vm4677 = vcmp.eq.f32.partialorder %v4660, %v983
        %v4678 = vsel %vm4662, 1.0, %v4642
        %v4679 = vsel %vm4663, 1.0, %v4643
        %v4680 = vsel %vm4664, 1.0, %v4644
        %v4681 = vsel %vm4665, 1.0, %v4645
        %v4682 = vsel %vm4666, 1.0, %v4646
        %v4683 = vsel %vm4667, 1.0, %v4647
        %v4684 = vsel %vm4668, 1.0, %v4648
        %v4685 = vsel %vm4669, 1.0, %v4649
        %v4686 = vsel %vm4670, 1.0, %v4650
        %v4687 = vsel %vm4671, 1.0, %v4651
        %v4688 = vsel %vm4672, 1.0, %v4652
        %v4689 = vsel %vm4673, 1.0, %v4653
        %v4690 = vsel %vm4674, 1.0, %v4654
        %v4691 = vsel %vm4675, 1.0, %v4655
        %v4692 = vsel %vm4676, 1.0, %v4656
        %v4693 = vsel %vm4677, 1.0, %v4657
        %4694 = vset.pattern.permute.xlu0 103
        %4695 = vperm.xlu0 %4694, %v984
        %v4696 = vpop.permute.xlu0 %4695
        %vm4698 = vcmp.eq.f32.partialorder %v4696, %v968
        %vm4699 = vcmp.eq.f32.partialorder %v4696, %v969
        %vm4700 = vcmp.eq.f32.partialorder %v4696, %v970
        %vm4701 = vcmp.eq.f32.partialorder %v4696, %v971
        %vm4702 = vcmp.eq.f32.partialorder %v4696, %v972
        %vm4703 = vcmp.eq.f32.partialorder %v4696, %v973
        %vm4704 = vcmp.eq.f32.partialorder %v4696, %v974
        %vm4705 = vcmp.eq.f32.partialorder %v4696, %v975
        %vm4706 = vcmp.eq.f32.partialorder %v4696, %v976
        %vm4707 = vcmp.eq.f32.partialorder %v4696, %v977
        %vm4708 = vcmp.eq.f32.partialorder %v4696, %v978
        %vm4709 = vcmp.eq.f32.partialorder %v4696, %v979
        %vm4710 = vcmp.eq.f32.partialorder %v4696, %v980
        %vm4711 = vcmp.eq.f32.partialorder %v4696, %v981
        %vm4712 = vcmp.eq.f32.partialorder %v4696, %v982
        %vm4713 = vcmp.eq.f32.partialorder %v4696, %v983
        %v4714 = vsel %vm4698, 1.0, %v4678
        %v4715 = vsel %vm4699, 1.0, %v4679
        %v4716 = vsel %vm4700, 1.0, %v4680
        %v4717 = vsel %vm4701, 1.0, %v4681
        %v4718 = vsel %vm4702, 1.0, %v4682
        %v4719 = vsel %vm4703, 1.0, %v4683
        %v4720 = vsel %vm4704, 1.0, %v4684
        %v4721 = vsel %vm4705, 1.0, %v4685
        %v4722 = vsel %vm4706, 1.0, %v4686
        %v4723 = vsel %vm4707, 1.0, %v4687
        %v4724 = vsel %vm4708, 1.0, %v4688
        %v4725 = vsel %vm4709, 1.0, %v4689
        %v4726 = vsel %vm4710, 1.0, %v4690
        %v4727 = vsel %vm4711, 1.0, %v4691
        %v4728 = vsel %vm4712, 1.0, %v4692
        %v4729 = vsel %vm4713, 1.0, %v4693
        %4730 = vset.pattern.permute.xlu0 104
        %4731 = vperm.xlu0 %4730, %v984
        %v4732 = vpop.permute.xlu0 %4731
        %vm4734 = vcmp.eq.f32.partialorder %v4732, %v968
        %vm4735 = vcmp.eq.f32.partialorder %v4732, %v969
        %vm4736 = vcmp.eq.f32.partialorder %v4732, %v970
        %vm4737 = vcmp.eq.f32.partialorder %v4732, %v971
        %vm4738 = vcmp.eq.f32.partialorder %v4732, %v972
        %vm4739 = vcmp.eq.f32.partialorder %v4732, %v973
        %vm4740 = vcmp.eq.f32.partialorder %v4732, %v974
        %vm4741 = vcmp.eq.f32.partialorder %v4732, %v975
        %vm4742 = vcmp.eq.f32.partialorder %v4732, %v976
        %vm4743 = vcmp.eq.f32.partialorder %v4732, %v977
        %vm4744 = vcmp.eq.f32.partialorder %v4732, %v978
        %vm4745 = vcmp.eq.f32.partialorder %v4732, %v979
        %vm4746 = vcmp.eq.f32.partialorder %v4732, %v980
        %vm4747 = vcmp.eq.f32.partialorder %v4732, %v981
        %vm4748 = vcmp.eq.f32.partialorder %v4732, %v982
        %vm4749 = vcmp.eq.f32.partialorder %v4732, %v983
        %v4750 = vsel %vm4734, 1.0, %v4714
        %v4751 = vsel %vm4735, 1.0, %v4715
        %v4752 = vsel %vm4736, 1.0, %v4716
        %v4753 = vsel %vm4737, 1.0, %v4717
        %v4754 = vsel %vm4738, 1.0, %v4718
        %v4755 = vsel %vm4739, 1.0, %v4719
        %v4756 = vsel %vm4740, 1.0, %v4720
        %v4757 = vsel %vm4741, 1.0, %v4721
        %v4758 = vsel %vm4742, 1.0, %v4722
        %v4759 = vsel %vm4743, 1.0, %v4723
        %v4760 = vsel %vm4744, 1.0, %v4724
        %v4761 = vsel %vm4745, 1.0, %v4725
        %v4762 = vsel %vm4746, 1.0, %v4726
        %v4763 = vsel %vm4747, 1.0, %v4727
        %v4764 = vsel %vm4748, 1.0, %v4728
        %v4765 = vsel %vm4749, 1.0, %v4729
        %4766 = vset.pattern.permute.xlu0 105
        %4767 = vperm.xlu0 %4766, %v984
        %v4768 = vpop.permute.xlu0 %4767
        %vm4770 = vcmp.eq.f32.partialorder %v4768, %v968
        %vm4771 = vcmp.eq.f32.partialorder %v4768, %v969
        %vm4772 = vcmp.eq.f32.partialorder %v4768, %v970
        %vm4773 = vcmp.eq.f32.partialorder %v4768, %v971
        %vm4774 = vcmp.eq.f32.partialorder %v4768, %v972
        %vm4775 = vcmp.eq.f32.partialorder %v4768, %v973
        %vm4776 = vcmp.eq.f32.partialorder %v4768, %v974
        %vm4777 = vcmp.eq.f32.partialorder %v4768, %v975
        %vm4778 = vcmp.eq.f32.partialorder %v4768, %v976
        %vm4779 = vcmp.eq.f32.partialorder %v4768, %v977
        %vm4780 = vcmp.eq.f32.partialorder %v4768, %v978
        %vm4781 = vcmp.eq.f32.partialorder %v4768, %v979
        %vm4782 = vcmp.eq.f32.partialorder %v4768, %v980
        %vm4783 = vcmp.eq.f32.partialorder %v4768, %v981
        %vm4784 = vcmp.eq.f32.partialorder %v4768, %v982
        %vm4785 = vcmp.eq.f32.partialorder %v4768, %v983
        %v4786 = vsel %vm4770, 1.0, %v4750
        %v4787 = vsel %vm4771, 1.0, %v4751
        %v4788 = vsel %vm4772, 1.0, %v4752
        %v4789 = vsel %vm4773, 1.0, %v4753
        %v4790 = vsel %vm4774, 1.0, %v4754
        %v4791 = vsel %vm4775, 1.0, %v4755
        %v4792 = vsel %vm4776, 1.0, %v4756
        %v4793 = vsel %vm4777, 1.0, %v4757
        %v4794 = vsel %vm4778, 1.0, %v4758
        %v4795 = vsel %vm4779, 1.0, %v4759
        %v4796 = vsel %vm4780, 1.0, %v4760
        %v4797 = vsel %vm4781, 1.0, %v4761
        %v4798 = vsel %vm4782, 1.0, %v4762
        %v4799 = vsel %vm4783, 1.0, %v4763
        %v4800 = vsel %vm4784, 1.0, %v4764
        %v4801 = vsel %vm4785, 1.0, %v4765
        %4802 = vset.pattern.permute.xlu0 106
        %4803 = vperm.xlu0 %4802, %v984
        %v4804 = vpop.permute.xlu0 %4803
        %vm4806 = vcmp.eq.f32.partialorder %v4804, %v968
        %vm4807 = vcmp.eq.f32.partialorder %v4804, %v969
        %vm4808 = vcmp.eq.f32.partialorder %v4804, %v970
        %vm4809 = vcmp.eq.f32.partialorder %v4804, %v971
        %vm4810 = vcmp.eq.f32.partialorder %v4804, %v972
        %vm4811 = vcmp.eq.f32.partialorder %v4804, %v973
        %vm4812 = vcmp.eq.f32.partialorder %v4804, %v974
        %vm4813 = vcmp.eq.f32.partialorder %v4804, %v975
        %vm4814 = vcmp.eq.f32.partialorder %v4804, %v976
        %vm4815 = vcmp.eq.f32.partialorder %v4804, %v977
        %vm4816 = vcmp.eq.f32.partialorder %v4804, %v978
        %vm4817 = vcmp.eq.f32.partialorder %v4804, %v979
        %vm4818 = vcmp.eq.f32.partialorder %v4804, %v980
        %vm4819 = vcmp.eq.f32.partialorder %v4804, %v981
        %vm4820 = vcmp.eq.f32.partialorder %v4804, %v982
        %vm4821 = vcmp.eq.f32.partialorder %v4804, %v983
        %v4822 = vsel %vm4806, 1.0, %v4786
        %v4823 = vsel %vm4807, 1.0, %v4787
        %v4824 = vsel %vm4808, 1.0, %v4788
        %v4825 = vsel %vm4809, 1.0, %v4789
        %v4826 = vsel %vm4810, 1.0, %v4790
        %v4827 = vsel %vm4811, 1.0, %v4791
        %v4828 = vsel %vm4812, 1.0, %v4792
        %v4829 = vsel %vm4813, 1.0, %v4793
        %v4830 = vsel %vm4814, 1.0, %v4794
        %v4831 = vsel %vm4815, 1.0, %v4795
        %v4832 = vsel %vm4816, 1.0, %v4796
        %v4833 = vsel %vm4817, 1.0, %v4797
        %v4834 = vsel %vm4818, 1.0, %v4798
        %v4835 = vsel %vm4819, 1.0, %v4799
        %v4836 = vsel %vm4820, 1.0, %v4800
        %v4837 = vsel %vm4821, 1.0, %v4801
        %4838 = vset.pattern.permute.xlu0 107
        %4839 = vperm.xlu0 %4838, %v984
        %v4840 = vpop.permute.xlu0 %4839
        %vm4842 = vcmp.eq.f32.partialorder %v4840, %v968
        %vm4843 = vcmp.eq.f32.partialorder %v4840, %v969
        %vm4844 = vcmp.eq.f32.partialorder %v4840, %v970
        %vm4845 = vcmp.eq.f32.partialorder %v4840, %v971
        %vm4846 = vcmp.eq.f32.partialorder %v4840, %v972
        %vm4847 = vcmp.eq.f32.partialorder %v4840, %v973
        %vm4848 = vcmp.eq.f32.partialorder %v4840, %v974
        %vm4849 = vcmp.eq.f32.partialorder %v4840, %v975
        %vm4850 = vcmp.eq.f32.partialorder %v4840, %v976
        %vm4851 = vcmp.eq.f32.partialorder %v4840, %v977
        %vm4852 = vcmp.eq.f32.partialorder %v4840, %v978
        %vm4853 = vcmp.eq.f32.partialorder %v4840, %v979
        %vm4854 = vcmp.eq.f32.partialorder %v4840, %v980
        %vm4855 = vcmp.eq.f32.partialorder %v4840, %v981
        %vm4856 = vcmp.eq.f32.partialorder %v4840, %v982
        %vm4857 = vcmp.eq.f32.partialorder %v4840, %v983
        %v4858 = vsel %vm4842, 1.0, %v4822
        %v4859 = vsel %vm4843, 1.0, %v4823
        %v4860 = vsel %vm4844, 1.0, %v4824
        %v4861 = vsel %vm4845, 1.0, %v4825
        %v4862 = vsel %vm4846, 1.0, %v4826
        %v4863 = vsel %vm4847, 1.0, %v4827
        %v4864 = vsel %vm4848, 1.0, %v4828
        %v4865 = vsel %vm4849, 1.0, %v4829
        %v4866 = vsel %vm4850, 1.0, %v4830
        %v4867 = vsel %vm4851, 1.0, %v4831
        %v4868 = vsel %vm4852, 1.0, %v4832
        %v4869 = vsel %vm4853, 1.0, %v4833
        %v4870 = vsel %vm4854, 1.0, %v4834
        %v4871 = vsel %vm4855, 1.0, %v4835
        %v4872 = vsel %vm4856, 1.0, %v4836
        %v4873 = vsel %vm4857, 1.0, %v4837
        %4874 = vset.pattern.permute.xlu0 108
        %4875 = vperm.xlu0 %4874, %v984
        %v4876 = vpop.permute.xlu0 %4875
        %vm4878 = vcmp.eq.f32.partialorder %v4876, %v968
        %vm4879 = vcmp.eq.f32.partialorder %v4876, %v969
        %vm4880 = vcmp.eq.f32.partialorder %v4876, %v970
        %vm4881 = vcmp.eq.f32.partialorder %v4876, %v971
        %vm4882 = vcmp.eq.f32.partialorder %v4876, %v972
        %vm4883 = vcmp.eq.f32.partialorder %v4876, %v973
        %vm4884 = vcmp.eq.f32.partialorder %v4876, %v974
        %vm4885 = vcmp.eq.f32.partialorder %v4876, %v975
        %vm4886 = vcmp.eq.f32.partialorder %v4876, %v976
        %vm4887 = vcmp.eq.f32.partialorder %v4876, %v977
        %vm4888 = vcmp.eq.f32.partialorder %v4876, %v978
        %vm4889 = vcmp.eq.f32.partialorder %v4876, %v979
        %vm4890 = vcmp.eq.f32.partialorder %v4876, %v980
        %vm4891 = vcmp.eq.f32.partialorder %v4876, %v981
        %vm4892 = vcmp.eq.f32.partialorder %v4876, %v982
        %vm4893 = vcmp.eq.f32.partialorder %v4876, %v983
        %v4894 = vsel %vm4878, 1.0, %v4858
        %v4895 = vsel %vm4879, 1.0, %v4859
        %v4896 = vsel %vm4880, 1.0, %v4860
        %v4897 = vsel %vm4881, 1.0, %v4861
        %v4898 = vsel %vm4882, 1.0, %v4862
        %v4899 = vsel %vm4883, 1.0, %v4863
        %v4900 = vsel %vm4884, 1.0, %v4864
        %v4901 = vsel %vm4885, 1.0, %v4865
        %v4902 = vsel %vm4886, 1.0, %v4866
        %v4903 = vsel %vm4887, 1.0, %v4867
        %v4904 = vsel %vm4888, 1.0, %v4868
        %v4905 = vsel %vm4889, 1.0, %v4869
        %v4906 = vsel %vm4890, 1.0, %v4870
        %v4907 = vsel %vm4891, 1.0, %v4871
        %v4908 = vsel %vm4892, 1.0, %v4872
        %v4909 = vsel %vm4893, 1.0, %v4873
        %4910 = vset.pattern.permute.xlu0 109
        %4911 = vperm.xlu0 %4910, %v984
        %v4912 = vpop.permute.xlu0 %4911
        %vm4914 = vcmp.eq.f32.partialorder %v4912, %v968
        %vm4915 = vcmp.eq.f32.partialorder %v4912, %v969
        %vm4916 = vcmp.eq.f32.partialorder %v4912, %v970
        %vm4917 = vcmp.eq.f32.partialorder %v4912, %v971
        %vm4918 = vcmp.eq.f32.partialorder %v4912, %v972
        %vm4919 = vcmp.eq.f32.partialorder %v4912, %v973
        %vm4920 = vcmp.eq.f32.partialorder %v4912, %v974
        %vm4921 = vcmp.eq.f32.partialorder %v4912, %v975
        %vm4922 = vcmp.eq.f32.partialorder %v4912, %v976
        %vm4923 = vcmp.eq.f32.partialorder %v4912, %v977
        %vm4924 = vcmp.eq.f32.partialorder %v4912, %v978
        %vm4925 = vcmp.eq.f32.partialorder %v4912, %v979
        %vm4926 = vcmp.eq.f32.partialorder %v4912, %v980
        %vm4927 = vcmp.eq.f32.partialorder %v4912, %v981
        %vm4928 = vcmp.eq.f32.partialorder %v4912, %v982
        %vm4929 = vcmp.eq.f32.partialorder %v4912, %v983
        %v4930 = vsel %vm4914, 1.0, %v4894
        %v4931 = vsel %vm4915, 1.0, %v4895
        %v4932 = vsel %vm4916, 1.0, %v4896
        %v4933 = vsel %vm4917, 1.0, %v4897
        %v4934 = vsel %vm4918, 1.0, %v4898
        %v4935 = vsel %vm4919, 1.0, %v4899
        %v4936 = vsel %vm4920, 1.0, %v4900
        %v4937 = vsel %vm4921, 1.0, %v4901
        %v4938 = vsel %vm4922, 1.0, %v4902
        %v4939 = vsel %vm4923, 1.0, %v4903
        %v4940 = vsel %vm4924, 1.0, %v4904
        %v4941 = vsel %vm4925, 1.0, %v4905
        %v4942 = vsel %vm4926, 1.0, %v4906
        %v4943 = vsel %vm4927, 1.0, %v4907
        %v4944 = vsel %vm4928, 1.0, %v4908
        %v4945 = vsel %vm4929, 1.0, %v4909
        %4946 = vset.pattern.permute.xlu0 110
        %4947 = vperm.xlu0 %4946, %v984
        %v4948 = vpop.permute.xlu0 %4947
        %vm4950 = vcmp.eq.f32.partialorder %v4948, %v968
        %vm4951 = vcmp.eq.f32.partialorder %v4948, %v969
        %vm4952 = vcmp.eq.f32.partialorder %v4948, %v970
        %vm4953 = vcmp.eq.f32.partialorder %v4948, %v971
        %vm4954 = vcmp.eq.f32.partialorder %v4948, %v972
        %vm4955 = vcmp.eq.f32.partialorder %v4948, %v973
        %vm4956 = vcmp.eq.f32.partialorder %v4948, %v974
        %vm4957 = vcmp.eq.f32.partialorder %v4948, %v975
        %vm4958 = vcmp.eq.f32.partialorder %v4948, %v976
        %vm4959 = vcmp.eq.f32.partialorder %v4948, %v977
        %vm4960 = vcmp.eq.f32.partialorder %v4948, %v978
        %vm4961 = vcmp.eq.f32.partialorder %v4948, %v979
        %vm4962 = vcmp.eq.f32.partialorder %v4948, %v980
        %vm4963 = vcmp.eq.f32.partialorder %v4948, %v981
        %vm4964 = vcmp.eq.f32.partialorder %v4948, %v982
        %vm4965 = vcmp.eq.f32.partialorder %v4948, %v983
        %v4966 = vsel %vm4950, 1.0, %v4930
        %v4967 = vsel %vm4951, 1.0, %v4931
        %v4968 = vsel %vm4952, 1.0, %v4932
        %v4969 = vsel %vm4953, 1.0, %v4933
        %v4970 = vsel %vm4954, 1.0, %v4934
        %v4971 = vsel %vm4955, 1.0, %v4935
        %v4972 = vsel %vm4956, 1.0, %v4936
        %v4973 = vsel %vm4957, 1.0, %v4937
        %v4974 = vsel %vm4958, 1.0, %v4938
        %v4975 = vsel %vm4959, 1.0, %v4939
        %v4976 = vsel %vm4960, 1.0, %v4940
        %v4977 = vsel %vm4961, 1.0, %v4941
        %v4978 = vsel %vm4962, 1.0, %v4942
        %v4979 = vsel %vm4963, 1.0, %v4943
        %v4980 = vsel %vm4964, 1.0, %v4944
        %v4981 = vsel %vm4965, 1.0, %v4945
        %4982 = vset.pattern.permute.xlu0 111
        %4983 = vperm.xlu0 %4982, %v984
        %v4984 = vpop.permute.xlu0 %4983
        %vm4986 = vcmp.eq.f32.partialorder %v4984, %v968
        %vm4987 = vcmp.eq.f32.partialorder %v4984, %v969
        %vm4988 = vcmp.eq.f32.partialorder %v4984, %v970
        %vm4989 = vcmp.eq.f32.partialorder %v4984, %v971
        %vm4990 = vcmp.eq.f32.partialorder %v4984, %v972
        %vm4991 = vcmp.eq.f32.partialorder %v4984, %v973
        %vm4992 = vcmp.eq.f32.partialorder %v4984, %v974
        %vm4993 = vcmp.eq.f32.partialorder %v4984, %v975
        %vm4994 = vcmp.eq.f32.partialorder %v4984, %v976
        %vm4995 = vcmp.eq.f32.partialorder %v4984, %v977
        %vm4996 = vcmp.eq.f32.partialorder %v4984, %v978
        %vm4997 = vcmp.eq.f32.partialorder %v4984, %v979
        %vm4998 = vcmp.eq.f32.partialorder %v4984, %v980
        %vm4999 = vcmp.eq.f32.partialorder %v4984, %v981
        %vm5000 = vcmp.eq.f32.partialorder %v4984, %v982
        %vm5001 = vcmp.eq.f32.partialorder %v4984, %v983
        %v5002 = vsel %vm4986, 1.0, %v4966
        %v5003 = vsel %vm4987, 1.0, %v4967
        %v5004 = vsel %vm4988, 1.0, %v4968
        %v5005 = vsel %vm4989, 1.0, %v4969
        %v5006 = vsel %vm4990, 1.0, %v4970
        %v5007 = vsel %vm4991, 1.0, %v4971
        %v5008 = vsel %vm4992, 1.0, %v4972
        %v5009 = vsel %vm4993, 1.0, %v4973
        %v5010 = vsel %vm4994, 1.0, %v4974
        %v5011 = vsel %vm4995, 1.0, %v4975
        %v5012 = vsel %vm4996, 1.0, %v4976
        %v5013 = vsel %vm4997, 1.0, %v4977
        %v5014 = vsel %vm4998, 1.0, %v4978
        %v5015 = vsel %vm4999, 1.0, %v4979
        %v5016 = vsel %vm5000, 1.0, %v4980
        %v5017 = vsel %vm5001, 1.0, %v4981
        %5018 = vset.pattern.permute.xlu0 112
        %5019 = vperm.xlu0 %5018, %v984
        %v5020 = vpop.permute.xlu0 %5019
        %vm5022 = vcmp.eq.f32.partialorder %v5020, %v968
        %vm5023 = vcmp.eq.f32.partialorder %v5020, %v969
        %vm5024 = vcmp.eq.f32.partialorder %v5020, %v970
        %vm5025 = vcmp.eq.f32.partialorder %v5020, %v971
        %vm5026 = vcmp.eq.f32.partialorder %v5020, %v972
        %vm5027 = vcmp.eq.f32.partialorder %v5020, %v973
        %vm5028 = vcmp.eq.f32.partialorder %v5020, %v974
        %vm5029 = vcmp.eq.f32.partialorder %v5020, %v975
        %vm5030 = vcmp.eq.f32.partialorder %v5020, %v976
        %vm5031 = vcmp.eq.f32.partialorder %v5020, %v977
        %vm5032 = vcmp.eq.f32.partialorder %v5020, %v978
        %vm5033 = vcmp.eq.f32.partialorder %v5020, %v979
        %vm5034 = vcmp.eq.f32.partialorder %v5020, %v980
        %vm5035 = vcmp.eq.f32.partialorder %v5020, %v981
        %vm5036 = vcmp.eq.f32.partialorder %v5020, %v982
        %vm5037 = vcmp.eq.f32.partialorder %v5020, %v983
        %v5038 = vsel %vm5022, 1.0, %v5002
        %v5039 = vsel %vm5023, 1.0, %v5003
        %v5040 = vsel %vm5024, 1.0, %v5004
        %v5041 = vsel %vm5025, 1.0, %v5005
        %v5042 = vsel %vm5026, 1.0, %v5006
        %v5043 = vsel %vm5027, 1.0, %v5007
        %v5044 = vsel %vm5028, 1.0, %v5008
        %v5045 = vsel %vm5029, 1.0, %v5009
        %v5046 = vsel %vm5030, 1.0, %v5010
        %v5047 = vsel %vm5031, 1.0, %v5011
        %v5048 = vsel %vm5032, 1.0, %v5012
        %v5049 = vsel %vm5033, 1.0, %v5013
        %v5050 = vsel %vm5034, 1.0, %v5014
        %v5051 = vsel %vm5035, 1.0, %v5015
        %v5052 = vsel %vm5036, 1.0, %v5016
        %v5053 = vsel %vm5037, 1.0, %v5017
        %5054 = vset.pattern.permute.xlu0 113
        %5055 = vperm.xlu0 %5054, %v984
        %v5056 = vpop.permute.xlu0 %5055
        %vm5058 = vcmp.eq.f32.partialorder %v5056, %v968
        %vm5059 = vcmp.eq.f32.partialorder %v5056, %v969
        %vm5060 = vcmp.eq.f32.partialorder %v5056, %v970
        %vm5061 = vcmp.eq.f32.partialorder %v5056, %v971
        %vm5062 = vcmp.eq.f32.partialorder %v5056, %v972
        %vm5063 = vcmp.eq.f32.partialorder %v5056, %v973
        %vm5064 = vcmp.eq.f32.partialorder %v5056, %v974
        %vm5065 = vcmp.eq.f32.partialorder %v5056, %v975
        %vm5066 = vcmp.eq.f32.partialorder %v5056, %v976
        %vm5067 = vcmp.eq.f32.partialorder %v5056, %v977
        %vm5068 = vcmp.eq.f32.partialorder %v5056, %v978
        %vm5069 = vcmp.eq.f32.partialorder %v5056, %v979
        %vm5070 = vcmp.eq.f32.partialorder %v5056, %v980
        %vm5071 = vcmp.eq.f32.partialorder %v5056, %v981
        %vm5072 = vcmp.eq.f32.partialorder %v5056, %v982
        %vm5073 = vcmp.eq.f32.partialorder %v5056, %v983
        %v5074 = vsel %vm5058, 1.0, %v5038
        %v5075 = vsel %vm5059, 1.0, %v5039
        %v5076 = vsel %vm5060, 1.0, %v5040
        %v5077 = vsel %vm5061, 1.0, %v5041
        %v5078 = vsel %vm5062, 1.0, %v5042
        %v5079 = vsel %vm5063, 1.0, %v5043
        %v5080 = vsel %vm5064, 1.0, %v5044
        %v5081 = vsel %vm5065, 1.0, %v5045
        %v5082 = vsel %vm5066, 1.0, %v5046
        %v5083 = vsel %vm5067, 1.0, %v5047
        %v5084 = vsel %vm5068, 1.0, %v5048
        %v5085 = vsel %vm5069, 1.0, %v5049
        %v5086 = vsel %vm5070, 1.0, %v5050
        %v5087 = vsel %vm5071, 1.0, %v5051
        %v5088 = vsel %vm5072, 1.0, %v5052
        %v5089 = vsel %vm5073, 1.0, %v5053
        %5090 = vset.pattern.permute.xlu0 114
        %5091 = vperm.xlu0 %5090, %v984
        %v5092 = vpop.permute.xlu0 %5091
        %vm5094 = vcmp.eq.f32.partialorder %v5092, %v968
        %vm5095 = vcmp.eq.f32.partialorder %v5092, %v969
        %vm5096 = vcmp.eq.f32.partialorder %v5092, %v970
        %vm5097 = vcmp.eq.f32.partialorder %v5092, %v971
        %vm5098 = vcmp.eq.f32.partialorder %v5092, %v972
        %vm5099 = vcmp.eq.f32.partialorder %v5092, %v973
        %vm5100 = vcmp.eq.f32.partialorder %v5092, %v974
        %vm5101 = vcmp.eq.f32.partialorder %v5092, %v975
        %vm5102 = vcmp.eq.f32.partialorder %v5092, %v976
        %vm5103 = vcmp.eq.f32.partialorder %v5092, %v977
        %vm5104 = vcmp.eq.f32.partialorder %v5092, %v978
        %vm5105 = vcmp.eq.f32.partialorder %v5092, %v979
        %vm5106 = vcmp.eq.f32.partialorder %v5092, %v980
        %vm5107 = vcmp.eq.f32.partialorder %v5092, %v981
        %vm5108 = vcmp.eq.f32.partialorder %v5092, %v982
        %vm5109 = vcmp.eq.f32.partialorder %v5092, %v983
        %v5110 = vsel %vm5094, 1.0, %v5074
        %v5111 = vsel %vm5095, 1.0, %v5075
        %v5112 = vsel %vm5096, 1.0, %v5076
        %v5113 = vsel %vm5097, 1.0, %v5077
        %v5114 = vsel %vm5098, 1.0, %v5078
        %v5115 = vsel %vm5099, 1.0, %v5079
        %v5116 = vsel %vm5100, 1.0, %v5080
        %v5117 = vsel %vm5101, 1.0, %v5081
        %v5118 = vsel %vm5102, 1.0, %v5082
        %v5119 = vsel %vm5103, 1.0, %v5083
        %v5120 = vsel %vm5104, 1.0, %v5084
        %v5121 = vsel %vm5105, 1.0, %v5085
        %v5122 = vsel %vm5106, 1.0, %v5086
        %v5123 = vsel %vm5107, 1.0, %v5087
        %v5124 = vsel %vm5108, 1.0, %v5088
        %v5125 = vsel %vm5109, 1.0, %v5089
        %5126 = vset.pattern.permute.xlu0 115
        %5127 = vperm.xlu0 %5126, %v984
        %v5128 = vpop.permute.xlu0 %5127
        %vm5130 = vcmp.eq.f32.partialorder %v5128, %v968
        %vm5131 = vcmp.eq.f32.partialorder %v5128, %v969
        %vm5132 = vcmp.eq.f32.partialorder %v5128, %v970
        %vm5133 = vcmp.eq.f32.partialorder %v5128, %v971
        %vm5134 = vcmp.eq.f32.partialorder %v5128, %v972
        %vm5135 = vcmp.eq.f32.partialorder %v5128, %v973
        %vm5136 = vcmp.eq.f32.partialorder %v5128, %v974
        %vm5137 = vcmp.eq.f32.partialorder %v5128, %v975
        %vm5138 = vcmp.eq.f32.partialorder %v5128, %v976
        %vm5139 = vcmp.eq.f32.partialorder %v5128, %v977
        %vm5140 = vcmp.eq.f32.partialorder %v5128, %v978
        %vm5141 = vcmp.eq.f32.partialorder %v5128, %v979
        %vm5142 = vcmp.eq.f32.partialorder %v5128, %v980
        %vm5143 = vcmp.eq.f32.partialorder %v5128, %v981
        %vm5144 = vcmp.eq.f32.partialorder %v5128, %v982
        %vm5145 = vcmp.eq.f32.partialorder %v5128, %v983
        %v5146 = vsel %vm5130, 1.0, %v5110
        %v5147 = vsel %vm5131, 1.0, %v5111
        %v5148 = vsel %vm5132, 1.0, %v5112
        %v5149 = vsel %vm5133, 1.0, %v5113
        %v5150 = vsel %vm5134, 1.0, %v5114
        %v5151 = vsel %vm5135, 1.0, %v5115
        %v5152 = vsel %vm5136, 1.0, %v5116
        %v5153 = vsel %vm5137, 1.0, %v5117
        %v5154 = vsel %vm5138, 1.0, %v5118
        %v5155 = vsel %vm5139, 1.0, %v5119
        %v5156 = vsel %vm5140, 1.0, %v5120
        %v5157 = vsel %vm5141, 1.0, %v5121
        %v5158 = vsel %vm5142, 1.0, %v5122
        %v5159 = vsel %vm5143, 1.0, %v5123
        %v5160 = vsel %vm5144, 1.0, %v5124
        %v5161 = vsel %vm5145, 1.0, %v5125
        %5162 = vset.pattern.permute.xlu0 116
        %5163 = vperm.xlu0 %5162, %v984
        %v5164 = vpop.permute.xlu0 %5163
        %vm5166 = vcmp.eq.f32.partialorder %v5164, %v968
        %vm5167 = vcmp.eq.f32.partialorder %v5164, %v969
        %vm5168 = vcmp.eq.f32.partialorder %v5164, %v970
        %vm5169 = vcmp.eq.f32.partialorder %v5164, %v971
        %vm5170 = vcmp.eq.f32.partialorder %v5164, %v972
        %vm5171 = vcmp.eq.f32.partialorder %v5164, %v973
        %vm5172 = vcmp.eq.f32.partialorder %v5164, %v974
        %vm5173 = vcmp.eq.f32.partialorder %v5164, %v975
        %vm5174 = vcmp.eq.f32.partialorder %v5164, %v976
        %vm5175 = vcmp.eq.f32.partialorder %v5164, %v977
        %vm5176 = vcmp.eq.f32.partialorder %v5164, %v978
        %vm5177 = vcmp.eq.f32.partialorder %v5164, %v979
        %vm5178 = vcmp.eq.f32.partialorder %v5164, %v980
        %vm5179 = vcmp.eq.f32.partialorder %v5164, %v981
        %vm5180 = vcmp.eq.f32.partialorder %v5164, %v982
        %vm5181 = vcmp.eq.f32.partialorder %v5164, %v983
        %v5182 = vsel %vm5166, 1.0, %v5146
        %v5183 = vsel %vm5167, 1.0, %v5147
        %v5184 = vsel %vm5168, 1.0, %v5148
        %v5185 = vsel %vm5169, 1.0, %v5149
        %v5186 = vsel %vm5170, 1.0, %v5150
        %v5187 = vsel %vm5171, 1.0, %v5151
        %v5188 = vsel %vm5172, 1.0, %v5152
        %v5189 = vsel %vm5173, 1.0, %v5153
        %v5190 = vsel %vm5174, 1.0, %v5154
        %v5191 = vsel %vm5175, 1.0, %v5155
        %v5192 = vsel %vm5176, 1.0, %v5156
        %v5193 = vsel %vm5177, 1.0, %v5157
        %v5194 = vsel %vm5178, 1.0, %v5158
        %v5195 = vsel %vm5179, 1.0, %v5159
        %v5196 = vsel %vm5180, 1.0, %v5160
        %v5197 = vsel %vm5181, 1.0, %v5161
        %5198 = vset.pattern.permute.xlu0 117
        %5199 = vperm.xlu0 %5198, %v984
        %v5200 = vpop.permute.xlu0 %5199
        %vm5202 = vcmp.eq.f32.partialorder %v5200, %v968
        %vm5203 = vcmp.eq.f32.partialorder %v5200, %v969
        %vm5204 = vcmp.eq.f32.partialorder %v5200, %v970
        %vm5205 = vcmp.eq.f32.partialorder %v5200, %v971
        %vm5206 = vcmp.eq.f32.partialorder %v5200, %v972
        %vm5207 = vcmp.eq.f32.partialorder %v5200, %v973
        %vm5208 = vcmp.eq.f32.partialorder %v5200, %v974
        %vm5209 = vcmp.eq.f32.partialorder %v5200, %v975
        %vm5210 = vcmp.eq.f32.partialorder %v5200, %v976
        %vm5211 = vcmp.eq.f32.partialorder %v5200, %v977
        %vm5212 = vcmp.eq.f32.partialorder %v5200, %v978
        %vm5213 = vcmp.eq.f32.partialorder %v5200, %v979
        %vm5214 = vcmp.eq.f32.partialorder %v5200, %v980
        %vm5215 = vcmp.eq.f32.partialorder %v5200, %v981
        %vm5216 = vcmp.eq.f32.partialorder %v5200, %v982
        %vm5217 = vcmp.eq.f32.partialorder %v5200, %v983
        %v5218 = vsel %vm5202, 1.0, %v5182
        %v5219 = vsel %vm5203, 1.0, %v5183
        %v5220 = vsel %vm5204, 1.0, %v5184
        %v5221 = vsel %vm5205, 1.0, %v5185
        %v5222 = vsel %vm5206, 1.0, %v5186
        %v5223 = vsel %vm5207, 1.0, %v5187
        %v5224 = vsel %vm5208, 1.0, %v5188
        %v5225 = vsel %vm5209, 1.0, %v5189
        %v5226 = vsel %vm5210, 1.0, %v5190
        %v5227 = vsel %vm5211, 1.0, %v5191
        %v5228 = vsel %vm5212, 1.0, %v5192
        %v5229 = vsel %vm5213, 1.0, %v5193
        %v5230 = vsel %vm5214, 1.0, %v5194
        %v5231 = vsel %vm5215, 1.0, %v5195
        %v5232 = vsel %vm5216, 1.0, %v5196
        %v5233 = vsel %vm5217, 1.0, %v5197
        %5234 = vset.pattern.permute.xlu0 118
        %5235 = vperm.xlu0 %5234, %v984
        %v5236 = vpop.permute.xlu0 %5235
        %vm5238 = vcmp.eq.f32.partialorder %v5236, %v968
        %vm5239 = vcmp.eq.f32.partialorder %v5236, %v969
        %vm5240 = vcmp.eq.f32.partialorder %v5236, %v970
        %vm5241 = vcmp.eq.f32.partialorder %v5236, %v971
        %vm5242 = vcmp.eq.f32.partialorder %v5236, %v972
        %vm5243 = vcmp.eq.f32.partialorder %v5236, %v973
        %vm5244 = vcmp.eq.f32.partialorder %v5236, %v974
        %vm5245 = vcmp.eq.f32.partialorder %v5236, %v975
        %vm5246 = vcmp.eq.f32.partialorder %v5236, %v976
        %vm5247 = vcmp.eq.f32.partialorder %v5236, %v977
        %vm5248 = vcmp.eq.f32.partialorder %v5236, %v978
        %vm5249 = vcmp.eq.f32.partialorder %v5236, %v979
        %vm5250 = vcmp.eq.f32.partialorder %v5236, %v980
        %vm5251 = vcmp.eq.f32.partialorder %v5236, %v981
        %vm5252 = vcmp.eq.f32.partialorder %v5236, %v982
        %vm5253 = vcmp.eq.f32.partialorder %v5236, %v983
        %v5254 = vsel %vm5238, 1.0, %v5218
        %v5255 = vsel %vm5239, 1.0, %v5219
        %v5256 = vsel %vm5240, 1.0, %v5220
        %v5257 = vsel %vm5241, 1.0, %v5221
        %v5258 = vsel %vm5242, 1.0, %v5222
        %v5259 = vsel %vm5243, 1.0, %v5223
        %v5260 = vsel %vm5244, 1.0, %v5224
        %v5261 = vsel %vm5245, 1.0, %v5225
        %v5262 = vsel %vm5246, 1.0, %v5226
        %v5263 = vsel %vm5247, 1.0, %v5227
        %v5264 = vsel %vm5248, 1.0, %v5228
        %v5265 = vsel %vm5249, 1.0, %v5229
        %v5266 = vsel %vm5250, 1.0, %v5230
        %v5267 = vsel %vm5251, 1.0, %v5231
        %v5268 = vsel %vm5252, 1.0, %v5232
        %v5269 = vsel %vm5253, 1.0, %v5233
        %5270 = vset.pattern.permute.xlu0 119
        %5271 = vperm.xlu0 %5270, %v984
        %v5272 = vpop.permute.xlu0 %5271
        %vm5274 = vcmp.eq.f32.partialorder %v5272, %v968
        %vm5275 = vcmp.eq.f32.partialorder %v5272, %v969
        %vm5276 = vcmp.eq.f32.partialorder %v5272, %v970
        %vm5277 = vcmp.eq.f32.partialorder %v5272, %v971
        %vm5278 = vcmp.eq.f32.partialorder %v5272, %v972
        %vm5279 = vcmp.eq.f32.partialorder %v5272, %v973
        %vm5280 = vcmp.eq.f32.partialorder %v5272, %v974
        %vm5281 = vcmp.eq.f32.partialorder %v5272, %v975
        %vm5282 = vcmp.eq.f32.partialorder %v5272, %v976
        %vm5283 = vcmp.eq.f32.partialorder %v5272, %v977
        %vm5284 = vcmp.eq.f32.partialorder %v5272, %v978
        %vm5285 = vcmp.eq.f32.partialorder %v5272, %v979
        %vm5286 = vcmp.eq.f32.partialorder %v5272, %v980
        %vm5287 = vcmp.eq.f32.partialorder %v5272, %v981
        %vm5288 = vcmp.eq.f32.partialorder %v5272, %v982
        %vm5289 = vcmp.eq.f32.partialorder %v5272, %v983
        %v5290 = vsel %vm5274, 1.0, %v5254
        %v5291 = vsel %vm5275, 1.0, %v5255
        %v5292 = vsel %vm5276, 1.0, %v5256
        %v5293 = vsel %vm5277, 1.0, %v5257
        %v5294 = vsel %vm5278, 1.0, %v5258
        %v5295 = vsel %vm5279, 1.0, %v5259
        %v5296 = vsel %vm5280, 1.0, %v5260
        %v5297 = vsel %vm5281, 1.0, %v5261
        %v5298 = vsel %vm5282, 1.0, %v5262
        %v5299 = vsel %vm5283, 1.0, %v5263
        %v5300 = vsel %vm5284, 1.0, %v5264
        %v5301 = vsel %vm5285, 1.0, %v5265
        %v5302 = vsel %vm5286, 1.0, %v5266
        %v5303 = vsel %vm5287, 1.0, %v5267
        %v5304 = vsel %vm5288, 1.0, %v5268
        %v5305 = vsel %vm5289, 1.0, %v5269
        %5306 = vset.pattern.permute.xlu0 120
        %5307 = vperm.xlu0 %5306, %v984
        %v5308 = vpop.permute.xlu0 %5307
        %vm5310 = vcmp.eq.f32.partialorder %v5308, %v968
        %vm5311 = vcmp.eq.f32.partialorder %v5308, %v969
        %vm5312 = vcmp.eq.f32.partialorder %v5308, %v970
        %vm5313 = vcmp.eq.f32.partialorder %v5308, %v971
        %vm5314 = vcmp.eq.f32.partialorder %v5308, %v972
        %vm5315 = vcmp.eq.f32.partialorder %v5308, %v973
        %vm5316 = vcmp.eq.f32.partialorder %v5308, %v974
        %vm5317 = vcmp.eq.f32.partialorder %v5308, %v975
        %vm5318 = vcmp.eq.f32.partialorder %v5308, %v976
        %vm5319 = vcmp.eq.f32.partialorder %v5308, %v977
        %vm5320 = vcmp.eq.f32.partialorder %v5308, %v978
        %vm5321 = vcmp.eq.f32.partialorder %v5308, %v979
        %vm5322 = vcmp.eq.f32.partialorder %v5308, %v980
        %vm5323 = vcmp.eq.f32.partialorder %v5308, %v981
        %vm5324 = vcmp.eq.f32.partialorder %v5308, %v982
        %vm5325 = vcmp.eq.f32.partialorder %v5308, %v983
        %v5326 = vsel %vm5310, 1.0, %v5290
        %v5327 = vsel %vm5311, 1.0, %v5291
        %v5328 = vsel %vm5312, 1.0, %v5292
        %v5329 = vsel %vm5313, 1.0, %v5293
        %v5330 = vsel %vm5314, 1.0, %v5294
        %v5331 = vsel %vm5315, 1.0, %v5295
        %v5332 = vsel %vm5316, 1.0, %v5296
        %v5333 = vsel %vm5317, 1.0, %v5297
        %v5334 = vsel %vm5318, 1.0, %v5298
        %v5335 = vsel %vm5319, 1.0, %v5299
        %v5336 = vsel %vm5320, 1.0, %v5300
        %v5337 = vsel %vm5321, 1.0, %v5301
        %v5338 = vsel %vm5322, 1.0, %v5302
        %v5339 = vsel %vm5323, 1.0, %v5303
        %v5340 = vsel %vm5324, 1.0, %v5304
        %v5341 = vsel %vm5325, 1.0, %v5305
        %5342 = vset.pattern.permute.xlu0 121
        %5343 = vperm.xlu0 %5342, %v984
        %v5344 = vpop.permute.xlu0 %5343
        %vm5346 = vcmp.eq.f32.partialorder %v5344, %v968
        %vm5347 = vcmp.eq.f32.partialorder %v5344, %v969
        %vm5348 = vcmp.eq.f32.partialorder %v5344, %v970
        %vm5349 = vcmp.eq.f32.partialorder %v5344, %v971
        %vm5350 = vcmp.eq.f32.partialorder %v5344, %v972
        %vm5351 = vcmp.eq.f32.partialorder %v5344, %v973
        %vm5352 = vcmp.eq.f32.partialorder %v5344, %v974
        %vm5353 = vcmp.eq.f32.partialorder %v5344, %v975
        %vm5354 = vcmp.eq.f32.partialorder %v5344, %v976
        %vm5355 = vcmp.eq.f32.partialorder %v5344, %v977
        %vm5356 = vcmp.eq.f32.partialorder %v5344, %v978
        %vm5357 = vcmp.eq.f32.partialorder %v5344, %v979
        %vm5358 = vcmp.eq.f32.partialorder %v5344, %v980
        %vm5359 = vcmp.eq.f32.partialorder %v5344, %v981
        %vm5360 = vcmp.eq.f32.partialorder %v5344, %v982
        %vm5361 = vcmp.eq.f32.partialorder %v5344, %v983
        %v5362 = vsel %vm5346, 1.0, %v5326
        %v5363 = vsel %vm5347, 1.0, %v5327
        %v5364 = vsel %vm5348, 1.0, %v5328
        %v5365 = vsel %vm5349, 1.0, %v5329
        %v5366 = vsel %vm5350, 1.0, %v5330
        %v5367 = vsel %vm5351, 1.0, %v5331
        %v5368 = vsel %vm5352, 1.0, %v5332
        %v5369 = vsel %vm5353, 1.0, %v5333
        %v5370 = vsel %vm5354, 1.0, %v5334
        %v5371 = vsel %vm5355, 1.0, %v5335
        %v5372 = vsel %vm5356, 1.0, %v5336
        %v5373 = vsel %vm5357, 1.0, %v5337
        %v5374 = vsel %vm5358, 1.0, %v5338
        %v5375 = vsel %vm5359, 1.0, %v5339
        %v5376 = vsel %vm5360, 1.0, %v5340
        %v5377 = vsel %vm5361, 1.0, %v5341
        %5378 = vset.pattern.permute.xlu0 122
        %5379 = vperm.xlu0 %5378, %v984
        %v5380 = vpop.permute.xlu0 %5379
        %vm5382 = vcmp.eq.f32.partialorder %v5380, %v968
        %vm5383 = vcmp.eq.f32.partialorder %v5380, %v969
        %vm5384 = vcmp.eq.f32.partialorder %v5380, %v970
        %vm5385 = vcmp.eq.f32.partialorder %v5380, %v971
        %vm5386 = vcmp.eq.f32.partialorder %v5380, %v972
        %vm5387 = vcmp.eq.f32.partialorder %v5380, %v973
        %vm5388 = vcmp.eq.f32.partialorder %v5380, %v974
        %vm5389 = vcmp.eq.f32.partialorder %v5380, %v975
        %vm5390 = vcmp.eq.f32.partialorder %v5380, %v976
        %vm5391 = vcmp.eq.f32.partialorder %v5380, %v977
        %vm5392 = vcmp.eq.f32.partialorder %v5380, %v978
        %vm5393 = vcmp.eq.f32.partialorder %v5380, %v979
        %vm5394 = vcmp.eq.f32.partialorder %v5380, %v980
        %vm5395 = vcmp.eq.f32.partialorder %v5380, %v981
        %vm5396 = vcmp.eq.f32.partialorder %v5380, %v982
        %vm5397 = vcmp.eq.f32.partialorder %v5380, %v983
        %v5398 = vsel %vm5382, 1.0, %v5362
        %v5399 = vsel %vm5383, 1.0, %v5363
        %v5400 = vsel %vm5384, 1.0, %v5364
        %v5401 = vsel %vm5385, 1.0, %v5365
        %v5402 = vsel %vm5386, 1.0, %v5366
        %v5403 = vsel %vm5387, 1.0, %v5367
        %v5404 = vsel %vm5388, 1.0, %v5368
        %v5405 = vsel %vm5389, 1.0, %v5369
        %v5406 = vsel %vm5390, 1.0, %v5370
        %v5407 = vsel %vm5391, 1.0, %v5371
        %v5408 = vsel %vm5392, 1.0, %v5372
        %v5409 = vsel %vm5393, 1.0, %v5373
        %v5410 = vsel %vm5394, 1.0, %v5374
        %v5411 = vsel %vm5395, 1.0, %v5375
        %v5412 = vsel %vm5396, 1.0, %v5376
        %v5413 = vsel %vm5397, 1.0, %v5377
        %5414 = vset.pattern.permute.xlu0 123
        %5415 = vperm.xlu0 %5414, %v984
        %v5416 = vpop.permute.xlu0 %5415
        %vm5418 = vcmp.eq.f32.partialorder %v5416, %v968
        %vm5419 = vcmp.eq.f32.partialorder %v5416, %v969
        %vm5420 = vcmp.eq.f32.partialorder %v5416, %v970
        %vm5421 = vcmp.eq.f32.partialorder %v5416, %v971
        %vm5422 = vcmp.eq.f32.partialorder %v5416, %v972
        %vm5423 = vcmp.eq.f32.partialorder %v5416, %v973
        %vm5424 = vcmp.eq.f32.partialorder %v5416, %v974
        %vm5425 = vcmp.eq.f32.partialorder %v5416, %v975
        %vm5426 = vcmp.eq.f32.partialorder %v5416, %v976
        %vm5427 = vcmp.eq.f32.partialorder %v5416, %v977
        %vm5428 = vcmp.eq.f32.partialorder %v5416, %v978
        %vm5429 = vcmp.eq.f32.partialorder %v5416, %v979
        %vm5430 = vcmp.eq.f32.partialorder %v5416, %v980
        %vm5431 = vcmp.eq.f32.partialorder %v5416, %v981
        %vm5432 = vcmp.eq.f32.partialorder %v5416, %v982
        %vm5433 = vcmp.eq.f32.partialorder %v5416, %v983
        %v5434 = vsel %vm5418, 1.0, %v5398
        %v5435 = vsel %vm5419, 1.0, %v5399
        %v5436 = vsel %vm5420, 1.0, %v5400
        %v5437 = vsel %vm5421, 1.0, %v5401
        %v5438 = vsel %vm5422, 1.0, %v5402
        %v5439 = vsel %vm5423, 1.0, %v5403
        %v5440 = vsel %vm5424, 1.0, %v5404
        %v5441 = vsel %vm5425, 1.0, %v5405
        %v5442 = vsel %vm5426, 1.0, %v5406
        %v5443 = vsel %vm5427, 1.0, %v5407
        %v5444 = vsel %vm5428, 1.0, %v5408
        %v5445 = vsel %vm5429, 1.0, %v5409
        %v5446 = vsel %vm5430, 1.0, %v5410
        %v5447 = vsel %vm5431, 1.0, %v5411
        %v5448 = vsel %vm5432, 1.0, %v5412
        %v5449 = vsel %vm5433, 1.0, %v5413
        %5450 = vset.pattern.permute.xlu0 124
        %5451 = vperm.xlu0 %5450, %v984
        %v5452 = vpop.permute.xlu0 %5451
        %vm5454 = vcmp.eq.f32.partialorder %v5452, %v968
        %vm5455 = vcmp.eq.f32.partialorder %v5452, %v969
        %vm5456 = vcmp.eq.f32.partialorder %v5452, %v970
        %vm5457 = vcmp.eq.f32.partialorder %v5452, %v971
        %vm5458 = vcmp.eq.f32.partialorder %v5452, %v972
        %vm5459 = vcmp.eq.f32.partialorder %v5452, %v973
        %vm5460 = vcmp.eq.f32.partialorder %v5452, %v974
        %vm5461 = vcmp.eq.f32.partialorder %v5452, %v975
        %vm5462 = vcmp.eq.f32.partialorder %v5452, %v976
        %vm5463 = vcmp.eq.f32.partialorder %v5452, %v977
        %vm5464 = vcmp.eq.f32.partialorder %v5452, %v978
        %vm5465 = vcmp.eq.f32.partialorder %v5452, %v979
        %vm5466 = vcmp.eq.f32.partialorder %v5452, %v980
        %vm5467 = vcmp.eq.f32.partialorder %v5452, %v981
        %vm5468 = vcmp.eq.f32.partialorder %v5452, %v982
        %vm5469 = vcmp.eq.f32.partialorder %v5452, %v983
        %v5470 = vsel %vm5454, 1.0, %v5434
        %v5471 = vsel %vm5455, 1.0, %v5435
        %v5472 = vsel %vm5456, 1.0, %v5436
        %v5473 = vsel %vm5457, 1.0, %v5437
        %v5474 = vsel %vm5458, 1.0, %v5438
        %v5475 = vsel %vm5459, 1.0, %v5439
        %v5476 = vsel %vm5460, 1.0, %v5440
        %v5477 = vsel %vm5461, 1.0, %v5441
        %v5478 = vsel %vm5462, 1.0, %v5442
        %v5479 = vsel %vm5463, 1.0, %v5443
        %v5480 = vsel %vm5464, 1.0, %v5444
        %v5481 = vsel %vm5465, 1.0, %v5445
        %v5482 = vsel %vm5466, 1.0, %v5446
        %v5483 = vsel %vm5467, 1.0, %v5447
        %v5484 = vsel %vm5468, 1.0, %v5448
        %v5485 = vsel %vm5469, 1.0, %v5449
        %5486 = vset.pattern.permute.xlu0 125
        %5487 = vperm.xlu0 %5486, %v984
        %v5488 = vpop.permute.xlu0 %5487
        %vm5490 = vcmp.eq.f32.partialorder %v5488, %v968
        %vm5491 = vcmp.eq.f32.partialorder %v5488, %v969
        %vm5492 = vcmp.eq.f32.partialorder %v5488, %v970
        %vm5493 = vcmp.eq.f32.partialorder %v5488, %v971
        %vm5494 = vcmp.eq.f32.partialorder %v5488, %v972
        %vm5495 = vcmp.eq.f32.partialorder %v5488, %v973
        %vm5496 = vcmp.eq.f32.partialorder %v5488, %v974
        %vm5497 = vcmp.eq.f32.partialorder %v5488, %v975
        %vm5498 = vcmp.eq.f32.partialorder %v5488, %v976
        %vm5499 = vcmp.eq.f32.partialorder %v5488, %v977
        %vm5500 = vcmp.eq.f32.partialorder %v5488, %v978
        %vm5501 = vcmp.eq.f32.partialorder %v5488, %v979
        %vm5502 = vcmp.eq.f32.partialorder %v5488, %v980
        %vm5503 = vcmp.eq.f32.partialorder %v5488, %v981
        %vm5504 = vcmp.eq.f32.partialorder %v5488, %v982
        %vm5505 = vcmp.eq.f32.partialorder %v5488, %v983
        %v5506 = vsel %vm5490, 1.0, %v5470
        %v5507 = vsel %vm5491, 1.0, %v5471
        %v5508 = vsel %vm5492, 1.0, %v5472
        %v5509 = vsel %vm5493, 1.0, %v5473
        %v5510 = vsel %vm5494, 1.0, %v5474
        %v5511 = vsel %vm5495, 1.0, %v5475
        %v5512 = vsel %vm5496, 1.0, %v5476
        %v5513 = vsel %vm5497, 1.0, %v5477
        %v5514 = vsel %vm5498, 1.0, %v5478
        %v5515 = vsel %vm5499, 1.0, %v5479
        %v5516 = vsel %vm5500, 1.0, %v5480
        %v5517 = vsel %vm5501, 1.0, %v5481
        %v5518 = vsel %vm5502, 1.0, %v5482
        %v5519 = vsel %vm5503, 1.0, %v5483
        %v5520 = vsel %vm5504, 1.0, %v5484
        %v5521 = vsel %vm5505, 1.0, %v5485
        %5522 = vset.pattern.permute.xlu0 126
        %5523 = vperm.xlu0 %5522, %v984
        %v5524 = vpop.permute.xlu0 %5523
        %vm5526 = vcmp.eq.f32.partialorder %v5524, %v968
        %vm5527 = vcmp.eq.f32.partialorder %v5524, %v969
        %vm5528 = vcmp.eq.f32.partialorder %v5524, %v970
        %vm5529 = vcmp.eq.f32.partialorder %v5524, %v971
        %vm5530 = vcmp.eq.f32.partialorder %v5524, %v972
        %vm5531 = vcmp.eq.f32.partialorder %v5524, %v973
        %vm5532 = vcmp.eq.f32.partialorder %v5524, %v974
        %vm5533 = vcmp.eq.f32.partialorder %v5524, %v975
        %vm5534 = vcmp.eq.f32.partialorder %v5524, %v976
        %vm5535 = vcmp.eq.f32.partialorder %v5524, %v977
        %vm5536 = vcmp.eq.f32.partialorder %v5524, %v978
        %vm5537 = vcmp.eq.f32.partialorder %v5524, %v979
        %vm5538 = vcmp.eq.f32.partialorder %v5524, %v980
        %vm5539 = vcmp.eq.f32.partialorder %v5524, %v981
        %vm5540 = vcmp.eq.f32.partialorder %v5524, %v982
        %vm5541 = vcmp.eq.f32.partialorder %v5524, %v983
        %v5542 = vsel %vm5526, 1.0, %v5506
        %v5543 = vsel %vm5527, 1.0, %v5507
        %v5544 = vsel %vm5528, 1.0, %v5508
        %v5545 = vsel %vm5529, 1.0, %v5509
        %v5546 = vsel %vm5530, 1.0, %v5510
        %v5547 = vsel %vm5531, 1.0, %v5511
        %v5548 = vsel %vm5532, 1.0, %v5512
        %v5549 = vsel %vm5533, 1.0, %v5513
        %v5550 = vsel %vm5534, 1.0, %v5514
        %v5551 = vsel %vm5535, 1.0, %v5515
        %v5552 = vsel %vm5536, 1.0, %v5516
        %v5553 = vsel %vm5537, 1.0, %v5517
        %v5554 = vsel %vm5538, 1.0, %v5518
        %v5555 = vsel %vm5539, 1.0, %v5519
        %v5556 = vsel %vm5540, 1.0, %v5520
        %v5557 = vsel %vm5541, 1.0, %v5521
        %5558 = vset.pattern.permute.xlu0 127
        %5559 = vperm.xlu0 %5558, %v984
        %v5560 = vpop.permute.xlu0 %5559
        %vm5562 = vcmp.eq.f32.partialorder %v5560, %v968
        %vm5563 = vcmp.eq.f32.partialorder %v5560, %v969
        %vm5564 = vcmp.eq.f32.partialorder %v5560, %v970
        %vm5565 = vcmp.eq.f32.partialorder %v5560, %v971
        %vm5566 = vcmp.eq.f32.partialorder %v5560, %v972
        %vm5567 = vcmp.eq.f32.partialorder %v5560, %v973
        %vm5568 = vcmp.eq.f32.partialorder %v5560, %v974
        %vm5569 = vcmp.eq.f32.partialorder %v5560, %v975
        %vm5570 = vcmp.eq.f32.partialorder %v5560, %v976
        %vm5571 = vcmp.eq.f32.partialorder %v5560, %v977
        %vm5572 = vcmp.eq.f32.partialorder %v5560, %v978
        %vm5573 = vcmp.eq.f32.partialorder %v5560, %v979
        %vm5574 = vcmp.eq.f32.partialorder %v5560, %v980
        %vm5575 = vcmp.eq.f32.partialorder %v5560, %v981
        %vm5576 = vcmp.eq.f32.partialorder %v5560, %v982
        %vm5577 = vcmp.eq.f32.partialorder %v5560, %v983
        %v5578 = vsel %vm5562, 1.0, %v5542
        %v5579 = vsel %vm5563, 1.0, %v5543
        %v5580 = vsel %vm5564, 1.0, %v5544
        %v5581 = vsel %vm5565, 1.0, %v5545
        %v5582 = vsel %vm5566, 1.0, %v5546
        %v5583 = vsel %vm5567, 1.0, %v5547
        %v5584 = vsel %vm5568, 1.0, %v5548
        %v5585 = vsel %vm5569, 1.0, %v5549
        %v5586 = vsel %vm5570, 1.0, %v5550
        %v5587 = vsel %vm5571, 1.0, %v5551
        %v5588 = vsel %vm5572, 1.0, %v5552
        %v5589 = vsel %vm5573, 1.0, %v5553
        %v5590 = vsel %vm5574, 1.0, %v5554
        %v5591 = vsel %vm5575, 1.0, %v5555
        %v5592 = vsel %vm5576, 1.0, %v5556
        %v5593 = vsel %vm5577, 1.0, %v5557
        %5594 = vst [vmem:[%s202] sm:$0xff] %v5578
        %5595 = vst [vmem:[%s202 + $0x8] sm:$0xff] %v5579
        %5596 = vst [vmem:[%s202 + $0x10] sm:$0xff] %v5580
        %5597 = vst [vmem:[%s202 + $0x18] sm:$0xff] %v5581
        %5598 = vst [vmem:[%s202 + $0x20] sm:$0xff] %v5582
        %5599 = vst [vmem:[%s202 + $0x28] sm:$0xff] %v5583
        %5600 = vst [vmem:[%s202 + $0x30] sm:$0xff] %v5584
        %5601 = vst [vmem:[%s202 + $0x38] sm:$0xff] %v5585
        %5602 = vst [vmem:[%s202 + $0x40] sm:$0xff] %v5586
        %5603 = vst [vmem:[%s202 + $0x48] sm:$0xff] %v5587
        %5604 = vst [vmem:[%s202 + $0x50] sm:$0xff] %v5588
        %5605 = vst [vmem:[%s202 + $0x58] sm:$0xff] %v5589
        %5606 = vst [vmem:[%s202 + $0x60] sm:$0xff] %v5590
        %5607 = vst [vmem:[%s202 + $0x68] sm:$0xff] %v5591
        %5608 = vst [vmem:[%s202 + $0x70] sm:$0xff] %v5592
        %5609 = vst [vmem:[%s202 + $0x78] sm:$0xff] %v5593
        %s5610 = smul.u32 8, %s23
        %p5611 = scmp.lt.s32.totalorder %s5610, 15
        %s5612 = scalar_select %p5611, %s5610, 15
        %s5613 = smul.addr %s5612, 4
        %s5614 = scalar_lea.vmem %s2, %s5613
        %s5615 = sand.u32 %s114, 1
        %s5616 = scalar_lea.sflag [#allocation4], %s5615
        %s5617 = sand.u32 %s114, 1
        %s5618 = smul.addr %s5617, 128
        %s5619 = scalar_lea.vmem [#allocation6], %s5618
        // Predicated region
        $region37: #{tpu_custom_call.1} parent=27 // pred_check
          %p5620 = pneg %p96
        $region38: #{tpu_custom_call.1} parent=27 // pred_check_branch
          %5622 = sbr.rel (%p5620) target = $region40
        $region39: #{tpu_custom_call.1} parent=27 // pred_region
          %s5623 = smul.u32 8, %s23
        $region40: #{tpu_custom_call.1} parent=27 // pred_fallthru
          _
        // Predicated region
        $region41: #{tpu_custom_call.1} parent=27 // pred_check
          %p5624 = pneg %p124
        $region42: #{tpu_custom_call.1} parent=27 // pred_check_branch
          %5626 = sbr.rel (%p5624) target = $region44
        $region43: #{tpu_custom_call.1} parent=27 // pred_region
          %s5627 = smul.u32 16, %s24
          %s5629 = ssub.s32 2048, 2048
          %5630 = vsyncadd %s5616, %s5629
          %s5631 = smul.addr %s23, 32
          %s5632 = sadd.s32 %s5627, %s5631
          %s5633 = smul.addr %s5632, 128
          %s5634 = scalar_lea.hbm %s3, %s5633
          %s5636 = sshll.u32 %s5619, 4
          %s5637 = int_to_ptr.vmem [resolvable:$true] %s5636
          %5639 = dma.vmem_to_hbm [thread:$0]  %s5637, 2048, %s5634, %s5616
        $region44: #{tpu_custom_call.1} parent=27 // pred_fallthru
          _
      $region28: #{tpu_custom_call.1} parent=5 // pred_fallthru
        _
      %p5640 = scmp.le.s32.totalorder 2, %s14
      // Predicated region
      $region45: #{tpu_custom_call.1} parent=5 // pred_check
        %p5641 = pneg %p5640
      $region46: #{tpu_custom_call.1} parent=5 // pred_check_branch
        %5643 = sbr.rel (%p5641) target = $region48
      $region47: #{tpu_custom_call.1} parent=5 // pred_region
        %s5644 = ssub.s32 %s14, 2
        // Predicated region
        $region49: #{tpu_custom_call.1} parent=47 // pred_check
          %p5645 = pneg %p102
        $region50: #{tpu_custom_call.1} parent=47 // pred_check_branch
          %5647 = sbr.rel (%p5645) target = $region52
        $region51: #{tpu_custom_call.1} parent=47 // pred_region
          %s5648 = smul.u32 8, %s25
          %p5649 = scmp.lt.s32.totalorder %s5648, 15
          %s5650 = scalar_select %p5649, %s5648, 15
          %s5651 = smul.addr %s5650, 4
          %s5652 = scalar_lea.vmem %s2, %s5651
        $region52: #{tpu_custom_call.1} parent=47 // pred_fallthru
          _
        // Predicated region
        $region53: #{tpu_custom_call.1} parent=47 // pred_check
          %p5653 = pneg %p130
        $region54: #{tpu_custom_call.1} parent=47 // pred_check_branch
          %5655 = sbr.rel (%p5653) target = $region56
        $region55: #{tpu_custom_call.1} parent=47 // pred_region
          %s5656 = sand.u32 %s115, 1
          %s5657 = scalar_lea.sflag [#allocation4], %s5656
          %s5658 = sand.u32 %s115, 1
          %s5659 = smul.addr %s5658, 128
          %s5660 = scalar_lea.vmem [#allocation6], %s5659
          %5661 = dma.done %s5657, 2048
        $region56: #{tpu_custom_call.1} parent=47 // pred_fallthru
          _
      $region48: #{tpu_custom_call.1} parent=5 // pred_fallthru
        _
    $region6: #{tpu_custom_call.1} parent=1 // loop_footer
      %s18 = sadd.s32 1, %s14
    $region7: #{tpu_custom_call.1} parent=1 // loop_footer_branch
      %13 = sbr.rel target = $region3
    $region8: #{tpu_custom_call.1} parent=1 // loop_exit
      _
    %5662 = vsyncpa [#allocation4], 1
    %s5663 = scalar_lea.sflag [#allocation4], 1
    %5664 = vsyncpa %s5663, 1
    %5665 = vsyncpa [#allocation5], 1
    %s5666 = scalar_lea.sflag [#allocation5], 1
    %5667 = vsyncpa %s5666, 1

</llo_original>
